<compile_context>
chip_gen: v6e
topology: v6e:2x2x1
jax: 0.10.0
libtpu: 0.0.40
codegen_flags: <defaults>
</compile_context>

<pallas_src>
import functools

import jax
import jax.numpy as jnp
from jax.experimental import pallas as pl
from jax.experimental.pallas import tpu as pltpu

# ----------------------------- FLAGS (chosen) --------------------------------
USE_BIAS = True
BATCH_NORM = False   # TODO(synk): BatchNorm2d path not implemented (BATCH_NORM=False config)
RESIDUAL = True


# ------------------------------- Pallas kernel -------------------------------
def _make_series_kernel(H, W, C, residual, compute_dtype):
    """Fused BlockSeries kernel.

    Grid = (batch, block).  VMEM scratch `act_ref` holds the current padded
    activation (H+2, W+2, C) in f32; it is initialized from x at block 0 and
    carried across the block axis.  `mid_ref` (residual path only) holds the
    padded intermediate after conv1+relu.  Output is written to HBM only once
    per batch element (last block).
    """
    HW = H * W

    def conv3x3(src, w, bias):
        # src:  (H+2, W+2, C) f32 value (zero halo)
        # w:    (9, C, C) compute_dtype value, tap order t = dy*3 + dx
        # bias: (1, C) f32 value
        # 3x3 SAME conv as 9 shifted (H*W, C) @ (C, C) MXU matmuls, f32 acc.
        acc = jnp.zeros((HW, C), jnp.float32)
        t = 0
        for dy in range(3):
            for dx in range(3):
                patch = src[dy:dy + H, dx:dx + W, :].reshape(HW, C)
                acc = acc + jnp.dot(patch.astype(compute_dtype), w[t],
                                    preferred_element_type=jnp.float32)
                t += 1
        return acc + bias                       # (H*W, C) f32

    if residual:
        def kernel(x_ref, w1_ref, b1_ref, w2_ref, b2_ref, o_ref, act_ref, mid_ref):
            blk = pl.program_id(1)
            n_blk = pl.num_programs(1)

            @pl.when(blk == 0)
            def _init():
                # Zero the halo once per batch element; load x into interior.
                act_ref[...] = jnp.zeros_like(act_ref)
                mid_ref[...] = jnp.zeros_like(mid_ref)
                act_ref[1:H + 1, 1:W + 1, :] = x_ref[0].astype(jnp.float32)

            w1 = w1_ref[0].astype(compute_dtype)    # (9, C, C)
            w2 = w2_ref[0].astype(compute_dtype)
            b1 = b1_ref[0]                          # (1, C) f32
            b2 = b2_ref[0]

            a = act_ref[...]                        # (H+2, W+2, C) f32
            res = a[1:H + 1, 1:W + 1, :].reshape(HW, C)

            # conv1 + bias + relu  -> padded intermediate in VMEM
            h1 = jnp.maximum(conv3x3(a, w1, b1), 0.0)
            mid_ref[1:H + 1, 1:W + 1, :] = h1.reshape(H, W, C)

            # conv2 + bias + residual + relu -> back into the carried activation
            out = jnp.maximum(conv3x3(mid_ref[...], w2, b2) + res, 0.0)
            act_ref[1:H + 1, 1:W + 1, :] = out.reshape(H, W, C)

            @pl.when(blk == n_blk - 1)
            def _store():
                o_ref[0] = out.reshape(H, W, C).astype(o_ref.dtype)

        return kernel

    def kernel(x_ref, w_ref, b_ref, o_ref, act_ref):
        blk = pl.program_id(1)
        n_blk = pl.num_programs(1)

        @pl.when(blk == 0)
        def _init():
            act_ref[...] = jnp.zeros_like(act_ref)
            act_ref[1:H + 1, 1:W + 1, :] = x_ref[0].astype(jnp.float32)

        w = w_ref[0].astype(compute_dtype)          # (9, C, C)
        bias = b_ref[0]                             # (1, C)

        out = jnp.maximum(conv3x3(act_ref[...], w, bias), 0.0)
        act_ref[1:H + 1, 1:W + 1, :] = out.reshape(H, W, C)

        @pl.when(blk == n_blk - 1)
        def _store():
            o_ref[0] = out.reshape(H, W, C).astype(o_ref.dtype)

    return kernel


# ------------------------------- wrapper --------------------------------------
def block_series_forward(x_nchw, params, residual=RESIDUAL,
                         compute_dtype=jnp.bfloat16):
    """Forward pass of BlockSeries.  Input/output are NCHW (torch convention)."""
    nb = params["w1"].shape[0]
    if nb == 0:
        return x_nchw
    # layout glue: NCHW -> NHWC so channels map to TPU lanes.
    x = jnp.transpose(x_nchw, (0, 2, 3, 1))
    N, H, W, C = x.shape

    # Weights HWIO (3,3,Cin,Cout) -> (9, Cin, Cout), tap order dy*3+dx, bf16.
    w1 = params["w1"].reshape(nb, 9, C, C).astype(compute_dtype)
    b1 = params["b1"].reshape(nb, 1, C).astype(jnp.float32)

    args = [x, w1, b1]
    in_specs = [
        # x: resident across the block axis (DMA'd once per batch element).
        pl.BlockSpec((1, H, W, C), lambda n, b: (n, 0, 0, 0)),
        # per-block weights / bias: prefetched (double-buffered) by BlockSpec.
        pl.BlockSpec((1, 9, C, C), lambda n, b: (b, 0, 0, 0)),
        pl.BlockSpec((1, 1, C), lambda n, b: (b, 0, 0)),
    ]
    scratch_shapes = [pltpu.VMEM((H + 2, W + 2, C), jnp.float32)]   # carried activation
    if residual:
        w2 = params["w2"].reshape(nb, 9, C, C).astype(compute_dtype)
        b2 = params["b2"].reshape(nb, 1, C).astype(jnp.float32)
        args += [w2, b2]
        in_specs += [
            pl.BlockSpec((1, 9, C, C), lambda n, b: (b, 0, 0, 0)),
            pl.BlockSpec((1, 1, C), lambda n, b: (b, 0, 0)),
        ]
        scratch_shapes.append(pltpu.VMEM((H + 2, W + 2, C), jnp.float32))  # conv1 output

    kernel = _make_series_kernel(H, W, C, residual, compute_dtype)

    y = pl.pallas_call(
        kernel,
        out_shape=jax.ShapeDtypeStruct((N, H, W, C), x.dtype),
        grid=(N, nb),
        in_specs=in_specs,
        out_specs=pl.BlockSpec((1, H, W, C), lambda n, b: (n, 0, 0, 0)),
        scratch_shapes=scratch_shapes,
        compiler_params=pltpu.CompilerParams(
            dimension_semantics=("parallel", "arbitrary"),
            vmem_limit_bytes=32 * 1024 * 1024,
        ),
    )(*args)
    return jnp.transpose(y, (0, 3, 1, 2))


# --------------------------- parameter initialization --------------------------
def init_block_series_params(key, inplanes, n_blocks, residual=RESIDUAL):
    """Deterministic init.  Weights stored stacked HWIO: (n_blocks, 3, 3, Cin, Cout)."""
    C = inplanes
    k1, k2, k3, k4 = jax.random.split(key, 4)
    scale = 0.1
    params = {
        "w1": scale * jax.random.normal(k1, (n_blocks, 3, 3, C, C), jnp.float32),
        "b1": (0.1 * jax.random.normal(k2, (n_blocks, C), jnp.float32)
               if USE_BIAS else jnp.zeros((n_blocks, C), jnp.float32)),
    }
    if residual:
        params["w2"] = scale * jax.random.normal(k3, (n_blocks, 3, 3, C, C), jnp.float32)
        params["b2"] = (0.1 * jax.random.normal(k4, (n_blocks, C), jnp.float32)
                        if USE_BIAS else jnp.zeros((n_blocks, C), jnp.float32))
    return params


# ----------------------------- pure-JAX reference ------------------------------
def _ref_conv(x_nhwc, w_hwio, bias):
    out = jax.lax.conv_general_dilated(
        x_nhwc, w_hwio, window_strides=(1, 1), padding="SAME",
        dimension_numbers=("NHWC", "HWIO", "NHWC"))
    return out + bias.reshape(1, 1, 1, -1)


def block_series_ref(x_nchw, params, residual=RESIDUAL):
    x = jnp.transpose(x_nchw, (0, 2, 3, 1))
    nb = params["w1"].shape[0]
    for i in range(nb):
        if residual:
            res = x
            h = jnp.maximum(_ref_conv(x, params["w1"][i], params["b1"][i]), 0.0)
            x = jnp.maximum(_ref_conv(h, params["w2"][i], params["b2"][i]) + res, 0.0)
        else:
            x = jnp.maximum(_ref_conv(x, params["w1"][i], params["b1"][i]), 0.0)
    return jnp.transpose(x, (0, 3, 1, 2))


# ------------------------------------ main --------------------------------------
if __name__ == "__main__":
    key = jax.random.PRNGKey(0)
    k_x, k_p, k_p2 = jax.random.split(key, 3)

    N, C, H, W = 2, 4, 16, 16
    n_blocks = 2

    x = jax.random.normal(k_x, (N, C, H, W), jnp.float32)

    # ---- residual = True (ResidualBlock series) ----
    params = init_block_series_params(k_p, inplanes=C, n_blocks=n_blocks, residual=True)
    y_ref = jax.block_until_ready(block_series_ref(x, params, residual=True))

    # f32 MXU operands: tight numerical check against the JAX reference.
    fwd_f32 = jax.jit(functools.partial(block_series_forward, residual=True,
                                        compute_dtype=jnp.float32))
    y_f32 = jax.block_until_ready(fwd_f32(x, params))
    assert y_f32.shape == (N, C, H, W)
    assert jnp.allclose(y_f32, y_ref, rtol=1e-4, atol=1e-4), "f32 residual mismatch"

    # bf16 MXU operands (f32 accumulate): production path, looser tolerance.
    fwd_bf16 = jax.jit(functools.partial(block_series_forward, residual=True,
                                         compute_dtype=jnp.bfloat16))
    y_bf16 = jax.block_until_ready(fwd_bf16(x, params))
    assert jnp.allclose(y_bf16, y_ref, rtol=1e-1, atol=1e-1), "bf16 residual mismatch"

    # ---- residual = False (plain Block series) ----
    params_nr = init_block_series_params(k_p2, inplanes=C, n_blocks=n_blocks, residual=False)
    y_ref_nr = jax.block_until_ready(block_series_ref(x, params_nr, residual=False))
    fwd_nr = jax.jit(functools.partial(block_series_forward, residual=False,
                                       compute_dtype=jnp.float32))
    y_nr = jax.block_until_ready(fwd_nr(x, params_nr))
    assert jnp.allclose(y_nr, y_ref_nr, rtol=1e-4, atol=1e-4), "non-residual mismatch"

    print("KERNEL_OK")
</pallas_src>

<mosaic_0001>
module attributes {stable_mosaic.version = 11 : i64} {
  func.func @kernel(%arg0: i32, %arg1: i32, %arg2: memref<1x16x16x4xf32, #tpu.memory_space<vmem>>, %arg3: memref<1x9x4x4xf32, #tpu.memory_space<vmem>>, %arg4: memref<1x1x4xf32, #tpu.memory_space<vmem>>, %arg5: memref<1x9x4x4xf32, #tpu.memory_space<vmem>>, %arg6: memref<1x1x4xf32, #tpu.memory_space<vmem>>, %arg7: memref<1x16x16x4xf32, #tpu.memory_space<vmem>>, %arg8: memref<18x18x4xf32, #tpu.memory_space<vmem>>, %arg9: memref<18x18x4xf32, #tpu.memory_space<vmem>>) attributes {dimension_semantics = [#tpu.dimension_semantics<parallel>, #tpu.dimension_semantics<arbitrary>], iteration_bounds = array<i64: 2, 2>, scalar_prefetch = 0 : i64, scratch_operands = 2 : i64, tpu.core_type = #tpu.core_type<tc>, window_params = [{transform_indices = @transform_0, window_bounds = array<i64: 1, 16, 16, 4>}, {transform_indices = @transform_1, window_bounds = array<i64: 1, 9, 4, 4>}, {transform_indices = @transform_2, window_bounds = array<i64: 1, 1, 4>}, {transform_indices = @transform_3, window_bounds = array<i64: 1, 9, 4, 4>}, {transform_indices = @transform_4, window_bounds = array<i64: 1, 1, 4>}, {transform_indices = @transform_5, window_bounds = array<i64: 1, 16, 16, 4>}]} {
    %c0_i32 = arith.constant 0 : i32
    %0 = arith.cmpi eq, %arg1, %c0_i32 : i32
    %1 = arith.extui %0 : i1 to i32
    %c0_i32_0 = arith.constant 0 : i32
    %2 = arith.cmpi ne, %1, %c0_i32_0 : i32
    scf.if %2 {
      %cst_47 = arith.constant 0.000000e+00 : f32
      %141 = vector.broadcast %cst_47 : f32 to vector<18x18x4xf32>
      %c0_48 = arith.constant 0 : index
      %c0_49 = arith.constant 0 : index
      %c0_50 = arith.constant 0 : index
      %142 = vector.load %arg8[%c0_48, %c0_49, %c0_50] : memref<18x18x4xf32, #tpu.memory_space<vmem>>, vector<18x18x4xf32>
      tpu.vector_store %arg8[%c0_48, %c0_49, %c0_50], %141 {strides = array<i32>} : memref<18x18x4xf32, #tpu.memory_space<vmem>>, vector<18x18x4xf32>,
      %cst_51 = arith.constant 0.000000e+00 : f32
      %143 = vector.broadcast %cst_51 : f32 to vector<18x18x4xf32>
      %c0_52 = arith.constant 0 : index
      %c0_53 = arith.constant 0 : index
      %c0_54 = arith.constant 0 : index
      %144 = vector.load %arg9[%c0_52, %c0_53, %c0_54] : memref<18x18x4xf32, #tpu.memory_space<vmem>>, vector<18x18x4xf32>
      tpu.vector_store %arg9[%c0_52, %c0_53, %c0_54], %143 {strides = array<i32>} : memref<18x18x4xf32, #tpu.memory_space<vmem>>, vector<18x18x4xf32>,
      %c0_55 = arith.constant 0 : index
      %c0_56 = arith.constant 0 : index
      %c0_57 = arith.constant 0 : index
      %c0_58 = arith.constant 0 : index
      %145 = vector.load %arg2[%c0_55, %c0_56, %c0_57, %c0_58] : memref<1x16x16x4xf32, #tpu.memory_space<vmem>>, vector<1x16x16x4xf32>
      %146 = vector.shape_cast %145 : vector<1x16x16x4xf32> to vector<16x16x4xf32>
      %c1_59 = arith.constant 1 : index
      %c1_60 = arith.constant 1 : index
      %c0_61 = arith.constant 0 : index
      %147 = vector.load %arg8[%c1_59, %c1_60, %c0_61] : memref<18x18x4xf32, #tpu.memory_space<vmem>>, vector<16x16x4xf32>
      tpu.vector_store %arg8[%c1_59, %c1_60, %c0_61], %146 {strides = array<i32>} : memref<18x18x4xf32, #tpu.memory_space<vmem>>, vector<16x16x4xf32>,
    } else {
    }
    %c0 = arith.constant 0 : index
    %c0_1 = arith.constant 0 : index
    %c0_2 = arith.constant 0 : index
    %c0_3 = arith.constant 0 : index
    %3 = vector.load %arg3[%c0, %c0_1, %c0_2, %c0_3] : memref<1x9x4x4xf32, #tpu.memory_space<vmem>>, vector<1x9x4x4xf32>
    %4 = vector.shape_cast %3 : vector<1x9x4x4xf32> to vector<9x4x4xf32>
    %c0_4 = arith.constant 0 : index
    %c0_5 = arith.constant 0 : index
    %c0_6 = arith.constant 0 : index
    %c0_7 = arith.constant 0 : index
    %5 = vector.load %arg5[%c0_4, %c0_5, %c0_6, %c0_7] : memref<1x9x4x4xf32, #tpu.memory_space<vmem>>, vector<1x9x4x4xf32>
    %6 = vector.shape_cast %5 : vector<1x9x4x4xf32> to vector<9x4x4xf32>
    %c0_8 = arith.constant 0 : index
    %c0_9 = arith.constant 0 : index
    %c0_10 = arith.constant 0 : index
    %7 = vector.load %arg4[%c0_8, %c0_9, %c0_10] : memref<1x1x4xf32, #tpu.memory_space<vmem>>, vector<1x1x4xf32>
    %8 = vector.shape_cast %7 : vector<1x1x4xf32> to vector<1x4xf32>
    %c0_11 = arith.constant 0 : index
    %c0_12 = arith.constant 0 : index
    %c0_13 = arith.constant 0 : index
    %9 = vector.load %arg6[%c0_11, %c0_12, %c0_13] : memref<1x1x4xf32, #tpu.memory_space<vmem>>, vector<1x1x4xf32>
    %10 = vector.shape_cast %9 : vector<1x1x4xf32> to vector<1x4xf32>
    %c0_14 = arith.constant 0 : index
    %c0_15 = arith.constant 0 : index
    %c0_16 = arith.constant 0 : index
    %11 = vector.load %arg8[%c0_14, %c0_15, %c0_16] : memref<18x18x4xf32, #tpu.memory_space<vmem>>, vector<18x18x4xf32>
    %12 = vector.extract_strided_slice %11 {offsets = [1, 1, 0], sizes = [16, 16, 4], strides = [1, 1, 1]} : vector<18x18x4xf32> to vector<16x16x4xf32>
    %13 = vector.shape_cast %12 : vector<16x16x4xf32> to vector<256x4xf32>
    %cst = arith.constant 0.000000e+00 : f32
    %14 = vector.broadcast %cst : f32 to vector<256x4xf32>
    %15 = vector.extract_strided_slice %11 {offsets = [0, 0, 0], sizes = [16, 16, 4], strides = [1, 1, 1]} : vector<18x18x4xf32> to vector<16x16x4xf32>
    %16 = vector.shape_cast %15 : vector<16x16x4xf32> to vector<256x4xf32>
    %17 = vector.extract_strided_slice %4 {offsets = [0, 0, 0], sizes = [1, 4, 4], strides = [1, 1, 1]} : vector<9x4x4xf32> to vector<1x4x4xf32>
    %18 = vector.shape_cast %17 : vector<1x4x4xf32> to vector<4x4xf32>
    %cst_17 = arith.constant dense<0.000000e+00> : vector<256x4xf32>
    %19 = tpu.matmul %16, %18, %cst_17 {dimension_numbers = #tpu.dot_dimension_numbers<[1], [0], [0], [1], [0, 0, 1, 1], [], []>} : vector<256x4xf32>, vector<4x4xf32>, vector<256x4xf32> -> vector<256x4xf32>
    %20 = arith.addf %14, %19 : vector<256x4xf32>
    %21 = vector.extract_strided_slice %11 {offsets = [0, 1, 0], sizes = [16, 16, 4], strides = [1, 1, 1]} : vector<18x18x4xf32> to vector<16x16x4xf32>
    %22 = vector.shape_cast %21 : vector<16x16x4xf32> to vector<256x4xf32>
    %23 = vector.extract_strided_slice %4 {offsets = [1, 0, 0], sizes = [1, 4, 4], strides = [1, 1, 1]} : vector<9x4x4xf32> to vector<1x4x4xf32>
    %24 = vector.shape_cast %23 : vector<1x4x4xf32> to vector<4x4xf32>
    %cst_18 = arith.constant dense<0.000000e+00> : vector<256x4xf32>
    %25 = tpu.matmul %22, %24, %cst_18 {dimension_numbers = #tpu.dot_dimension_numbers<[1], [0], [0], [1], [0, 0, 1, 1], [], []>} : vector<256x4xf32>, vector<4x4xf32>, vector<256x4xf32> -> vector<256x4xf32>
    %26 = arith.addf %20, %25 : vector<256x4xf32>
    %27 = vector.extract_strided_slice %11 {offsets = [0, 2, 0], sizes = [16, 16, 4], strides = [1, 1, 1]} : vector<18x18x4xf32> to vector<16x16x4xf32>
    %28 = vector.shape_cast %27 : vector<16x16x4xf32> to vector<256x4xf32>
    %29 = vector.extract_strided_slice %4 {offsets = [2, 0, 0], sizes = [1, 4, 4], strides = [1, 1, 1]} : vector<9x4x4xf32> to vector<1x4x4xf32>
    %30 = vector.shape_cast %29 : vector<1x4x4xf32> to vector<4x4xf32>
    %cst_19 = arith.constant dense<0.000000e+00> : vector<256x4xf32>
    %31 = tpu.matmul %28, %30, %cst_19 {dimension_numbers = #tpu.dot_dimension_numbers<[1], [0], [0], [1], [0, 0, 1, 1], [], []>} : vector<256x4xf32>, vector<4x4xf32>, vector<256x4xf32> -> vector<256x4xf32>
    %32 = arith.addf %26, %31 : vector<256x4xf32>
    %33 = vector.extract_strided_slice %11 {offsets = [1, 0, 0], sizes = [16, 16, 4], strides = [1, 1, 1]} : vector<18x18x4xf32> to vector<16x16x4xf32>
    %34 = vector.shape_cast %33 : vector<16x16x4xf32> to vector<256x4xf32>
    %35 = vector.extract_strided_slice %4 {offsets = [3, 0, 0], sizes = [1, 4, 4], strides = [1, 1, 1]} : vector<9x4x4xf32> to vector<1x4x4xf32>
    %36 = vector.shape_cast %35 : vector<1x4x4xf32> to vector<4x4xf32>
    %cst_20 = arith.constant dense<0.000000e+00> : vector<256x4xf32>
    %37 = tpu.matmul %34, %36, %cst_20 {dimension_numbers = #tpu.dot_dimension_numbers<[1], [0], [0], [1], [0, 0, 1, 1], [], []>} : vector<256x4xf32>, vector<4x4xf32>, vector<256x4xf32> -> vector<256x4xf32>
    %38 = arith.addf %32, %37 : vector<256x4xf32>
    %39 = vector.extract_strided_slice %11 {offsets = [1, 1, 0], sizes = [16, 16, 4], strides = [1, 1, 1]} : vector<18x18x4xf32> to vector<16x16x4xf32>
    %40 = vector.shape_cast %39 : vector<16x16x4xf32> to vector<256x4xf32>
    %41 = vector.extract_strided_slice %4 {offsets = [4, 0, 0], sizes = [1, 4, 4], strides = [1, 1, 1]} : vector<9x4x4xf32> to vector<1x4x4xf32>
    %42 = vector.shape_cast %41 : vector<1x4x4xf32> to vector<4x4xf32>
    %cst_21 = arith.constant dense<0.000000e+00> : vector<256x4xf32>
    %43 = tpu.matmul %40, %42, %cst_21 {dimension_numbers = #tpu.dot_dimension_numbers<[1], [0], [0], [1], [0, 0, 1, 1], [], []>} : vector<256x4xf32>, vector<4x4xf32>, vector<256x4xf32> -> vector<256x4xf32>
    %44 = arith.addf %38, %43 : vector<256x4xf32>
    %45 = vector.extract_strided_slice %11 {offsets = [1, 2, 0], sizes = [16, 16, 4], strides = [1, 1, 1]} : vector<18x18x4xf32> to vector<16x16x4xf32>
    %46 = vector.shape_cast %45 : vector<16x16x4xf32> to vector<256x4xf32>
    %47 = vector.extract_strided_slice %4 {offsets = [5, 0, 0], sizes = [1, 4, 4], strides = [1, 1, 1]} : vector<9x4x4xf32> to vector<1x4x4xf32>
    %48 = vector.shape_cast %47 : vector<1x4x4xf32> to vector<4x4xf32>
    %cst_22 = arith.constant dense<0.000000e+00> : vector<256x4xf32>
    %49 = tpu.matmul %46, %48, %cst_22 {dimension_numbers = #tpu.dot_dimension_numbers<[1], [0], [0], [1], [0, 0, 1, 1], [], []>} : vector<256x4xf32>, vector<4x4xf32>, vector<256x4xf32> -> vector<256x4xf32>
    %50 = arith.addf %44, %49 : vector<256x4xf32>
    %51 = vector.extract_strided_slice %11 {offsets = [2, 0, 0], sizes = [16, 16, 4], strides = [1, 1, 1]} : vector<18x18x4xf32> to vector<16x16x4xf32>
    %52 = vector.shape_cast %51 : vector<16x16x4xf32> to vector<256x4xf32>
    %53 = vector.extract_strided_slice %4 {offsets = [6, 0, 0], sizes = [1, 4, 4], strides = [1, 1, 1]} : vector<9x4x4xf32> to vector<1x4x4xf32>
    %54 = vector.shape_cast %53 : vector<1x4x4xf32> to vector<4x4xf32>
    %cst_23 = arith.constant dense<0.000000e+00> : vector<256x4xf32>
    %55 = tpu.matmul %52, %54, %cst_23 {dimension_numbers = #tpu.dot_dimension_numbers<[1], [0], [0], [1], [0, 0, 1, 1], [], []>} : vector<256x4xf32>, vector<4x4xf32>, vector<256x4xf32> -> vector<256x4xf32>
    %56 = arith.addf %50, %55 : vector<256x4xf32>
    %57 = vector.extract_strided_slice %11 {offsets = [2, 1, 0], sizes = [16, 16, 4], strides = [1, 1, 1]} : vector<18x18x4xf32> to vector<16x16x4xf32>
    %58 = vector.shape_cast %57 : vector<16x16x4xf32> to vector<256x4xf32>
    %59 = vector.extract_strided_slice %4 {offsets = [7, 0, 0], sizes = [1, 4, 4], strides = [1, 1, 1]} : vector<9x4x4xf32> to vector<1x4x4xf32>
    %60 = vector.shape_cast %59 : vector<1x4x4xf32> to vector<4x4xf32>
    %cst_24 = arith.constant dense<0.000000e+00> : vector<256x4xf32>
    %61 = tpu.matmul %58, %60, %cst_24 {dimension_numbers = #tpu.dot_dimension_numbers<[1], [0], [0], [1], [0, 0, 1, 1], [], []>} : vector<256x4xf32>, vector<4x4xf32>, vector<256x4xf32> -> vector<256x4xf32>
    %62 = arith.addf %56, %61 : vector<256x4xf32>
    %63 = vector.extract_strided_slice %11 {offsets = [2, 2, 0], sizes = [16, 16, 4], strides = [1, 1, 1]} : vector<18x18x4xf32> to vector<16x16x4xf32>
    %64 = vector.shape_cast %63 : vector<16x16x4xf32> to vector<256x4xf32>
    %65 = vector.extract_strided_slice %4 {offsets = [8, 0, 0], sizes = [1, 4, 4], strides = [1, 1, 1]} : vector<9x4x4xf32> to vector<1x4x4xf32>
    %66 = vector.shape_cast %65 : vector<1x4x4xf32> to vector<4x4xf32>
    %cst_25 = arith.constant dense<0.000000e+00> : vector<256x4xf32>
    %67 = tpu.matmul %64, %66, %cst_25 {dimension_numbers = #tpu.dot_dimension_numbers<[1], [0], [0], [1], [0, 0, 1, 1], [], []>} : vector<256x4xf32>, vector<4x4xf32>, vector<256x4xf32> -> vector<256x4xf32>
    %68 = arith.addf %62, %67 : vector<256x4xf32>
    %69 = vector.broadcast %8 : vector<1x4xf32> to vector<256x4xf32>
    %70 = arith.addf %68, %69 : vector<256x4xf32>
    %cst_26 = arith.constant 0.000000e+00 : f32
    %71 = vector.broadcast %cst_26 : f32 to vector<256x4xf32>
    %72 = arith.maximumf %70, %71 : vector<256x4xf32>
    %73 = vector.shape_cast %72 : vector<256x4xf32> to vector<16x16x4xf32>
    %c1 = arith.constant 1 : index
    %c1_27 = arith.constant 1 : index
    %c0_28 = arith.constant 0 : index
    %74 = vector.load %arg9[%c1, %c1_27, %c0_28] : memref<18x18x4xf32, #tpu.memory_space<vmem>>, vector<16x16x4xf32>
    tpu.vector_store %arg9[%c1, %c1_27, %c0_28], %73 {strides = array<i32>} : memref<18x18x4xf32, #tpu.memory_space<vmem>>, vector<16x16x4xf32>,
    %c0_29 = arith.constant 0 : index
    %c0_30 = arith.constant 0 : index
    %c0_31 = arith.constant 0 : index
    %75 = vector.load %arg9[%c0_29, %c0_30, %c0_31] : memref<18x18x4xf32, #tpu.memory_space<vmem>>, vector<18x18x4xf32>
    %cst_32 = arith.constant 0.000000e+00 : f32
    %76 = vector.broadcast %cst_32 : f32 to vector<256x4xf32>
    %77 = vector.extract_strided_slice %75 {offsets = [0, 0, 0], sizes = [16, 16, 4], strides = [1, 1, 1]} : vector<18x18x4xf32> to vector<16x16x4xf32>
    %78 = vector.shape_cast %77 : vector<16x16x4xf32> to vector<256x4xf32>
    %79 = vector.extract_strided_slice %6 {offsets = [0, 0, 0], sizes = [1, 4, 4], strides = [1, 1, 1]} : vector<9x4x4xf32> to vector<1x4x4xf32>
    %80 = vector.shape_cast %79 : vector<1x4x4xf32> to vector<4x4xf32>
    %cst_33 = arith.constant dense<0.000000e+00> : vector<256x4xf32>
    %81 = tpu.matmul %78, %80, %cst_33 {dimension_numbers = #tpu.dot_dimension_numbers<[1], [0], [0], [1], [0, 0, 1, 1], [], []>} : vector<256x4xf32>, vector<4x4xf32>, vector<256x4xf32> -> vector<256x4xf32>
    %82 = arith.addf %76, %81 : vector<256x4xf32>
    %83 = vector.extract_strided_slice %75 {offsets = [0, 1, 0], sizes = [16, 16, 4], strides = [1, 1, 1]} : vector<18x18x4xf32> to vector<16x16x4xf32>
    %84 = vector.shape_cast %83 : vector<16x16x4xf32> to vector<256x4xf32>
    %85 = vector.extract_strided_slice %6 {offsets = [1, 0, 0], sizes = [1, 4, 4], strides = [1, 1, 1]} : vector<9x4x4xf32> to vector<1x4x4xf32>
    %86 = vector.shape_cast %85 : vector<1x4x4xf32> to vector<4x4xf32>
    %cst_34 = arith.constant dense<0.000000e+00> : vector<256x4xf32>
    %87 = tpu.matmul %84, %86, %cst_34 {dimension_numbers = #tpu.dot_dimension_numbers<[1], [0], [0], [1], [0, 0, 1, 1], [], []>} : vector<256x4xf32>, vector<4x4xf32>, vector<256x4xf32> -> vector<256x4xf32>
    %88 = arith.addf %82, %87 : vector<256x4xf32>
    %89 = vector.extract_strided_slice %75 {offsets = [0, 2, 0], sizes = [16, 16, 4], strides = [1, 1, 1]} : vector<18x18x4xf32> to vector<16x16x4xf32>
    %90 = vector.shape_cast %89 : vector<16x16x4xf32> to vector<256x4xf32>
    %91 = vector.extract_strided_slice %6 {offsets = [2, 0, 0], sizes = [1, 4, 4], strides = [1, 1, 1]} : vector<9x4x4xf32> to vector<1x4x4xf32>
    %92 = vector.shape_cast %91 : vector<1x4x4xf32> to vector<4x4xf32>
    %cst_35 = arith.constant dense<0.000000e+00> : vector<256x4xf32>
    %93 = tpu.matmul %90, %92, %cst_35 {dimension_numbers = #tpu.dot_dimension_numbers<[1], [0], [0], [1], [0, 0, 1, 1], [], []>} : vector<256x4xf32>, vector<4x4xf32>, vector<256x4xf32> -> vector<256x4xf32>
    %94 = arith.addf %88, %93 : vector<256x4xf32>
    %95 = vector.extract_strided_slice %75 {offsets = [1, 0, 0], sizes = [16, 16, 4], strides = [1, 1, 1]} : vector<18x18x4xf32> to vector<16x16x4xf32>
    %96 = vector.shape_cast %95 : vector<16x16x4xf32> to vector<256x4xf32>
    %97 = vector.extract_strided_slice %6 {offsets = [3, 0, 0], sizes = [1, 4, 4], strides = [1, 1, 1]} : vector<9x4x4xf32> to vector<1x4x4xf32>
    %98 = vector.shape_cast %97 : vector<1x4x4xf32> to vector<4x4xf32>
    %cst_36 = arith.constant dense<0.000000e+00> : vector<256x4xf32>
    %99 = tpu.matmul %96, %98, %cst_36 {dimension_numbers = #tpu.dot_dimension_numbers<[1], [0], [0], [1], [0, 0, 1, 1], [], []>} : vector<256x4xf32>, vector<4x4xf32>, vector<256x4xf32> -> vector<256x4xf32>
    %100 = arith.addf %94, %99 : vector<256x4xf32>
    %101 = vector.extract_strided_slice %75 {offsets = [1, 1, 0], sizes = [16, 16, 4], strides = [1, 1, 1]} : vector<18x18x4xf32> to vector<16x16x4xf32>
    %102 = vector.shape_cast %101 : vector<16x16x4xf32> to vector<256x4xf32>
    %103 = vector.extract_strided_slice %6 {offsets = [4, 0, 0], sizes = [1, 4, 4], strides = [1, 1, 1]} : vector<9x4x4xf32> to vector<1x4x4xf32>
    %104 = vector.shape_cast %103 : vector<1x4x4xf32> to vector<4x4xf32>
    %cst_37 = arith.constant dense<0.000000e+00> : vector<256x4xf32>
    %105 = tpu.matmul %102, %104, %cst_37 {dimension_numbers = #tpu.dot_dimension_numbers<[1], [0], [0], [1], [0, 0, 1, 1], [], []>} : vector<256x4xf32>, vector<4x4xf32>, vector<256x4xf32> -> vector<256x4xf32>
    %106 = arith.addf %100, %105 : vector<256x4xf32>
    %107 = vector.extract_strided_slice %75 {offsets = [1, 2, 0], sizes = [16, 16, 4], strides = [1, 1, 1]} : vector<18x18x4xf32> to vector<16x16x4xf32>
    %108 = vector.shape_cast %107 : vector<16x16x4xf32> to vector<256x4xf32>
    %109 = vector.extract_strided_slice %6 {offsets = [5, 0, 0], sizes = [1, 4, 4], strides = [1, 1, 1]} : vector<9x4x4xf32> to vector<1x4x4xf32>
    %110 = vector.shape_cast %109 : vector<1x4x4xf32> to vector<4x4xf32>
    %cst_38 = arith.constant dense<0.000000e+00> : vector<256x4xf32>
    %111 = tpu.matmul %108, %110, %cst_38 {dimension_numbers = #tpu.dot_dimension_numbers<[1], [0], [0], [1], [0, 0, 1, 1], [], []>} : vector<256x4xf32>, vector<4x4xf32>, vector<256x4xf32> -> vector<256x4xf32>
    %112 = arith.addf %106, %111 : vector<256x4xf32>
    %113 = vector.extract_strided_slice %75 {offsets = [2, 0, 0], sizes = [16, 16, 4], strides = [1, 1, 1]} : vector<18x18x4xf32> to vector<16x16x4xf32>
    %114 = vector.shape_cast %113 : vector<16x16x4xf32> to vector<256x4xf32>
    %115 = vector.extract_strided_slice %6 {offsets = [6, 0, 0], sizes = [1, 4, 4], strides = [1, 1, 1]} : vector<9x4x4xf32> to vector<1x4x4xf32>
    %116 = vector.shape_cast %115 : vector<1x4x4xf32> to vector<4x4xf32>
    %cst_39 = arith.constant dense<0.000000e+00> : vector<256x4xf32>
    %117 = tpu.matmul %114, %116, %cst_39 {dimension_numbers = #tpu.dot_dimension_numbers<[1], [0], [0], [1], [0, 0, 1, 1], [], []>} : vector<256x4xf32>, vector<4x4xf32>, vector<256x4xf32> -> vector<256x4xf32>
    %118 = arith.addf %112, %117 : vector<256x4xf32>
    %119 = vector.extract_strided_slice %75 {offsets = [2, 1, 0], sizes = [16, 16, 4], strides = [1, 1, 1]} : vector<18x18x4xf32> to vector<16x16x4xf32>
    %120 = vector.shape_cast %119 : vector<16x16x4xf32> to vector<256x4xf32>
    %121 = vector.extract_strided_slice %6 {offsets = [7, 0, 0], sizes = [1, 4, 4], strides = [1, 1, 1]} : vector<9x4x4xf32> to vector<1x4x4xf32>
    %122 = vector.shape_cast %121 : vector<1x4x4xf32> to vector<4x4xf32>
    %cst_40 = arith.constant dense<0.000000e+00> : vector<256x4xf32>
    %123 = tpu.matmul %120, %122, %cst_40 {dimension_numbers = #tpu.dot_dimension_numbers<[1], [0], [0], [1], [0, 0, 1, 1], [], []>} : vector<256x4xf32>, vector<4x4xf32>, vector<256x4xf32> -> vector<256x4xf32>
    %124 = arith.addf %118, %123 : vector<256x4xf32>
    %125 = vector.extract_strided_slice %75 {offsets = [2, 2, 0], sizes = [16, 16, 4], strides = [1, 1, 1]} : vector<18x18x4xf32> to vector<16x16x4xf32>
    %126 = vector.shape_cast %125 : vector<16x16x4xf32> to vector<256x4xf32>
    %127 = vector.extract_strided_slice %6 {offsets = [8, 0, 0], sizes = [1, 4, 4], strides = [1, 1, 1]} : vector<9x4x4xf32> to vector<1x4x4xf32>
    %128 = vector.shape_cast %127 : vector<1x4x4xf32> to vector<4x4xf32>
    %cst_41 = arith.constant dense<0.000000e+00> : vector<256x4xf32>
    %129 = tpu.matmul %126, %128, %cst_41 {dimension_numbers = #tpu.dot_dimension_numbers<[1], [0], [0], [1], [0, 0, 1, 1], [], []>} : vector<256x4xf32>, vector<4x4xf32>, vector<256x4xf32> -> vector<256x4xf32>
    %130 = arith.addf %124, %129 : vector<256x4xf32>
    %131 = vector.broadcast %10 : vector<1x4xf32> to vector<256x4xf32>
    %132 = arith.addf %130, %131 : vector<256x4xf32>
    %133 = arith.addf %132, %13 : vector<256x4xf32>
    %cst_42 = arith.constant 0.000000e+00 : f32
    %134 = vector.broadcast %cst_42 : f32 to vector<256x4xf32>
    %135 = arith.maximumf %133, %134 : vector<256x4xf32>
    %136 = vector.shape_cast %135 : vector<256x4xf32> to vector<16x16x4xf32>
    %c1_43 = arith.constant 1 : index
    %c1_44 = arith.constant 1 : index
    %c0_45 = arith.constant 0 : index
    %137 = vector.load %arg8[%c1_43, %c1_44, %c0_45] : memref<18x18x4xf32, #tpu.memory_space<vmem>>, vector<16x16x4xf32>
    tpu.vector_store %arg8[%c1_43, %c1_44, %c0_45], %136 {strides = array<i32>} : memref<18x18x4xf32, #tpu.memory_space<vmem>>, vector<16x16x4xf32>,
    %c1_i32 = arith.constant 1 : i32
    %138 = arith.cmpi eq, %arg1, %c1_i32 : i32
    %139 = arith.extui %138 : i1 to i32
    %c0_i32_46 = arith.constant 0 : i32
    %140 = arith.cmpi ne, %139, %c0_i32_46 : i32
    scf.if %140 {
      %141 = vector.shape_cast %135 : vector<256x4xf32> to vector<16x16x4xf32>
      %c0_47 = arith.constant 0 : index
      %c0_48 = arith.constant 0 : index
      %c0_49 = arith.constant 0 : index
      %c0_50 = arith.constant 0 : index
      %142 = vector.load %arg7[%c0_47, %c0_48, %c0_49, %c0_50] : memref<1x16x16x4xf32, #tpu.memory_space<vmem>>, vector<1x16x16x4xf32>
      %143 = vector.shape_cast %142 : vector<1x16x16x4xf32> to vector<16x16x4xf32>
      %144 = vector.shape_cast %141 : vector<16x16x4xf32> to vector<1x16x16x4xf32>
      tpu.vector_store %arg7[%c0_47, %c0_48, %c0_49, %c0_50], %144 {strides = array<i32>} : memref<1x16x16x4xf32, #tpu.memory_space<vmem>>, vector<1x16x16x4xf32>,
    } else {
    }
    return
  }
  func.func @transform_0(%arg0: i32, %arg1: i32) -> (i32, i32, i32, i32) {
    %c0_i32 = arith.constant 0 : i32
    %c0_i32_0 = arith.constant 0 : i32
    %c0_i32_1 = arith.constant 0 : i32
    %c0_i32_2 = arith.constant 0 : i32
    return %arg0, %c0_i32, %c0_i32_0, %c0_i32_1 : i32, i32, i32, i32
  }
  func.func @transform_1(%arg0: i32, %arg1: i32) -> (i32, i32, i32, i32) {
    %c0_i32 = arith.constant 0 : i32
    %c0_i32_0 = arith.constant 0 : i32
    %c0_i32_1 = arith.constant 0 : i32
    %c0_i32_2 = arith.constant 0 : i32
    return %arg1, %c0_i32, %c0_i32_0, %c0_i32_1 : i32, i32, i32, i32
  }
  func.func @transform_2(%arg0: i32, %arg1: i32) -> (i32, i32, i32) {
    %c0_i32 = arith.constant 0 : i32
    %c0_i32_0 = arith.constant 0 : i32
    %c0_i32_1 = arith.constant 0 : i32
    return %arg1, %c0_i32, %c0_i32_0 : i32, i32, i32
  }
  func.func @transform_3(%arg0: i32, %arg1: i32) -> (i32, i32, i32, i32) {
    %c0_i32 = arith.constant 0 : i32
    %c0_i32_0 = arith.constant 0 : i32
    %c0_i32_1 = arith.constant 0 : i32
    %c0_i32_2 = arith.constant 0 : i32
    return %arg1, %c0_i32, %c0_i32_0, %c0_i32_1 : i32, i32, i32, i32
  }
  func.func @transform_4(%arg0: i32, %arg1: i32) -> (i32, i32, i32) {
    %c0_i32 = arith.constant 0 : i32
    %c0_i32_0 = arith.constant 0 : i32
    %c0_i32_1 = arith.constant 0 : i32
    return %arg1, %c0_i32, %c0_i32_0 : i32, i32, i32
  }
  func.func @transform_5(%arg0: i32, %arg1: i32) -> (i32, i32, i32, i32) {
    %c0_i32 = arith.constant 0 : i32
    %c0_i32_0 = arith.constant 0 : i32
    %c0_i32_1 = arith.constant 0 : i32
    %c0_i32_2 = arith.constant 0 : i32
    return %arg0, %c0_i32, %c0_i32_0, %c0_i32_1 : i32, i32, i32, i32
  }
}

</mosaic_0001>

<llo_original>
// kernel: block_series_forward.1
$region0: #{block_series_forward.1}
  #allocation0 [shape = 'u32[]', space=smem, size = 0x4, offset = 0x4, fixed_abs, tag = 'smem constant byte address 0x4 - core index']
  #allocation1 [shape = 'u32[144,128]{1,0:T(1,128)}', space=vmem, size = 0x12000, scoped, tag = 'internal scratch']
  #allocation2 [shape = 'f32[18,18,4]{2,1,0:T(8,128)}', space=vmem, size = 0x36000, scoped, tag = 'scratch operand']
  #allocation3 [shape = 'f32[18,18,4]{2,1,0:T(8,128)}', space=vmem, size = 0x36000, scoped, tag = 'scratch operand']
  %s0 = inlined_call_operand.vmem [shape: f32[2,16,16,4], index: 0, kind: input, shape index: {}]
  %s1 = inlined_call_operand.vmem [shape: f32[2,9,4,4], index: 1, kind: input, shape index: {}]
  %s2 = inlined_call_operand.vmem [shape: f32[2,1,4], index: 2, kind: input, shape index: {}]
  %s3 = inlined_call_operand.vmem [shape: f32[2,9,4,4], index: 3, kind: input, shape index: {}]
  %s4 = inlined_call_operand.vmem [shape: f32[2,1,4], index: 4, kind: input, shape index: {}]
  %s5 = inlined_call_operand.vmem [shape: f32[2,16,16,4], index: 5, kind: output, shape index: {}]
  %s6 = sld [smem:[#allocation0]]
  $region61: #{block_series_forward.1} parent=0
    _
  %s8 = ssub.s32 1, %s6
  %s9 = scalar_select 0, %s8, %s6
  loop: start=0, step=1, limit=6
  $region2: #{block_series_forward.1} parent=0 // loop_pre_header
    _
  $region3: #{block_series_forward.1} parent=0 // loop_header
    %s11 = sphi 0, %s15
    %p12 = scmp.ge.s32.totalorder %s11, 6
    %s18 = sphi 0, %s30
    %s19 = sphi 0, %s26
    %s20 = sphi 0, %s18
    %s21 = sphi 0, %s19
    %s22 = sphi 0, %s20
    %s23 = sphi 0, %s21
    %s33 = sphi 0, %s35
    %s36 = sphi 0, %s33
    %s37 = sphi 0, %s36
    %s53 = sphi 0, %s37
    %s59 = sphi 0, %s61
    %s62 = sphi 0, %s59
    %s63 = sphi 0, %s62
    %s79 = sphi 0, %s63
    %s85 = sphi 0, %s87
    %s88 = sphi 0, %s85
    %s89 = sphi 0, %s88
    %s105 = sphi 0, %s89
    %s111 = sphi 0, %s113
    %s114 = sphi 0, %s111
    %s115 = sphi 0, %s114
    %s131 = sphi 0, %s115
    %s137 = sphi 0, %s139
    %s140 = sphi 0, %s137
    %s141 = sphi 0, %s140
    %s157 = sphi 0, %s141
    %s163 = sphi 0, %s165
    %s166 = sphi 0, %s163
    %s167 = sphi 0, %s166
    %s183 = sphi 0, %s167
  $region4: #{block_series_forward.1} parent=0 // loop_header_branch
    %14 = sbr.rel (%p12) target = $region8
  $region5: #{block_series_forward.1} parent=0 // loop_body
    %s16 = ssub.s32 %s11, 1
    %s17 = ssub.s32 %s11, 2
    %s24 = sadd.s32 1, %s19
    %p25 = scmp.ge.s32.totalorder %s24, 2
    %s26 = scalar_select %p25, 0, %s24
    %s27 = sadd.s32 1, %s18
    %s28 = scalar_select %p25, %s27, %s18
    %p29 = scmp.ge.s32.totalorder %s28, 2
    %s30 = scalar_select %p29, 0, %s28
    %s31 = ssub.s32 %s18, %s30
    %p32 = scmp.eq.s32.totalorder %s31, 0
    %s34 = sadd.s32 %s33, 1
    %s35 = scalar_select %p32, %s33, %s34
    %p38 = pneg %p32
    %p39 = scmp.eq.s32.totalorder %s11, 3
    %p40 = por %p38, %p39
    %p41 = scmp.ne.s32.totalorder %s33, %s36
    %p42 = scmp.eq.s32.totalorder %s11, 0
    %p43 = por %p41, %p42
    %p44 = scmp.ne.s32.totalorder %s33, %s36
    %p45 = scmp.eq.s32.totalorder %s16, 3
    %p46 = por %p44, %p45
    %p47 = scmp.ne.s32.totalorder %s36, %s37
    %p48 = scmp.eq.s32.totalorder %s16, 0
    %p49 = por %p47, %p48
    %p50 = scmp.ne.s32.totalorder %s36, %s37
    %p51 = scmp.eq.s32.totalorder %s17, 3
    %p52 = por %p50, %p51
    %p54 = scmp.ne.s32.totalorder %s37, %s53
    %p55 = scmp.eq.s32.totalorder %s17, 0
    %p56 = por %p54, %p55
    %s57 = ssub.s32 %s19, %s26
    %p58 = scmp.eq.s32.totalorder %s57, 0
    %s60 = sadd.s32 %s59, 1
    %s61 = scalar_select %p58, %s59, %s60
    %p64 = pneg %p58
    %p65 = scmp.eq.s32.totalorder %s11, 3
    %p66 = por %p64, %p65
    %p67 = scmp.ne.s32.totalorder %s59, %s62
    %p68 = scmp.eq.s32.totalorder %s11, 0
    %p69 = por %p67, %p68
    %p70 = scmp.ne.s32.totalorder %s59, %s62
    %p71 = scmp.eq.s32.totalorder %s16, 3
    %p72 = por %p70, %p71
    %p73 = scmp.ne.s32.totalorder %s62, %s63
    %p74 = scmp.eq.s32.totalorder %s16, 0
    %p75 = por %p73, %p74
    %p76 = scmp.ne.s32.totalorder %s62, %s63
    %p77 = scmp.eq.s32.totalorder %s17, 3
    %p78 = por %p76, %p77
    %p80 = scmp.ne.s32.totalorder %s63, %s79
    %p81 = scmp.eq.s32.totalorder %s17, 0
    %p82 = por %p80, %p81
    %s83 = ssub.s32 %s19, %s26
    %p84 = scmp.eq.s32.totalorder %s83, 0
    %s86 = sadd.s32 %s85, 1
    %s87 = scalar_select %p84, %s85, %s86
    %p90 = pneg %p84
    %p91 = scmp.eq.s32.totalorder %s11, 3
    %p92 = por %p90, %p91
    %p93 = scmp.ne.s32.totalorder %s85, %s88
    %p94 = scmp.eq.s32.totalorder %s11, 0
    %p95 = por %p93, %p94
    %p96 = scmp.ne.s32.totalorder %s85, %s88
    %p97 = scmp.eq.s32.totalorder %s16, 3
    %p98 = por %p96, %p97
    %p99 = scmp.ne.s32.totalorder %s88, %s89
    %p100 = scmp.eq.s32.totalorder %s16, 0
    %p101 = por %p99, %p100
    %p102 = scmp.ne.s32.totalorder %s88, %s89
    %p103 = scmp.eq.s32.totalorder %s17, 3
    %p104 = por %p102, %p103
    %p106 = scmp.ne.s32.totalorder %s89, %s105
    %p107 = scmp.eq.s32.totalorder %s17, 0
    %p108 = por %p106, %p107
    %s109 = ssub.s32 %s19, %s26
    %p110 = scmp.eq.s32.totalorder %s109, 0
    %s112 = sadd.s32 %s111, 1
    %s113 = scalar_select %p110, %s111, %s112
    %p116 = pneg %p110
    %p117 = scmp.eq.s32.totalorder %s11, 3
    %p118 = por %p116, %p117
    %p119 = scmp.ne.s32.totalorder %s111, %s114
    %p120 = scmp.eq.s32.totalorder %s11, 0
    %p121 = por %p119, %p120
    %p122 = scmp.ne.s32.totalorder %s111, %s114
    %p123 = scmp.eq.s32.totalorder %s16, 3
    %p124 = por %p122, %p123
    %p125 = scmp.ne.s32.totalorder %s114, %s115
    %p126 = scmp.eq.s32.totalorder %s16, 0
    %p127 = por %p125, %p126
    %p128 = scmp.ne.s32.totalorder %s114, %s115
    %p129 = scmp.eq.s32.totalorder %s17, 3
    %p130 = por %p128, %p129
    %p132 = scmp.ne.s32.totalorder %s115, %s131
    %p133 = scmp.eq.s32.totalorder %s17, 0
    %p134 = por %p132, %p133
    %s135 = ssub.s32 %s19, %s26
    %p136 = scmp.eq.s32.totalorder %s135, 0
    %s138 = sadd.s32 %s137, 1
    %s139 = scalar_select %p136, %s137, %s138
    %p142 = pneg %p136
    %p143 = scmp.eq.s32.totalorder %s11, 3
    %p144 = por %p142, %p143
    %p145 = scmp.ne.s32.totalorder %s137, %s140
    %p146 = scmp.eq.s32.totalorder %s11, 0
    %p147 = por %p145, %p146
    %p148 = scmp.ne.s32.totalorder %s137, %s140
    %p149 = scmp.eq.s32.totalorder %s16, 3
    %p150 = por %p148, %p149
    %p151 = scmp.ne.s32.totalorder %s140, %s141
    %p152 = scmp.eq.s32.totalorder %s16, 0
    %p153 = por %p151, %p152
    %p154 = scmp.ne.s32.totalorder %s140, %s141
    %p155 = scmp.eq.s32.totalorder %s17, 3
    %p156 = por %p154, %p155
    %p158 = scmp.ne.s32.totalorder %s141, %s157
    %p159 = scmp.eq.s32.totalorder %s17, 0
    %p160 = por %p158, %p159
    %s161 = ssub.s32 %s18, %s30
    %p162 = scmp.eq.s32.totalorder %s161, 0
    %s164 = sadd.s32 %s163, 1
    %s165 = scalar_select %p162, %s163, %s164
    %p168 = pneg %p162
    %p169 = scmp.eq.s32.totalorder %s11, 3
    %p170 = por %p168, %p169
    %p171 = scmp.ne.s32.totalorder %s163, %s166
    %p172 = scmp.eq.s32.totalorder %s11, 0
    %p173 = por %p171, %p172
    %p174 = scmp.ne.s32.totalorder %s163, %s166
    %p175 = scmp.eq.s32.totalorder %s16, 3
    %p176 = por %p174, %p175
    %p177 = scmp.ne.s32.totalorder %s166, %s167
    %p178 = scmp.eq.s32.totalorder %s16, 0
    %p179 = por %p177, %p178
    %p180 = scmp.ne.s32.totalorder %s166, %s167
    %p181 = scmp.eq.s32.totalorder %s17, 3
    %p182 = por %p180, %p181
    %p184 = scmp.ne.s32.totalorder %s167, %s183
    %p185 = scmp.eq.s32.totalorder %s17, 0
    %p186 = por %p184, %p185
    %p187 = scmp.le.s32.totalorder 1, %s11
    %p188 = scmp.lt.s32.totalorder %s11, 5
    %p189 = pnand %p187, %p188
    %p190 = pneg %p189
    // Predicated region
    $region9: #{block_series_forward.1} parent=5 // pred_check
      _
    $region10: #{block_series_forward.1} parent=5 // pred_check_branch
      %192 = sbr.rel (%p189) target = $region12
    $region11: #{block_series_forward.1} parent=5 // pred_region
      %s193 = ssub.s32 %s11, 1
    $region12: #{block_series_forward.1} parent=5 // pred_fallthru
      _
    %p194 = scmp.lt.s32.totalorder %s11, 4
    // Predicated region
    $region13: #{block_series_forward.1} parent=5 // pred_check
      %p195 = pneg %p194
    $region14: #{block_series_forward.1} parent=5 // pred_check_branch
      %197 = sbr.rel (%p195) target = $region16
    $region15: #{block_series_forward.1} parent=5 // pred_region
      // Predicated region
      $region17: #{block_series_forward.1} parent=15 // pred_check
        %p198 = pneg %p43
      $region18: #{block_series_forward.1} parent=15 // pred_check_branch
        %200 = sbr.rel (%p198) target = $region20
      $region19: #{block_series_forward.1} parent=15 // pred_region
        %p201 = scmp.lt.s32.totalorder %s18, 1
        %s202 = scalar_select %p201, %s18, 1
        %s203 = smul.addr %s202, 32
        %s204 = smul.addr %s203, 8
        %s205 = scalar_lea.vmem %s0, %s204
      $region20: #{block_series_forward.1} parent=15 // pred_fallthru
        _
      // Predicated region
      $region21: #{block_series_forward.1} parent=15 // pred_check
        %p206 = pneg %p69
      $region22: #{block_series_forward.1} parent=15 // pred_check_branch
        %208 = sbr.rel (%p206) target = $region24
      $region23: #{block_series_forward.1} parent=15 // pred_region
        %p209 = scmp.lt.s32.totalorder %s19, 1
        %s210 = scalar_select %p209, %s19, 1
        %s211 = smul.addr %s210, 9
        %s212 = smul.addr %s211, 4
        %s213 = scalar_lea.vmem %s1, %s212
      $region24: #{block_series_forward.1} parent=15 // pred_fallthru
        _
      // Predicated region
      $region25: #{block_series_forward.1} parent=15 // pred_check
        %p214 = pneg %p95
      $region26: #{block_series_forward.1} parent=15 // pred_check_branch
        %216 = sbr.rel (%p214) target = $region28
      $region27: #{block_series_forward.1} parent=15 // pred_region
        %p217 = scmp.lt.s32.totalorder %s19, 1
        %s218 = scalar_select %p217, %s19, 1
        %s219 = scalar_lea.vmem %s2, %s218
      $region28: #{block_series_forward.1} parent=15 // pred_fallthru
        _
      // Predicated region
      $region29: #{block_series_forward.1} parent=15 // pred_check
        %p220 = pneg %p121
      $region30: #{block_series_forward.1} parent=15 // pred_check_branch
        %222 = sbr.rel (%p220) target = $region32
      $region31: #{block_series_forward.1} parent=15 // pred_region
        %p223 = scmp.lt.s32.totalorder %s19, 1
        %s224 = scalar_select %p223, %s19, 1
        %s225 = smul.addr %s224, 9
        %s226 = smul.addr %s225, 4
        %s227 = scalar_lea.vmem %s3, %s226
      $region32: #{block_series_forward.1} parent=15 // pred_fallthru
        _
      // Predicated region
      $region33: #{block_series_forward.1} parent=15 // pred_check
        %p228 = pneg %p147
      $region34: #{block_series_forward.1} parent=15 // pred_check_branch
        %230 = sbr.rel (%p228) target = $region36
      $region35: #{block_series_forward.1} parent=15 // pred_region
        %p231 = scmp.lt.s32.totalorder %s19, 1
        %s232 = scalar_select %p231, %s19, 1
        %s233 = scalar_lea.vmem %s4, %s232
      $region36: #{block_series_forward.1} parent=15 // pred_fallthru
        _
    $region16: #{block_series_forward.1} parent=5 // pred_fallthru
      _
    %p234 = scmp.le.s32.totalorder 1, %s11
    %p235 = scmp.lt.s32.totalorder %s11, 5
    %p236 = pnand %p234, %p235
    %p237 = pneg %p236
    // Predicated region
    $region37: #{block_series_forward.1} parent=5 // pred_check
      _
    $region38: #{block_series_forward.1} parent=5 // pred_check_branch
      %239 = sbr.rel (%p236) target = $region40
    $region39: #{block_series_forward.1} parent=5 // pred_region
      %s240 = ssub.s32 %s11, 1
      %p241 = scmp.lt.s32.totalorder %s20, 1
      %s242 = scalar_select %p241, %s20, 1
      %s243 = smul.addr %s242, 32
      %s244 = smul.addr %s243, 8
      %s245 = scalar_lea.vmem %s0, %s244
      %p246 = pneg %p49
      %p247 = pneg %p46
      %p248 = scmp.lt.s32.totalorder %s21, 1
      %s249 = scalar_select %p248, %s21, 1
      %s250 = smul.addr %s249, 9
      %s251 = smul.addr %s250, 4
      %s252 = scalar_lea.vmem %s1, %s251
      %p253 = pneg %p75
      %p254 = pneg %p72
      %p255 = scmp.lt.s32.totalorder %s21, 1
      %s256 = scalar_select %p255, %s21, 1
      %s257 = scalar_lea.vmem %s2, %s256
      %p258 = pneg %p101
      %p259 = pneg %p98
      %p260 = scmp.lt.s32.totalorder %s21, 1
      %s261 = scalar_select %p260, %s21, 1
      %s262 = smul.addr %s261, 9
      %s263 = smul.addr %s262, 4
      %s264 = scalar_lea.vmem %s3, %s263
      %p265 = pneg %p127
      %p266 = pneg %p124
      %p267 = scmp.lt.s32.totalorder %s21, 1
      %s268 = scalar_select %p267, %s21, 1
      %s269 = scalar_lea.vmem %s4, %s268
      %p270 = pneg %p153
      %p271 = pneg %p150
      %p272 = pneg %p179
      %p273 = pneg %p176
      %p274 = scmp.lt.s32.totalorder %s20, 1
      %s275 = scalar_select %p274, %s20, 1
      %s276 = smul.addr %s275, 32
      %s277 = smul.addr %s276, 8
      %s278 = scalar_lea.vmem %s5, %s277
      %p279 = scmp.lt.s32.totalorder %s20, 1
      %s280 = scalar_select %p279, %s20, 1
      %s281 = smul.addr %s280, 32
      %s282 = smul.addr %s281, 8
      %s283 = scalar_lea.vmem %s0, %s282
      %p284 = scmp.lt.s32.totalorder %s21, 1
      %s285 = scalar_select %p284, %s21, 1
      %s286 = smul.addr %s285, 9
      %s287 = smul.addr %s286, 4
      %s288 = scalar_lea.vmem %s1, %s287
      %p289 = scmp.lt.s32.totalorder %s21, 1
      %s290 = scalar_select %p289, %s21, 1
      %s291 = scalar_lea.vmem %s2, %s290
      %p292 = scmp.lt.s32.totalorder %s21, 1
      %s293 = scalar_select %p292, %s21, 1
      %s294 = smul.addr %s293, 9
      %s295 = smul.addr %s294, 4
      %s296 = scalar_lea.vmem %s3, %s295
      %p297 = scmp.lt.s32.totalorder %s21, 1
      %s298 = scalar_select %p297, %s21, 1
      %s299 = scalar_lea.vmem %s4, %s298
      %p300 = scmp.lt.s32.totalorder %s20, 1
      %s301 = scalar_select %p300, %s20, 1
      %s302 = smul.addr %s301, 32
      %s303 = smul.addr %s302, 8
      %s304 = scalar_lea.vmem %s5, %s303
      %p305 = scmp.eq.s32.totalorder %s21, 0
      // Predicated region
      $region41: #{block_series_forward.1} parent=39 // pred_check
        %p306 = pneg %p305
      $region42: #{block_series_forward.1} parent=39 // pred_check_branch
        %308 = sbr.rel (%p306) target = $region44
      $region43: #{block_series_forward.1} parent=39 // pred_region
        %vm309 = vcmask 31744
        %310 = vst.msk [vmem:[#allocation2] sm:$0xff] %vm309, 0.0
        %311 = vst.msk [vmem:[#allocation2 + $0x8] sm:$0xff] %vm309, 0.0
        %vm312 = vcmask 25600
        %313 = vst.msk [vmem:[#allocation2 + $0x10] sm:$0x3] %vm312, 0.0
        %314 = vst.msk [vmem:[#allocation2 + $0x18] sm:$0xff] %vm309, 0.0
        %315 = vst.msk [vmem:[#allocation2 + $0x20] sm:$0xff] %vm309, 0.0
        %316 = vst.msk [vmem:[#allocation2 + $0x28] sm:$0x3] %vm312, 0.0
        %317 = vst.msk [vmem:[#allocation2 + $0x30] sm:$0xff] %vm309, 0.0
        %318 = vst.msk [vmem:[#allocation2 + $0x38] sm:$0xff] %vm309, 0.0
        %319 = vst.msk [vmem:[#allocation2 + $0x40] sm:$0x3] %vm312, 0.0
        %320 = vst.msk [vmem:[#allocation2 + $0x48] sm:$0xff] %vm309, 0.0
        %321 = vst.msk [vmem:[#allocation2 + $0x50] sm:$0xff] %vm309, 0.0
        %322 = vst.msk [vmem:[#allocation2 + $0x58] sm:$0x3] %vm312, 0.0
        %323 = vst.msk [vmem:[#allocation2 + $0x60] sm:$0xff] %vm309, 0.0
        %324 = vst.msk [vmem:[#allocation2 + $0x68] sm:$0xff] %vm309, 0.0
        %325 = vst.msk [vmem:[#allocation2 + $0x70] sm:$0x3] %vm312, 0.0
        %326 = vst.msk [vmem:[#allocation2 + $0x78] sm:$0xff] %vm309, 0.0
        %327 = vst.msk [vmem:[#allocation2 + $0x80] sm:$0xff] %vm309, 0.0
        %328 = vst.msk [vmem:[#allocation2 + $0x88] sm:$0x3] %vm312, 0.0
        %329 = vst.msk [vmem:[#allocation2 + $0x90] sm:$0xff] %vm309, 0.0
        %330 = vst.msk [vmem:[#allocation2 + $0x98] sm:$0xff] %vm309, 0.0
        %331 = vst.msk [vmem:[#allocation2 + $0xa0] sm:$0x3] %vm312, 0.0
        %332 = vst.msk [vmem:[#allocation2 + $0xa8] sm:$0xff] %vm309, 0.0
        %333 = vst.msk [vmem:[#allocation2 + $0xb0] sm:$0xff] %vm309, 0.0
        %334 = vst.msk [vmem:[#allocation2 + $0xb8] sm:$0x3] %vm312, 0.0
        %335 = vst.msk [vmem:[#allocation2 + $0xc0] sm:$0xff] %vm309, 0.0
        %336 = vst.msk [vmem:[#allocation2 + $0xc8] sm:$0xff] %vm309, 0.0
        %337 = vst.msk [vmem:[#allocation2 + $0xd0] sm:$0x3] %vm312, 0.0
        %338 = vst.msk [vmem:[#allocation2 + $0xd8] sm:$0xff] %vm309, 0.0
        %339 = vst.msk [vmem:[#allocation2 + $0xe0] sm:$0xff] %vm309, 0.0
        %340 = vst.msk [vmem:[#allocation2 + $0xe8] sm:$0x3] %vm312, 0.0
        %341 = vst.msk [vmem:[#allocation2 + $0xf0] sm:$0xff] %vm309, 0.0
        %342 = vst.msk [vmem:[#allocation2 + $0xf8] sm:$0xff] %vm309, 0.0
        %343 = vst.msk [vmem:[#allocation2 + $0x100] sm:$0x3] %vm312, 0.0
        %344 = vst.msk [vmem:[#allocation2 + $0x108] sm:$0xff] %vm309, 0.0
        %345 = vst.msk [vmem:[#allocation2 + $0x110] sm:$0xff] %vm309, 0.0
        %346 = vst.msk [vmem:[#allocation2 + $0x118] sm:$0x3] %vm312, 0.0
        %347 = vst.msk [vmem:[#allocation2 + $0x120] sm:$0xff] %vm309, 0.0
        %348 = vst.msk [vmem:[#allocation2 + $0x128] sm:$0xff] %vm309, 0.0
        %349 = vst.msk [vmem:[#allocation2 + $0x130] sm:$0x3] %vm312, 0.0
        %350 = vst.msk [vmem:[#allocation2 + $0x138] sm:$0xff] %vm309, 0.0
        %351 = vst.msk [vmem:[#allocation2 + $0x140] sm:$0xff] %vm309, 0.0
        %352 = vst.msk [vmem:[#allocation2 + $0x148] sm:$0x3] %vm312, 0.0
        %353 = vst.msk [vmem:[#allocation2 + $0x150] sm:$0xff] %vm309, 0.0
        %354 = vst.msk [vmem:[#allocation2 + $0x158] sm:$0xff] %vm309, 0.0
        %355 = vst.msk [vmem:[#allocation2 + $0x160] sm:$0x3] %vm312, 0.0
        %356 = vst.msk [vmem:[#allocation2 + $0x168] sm:$0xff] %vm309, 0.0
        %357 = vst.msk [vmem:[#allocation2 + $0x170] sm:$0xff] %vm309, 0.0
        %358 = vst.msk [vmem:[#allocation2 + $0x178] sm:$0x3] %vm312, 0.0
        %359 = vst.msk [vmem:[#allocation2 + $0x180] sm:$0xff] %vm309, 0.0
        %360 = vst.msk [vmem:[#allocation2 + $0x188] sm:$0xff] %vm309, 0.0
        %361 = vst.msk [vmem:[#allocation2 + $0x190] sm:$0x3] %vm312, 0.0
        %362 = vst.msk [vmem:[#allocation2 + $0x198] sm:$0xff] %vm309, 0.0
        %363 = vst.msk [vmem:[#allocation2 + $0x1a0] sm:$0xff] %vm309, 0.0
        %364 = vst.msk [vmem:[#allocation2 + $0x1a8] sm:$0x3] %vm312, 0.0
        %365 = vst.msk [vmem:[#allocation3] sm:$0xff] %vm309, 0.0
        %366 = vst.msk [vmem:[#allocation3 + $0x8] sm:$0xff] %vm309, 0.0
        %367 = vst.msk [vmem:[#allocation3 + $0x10] sm:$0x3] %vm312, 0.0
        %368 = vst.msk [vmem:[#allocation3 + $0x18] sm:$0xff] %vm309, 0.0
        %369 = vst.msk [vmem:[#allocation3 + $0x20] sm:$0xff] %vm309, 0.0
        %370 = vst.msk [vmem:[#allocation3 + $0x28] sm:$0x3] %vm312, 0.0
        %371 = vst.msk [vmem:[#allocation3 + $0x30] sm:$0xff] %vm309, 0.0
        %372 = vst.msk [vmem:[#allocation3 + $0x38] sm:$0xff] %vm309, 0.0
        %373 = vst.msk [vmem:[#allocation3 + $0x40] sm:$0x3] %vm312, 0.0
        %374 = vst.msk [vmem:[#allocation3 + $0x48] sm:$0xff] %vm309, 0.0
        %375 = vst.msk [vmem:[#allocation3 + $0x50] sm:$0xff] %vm309, 0.0
        %376 = vst.msk [vmem:[#allocation3 + $0x58] sm:$0x3] %vm312, 0.0
        %377 = vst.msk [vmem:[#allocation3 + $0x60] sm:$0xff] %vm309, 0.0
        %378 = vst.msk [vmem:[#allocation3 + $0x68] sm:$0xff] %vm309, 0.0
        %379 = vst.msk [vmem:[#allocation3 + $0x70] sm:$0x3] %vm312, 0.0
        %380 = vst.msk [vmem:[#allocation3 + $0x78] sm:$0xff] %vm309, 0.0
        %381 = vst.msk [vmem:[#allocation3 + $0x80] sm:$0xff] %vm309, 0.0
        %382 = vst.msk [vmem:[#allocation3 + $0x88] sm:$0x3] %vm312, 0.0
        %383 = vst.msk [vmem:[#allocation3 + $0x90] sm:$0xff] %vm309, 0.0
        %384 = vst.msk [vmem:[#allocation3 + $0x98] sm:$0xff] %vm309, 0.0
        %385 = vst.msk [vmem:[#allocation3 + $0xa0] sm:$0x3] %vm312, 0.0
        %386 = vst.msk [vmem:[#allocation3 + $0xa8] sm:$0xff] %vm309, 0.0
        %387 = vst.msk [vmem:[#allocation3 + $0xb0] sm:$0xff] %vm309, 0.0
        %388 = vst.msk [vmem:[#allocation3 + $0xb8] sm:$0x3] %vm312, 0.0
        %389 = vst.msk [vmem:[#allocation3 + $0xc0] sm:$0xff] %vm309, 0.0
        %390 = vst.msk [vmem:[#allocation3 + $0xc8] sm:$0xff] %vm309, 0.0
        %391 = vst.msk [vmem:[#allocation3 + $0xd0] sm:$0x3] %vm312, 0.0
        %392 = vst.msk [vmem:[#allocation3 + $0xd8] sm:$0xff] %vm309, 0.0
        %393 = vst.msk [vmem:[#allocation3 + $0xe0] sm:$0xff] %vm309, 0.0
        %394 = vst.msk [vmem:[#allocation3 + $0xe8] sm:$0x3] %vm312, 0.0
        %395 = vst.msk [vmem:[#allocation3 + $0xf0] sm:$0xff] %vm309, 0.0
        %396 = vst.msk [vmem:[#allocation3 + $0xf8] sm:$0xff] %vm309, 0.0
        %397 = vst.msk [vmem:[#allocation3 + $0x100] sm:$0x3] %vm312, 0.0
        %398 = vst.msk [vmem:[#allocation3 + $0x108] sm:$0xff] %vm309, 0.0
        %399 = vst.msk [vmem:[#allocation3 + $0x110] sm:$0xff] %vm309, 0.0
        %400 = vst.msk [vmem:[#allocation3 + $0x118] sm:$0x3] %vm312, 0.0
        %401 = vst.msk [vmem:[#allocation3 + $0x120] sm:$0xff] %vm309, 0.0
        %402 = vst.msk [vmem:[#allocation3 + $0x128] sm:$0xff] %vm309, 0.0
        %403 = vst.msk [vmem:[#allocation3 + $0x130] sm:$0x3] %vm312, 0.0
        %404 = vst.msk [vmem:[#allocation3 + $0x138] sm:$0xff] %vm309, 0.0
        %405 = vst.msk [vmem:[#allocation3 + $0x140] sm:$0xff] %vm309, 0.0
        %406 = vst.msk [vmem:[#allocation3 + $0x148] sm:$0x3] %vm312, 0.0
        %407 = vst.msk [vmem:[#allocation3 + $0x150] sm:$0xff] %vm309, 0.0
        %408 = vst.msk [vmem:[#allocation3 + $0x158] sm:$0xff] %vm309, 0.0
        %409 = vst.msk [vmem:[#allocation3 + $0x160] sm:$0x3] %vm312, 0.0
        %410 = vst.msk [vmem:[#allocation3 + $0x168] sm:$0xff] %vm309, 0.0
        %411 = vst.msk [vmem:[#allocation3 + $0x170] sm:$0xff] %vm309, 0.0
        %412 = vst.msk [vmem:[#allocation3 + $0x178] sm:$0x3] %vm312, 0.0
        %413 = vst.msk [vmem:[#allocation3 + $0x180] sm:$0xff] %vm309, 0.0
        %414 = vst.msk [vmem:[#allocation3 + $0x188] sm:$0xff] %vm309, 0.0
        %415 = vst.msk [vmem:[#allocation3 + $0x190] sm:$0x3] %vm312, 0.0
        %416 = vst.msk [vmem:[#allocation3 + $0x198] sm:$0xff] %vm309, 0.0
        %417 = vst.msk [vmem:[#allocation3 + $0x1a0] sm:$0xff] %vm309, 0.0
        %418 = vst.msk [vmem:[#allocation3 + $0x1a8] sm:$0x3] %vm312, 0.0
        %v419 = vld [vmem:[%s283] sm:$0xff]
        %v420 = vld [vmem:[%s283 + $0x8] sm:$0xff]
        %v421 = vld [vmem:[%s283 + $0x10] sm:$0xff]
        %v422 = vld [vmem:[%s283 + $0x18] sm:$0xff]
        %v423 = vld [vmem:[%s283 + $0x20] sm:$0xff]
        %v424 = vld [vmem:[%s283 + $0x28] sm:$0xff]
        %v425 = vld [vmem:[%s283 + $0x30] sm:$0xff]
        %v426 = vld [vmem:[%s283 + $0x38] sm:$0xff]
        %v427 = vld [vmem:[%s283 + $0x40] sm:$0xff]
        %v428 = vld [vmem:[%s283 + $0x48] sm:$0xff]
        %v429 = vld [vmem:[%s283 + $0x50] sm:$0xff]
        %v430 = vld [vmem:[%s283 + $0x58] sm:$0xff]
        %v431 = vld [vmem:[%s283 + $0x60] sm:$0xff]
        %v432 = vld [vmem:[%s283 + $0x68] sm:$0xff]
        %v433 = vld [vmem:[%s283 + $0x70] sm:$0xff]
        %v434 = vld [vmem:[%s283 + $0x78] sm:$0xff]
        %v435 = vld [vmem:[%s283 + $0x80] sm:$0xff]
        %v436 = vld [vmem:[%s283 + $0x88] sm:$0xff]
        %v437 = vld [vmem:[%s283 + $0x90] sm:$0xff]
        %v438 = vld [vmem:[%s283 + $0x98] sm:$0xff]
        %v439 = vld [vmem:[%s283 + $0xa0] sm:$0xff]
        %v440 = vld [vmem:[%s283 + $0xa8] sm:$0xff]
        %v441 = vld [vmem:[%s283 + $0xb0] sm:$0xff]
        %v442 = vld [vmem:[%s283 + $0xb8] sm:$0xff]
        %v443 = vld [vmem:[%s283 + $0xc0] sm:$0xff]
        %v444 = vld [vmem:[%s283 + $0xc8] sm:$0xff]
        %v445 = vld [vmem:[%s283 + $0xd0] sm:$0xff]
        %v446 = vld [vmem:[%s283 + $0xd8] sm:$0xff]
        %v447 = vld [vmem:[%s283 + $0xe0] sm:$0xff]
        %v448 = vld [vmem:[%s283 + $0xe8] sm:$0xff]
        %v449 = vld [vmem:[%s283 + $0xf0] sm:$0xff]
        %v450 = vld [vmem:[%s283 + $0xf8] sm:$0xff]
        %s451 = scalar_lea.vmem [#allocation2], 24
        %452 = vst.msk [vmem:[%s451 + $0x1] sm:$0xff] %vm309, %v419
        %453 = vst.msk [vmem:[%s451 + $0x9] sm:$0xff] %vm309, %v420
        %454 = vst.msk [vmem:[%s451 + $0x19] sm:$0xff] %vm309, %v421
        %455 = vst.msk [vmem:[%s451 + $0x21] sm:$0xff] %vm309, %v422
        %456 = vst.msk [vmem:[%s451 + $0x31] sm:$0xff] %vm309, %v423
        %457 = vst.msk [vmem:[%s451 + $0x39] sm:$0xff] %vm309, %v424
        %458 = vst.msk [vmem:[%s451 + $0x49] sm:$0xff] %vm309, %v425
        %459 = vst.msk [vmem:[%s451 + $0x51] sm:$0xff] %vm309, %v426
        %460 = vst.msk [vmem:[%s451 + $0x61] sm:$0xff] %vm309, %v427
        %461 = vst.msk [vmem:[%s451 + $0x69] sm:$0xff] %vm309, %v428
        %462 = vst.msk [vmem:[%s451 + $0x79] sm:$0xff] %vm309, %v429
        %463 = vst.msk [vmem:[%s451 + $0x81] sm:$0xff] %vm309, %v430
        %464 = vst.msk [vmem:[%s451 + $0x91] sm:$0xff] %vm309, %v431
        %465 = vst.msk [vmem:[%s451 + $0x99] sm:$0xff] %vm309, %v432
        %466 = vst.msk [vmem:[%s451 + $0xa9] sm:$0xff] %vm309, %v433
        %467 = vst.msk [vmem:[%s451 + $0xb1] sm:$0xff] %vm309, %v434
        %468 = vst.msk [vmem:[%s451 + $0xc1] sm:$0xff] %vm309, %v435
        %469 = vst.msk [vmem:[%s451 + $0xc9] sm:$0xff] %vm309, %v436
        %470 = vst.msk [vmem:[%s451 + $0xd9] sm:$0xff] %vm309, %v437
        %471 = vst.msk [vmem:[%s451 + $0xe1] sm:$0xff] %vm309, %v438
        %472 = vst.msk [vmem:[%s451 + $0xf1] sm:$0xff] %vm309, %v439
        %473 = vst.msk [vmem:[%s451 + $0xf9] sm:$0xff] %vm309, %v440
        %474 = vst.msk [vmem:[%s451 + $0x109] sm:$0xff] %vm309, %v441
        %475 = vst.msk [vmem:[%s451 + $0x111] sm:$0xff] %vm309, %v442
        %476 = vst.msk [vmem:[%s451 + $0x121] sm:$0xff] %vm309, %v443
        %477 = vst.msk [vmem:[%s451 + $0x129] sm:$0xff] %vm309, %v444
        %478 = vst.msk [vmem:[%s451 + $0x139] sm:$0xff] %vm309, %v445
        %479 = vst.msk [vmem:[%s451 + $0x141] sm:$0xff] %vm309, %v446
        %480 = vst.msk [vmem:[%s451 + $0x151] sm:$0xff] %vm309, %v447
        %481 = vst.msk [vmem:[%s451 + $0x159] sm:$0xff] %vm309, %v448
        %482 = vst.msk [vmem:[%s451 + $0x169] sm:$0xff] %vm309, %v449
        %483 = vst.msk [vmem:[%s451 + $0x171] sm:$0xff] %vm309, %v450
      $region44: #{block_series_forward.1} parent=39 // pred_fallthru
        _
      %v484 = vld [vmem:[%s288] sm:$0xf]
      %v485 = vld [vmem:[%s288 + $0x4] sm:$0xf]
      %v486 = vld [vmem:[%s288 + $0x8] sm:$0xf]
      %v487 = vld [vmem:[%s288 + $0xc] sm:$0xf]
      %v488 = vld [vmem:[%s288 + $0x10] sm:$0xf]
      %v489 = vld [vmem:[%s288 + $0x14] sm:$0xf]
      %v490 = vld [vmem:[%s288 + $0x18] sm:$0xf]
      %v491 = vld [vmem:[%s288 + $0x1c] sm:$0xf]
      %v492 = vld [vmem:[%s288 + $0x20] sm:$0xf]
      %v493 = vld [vmem:[%s296] sm:$0xf]
      %v494 = vld [vmem:[%s296 + $0x4] sm:$0xf]
      %v495 = vld [vmem:[%s296 + $0x8] sm:$0xf]
      %v496 = vld [vmem:[%s296 + $0xc] sm:$0xf]
      %v497 = vld [vmem:[%s296 + $0x10] sm:$0xf]
      %v498 = vld [vmem:[%s296 + $0x14] sm:$0xf]
      %v499 = vld [vmem:[%s296 + $0x18] sm:$0xf]
      %v500 = vld [vmem:[%s296 + $0x1c] sm:$0xf]
      %v501 = vld [vmem:[%s296 + $0x20] sm:$0xf]
      %v502 = vld [vmem:[%s291] sm:$0x1]
      %v503 = vld [vmem:[%s299] sm:$0x1]
      %v504 = vld [vmem:[#allocation2] sm:$0xff]
      %v505 = vld [vmem:[#allocation2 + $0x8] sm:$0xff]
      %v506 = vld [vmem:[#allocation2 + $0x10] sm:$0x3]
      %v507 = vld [vmem:[#allocation2 + $0x18] sm:$0xff]
      %v508 = vld [vmem:[#allocation2 + $0x20] sm:$0xff]
      %v509 = vld [vmem:[#allocation2 + $0x28] sm:$0x3]
      %v510 = vld [vmem:[#allocation2 + $0x30] sm:$0xff]
      %v511 = vld [vmem:[#allocation2 + $0x38] sm:$0xff]
      %v512 = vld [vmem:[#allocation2 + $0x40] sm:$0x3]
      %v513 = vld [vmem:[#allocation2 + $0x48] sm:$0xff]
      %v514 = vld [vmem:[#allocation2 + $0x50] sm:$0xff]
      %v515 = vld [vmem:[#allocation2 + $0x58] sm:$0x3]
      %v516 = vld [vmem:[#allocation2 + $0x60] sm:$0xff]
      %v517 = vld [vmem:[#allocation2 + $0x68] sm:$0xff]
      %v518 = vld [vmem:[#allocation2 + $0x70] sm:$0x3]
      %v519 = vld [vmem:[#allocation2 + $0x78] sm:$0xff]
      %v520 = vld [vmem:[#allocation2 + $0x80] sm:$0xff]
      %v521 = vld [vmem:[#allocation2 + $0x88] sm:$0x3]
      %v522 = vld [vmem:[#allocation2 + $0x90] sm:$0xff]
      %v523 = vld [vmem:[#allocation2 + $0x98] sm:$0xff]
      %v524 = vld [vmem:[#allocation2 + $0xa0] sm:$0x3]
      %v525 = vld [vmem:[#allocation2 + $0xa8] sm:$0xff]
      %v526 = vld [vmem:[#allocation2 + $0xb0] sm:$0xff]
      %v527 = vld [vmem:[#allocation2 + $0xb8] sm:$0x3]
      %v528 = vld [vmem:[#allocation2 + $0xc0] sm:$0xff]
      %v529 = vld [vmem:[#allocation2 + $0xc8] sm:$0xff]
      %v530 = vld [vmem:[#allocation2 + $0xd0] sm:$0x3]
      %v531 = vld [vmem:[#allocation2 + $0xd8] sm:$0xff]
      %v532 = vld [vmem:[#allocation2 + $0xe0] sm:$0xff]
      %v533 = vld [vmem:[#allocation2 + $0xe8] sm:$0x3]
      %v534 = vld [vmem:[#allocation2 + $0xf0] sm:$0xff]
      %v535 = vld [vmem:[#allocation2 + $0xf8] sm:$0xff]
      %v536 = vld [vmem:[#allocation2 + $0x100] sm:$0x3]
      %v537 = vld [vmem:[#allocation2 + $0x108] sm:$0xff]
      %v538 = vld [vmem:[#allocation2 + $0x110] sm:$0xff]
      %v539 = vld [vmem:[#allocation2 + $0x118] sm:$0x3]
      %v540 = vld [vmem:[#allocation2 + $0x120] sm:$0xff]
      %v541 = vld [vmem:[#allocation2 + $0x128] sm:$0xff]
      %v542 = vld [vmem:[#allocation2 + $0x130] sm:$0x3]
      %v543 = vld [vmem:[#allocation2 + $0x138] sm:$0xff]
      %v544 = vld [vmem:[#allocation2 + $0x140] sm:$0xff]
      %v545 = vld [vmem:[#allocation2 + $0x148] sm:$0x3]
      %v546 = vld [vmem:[#allocation2 + $0x150] sm:$0xff]
      %v547 = vld [vmem:[#allocation2 + $0x158] sm:$0xff]
      %v548 = vld [vmem:[#allocation2 + $0x160] sm:$0x3]
      %v549 = vld [vmem:[#allocation2 + $0x168] sm:$0xff]
      %v550 = vld [vmem:[#allocation2 + $0x170] sm:$0xff]
      %v551 = vld [vmem:[#allocation2 + $0x178] sm:$0x3]
      %v552 = vld [vmem:[#allocation2 + $0x180] sm:$0xff]
      %v553 = vld [vmem:[#allocation2 + $0x188] sm:$0xff]
      %v554 = vld [vmem:[#allocation2 + $0x190] sm:$0x3]
      %v555 = vld [vmem:[#allocation2 + $0x198] sm:$0xff]
      %v556 = vld [vmem:[#allocation2 + $0x1a0] sm:$0xff]
      %v557 = vld [vmem:[#allocation2 + $0x1a8] sm:$0x3]
      %vm606 = vcmask 1046528
      %v607 = vrot.slane %v507, 1
      %v608 = vrot.slane %v508, 1
      %v609 = vsel %vm606, %v607, %v608
      %v610 = vrot.slane %v509, 1
      %v611 = vsel %vm606, %v608, %v610
      %v612 = vrot.slane %v510, 1
      %v613 = vrot.slane %v511, 1
      %v614 = vsel %vm606, %v612, %v613
      %v615 = vrot.slane %v512, 1
      %v616 = vsel %vm606, %v613, %v615
      %v617 = vrot.slane %v513, 1
      %v618 = vrot.slane %v514, 1
      %v619 = vsel %vm606, %v617, %v618
      %v620 = vrot.slane %v515, 1
      %v621 = vsel %vm606, %v618, %v620
      %v622 = vrot.slane %v516, 1
      %v623 = vrot.slane %v517, 1
      %v624 = vsel %vm606, %v622, %v623
      %v625 = vrot.slane %v518, 1
      %v626 = vsel %vm606, %v623, %v625
      %v627 = vrot.slane %v519, 1
      %v628 = vrot.slane %v520, 1
      %v629 = vsel %vm606, %v627, %v628
      %v630 = vrot.slane %v521, 1
      %v631 = vsel %vm606, %v628, %v630
      %v632 = vrot.slane %v522, 1
      %v633 = vrot.slane %v523, 1
      %v634 = vsel %vm606, %v632, %v633
      %v635 = vrot.slane %v524, 1
      %v636 = vsel %vm606, %v633, %v635
      %v637 = vrot.slane %v525, 1
      %v638 = vrot.slane %v526, 1
      %v639 = vsel %vm606, %v637, %v638
      %v640 = vrot.slane %v527, 1
      %v641 = vsel %vm606, %v638, %v640
      %v642 = vrot.slane %v528, 1
      %v643 = vrot.slane %v529, 1
      %v644 = vsel %vm606, %v642, %v643
      %v645 = vrot.slane %v530, 1
      %v646 = vsel %vm606, %v643, %v645
      %v647 = vrot.slane %v531, 1
      %v648 = vrot.slane %v532, 1
      %v649 = vsel %vm606, %v647, %v648
      %v650 = vrot.slane %v533, 1
      %v651 = vsel %vm606, %v648, %v650
      %v652 = vrot.slane %v534, 1
      %v653 = vrot.slane %v535, 1
      %v654 = vsel %vm606, %v652, %v653
      %v655 = vrot.slane %v536, 1
      %v656 = vsel %vm606, %v653, %v655
      %v657 = vrot.slane %v537, 1
      %v658 = vrot.slane %v538, 1
      %v659 = vsel %vm606, %v657, %v658
      %v660 = vrot.slane %v539, 1
      %v661 = vsel %vm606, %v658, %v660
      %v662 = vrot.slane %v540, 1
      %v663 = vrot.slane %v541, 1
      %v664 = vsel %vm606, %v662, %v663
      %v665 = vrot.slane %v542, 1
      %v666 = vsel %vm606, %v663, %v665
      %v667 = vrot.slane %v543, 1
      %v668 = vrot.slane %v544, 1
      %v669 = vsel %vm606, %v667, %v668
      %v670 = vrot.slane %v545, 1
      %v671 = vsel %vm606, %v668, %v670
      %v672 = vrot.slane %v546, 1
      %v673 = vrot.slane %v547, 1
      %v674 = vsel %vm606, %v672, %v673
      %v675 = vrot.slane %v548, 1
      %v676 = vsel %vm606, %v673, %v675
      %v677 = vrot.slane %v549, 1
      %v678 = vrot.slane %v550, 1
      %v679 = vsel %vm606, %v677, %v678
      %v680 = vrot.slane %v551, 1
      %v681 = vsel %vm606, %v678, %v680
      %v682 = vrot.slane %v552, 1
      %v683 = vrot.slane %v553, 1
      %v684 = vsel %vm606, %v682, %v683
      %v685 = vrot.slane %v554, 1
      %v686 = vsel %vm606, %v683, %v685
      %v722 = vrot.slane %v504, 1
      %v723 = vrot.slane %v505, 1
      %v724 = vsel %vm606, %v722, %v723
      %v725 = vrot.slane %v506, 1
      %v726 = vsel %vm606, %v723, %v725
      %vm727 = vcmask 31744
      %v728 = vsel %vm727, %v724, 0
      %v730 = vsel %vm727, %v726, 0
      %v732 = vsel %vm727, %v609, 0
      %v734 = vsel %vm727, %v611, 0
      %v736 = vsel %vm727, %v614, 0
      %v738 = vsel %vm727, %v616, 0
      %v740 = vsel %vm727, %v619, 0
      %v742 = vsel %vm727, %v621, 0
      %v744 = vsel %vm727, %v624, 0
      %v746 = vsel %vm727, %v626, 0
      %v748 = vsel %vm727, %v629, 0
      %v750 = vsel %vm727, %v631, 0
      %v752 = vsel %vm727, %v634, 0
      %v754 = vsel %vm727, %v636, 0
      %v756 = vsel %vm727, %v639, 0
      %v758 = vsel %vm727, %v641, 0
      %v760 = vsel %vm727, %v644, 0
      %v762 = vsel %vm727, %v646, 0
      %v764 = vsel %vm727, %v649, 0
      %v766 = vsel %vm727, %v651, 0
      %v768 = vsel %vm727, %v654, 0
      %v770 = vsel %vm727, %v656, 0
      %v772 = vsel %vm727, %v659, 0
      %v774 = vsel %vm727, %v661, 0
      %v776 = vsel %vm727, %v664, 0
      %v778 = vsel %vm727, %v666, 0
      %v780 = vsel %vm727, %v669, 0
      %v782 = vsel %vm727, %v671, 0
      %v784 = vsel %vm727, %v674, 0
      %v786 = vsel %vm727, %v676, 0
      %v788 = vsel %vm727, %v679, 0
      %v790 = vsel %vm727, %v681, 0
      %vm792 = vcmask 1043456
      %v794 = vsel %vm792, %v485, 0
      %796 = vmatprep.subr.mxu0 0.0
      %797 = vmatpush1.msra.mxu0 0.0
      %798 = vmatprep.subr.mxu0 0.0
      %799 = vmatpush1.msra.mxu0 0.0
      %800 = vmatprep.subr.mxu0 0.0
      %801 = vmatpush1.msra.mxu0 0.0
      %802 = vmatprep.subr.mxu0 0.0
      %803 = vmatpush1.msra.mxu0 0.0
      %804 = vmatprep.subr.mxu0 0.0
      %805 = vmatpush1.msra.mxu0 0.0
      %806 = vmatprep.subr.mxu0 0.0
      %807 = vmatpush1.msra.mxu0 0.0
      %808 = vmatprep.subr.mxu0 0.0
      %809 = vmatpush1.msra.mxu0 0.0
      %810 = vmatprep.subr.mxu0 0.0
      %811 = vmatpush1.msra.mxu0 0.0
      %812 = vmatprep.subr.mxu0 0.0
      %813 = vmatpush1.msra.mxu0 0.0
      %814 = vmatprep.subr.mxu0 0.0
      %815 = vmatpush1.msra.mxu0 0.0
      %816 = vmatprep.subr.mxu0 0.0
      %817 = vmatpush1.msra.mxu0 0.0
      %818 = vmatprep.subr.mxu0 0.0
      %819 = vmatpush1.msra.mxu0 0.0
      %820 = vmatprep.subr.mxu0 0.0
      %821 = vmatpush1.msra.mxu0 0.0
      %822 = vmatprep.subr.mxu0 0.0
      %823 = vmatpush1.msra.mxu0 0.0
      %824 = vmatprep.subr.mxu0 0.0
      %825 = vmatpush1.msra.mxu0 0.0
      %826 = vmatprep.subr.mxu0 0.0
      %827 = vmatpush1.msra.mxu0 %v794
      %828 = vmatprep.subr.mxu0 0.0
      %829 = vmatpush2.msra.mxu0 0.0
      %830 = vmatprep.subr.mxu0 0.0
      %831 = vmatpush2.msra.mxu0 0.0
      %832 = vmatprep.subr.mxu0 0.0
      %833 = vmatpush2.msra.mxu0 0.0
      %834 = vmatprep.subr.mxu0 0.0
      %835 = vmatpush2.msra.mxu0 0.0
      %836 = vmatprep.subr.mxu0 0.0
      %837 = vmatpush2.msra.mxu0 0.0
      %838 = vmatprep.subr.mxu0 0.0
      %839 = vmatpush2.msra.mxu0 0.0
      %840 = vmatprep.subr.mxu0 0.0
      %841 = vmatpush2.msra.mxu0 0.0
      %842 = vmatprep.subr.mxu0 0.0
      %843 = vmatpush2.msra.mxu0 0.0
      %844 = vmatprep.subr.mxu0 0.0
      %845 = vmatpush2.msra.mxu0 0.0
      %846 = vmatprep.subr.mxu0 0.0
      %847 = vmatpush2.msra.mxu0 0.0
      %848 = vmatprep.subr.mxu0 0.0
      %849 = vmatpush2.msra.mxu0 0.0
      %850 = vmatprep.subr.mxu0 0.0
      %851 = vmatpush2.msra.mxu0 0.0
      %852 = vmatprep.subr.mxu0 0.0
      %853 = vmatpush2.msra.mxu0 0.0
      %854 = vmatprep.subr.mxu0 0.0
      %855 = vmatpush2.msra.mxu0 0.0
      %856 = vmatprep.subr.mxu0 0.0
      %857 = vmatpush2.msra.mxu0 0.0
      %858 = vmatprep.subr.mxu0 0.0
      %859 = vmatpush2.msra.mxu0 0.0
      %860 = vmatprep.mubr.f32.mxu0 0.0
      %861 = vmatmul.mubr.f32.gmra.mxu0 %v728
      %v862 = vpop.f32.mrf.mxu0
      %v863 = vadd.f32 0.0, %v862
      %v864 = vpop.f32.mrf.mxu0
      %865 = vmatprep.mubr.f32.mxu0 0.0
      %866 = vmatmul.mubr.f32.gmra.mxu0 %v730
      %v867 = vpop.f32.mrf.mxu0
      %v868 = vadd.f32 0.0, %v867
      %v869 = vpop.f32.mrf.mxu0
      %870 = vmatprep.mubr.f32.mxu0 0.0
      %871 = vmatmul.mubr.f32.gmra.mxu0 %v732
      %v872 = vpop.f32.mrf.mxu0
      %v873 = vadd.f32 0.0, %v872
      %v874 = vpop.f32.mrf.mxu0
      %875 = vmatprep.mubr.f32.mxu0 0.0
      %876 = vmatmul.mubr.f32.gmra.mxu0 %v734
      %v877 = vpop.f32.mrf.mxu0
      %v878 = vadd.f32 0.0, %v877
      %v879 = vpop.f32.mrf.mxu0
      %880 = vmatprep.mubr.f32.mxu0 0.0
      %881 = vmatmul.mubr.f32.gmra.mxu0 %v736
      %v882 = vpop.f32.mrf.mxu0
      %v883 = vadd.f32 0.0, %v882
      %v884 = vpop.f32.mrf.mxu0
      %885 = vmatprep.mubr.f32.mxu0 0.0
      %886 = vmatmul.mubr.f32.gmra.mxu0 %v738
      %v887 = vpop.f32.mrf.mxu0
      %v888 = vadd.f32 0.0, %v887
      %v889 = vpop.f32.mrf.mxu0
      %890 = vmatprep.mubr.f32.mxu0 0.0
      %891 = vmatmul.mubr.f32.gmra.mxu0 %v740
      %v892 = vpop.f32.mrf.mxu0
      %v893 = vadd.f32 0.0, %v892
      %v894 = vpop.f32.mrf.mxu0
      %895 = vmatprep.mubr.f32.mxu0 0.0
      %896 = vmatmul.mubr.f32.gmra.mxu0 %v742
      %v897 = vpop.f32.mrf.mxu0
      %v898 = vadd.f32 0.0, %v897
      %v899 = vpop.f32.mrf.mxu0
      %900 = vmatprep.mubr.f32.mxu0 0.0
      %901 = vmatmul.mubr.f32.gmra.mxu0 %v744
      %v902 = vpop.f32.mrf.mxu0
      %v903 = vadd.f32 0.0, %v902
      %v904 = vpop.f32.mrf.mxu0
      %905 = vmatprep.mubr.f32.mxu0 0.0
      %906 = vmatmul.mubr.f32.gmra.mxu0 %v746
      %v907 = vpop.f32.mrf.mxu0
      %v908 = vadd.f32 0.0, %v907
      %v909 = vpop.f32.mrf.mxu0
      %910 = vmatprep.mubr.f32.mxu0 0.0
      %911 = vmatmul.mubr.f32.gmra.mxu0 %v748
      %v912 = vpop.f32.mrf.mxu0
      %v913 = vadd.f32 0.0, %v912
      %v914 = vpop.f32.mrf.mxu0
      %915 = vmatprep.mubr.f32.mxu0 0.0
      %916 = vmatmul.mubr.f32.gmra.mxu0 %v750
      %v917 = vpop.f32.mrf.mxu0
      %v918 = vadd.f32 0.0, %v917
      %v919 = vpop.f32.mrf.mxu0
      %920 = vmatprep.mubr.f32.mxu0 0.0
      %921 = vmatmul.mubr.f32.gmra.mxu0 %v752
      %v922 = vpop.f32.mrf.mxu0
      %v923 = vadd.f32 0.0, %v922
      %v924 = vpop.f32.mrf.mxu0
      %925 = vmatprep.mubr.f32.mxu0 0.0
      %926 = vmatmul.mubr.f32.gmra.mxu0 %v754
      %v927 = vpop.f32.mrf.mxu0
      %v928 = vadd.f32 0.0, %v927
      %v929 = vpop.f32.mrf.mxu0
      %930 = vmatprep.mubr.f32.mxu0 0.0
      %931 = vmatmul.mubr.f32.gmra.mxu0 %v756
      %v932 = vpop.f32.mrf.mxu0
      %v933 = vadd.f32 0.0, %v932
      %v934 = vpop.f32.mrf.mxu0
      %935 = vmatprep.mubr.f32.mxu0 0.0
      %936 = vmatmul.mubr.f32.gmra.mxu0 %v758
      %v937 = vpop.f32.mrf.mxu0
      %v938 = vadd.f32 0.0, %v937
      %v939 = vpop.f32.mrf.mxu0
      %940 = vmatprep.mubr.f32.mxu0 0.0
      %941 = vmatmul.mubr.f32.gmra.mxu0 %v760
      %v942 = vpop.f32.mrf.mxu0
      %v943 = vadd.f32 0.0, %v942
      %v944 = vpop.f32.mrf.mxu0
      %945 = vmatprep.mubr.f32.mxu0 0.0
      %946 = vmatmul.mubr.f32.gmra.mxu0 %v762
      %v947 = vpop.f32.mrf.mxu0
      %v948 = vadd.f32 0.0, %v947
      %v949 = vpop.f32.mrf.mxu0
      %950 = vmatprep.mubr.f32.mxu0 0.0
      %951 = vmatmul.mubr.f32.gmra.mxu0 %v764
      %v952 = vpop.f32.mrf.mxu0
      %v953 = vadd.f32 0.0, %v952
      %v954 = vpop.f32.mrf.mxu0
      %955 = vmatprep.mubr.f32.mxu0 0.0
      %956 = vmatmul.mubr.f32.gmra.mxu0 %v766
      %v957 = vpop.f32.mrf.mxu0
      %v958 = vadd.f32 0.0, %v957
      %v959 = vpop.f32.mrf.mxu0
      %960 = vmatprep.mubr.f32.mxu0 0.0
      %961 = vmatmul.mubr.f32.gmra.mxu0 %v768
      %v962 = vpop.f32.mrf.mxu0
      %v963 = vadd.f32 0.0, %v962
      %v964 = vpop.f32.mrf.mxu0
      %965 = vmatprep.mubr.f32.mxu0 0.0
      %966 = vmatmul.mubr.f32.gmra.mxu0 %v770
      %v967 = vpop.f32.mrf.mxu0
      %v968 = vadd.f32 0.0, %v967
      %v969 = vpop.f32.mrf.mxu0
      %970 = vmatprep.mubr.f32.mxu0 0.0
      %971 = vmatmul.mubr.f32.gmra.mxu0 %v772
      %v972 = vpop.f32.mrf.mxu0
      %v973 = vadd.f32 0.0, %v972
      %v974 = vpop.f32.mrf.mxu0
      %975 = vmatprep.mubr.f32.mxu0 0.0
      %976 = vmatmul.mubr.f32.gmra.mxu0 %v774
      %v977 = vpop.f32.mrf.mxu0
      %v978 = vadd.f32 0.0, %v977
      %v979 = vpop.f32.mrf.mxu0
      %980 = vmatprep.mubr.f32.mxu0 0.0
      %981 = vmatmul.mubr.f32.gmra.mxu0 %v776
      %v982 = vpop.f32.mrf.mxu0
      %v983 = vadd.f32 0.0, %v982
      %v984 = vpop.f32.mrf.mxu0
      %985 = vmatprep.mubr.f32.mxu0 0.0
      %986 = vmatmul.mubr.f32.gmra.mxu0 %v778
      %v987 = vpop.f32.mrf.mxu0
      %v988 = vadd.f32 0.0, %v987
      %v989 = vpop.f32.mrf.mxu0
      %990 = vmatprep.mubr.f32.mxu0 0.0
      %991 = vmatmul.mubr.f32.gmra.mxu0 %v780
      %v992 = vpop.f32.mrf.mxu0
      %v993 = vadd.f32 0.0, %v992
      %v994 = vpop.f32.mrf.mxu0
      %995 = vmatprep.mubr.f32.mxu0 0.0
      %996 = vmatmul.mubr.f32.gmra.mxu0 %v782
      %v997 = vpop.f32.mrf.mxu0
      %v998 = vadd.f32 0.0, %v997
      %v999 = vpop.f32.mrf.mxu0
      %1000 = vmatprep.mubr.f32.mxu0 0.0
      %1001 = vmatmul.mubr.f32.gmra.mxu0 %v784
      %v1002 = vpop.f32.mrf.mxu0
      %v1003 = vadd.f32 0.0, %v1002
      %v1004 = vpop.f32.mrf.mxu0
      %1005 = vmatprep.mubr.f32.mxu0 0.0
      %1006 = vmatmul.mubr.f32.gmra.mxu0 %v786
      %v1007 = vpop.f32.mrf.mxu0
      %v1008 = vadd.f32 0.0, %v1007
      %v1009 = vpop.f32.mrf.mxu0
      %1010 = vmatprep.mubr.f32.mxu0 0.0
      %1011 = vmatmul.mubr.f32.gmra.mxu0 %v788
      %v1012 = vpop.f32.mrf.mxu0
      %v1013 = vadd.f32 0.0, %v1012
      %v1014 = vpop.f32.mrf.mxu0
      %1015 = vmatprep.mubr.f32.mxu0 0.0
      %1016 = vmatmul.mubr.f32.gmra.mxu0 %v790
      %v1017 = vpop.f32.mrf.mxu0
      %v1018 = vadd.f32 0.0, %v1017
      %v1019 = vpop.f32.mrf.mxu0
      %1020 = vdwg.mxu0
      %v1021 = vsel %vm727, %v504, 0
      %v1023 = vsel %vm727, %v505, 0
      %v1025 = vsel %vm727, %v507, 0
      %v1027 = vsel %vm727, %v508, 0
      %v1029 = vsel %vm727, %v510, 0
      %v1031 = vsel %vm727, %v511, 0
      %v1033 = vsel %vm727, %v513, 0
      %v1035 = vsel %vm727, %v514, 0
      %v1037 = vsel %vm727, %v516, 0
      %v1039 = vsel %vm727, %v517, 0
      %v1041 = vsel %vm727, %v519, 0
      %v1043 = vsel %vm727, %v520, 0
      %v1045 = vsel %vm727, %v522, 0
      %v1047 = vsel %vm727, %v523, 0
      %v1049 = vsel %vm727, %v525, 0
      %v1051 = vsel %vm727, %v526, 0
      %v1053 = vsel %vm727, %v528, 0
      %v1055 = vsel %vm727, %v529, 0
      %v1057 = vsel %vm727, %v531, 0
      %v1059 = vsel %vm727, %v532, 0
      %v1061 = vsel %vm727, %v534, 0
      %v1063 = vsel %vm727, %v535, 0
      %v1065 = vsel %vm727, %v537, 0
      %v1067 = vsel %vm727, %v538, 0
      %v1069 = vsel %vm727, %v540, 0
      %v1071 = vsel %vm727, %v541, 0
      %v1073 = vsel %vm727, %v543, 0
      %v1075 = vsel %vm727, %v544, 0
      %v1077 = vsel %vm727, %v546, 0
      %v1079 = vsel %vm727, %v547, 0
      %v1081 = vsel %vm727, %v549, 0
      %v1083 = vsel %vm727, %v550, 0
      %v1086 = vsel %vm792, %v484, 0
      %1088 = vmatprep.subr.mxu0 0.0
      %1089 = vmatpush1.msra.mxu0 0.0
      %1090 = vmatprep.subr.mxu0 0.0
      %1091 = vmatpush1.msra.mxu0 0.0
      %1092 = vmatprep.subr.mxu0 0.0
      %1093 = vmatpush1.msra.mxu0 0.0
      %1094 = vmatprep.subr.mxu0 0.0
      %1095 = vmatpush1.msra.mxu0 0.0
      %1096 = vmatprep.subr.mxu0 0.0
      %1097 = vmatpush1.msra.mxu0 0.0
      %1098 = vmatprep.subr.mxu0 0.0
      %1099 = vmatpush1.msra.mxu0 0.0
      %1100 = vmatprep.subr.mxu0 0.0
      %1101 = vmatpush1.msra.mxu0 0.0
      %1102 = vmatprep.subr.mxu0 0.0
      %1103 = vmatpush1.msra.mxu0 0.0
      %1104 = vmatprep.subr.mxu0 0.0
      %1105 = vmatpush1.msra.mxu0 0.0
      %1106 = vmatprep.subr.mxu0 0.0
      %1107 = vmatpush1.msra.mxu0 0.0
      %1108 = vmatprep.subr.mxu0 0.0
      %1109 = vmatpush1.msra.mxu0 0.0
      %1110 = vmatprep.subr.mxu0 0.0
      %1111 = vmatpush1.msra.mxu0 0.0
      %1112 = vmatprep.subr.mxu0 0.0
      %1113 = vmatpush1.msra.mxu0 0.0
      %1114 = vmatprep.subr.mxu0 0.0
      %1115 = vmatpush1.msra.mxu0 0.0
      %1116 = vmatprep.subr.mxu0 0.0
      %1117 = vmatpush1.msra.mxu0 0.0
      %1118 = vmatprep.subr.mxu0 0.0
      %1119 = vmatpush1.msra.mxu0 %v1086
      %1120 = vmatprep.subr.mxu0 0.0
      %1121 = vmatpush2.msra.mxu0 0.0
      %1122 = vmatprep.subr.mxu0 0.0
      %1123 = vmatpush2.msra.mxu0 0.0
      %1124 = vmatprep.subr.mxu0 0.0
      %1125 = vmatpush2.msra.mxu0 0.0
      %1126 = vmatprep.subr.mxu0 0.0
      %1127 = vmatpush2.msra.mxu0 0.0
      %1128 = vmatprep.subr.mxu0 0.0
      %1129 = vmatpush2.msra.mxu0 0.0
      %1130 = vmatprep.subr.mxu0 0.0
      %1131 = vmatpush2.msra.mxu0 0.0
      %1132 = vmatprep.subr.mxu0 0.0
      %1133 = vmatpush2.msra.mxu0 0.0
      %1134 = vmatprep.subr.mxu0 0.0
      %1135 = vmatpush2.msra.mxu0 0.0
      %1136 = vmatprep.subr.mxu0 0.0
      %1137 = vmatpush2.msra.mxu0 0.0
      %1138 = vmatprep.subr.mxu0 0.0
      %1139 = vmatpush2.msra.mxu0 0.0
      %1140 = vmatprep.subr.mxu0 0.0
      %1141 = vmatpush2.msra.mxu0 0.0
      %1142 = vmatprep.subr.mxu0 0.0
      %1143 = vmatpush2.msra.mxu0 0.0
      %1144 = vmatprep.subr.mxu0 0.0
      %1145 = vmatpush2.msra.mxu0 0.0
      %1146 = vmatprep.subr.mxu0 0.0
      %1147 = vmatpush2.msra.mxu0 0.0
      %1148 = vmatprep.subr.mxu0 0.0
      %1149 = vmatpush2.msra.mxu0 0.0
      %1150 = vmatprep.subr.mxu0 0.0
      %1151 = vmatpush2.msra.mxu0 0.0
      %1152 = vmatprep.mubr.f32.mxu0 0.0
      %1153 = vmatmul.mubr.f32.gmra.mxu0 %v1021
      %v1154 = vpop.f32.mrf.mxu0
      %v1155 = vadd.f32 %v863, %v1154
      %v1156 = vpop.f32.mrf.mxu0
      %1157 = vmatprep.mubr.f32.mxu0 0.0
      %1158 = vmatmul.mubr.f32.gmra.mxu0 %v1023
      %v1159 = vpop.f32.mrf.mxu0
      %v1160 = vadd.f32 %v868, %v1159
      %v1161 = vpop.f32.mrf.mxu0
      %1162 = vmatprep.mubr.f32.mxu0 0.0
      %1163 = vmatmul.mubr.f32.gmra.mxu0 %v1025
      %v1164 = vpop.f32.mrf.mxu0
      %v1165 = vadd.f32 %v873, %v1164
      %v1166 = vpop.f32.mrf.mxu0
      %1167 = vmatprep.mubr.f32.mxu0 0.0
      %1168 = vmatmul.mubr.f32.gmra.mxu0 %v1027
      %v1169 = vpop.f32.mrf.mxu0
      %v1170 = vadd.f32 %v878, %v1169
      %v1171 = vpop.f32.mrf.mxu0
      %1172 = vmatprep.mubr.f32.mxu0 0.0
      %1173 = vmatmul.mubr.f32.gmra.mxu0 %v1029
      %v1174 = vpop.f32.mrf.mxu0
      %v1175 = vadd.f32 %v883, %v1174
      %v1176 = vpop.f32.mrf.mxu0
      %1177 = vmatprep.mubr.f32.mxu0 0.0
      %1178 = vmatmul.mubr.f32.gmra.mxu0 %v1031
      %v1179 = vpop.f32.mrf.mxu0
      %v1180 = vadd.f32 %v888, %v1179
      %v1181 = vpop.f32.mrf.mxu0
      %1182 = vmatprep.mubr.f32.mxu0 0.0
      %1183 = vmatmul.mubr.f32.gmra.mxu0 %v1033
      %v1184 = vpop.f32.mrf.mxu0
      %v1185 = vadd.f32 %v893, %v1184
      %v1186 = vpop.f32.mrf.mxu0
      %1187 = vmatprep.mubr.f32.mxu0 0.0
      %1188 = vmatmul.mubr.f32.gmra.mxu0 %v1035
      %v1189 = vpop.f32.mrf.mxu0
      %v1190 = vadd.f32 %v898, %v1189
      %v1191 = vpop.f32.mrf.mxu0
      %1192 = vmatprep.mubr.f32.mxu0 0.0
      %1193 = vmatmul.mubr.f32.gmra.mxu0 %v1037
      %v1194 = vpop.f32.mrf.mxu0
      %v1195 = vadd.f32 %v903, %v1194
      %v1196 = vpop.f32.mrf.mxu0
      %1197 = vmatprep.mubr.f32.mxu0 0.0
      %1198 = vmatmul.mubr.f32.gmra.mxu0 %v1039
      %v1199 = vpop.f32.mrf.mxu0
      %v1200 = vadd.f32 %v908, %v1199
      %v1201 = vpop.f32.mrf.mxu0
      %1202 = vmatprep.mubr.f32.mxu0 0.0
      %1203 = vmatmul.mubr.f32.gmra.mxu0 %v1041
      %v1204 = vpop.f32.mrf.mxu0
      %v1205 = vadd.f32 %v913, %v1204
      %v1206 = vpop.f32.mrf.mxu0
      %1207 = vmatprep.mubr.f32.mxu0 0.0
      %1208 = vmatmul.mubr.f32.gmra.mxu0 %v1043
      %v1209 = vpop.f32.mrf.mxu0
      %v1210 = vadd.f32 %v918, %v1209
      %v1211 = vpop.f32.mrf.mxu0
      %1212 = vmatprep.mubr.f32.mxu0 0.0
      %1213 = vmatmul.mubr.f32.gmra.mxu0 %v1045
      %v1214 = vpop.f32.mrf.mxu0
      %v1215 = vadd.f32 %v923, %v1214
      %v1216 = vpop.f32.mrf.mxu0
      %1217 = vmatprep.mubr.f32.mxu0 0.0
      %1218 = vmatmul.mubr.f32.gmra.mxu0 %v1047
      %v1219 = vpop.f32.mrf.mxu0
      %v1220 = vadd.f32 %v928, %v1219
      %v1221 = vpop.f32.mrf.mxu0
      %1222 = vmatprep.mubr.f32.mxu0 0.0
      %1223 = vmatmul.mubr.f32.gmra.mxu0 %v1049
      %v1224 = vpop.f32.mrf.mxu0
      %v1225 = vadd.f32 %v933, %v1224
      %v1226 = vpop.f32.mrf.mxu0
      %1227 = vmatprep.mubr.f32.mxu0 0.0
      %1228 = vmatmul.mubr.f32.gmra.mxu0 %v1051
      %v1229 = vpop.f32.mrf.mxu0
      %v1230 = vadd.f32 %v938, %v1229
      %v1231 = vpop.f32.mrf.mxu0
      %1232 = vmatprep.mubr.f32.mxu0 0.0
      %1233 = vmatmul.mubr.f32.gmra.mxu0 %v1053
      %v1234 = vpop.f32.mrf.mxu0
      %v1235 = vadd.f32 %v943, %v1234
      %v1236 = vpop.f32.mrf.mxu0
      %1237 = vmatprep.mubr.f32.mxu0 0.0
      %1238 = vmatmul.mubr.f32.gmra.mxu0 %v1055
      %v1239 = vpop.f32.mrf.mxu0
      %v1240 = vadd.f32 %v948, %v1239
      %v1241 = vpop.f32.mrf.mxu0
      %1242 = vmatprep.mubr.f32.mxu0 0.0
      %1243 = vmatmul.mubr.f32.gmra.mxu0 %v1057
      %v1244 = vpop.f32.mrf.mxu0
      %v1245 = vadd.f32 %v953, %v1244
      %v1246 = vpop.f32.mrf.mxu0
      %1247 = vmatprep.mubr.f32.mxu0 0.0
      %1248 = vmatmul.mubr.f32.gmra.mxu0 %v1059
      %v1249 = vpop.f32.mrf.mxu0
      %v1250 = vadd.f32 %v958, %v1249
      %v1251 = vpop.f32.mrf.mxu0
      %1252 = vmatprep.mubr.f32.mxu0 0.0
      %1253 = vmatmul.mubr.f32.gmra.mxu0 %v1061
      %v1254 = vpop.f32.mrf.mxu0
      %v1255 = vadd.f32 %v963, %v1254
      %v1256 = vpop.f32.mrf.mxu0
      %1257 = vmatprep.mubr.f32.mxu0 0.0
      %1258 = vmatmul.mubr.f32.gmra.mxu0 %v1063
      %v1259 = vpop.f32.mrf.mxu0
      %v1260 = vadd.f32 %v968, %v1259
      %v1261 = vpop.f32.mrf.mxu0
      %1262 = vmatprep.mubr.f32.mxu0 0.0
      %1263 = vmatmul.mubr.f32.gmra.mxu0 %v1065
      %v1264 = vpop.f32.mrf.mxu0
      %v1265 = vadd.f32 %v973, %v1264
      %v1266 = vpop.f32.mrf.mxu0
      %1267 = vmatprep.mubr.f32.mxu0 0.0
      %1268 = vmatmul.mubr.f32.gmra.mxu0 %v1067
      %v1269 = vpop.f32.mrf.mxu0
      %v1270 = vadd.f32 %v978, %v1269
      %v1271 = vpop.f32.mrf.mxu0
      %1272 = vmatprep.mubr.f32.mxu0 0.0
      %1273 = vmatmul.mubr.f32.gmra.mxu0 %v1069
      %v1274 = vpop.f32.mrf.mxu0
      %v1275 = vadd.f32 %v983, %v1274
      %v1276 = vpop.f32.mrf.mxu0
      %1277 = vmatprep.mubr.f32.mxu0 0.0
      %1278 = vmatmul.mubr.f32.gmra.mxu0 %v1071
      %v1279 = vpop.f32.mrf.mxu0
      %v1280 = vadd.f32 %v988, %v1279
      %v1281 = vpop.f32.mrf.mxu0
      %1282 = vmatprep.mubr.f32.mxu0 0.0
      %1283 = vmatmul.mubr.f32.gmra.mxu0 %v1073
      %v1284 = vpop.f32.mrf.mxu0
      %v1285 = vadd.f32 %v993, %v1284
      %v1286 = vpop.f32.mrf.mxu0
      %1287 = vmatprep.mubr.f32.mxu0 0.0
      %1288 = vmatmul.mubr.f32.gmra.mxu0 %v1075
      %v1289 = vpop.f32.mrf.mxu0
      %v1290 = vadd.f32 %v998, %v1289
      %v1291 = vpop.f32.mrf.mxu0
      %1292 = vmatprep.mubr.f32.mxu0 0.0
      %1293 = vmatmul.mubr.f32.gmra.mxu0 %v1077
      %v1294 = vpop.f32.mrf.mxu0
      %v1295 = vadd.f32 %v1003, %v1294
      %v1296 = vpop.f32.mrf.mxu0
      %1297 = vmatprep.mubr.f32.mxu0 0.0
      %1298 = vmatmul.mubr.f32.gmra.mxu0 %v1079
      %v1299 = vpop.f32.mrf.mxu0
      %v1300 = vadd.f32 %v1008, %v1299
      %v1301 = vpop.f32.mrf.mxu0
      %1302 = vmatprep.mubr.f32.mxu0 0.0
      %1303 = vmatmul.mubr.f32.gmra.mxu0 %v1081
      %v1304 = vpop.f32.mrf.mxu0
      %v1305 = vadd.f32 %v1013, %v1304
      %v1306 = vpop.f32.mrf.mxu0
      %1307 = vmatprep.mubr.f32.mxu0 0.0
      %1308 = vmatmul.mubr.f32.gmra.mxu0 %v1083
      %v1309 = vpop.f32.mrf.mxu0
      %v1310 = vadd.f32 %v1018, %v1309
      %v1311 = vpop.f32.mrf.mxu0
      %1312 = vdwg.mxu0
      %vm1313 = vcmask 1045504
      %v1314 = vrot.slane %v504, 2
      %v1315 = vrot.slane %v505, 2
      %v1316 = vsel %vm1313, %v1314, %v1315
      %v1317 = vrot.slane %v506, 2
      %v1318 = vsel %vm1313, %v1315, %v1317
      %v1319 = vrot.slane %v507, 2
      %v1320 = vrot.slane %v508, 2
      %v1321 = vsel %vm1313, %v1319, %v1320
      %v1322 = vrot.slane %v509, 2
      %v1323 = vsel %vm1313, %v1320, %v1322
      %v1324 = vrot.slane %v510, 2
      %v1325 = vrot.slane %v511, 2
      %v1326 = vsel %vm1313, %v1324, %v1325
      %v1327 = vrot.slane %v512, 2
      %v1328 = vsel %vm1313, %v1325, %v1327
      %v1329 = vrot.slane %v513, 2
      %v1330 = vrot.slane %v514, 2
      %v1331 = vsel %vm1313, %v1329, %v1330
      %v1332 = vrot.slane %v515, 2
      %v1333 = vsel %vm1313, %v1330, %v1332
      %v1334 = vrot.slane %v516, 2
      %v1335 = vrot.slane %v517, 2
      %v1336 = vsel %vm1313, %v1334, %v1335
      %v1337 = vrot.slane %v518, 2
      %v1338 = vsel %vm1313, %v1335, %v1337
      %v1339 = vrot.slane %v519, 2
      %v1340 = vrot.slane %v520, 2
      %v1341 = vsel %vm1313, %v1339, %v1340
      %v1342 = vrot.slane %v521, 2
      %v1343 = vsel %vm1313, %v1340, %v1342
      %v1344 = vrot.slane %v522, 2
      %v1345 = vrot.slane %v523, 2
      %v1346 = vsel %vm1313, %v1344, %v1345
      %v1347 = vrot.slane %v524, 2
      %v1348 = vsel %vm1313, %v1345, %v1347
      %v1349 = vrot.slane %v525, 2
      %v1350 = vrot.slane %v526, 2
      %v1351 = vsel %vm1313, %v1349, %v1350
      %v1352 = vrot.slane %v527, 2
      %v1353 = vsel %vm1313, %v1350, %v1352
      %v1354 = vrot.slane %v528, 2
      %v1355 = vrot.slane %v529, 2
      %v1356 = vsel %vm1313, %v1354, %v1355
      %v1357 = vrot.slane %v530, 2
      %v1358 = vsel %vm1313, %v1355, %v1357
      %v1359 = vrot.slane %v531, 2
      %v1360 = vrot.slane %v532, 2
      %v1361 = vsel %vm1313, %v1359, %v1360
      %v1362 = vrot.slane %v533, 2
      %v1363 = vsel %vm1313, %v1360, %v1362
      %v1364 = vrot.slane %v534, 2
      %v1365 = vrot.slane %v535, 2
      %v1366 = vsel %vm1313, %v1364, %v1365
      %v1367 = vrot.slane %v536, 2
      %v1368 = vsel %vm1313, %v1365, %v1367
      %v1369 = vrot.slane %v537, 2
      %v1370 = vrot.slane %v538, 2
      %v1371 = vsel %vm1313, %v1369, %v1370
      %v1372 = vrot.slane %v539, 2
      %v1373 = vsel %vm1313, %v1370, %v1372
      %v1374 = vrot.slane %v540, 2
      %v1375 = vrot.slane %v541, 2
      %v1376 = vsel %vm1313, %v1374, %v1375
      %v1377 = vrot.slane %v542, 2
      %v1378 = vsel %vm1313, %v1375, %v1377
      %v1379 = vrot.slane %v543, 2
      %v1380 = vrot.slane %v544, 2
      %v1381 = vsel %vm1313, %v1379, %v1380
      %v1382 = vrot.slane %v545, 2
      %v1383 = vsel %vm1313, %v1380, %v1382
      %v1384 = vrot.slane %v546, 2
      %v1385 = vrot.slane %v547, 2
      %v1386 = vsel %vm1313, %v1384, %v1385
      %v1387 = vrot.slane %v548, 2
      %v1388 = vsel %vm1313, %v1385, %v1387
      %v1389 = vrot.slane %v549, 2
      %v1390 = vrot.slane %v550, 2
      %v1391 = vsel %vm1313, %v1389, %v1390
      %v1392 = vrot.slane %v551, 2
      %v1393 = vsel %vm1313, %v1390, %v1392
      %v1394 = vsel %vm727, %v1316, 0
      %v1396 = vsel %vm727, %v1318, 0
      %v1398 = vsel %vm727, %v1321, 0
      %v1400 = vsel %vm727, %v1323, 0
      %v1402 = vsel %vm727, %v1326, 0
      %v1404 = vsel %vm727, %v1328, 0
      %v1406 = vsel %vm727, %v1331, 0
      %v1408 = vsel %vm727, %v1333, 0
      %v1410 = vsel %vm727, %v1336, 0
      %v1412 = vsel %vm727, %v1338, 0
      %v1414 = vsel %vm727, %v1341, 0
      %v1416 = vsel %vm727, %v1343, 0
      %v1418 = vsel %vm727, %v1346, 0
      %v1420 = vsel %vm727, %v1348, 0
      %v1422 = vsel %vm727, %v1351, 0
      %v1424 = vsel %vm727, %v1353, 0
      %v1426 = vsel %vm727, %v1356, 0
      %v1428 = vsel %vm727, %v1358, 0
      %v1430 = vsel %vm727, %v1361, 0
      %v1432 = vsel %vm727, %v1363, 0
      %v1434 = vsel %vm727, %v1366, 0
      %v1436 = vsel %vm727, %v1368, 0
      %v1438 = vsel %vm727, %v1371, 0
      %v1440 = vsel %vm727, %v1373, 0
      %v1442 = vsel %vm727, %v1376, 0
      %v1444 = vsel %vm727, %v1378, 0
      %v1446 = vsel %vm727, %v1381, 0
      %v1448 = vsel %vm727, %v1383, 0
      %v1450 = vsel %vm727, %v1386, 0
      %v1452 = vsel %vm727, %v1388, 0
      %v1454 = vsel %vm727, %v1391, 0
      %v1456 = vsel %vm727, %v1393, 0
      %v1459 = vsel %vm792, %v486, 0
      %1461 = vmatprep.subr.mxu0 0.0
      %1462 = vmatpush1.msra.mxu0 0.0
      %1463 = vmatprep.subr.mxu0 0.0
      %1464 = vmatpush1.msra.mxu0 0.0
      %1465 = vmatprep.subr.mxu0 0.0
      %1466 = vmatpush1.msra.mxu0 0.0
      %1467 = vmatprep.subr.mxu0 0.0
      %1468 = vmatpush1.msra.mxu0 0.0
      %1469 = vmatprep.subr.mxu0 0.0
      %1470 = vmatpush1.msra.mxu0 0.0
      %1471 = vmatprep.subr.mxu0 0.0
      %1472 = vmatpush1.msra.mxu0 0.0
      %1473 = vmatprep.subr.mxu0 0.0
      %1474 = vmatpush1.msra.mxu0 0.0
      %1475 = vmatprep.subr.mxu0 0.0
      %1476 = vmatpush1.msra.mxu0 0.0
      %1477 = vmatprep.subr.mxu0 0.0
      %1478 = vmatpush1.msra.mxu0 0.0
      %1479 = vmatprep.subr.mxu0 0.0
      %1480 = vmatpush1.msra.mxu0 0.0
      %1481 = vmatprep.subr.mxu0 0.0
      %1482 = vmatpush1.msra.mxu0 0.0
      %1483 = vmatprep.subr.mxu0 0.0
      %1484 = vmatpush1.msra.mxu0 0.0
      %1485 = vmatprep.subr.mxu0 0.0
      %1486 = vmatpush1.msra.mxu0 0.0
      %1487 = vmatprep.subr.mxu0 0.0
      %1488 = vmatpush1.msra.mxu0 0.0
      %1489 = vmatprep.subr.mxu0 0.0
      %1490 = vmatpush1.msra.mxu0 0.0
      %1491 = vmatprep.subr.mxu0 0.0
      %1492 = vmatpush1.msra.mxu0 %v1459
      %1493 = vmatprep.subr.mxu0 0.0
      %1494 = vmatpush2.msra.mxu0 0.0
      %1495 = vmatprep.subr.mxu0 0.0
      %1496 = vmatpush2.msra.mxu0 0.0
      %1497 = vmatprep.subr.mxu0 0.0
      %1498 = vmatpush2.msra.mxu0 0.0
      %1499 = vmatprep.subr.mxu0 0.0
      %1500 = vmatpush2.msra.mxu0 0.0
      %1501 = vmatprep.subr.mxu0 0.0
      %1502 = vmatpush2.msra.mxu0 0.0
      %1503 = vmatprep.subr.mxu0 0.0
      %1504 = vmatpush2.msra.mxu0 0.0
      %1505 = vmatprep.subr.mxu0 0.0
      %1506 = vmatpush2.msra.mxu0 0.0
      %1507 = vmatprep.subr.mxu0 0.0
      %1508 = vmatpush2.msra.mxu0 0.0
      %1509 = vmatprep.subr.mxu0 0.0
      %1510 = vmatpush2.msra.mxu0 0.0
      %1511 = vmatprep.subr.mxu0 0.0
      %1512 = vmatpush2.msra.mxu0 0.0
      %1513 = vmatprep.subr.mxu0 0.0
      %1514 = vmatpush2.msra.mxu0 0.0
      %1515 = vmatprep.subr.mxu0 0.0
      %1516 = vmatpush2.msra.mxu0 0.0
      %1517 = vmatprep.subr.mxu0 0.0
      %1518 = vmatpush2.msra.mxu0 0.0
      %1519 = vmatprep.subr.mxu0 0.0
      %1520 = vmatpush2.msra.mxu0 0.0
      %1521 = vmatprep.subr.mxu0 0.0
      %1522 = vmatpush2.msra.mxu0 0.0
      %1523 = vmatprep.subr.mxu0 0.0
      %1524 = vmatpush2.msra.mxu0 0.0
      %1525 = vmatprep.mubr.f32.mxu0 0.0
      %1526 = vmatmul.mubr.f32.gmra.mxu0 %v1394
      %v1527 = vpop.f32.mrf.mxu0
      %v1528 = vadd.f32 0.0, %v1527
      %v1529 = vpop.f32.mrf.mxu0
      %1530 = vmatprep.mubr.f32.mxu0 0.0
      %1531 = vmatmul.mubr.f32.gmra.mxu0 %v1396
      %v1532 = vpop.f32.mrf.mxu0
      %v1533 = vadd.f32 0.0, %v1532
      %v1534 = vpop.f32.mrf.mxu0
      %1535 = vmatprep.mubr.f32.mxu0 0.0
      %1536 = vmatmul.mubr.f32.gmra.mxu0 %v1398
      %v1537 = vpop.f32.mrf.mxu0
      %v1538 = vadd.f32 0.0, %v1537
      %v1539 = vpop.f32.mrf.mxu0
      %1540 = vmatprep.mubr.f32.mxu0 0.0
      %1541 = vmatmul.mubr.f32.gmra.mxu0 %v1400
      %v1542 = vpop.f32.mrf.mxu0
      %v1543 = vadd.f32 0.0, %v1542
      %v1544 = vpop.f32.mrf.mxu0
      %1545 = vmatprep.mubr.f32.mxu0 0.0
      %1546 = vmatmul.mubr.f32.gmra.mxu0 %v1402
      %v1547 = vpop.f32.mrf.mxu0
      %v1548 = vadd.f32 0.0, %v1547
      %v1549 = vpop.f32.mrf.mxu0
      %1550 = vmatprep.mubr.f32.mxu0 0.0
      %1551 = vmatmul.mubr.f32.gmra.mxu0 %v1404
      %v1552 = vpop.f32.mrf.mxu0
      %v1553 = vadd.f32 0.0, %v1552
      %v1554 = vpop.f32.mrf.mxu0
      %1555 = vmatprep.mubr.f32.mxu0 0.0
      %1556 = vmatmul.mubr.f32.gmra.mxu0 %v1406
      %v1557 = vpop.f32.mrf.mxu0
      %v1558 = vadd.f32 0.0, %v1557
      %v1559 = vpop.f32.mrf.mxu0
      %1560 = vmatprep.mubr.f32.mxu0 0.0
      %1561 = vmatmul.mubr.f32.gmra.mxu0 %v1408
      %v1562 = vpop.f32.mrf.mxu0
      %v1563 = vadd.f32 0.0, %v1562
      %v1564 = vpop.f32.mrf.mxu0
      %1565 = vmatprep.mubr.f32.mxu0 0.0
      %1566 = vmatmul.mubr.f32.gmra.mxu0 %v1410
      %v1567 = vpop.f32.mrf.mxu0
      %v1568 = vadd.f32 0.0, %v1567
      %v1569 = vpop.f32.mrf.mxu0
      %1570 = vmatprep.mubr.f32.mxu0 0.0
      %1571 = vmatmul.mubr.f32.gmra.mxu0 %v1412
      %v1572 = vpop.f32.mrf.mxu0
      %v1573 = vadd.f32 0.0, %v1572
      %v1574 = vpop.f32.mrf.mxu0
      %1575 = vmatprep.mubr.f32.mxu0 0.0
      %1576 = vmatmul.mubr.f32.gmra.mxu0 %v1414
      %v1577 = vpop.f32.mrf.mxu0
      %v1578 = vadd.f32 0.0, %v1577
      %v1579 = vpop.f32.mrf.mxu0
      %1580 = vmatprep.mubr.f32.mxu0 0.0
      %1581 = vmatmul.mubr.f32.gmra.mxu0 %v1416
      %v1582 = vpop.f32.mrf.mxu0
      %v1583 = vadd.f32 0.0, %v1582
      %v1584 = vpop.f32.mrf.mxu0
      %1585 = vmatprep.mubr.f32.mxu0 0.0
      %1586 = vmatmul.mubr.f32.gmra.mxu0 %v1418
      %v1587 = vpop.f32.mrf.mxu0
      %v1588 = vadd.f32 0.0, %v1587
      %v1589 = vpop.f32.mrf.mxu0
      %1590 = vmatprep.mubr.f32.mxu0 0.0
      %1591 = vmatmul.mubr.f32.gmra.mxu0 %v1420
      %v1592 = vpop.f32.mrf.mxu0
      %v1593 = vadd.f32 0.0, %v1592
      %v1594 = vpop.f32.mrf.mxu0
      %1595 = vmatprep.mubr.f32.mxu0 0.0
      %1596 = vmatmul.mubr.f32.gmra.mxu0 %v1422
      %v1597 = vpop.f32.mrf.mxu0
      %v1598 = vadd.f32 0.0, %v1597
      %v1599 = vpop.f32.mrf.mxu0
      %1600 = vmatprep.mubr.f32.mxu0 0.0
      %1601 = vmatmul.mubr.f32.gmra.mxu0 %v1424
      %v1602 = vpop.f32.mrf.mxu0
      %v1603 = vadd.f32 0.0, %v1602
      %v1604 = vpop.f32.mrf.mxu0
      %1605 = vmatprep.mubr.f32.mxu0 0.0
      %1606 = vmatmul.mubr.f32.gmra.mxu0 %v1426
      %v1607 = vpop.f32.mrf.mxu0
      %v1608 = vadd.f32 0.0, %v1607
      %v1609 = vpop.f32.mrf.mxu0
      %1610 = vmatprep.mubr.f32.mxu0 0.0
      %1611 = vmatmul.mubr.f32.gmra.mxu0 %v1428
      %v1612 = vpop.f32.mrf.mxu0
      %v1613 = vadd.f32 0.0, %v1612
      %v1614 = vpop.f32.mrf.mxu0
      %1615 = vmatprep.mubr.f32.mxu0 0.0
      %1616 = vmatmul.mubr.f32.gmra.mxu0 %v1430
      %v1617 = vpop.f32.mrf.mxu0
      %v1618 = vadd.f32 0.0, %v1617
      %v1619 = vpop.f32.mrf.mxu0
      %1620 = vmatprep.mubr.f32.mxu0 0.0
      %1621 = vmatmul.mubr.f32.gmra.mxu0 %v1432
      %v1622 = vpop.f32.mrf.mxu0
      %v1623 = vadd.f32 0.0, %v1622
      %v1624 = vpop.f32.mrf.mxu0
      %1625 = vmatprep.mubr.f32.mxu0 0.0
      %1626 = vmatmul.mubr.f32.gmra.mxu0 %v1434
      %v1627 = vpop.f32.mrf.mxu0
      %v1628 = vadd.f32 0.0, %v1627
      %v1629 = vpop.f32.mrf.mxu0
      %1630 = vmatprep.mubr.f32.mxu0 0.0
      %1631 = vmatmul.mubr.f32.gmra.mxu0 %v1436
      %v1632 = vpop.f32.mrf.mxu0
      %v1633 = vadd.f32 0.0, %v1632
      %v1634 = vpop.f32.mrf.mxu0
      %1635 = vmatprep.mubr.f32.mxu0 0.0
      %1636 = vmatmul.mubr.f32.gmra.mxu0 %v1438
      %v1637 = vpop.f32.mrf.mxu0
      %v1638 = vadd.f32 0.0, %v1637
      %v1639 = vpop.f32.mrf.mxu0
      %1640 = vmatprep.mubr.f32.mxu0 0.0
      %1641 = vmatmul.mubr.f32.gmra.mxu0 %v1440
      %v1642 = vpop.f32.mrf.mxu0
      %v1643 = vadd.f32 0.0, %v1642
      %v1644 = vpop.f32.mrf.mxu0
      %1645 = vmatprep.mubr.f32.mxu0 0.0
      %1646 = vmatmul.mubr.f32.gmra.mxu0 %v1442
      %v1647 = vpop.f32.mrf.mxu0
      %v1648 = vadd.f32 0.0, %v1647
      %v1649 = vpop.f32.mrf.mxu0
      %1650 = vmatprep.mubr.f32.mxu0 0.0
      %1651 = vmatmul.mubr.f32.gmra.mxu0 %v1444
      %v1652 = vpop.f32.mrf.mxu0
      %v1653 = vadd.f32 0.0, %v1652
      %v1654 = vpop.f32.mrf.mxu0
      %1655 = vmatprep.mubr.f32.mxu0 0.0
      %1656 = vmatmul.mubr.f32.gmra.mxu0 %v1446
      %v1657 = vpop.f32.mrf.mxu0
      %v1658 = vadd.f32 0.0, %v1657
      %v1659 = vpop.f32.mrf.mxu0
      %1660 = vmatprep.mubr.f32.mxu0 0.0
      %1661 = vmatmul.mubr.f32.gmra.mxu0 %v1448
      %v1662 = vpop.f32.mrf.mxu0
      %v1663 = vadd.f32 0.0, %v1662
      %v1664 = vpop.f32.mrf.mxu0
      %1665 = vmatprep.mubr.f32.mxu0 0.0
      %1666 = vmatmul.mubr.f32.gmra.mxu0 %v1450
      %v1667 = vpop.f32.mrf.mxu0
      %v1668 = vadd.f32 0.0, %v1667
      %v1669 = vpop.f32.mrf.mxu0
      %1670 = vmatprep.mubr.f32.mxu0 0.0
      %1671 = vmatmul.mubr.f32.gmra.mxu0 %v1452
      %v1672 = vpop.f32.mrf.mxu0
      %v1673 = vadd.f32 0.0, %v1672
      %v1674 = vpop.f32.mrf.mxu0
      %1675 = vmatprep.mubr.f32.mxu0 0.0
      %1676 = vmatmul.mubr.f32.gmra.mxu0 %v1454
      %v1677 = vpop.f32.mrf.mxu0
      %v1678 = vadd.f32 0.0, %v1677
      %v1679 = vpop.f32.mrf.mxu0
      %1680 = vmatprep.mubr.f32.mxu0 0.0
      %1681 = vmatmul.mubr.f32.gmra.mxu0 %v1456
      %v1682 = vpop.f32.mrf.mxu0
      %v1683 = vadd.f32 0.0, %v1682
      %v1684 = vpop.f32.mrf.mxu0
      %1685 = vdwg.mxu0
      %v1686 = vadd.f32 %v1155, %v1528
      %v1687 = vadd.f32 %v1160, %v1533
      %v1688 = vadd.f32 %v1165, %v1538
      %v1689 = vadd.f32 %v1170, %v1543
      %v1690 = vadd.f32 %v1175, %v1548
      %v1691 = vadd.f32 %v1180, %v1553
      %v1692 = vadd.f32 %v1185, %v1558
      %v1693 = vadd.f32 %v1190, %v1563
      %v1694 = vadd.f32 %v1195, %v1568
      %v1695 = vadd.f32 %v1200, %v1573
      %v1696 = vadd.f32 %v1205, %v1578
      %v1697 = vadd.f32 %v1210, %v1583
      %v1698 = vadd.f32 %v1215, %v1588
      %v1699 = vadd.f32 %v1220, %v1593
      %v1700 = vadd.f32 %v1225, %v1598
      %v1701 = vadd.f32 %v1230, %v1603
      %v1702 = vadd.f32 %v1235, %v1608
      %v1703 = vadd.f32 %v1240, %v1613
      %v1704 = vadd.f32 %v1245, %v1618
      %v1705 = vadd.f32 %v1250, %v1623
      %v1706 = vadd.f32 %v1255, %v1628
      %v1707 = vadd.f32 %v1260, %v1633
      %v1708 = vadd.f32 %v1265, %v1638
      %v1709 = vadd.f32 %v1270, %v1643
      %v1710 = vadd.f32 %v1275, %v1648
      %v1711 = vadd.f32 %v1280, %v1653
      %v1712 = vadd.f32 %v1285, %v1658
      %v1713 = vadd.f32 %v1290, %v1663
      %v1714 = vadd.f32 %v1295, %v1668
      %v1715 = vadd.f32 %v1300, %v1673
      %v1716 = vadd.f32 %v1305, %v1678
      %v1717 = vadd.f32 %v1310, %v1683
      %v1718 = vsel %vm727, %v552, 0
      %v1720 = vsel %vm727, %v553, 0
      %v1723 = vsel %vm792, %v487, 0
      %1725 = vmatprep.subr.mxu0 0.0
      %1726 = vmatpush1.msra.mxu0 0.0
      %1727 = vmatprep.subr.mxu0 0.0
      %1728 = vmatpush1.msra.mxu0 0.0
      %1729 = vmatprep.subr.mxu0 0.0
      %1730 = vmatpush1.msra.mxu0 0.0
      %1731 = vmatprep.subr.mxu0 0.0
      %1732 = vmatpush1.msra.mxu0 0.0
      %1733 = vmatprep.subr.mxu0 0.0
      %1734 = vmatpush1.msra.mxu0 0.0
      %1735 = vmatprep.subr.mxu0 0.0
      %1736 = vmatpush1.msra.mxu0 0.0
      %1737 = vmatprep.subr.mxu0 0.0
      %1738 = vmatpush1.msra.mxu0 0.0
      %1739 = vmatprep.subr.mxu0 0.0
      %1740 = vmatpush1.msra.mxu0 0.0
      %1741 = vmatprep.subr.mxu0 0.0
      %1742 = vmatpush1.msra.mxu0 0.0
      %1743 = vmatprep.subr.mxu0 0.0
      %1744 = vmatpush1.msra.mxu0 0.0
      %1745 = vmatprep.subr.mxu0 0.0
      %1746 = vmatpush1.msra.mxu0 0.0
      %1747 = vmatprep.subr.mxu0 0.0
      %1748 = vmatpush1.msra.mxu0 0.0
      %1749 = vmatprep.subr.mxu0 0.0
      %1750 = vmatpush1.msra.mxu0 0.0
      %1751 = vmatprep.subr.mxu0 0.0
      %1752 = vmatpush1.msra.mxu0 0.0
      %1753 = vmatprep.subr.mxu0 0.0
      %1754 = vmatpush1.msra.mxu0 0.0
      %1755 = vmatprep.subr.mxu0 0.0
      %1756 = vmatpush1.msra.mxu0 %v1723
      %1757 = vmatprep.subr.mxu0 0.0
      %1758 = vmatpush2.msra.mxu0 0.0
      %1759 = vmatprep.subr.mxu0 0.0
      %1760 = vmatpush2.msra.mxu0 0.0
      %1761 = vmatprep.subr.mxu0 0.0
      %1762 = vmatpush2.msra.mxu0 0.0
      %1763 = vmatprep.subr.mxu0 0.0
      %1764 = vmatpush2.msra.mxu0 0.0
      %1765 = vmatprep.subr.mxu0 0.0
      %1766 = vmatpush2.msra.mxu0 0.0
      %1767 = vmatprep.subr.mxu0 0.0
      %1768 = vmatpush2.msra.mxu0 0.0
      %1769 = vmatprep.subr.mxu0 0.0
      %1770 = vmatpush2.msra.mxu0 0.0
      %1771 = vmatprep.subr.mxu0 0.0
      %1772 = vmatpush2.msra.mxu0 0.0
      %1773 = vmatprep.subr.mxu0 0.0
      %1774 = vmatpush2.msra.mxu0 0.0
      %1775 = vmatprep.subr.mxu0 0.0
      %1776 = vmatpush2.msra.mxu0 0.0
      %1777 = vmatprep.subr.mxu0 0.0
      %1778 = vmatpush2.msra.mxu0 0.0
      %1779 = vmatprep.subr.mxu0 0.0
      %1780 = vmatpush2.msra.mxu0 0.0
      %1781 = vmatprep.subr.mxu0 0.0
      %1782 = vmatpush2.msra.mxu0 0.0
      %1783 = vmatprep.subr.mxu0 0.0
      %1784 = vmatpush2.msra.mxu0 0.0
      %1785 = vmatprep.subr.mxu0 0.0
      %1786 = vmatpush2.msra.mxu0 0.0
      %1787 = vmatprep.subr.mxu0 0.0
      %1788 = vmatpush2.msra.mxu0 0.0
      %1789 = vmatprep.mubr.f32.mxu0 0.0
      %1790 = vmatmul.mubr.f32.gmra.mxu0 %v1025
      %v1791 = vpop.f32.mrf.mxu0
      %v1792 = vadd.f32 0.0, %v1791
      %v1793 = vpop.f32.mrf.mxu0
      %1794 = vmatprep.mubr.f32.mxu0 0.0
      %1795 = vmatmul.mubr.f32.gmra.mxu0 %v1027
      %v1796 = vpop.f32.mrf.mxu0
      %v1797 = vadd.f32 0.0, %v1796
      %v1798 = vpop.f32.mrf.mxu0
      %1799 = vmatprep.mubr.f32.mxu0 0.0
      %1800 = vmatmul.mubr.f32.gmra.mxu0 %v1029
      %v1801 = vpop.f32.mrf.mxu0
      %v1802 = vadd.f32 0.0, %v1801
      %v1803 = vpop.f32.mrf.mxu0
      %1804 = vmatprep.mubr.f32.mxu0 0.0
      %1805 = vmatmul.mubr.f32.gmra.mxu0 %v1031
      %v1806 = vpop.f32.mrf.mxu0
      %v1807 = vadd.f32 0.0, %v1806
      %v1808 = vpop.f32.mrf.mxu0
      %1809 = vmatprep.mubr.f32.mxu0 0.0
      %1810 = vmatmul.mubr.f32.gmra.mxu0 %v1033
      %v1811 = vpop.f32.mrf.mxu0
      %v1812 = vadd.f32 0.0, %v1811
      %v1813 = vpop.f32.mrf.mxu0
      %1814 = vmatprep.mubr.f32.mxu0 0.0
      %1815 = vmatmul.mubr.f32.gmra.mxu0 %v1035
      %v1816 = vpop.f32.mrf.mxu0
      %v1817 = vadd.f32 0.0, %v1816
      %v1818 = vpop.f32.mrf.mxu0
      %1819 = vmatprep.mubr.f32.mxu0 0.0
      %1820 = vmatmul.mubr.f32.gmra.mxu0 %v1037
      %v1821 = vpop.f32.mrf.mxu0
      %v1822 = vadd.f32 0.0, %v1821
      %v1823 = vpop.f32.mrf.mxu0
      %1824 = vmatprep.mubr.f32.mxu0 0.0
      %1825 = vmatmul.mubr.f32.gmra.mxu0 %v1039
      %v1826 = vpop.f32.mrf.mxu0
      %v1827 = vadd.f32 0.0, %v1826
      %v1828 = vpop.f32.mrf.mxu0
      %1829 = vmatprep.mubr.f32.mxu0 0.0
      %1830 = vmatmul.mubr.f32.gmra.mxu0 %v1041
      %v1831 = vpop.f32.mrf.mxu0
      %v1832 = vadd.f32 0.0, %v1831
      %v1833 = vpop.f32.mrf.mxu0
      %1834 = vmatprep.mubr.f32.mxu0 0.0
      %1835 = vmatmul.mubr.f32.gmra.mxu0 %v1043
      %v1836 = vpop.f32.mrf.mxu0
      %v1837 = vadd.f32 0.0, %v1836
      %v1838 = vpop.f32.mrf.mxu0
      %1839 = vmatprep.mubr.f32.mxu0 0.0
      %1840 = vmatmul.mubr.f32.gmra.mxu0 %v1045
      %v1841 = vpop.f32.mrf.mxu0
      %v1842 = vadd.f32 0.0, %v1841
      %v1843 = vpop.f32.mrf.mxu0
      %1844 = vmatprep.mubr.f32.mxu0 0.0
      %1845 = vmatmul.mubr.f32.gmra.mxu0 %v1047
      %v1846 = vpop.f32.mrf.mxu0
      %v1847 = vadd.f32 0.0, %v1846
      %v1848 = vpop.f32.mrf.mxu0
      %1849 = vmatprep.mubr.f32.mxu0 0.0
      %1850 = vmatmul.mubr.f32.gmra.mxu0 %v1049
      %v1851 = vpop.f32.mrf.mxu0
      %v1852 = vadd.f32 0.0, %v1851
      %v1853 = vpop.f32.mrf.mxu0
      %1854 = vmatprep.mubr.f32.mxu0 0.0
      %1855 = vmatmul.mubr.f32.gmra.mxu0 %v1051
      %v1856 = vpop.f32.mrf.mxu0
      %v1857 = vadd.f32 0.0, %v1856
      %v1858 = vpop.f32.mrf.mxu0
      %1859 = vmatprep.mubr.f32.mxu0 0.0
      %1860 = vmatmul.mubr.f32.gmra.mxu0 %v1053
      %v1861 = vpop.f32.mrf.mxu0
      %v1862 = vadd.f32 0.0, %v1861
      %v1863 = vpop.f32.mrf.mxu0
      %1864 = vmatprep.mubr.f32.mxu0 0.0
      %1865 = vmatmul.mubr.f32.gmra.mxu0 %v1055
      %v1866 = vpop.f32.mrf.mxu0
      %v1867 = vadd.f32 0.0, %v1866
      %v1868 = vpop.f32.mrf.mxu0
      %1869 = vmatprep.mubr.f32.mxu0 0.0
      %1870 = vmatmul.mubr.f32.gmra.mxu0 %v1057
      %v1871 = vpop.f32.mrf.mxu0
      %v1872 = vadd.f32 0.0, %v1871
      %v1873 = vpop.f32.mrf.mxu0
      %1874 = vmatprep.mubr.f32.mxu0 0.0
      %1875 = vmatmul.mubr.f32.gmra.mxu0 %v1059
      %v1876 = vpop.f32.mrf.mxu0
      %v1877 = vadd.f32 0.0, %v1876
      %v1878 = vpop.f32.mrf.mxu0
      %1879 = vmatprep.mubr.f32.mxu0 0.0
      %1880 = vmatmul.mubr.f32.gmra.mxu0 %v1061
      %v1881 = vpop.f32.mrf.mxu0
      %v1882 = vadd.f32 0.0, %v1881
      %v1883 = vpop.f32.mrf.mxu0
      %1884 = vmatprep.mubr.f32.mxu0 0.0
      %1885 = vmatmul.mubr.f32.gmra.mxu0 %v1063
      %v1886 = vpop.f32.mrf.mxu0
      %v1887 = vadd.f32 0.0, %v1886
      %v1888 = vpop.f32.mrf.mxu0
      %1889 = vmatprep.mubr.f32.mxu0 0.0
      %1890 = vmatmul.mubr.f32.gmra.mxu0 %v1065
      %v1891 = vpop.f32.mrf.mxu0
      %v1892 = vadd.f32 0.0, %v1891
      %v1893 = vpop.f32.mrf.mxu0
      %1894 = vmatprep.mubr.f32.mxu0 0.0
      %1895 = vmatmul.mubr.f32.gmra.mxu0 %v1067
      %v1896 = vpop.f32.mrf.mxu0
      %v1897 = vadd.f32 0.0, %v1896
      %v1898 = vpop.f32.mrf.mxu0
      %1899 = vmatprep.mubr.f32.mxu0 0.0
      %1900 = vmatmul.mubr.f32.gmra.mxu0 %v1069
      %v1901 = vpop.f32.mrf.mxu0
      %v1902 = vadd.f32 0.0, %v1901
      %v1903 = vpop.f32.mrf.mxu0
      %1904 = vmatprep.mubr.f32.mxu0 0.0
      %1905 = vmatmul.mubr.f32.gmra.mxu0 %v1071
      %v1906 = vpop.f32.mrf.mxu0
      %v1907 = vadd.f32 0.0, %v1906
      %v1908 = vpop.f32.mrf.mxu0
      %1909 = vmatprep.mubr.f32.mxu0 0.0
      %1910 = vmatmul.mubr.f32.gmra.mxu0 %v1073
      %v1911 = vpop.f32.mrf.mxu0
      %v1912 = vadd.f32 0.0, %v1911
      %v1913 = vpop.f32.mrf.mxu0
      %1914 = vmatprep.mubr.f32.mxu0 0.0
      %1915 = vmatmul.mubr.f32.gmra.mxu0 %v1075
      %v1916 = vpop.f32.mrf.mxu0
      %v1917 = vadd.f32 0.0, %v1916
      %v1918 = vpop.f32.mrf.mxu0
      %1919 = vmatprep.mubr.f32.mxu0 0.0
      %1920 = vmatmul.mubr.f32.gmra.mxu0 %v1077
      %v1921 = vpop.f32.mrf.mxu0
      %v1922 = vadd.f32 0.0, %v1921
      %v1923 = vpop.f32.mrf.mxu0
      %1924 = vmatprep.mubr.f32.mxu0 0.0
      %1925 = vmatmul.mubr.f32.gmra.mxu0 %v1079
      %v1926 = vpop.f32.mrf.mxu0
      %v1927 = vadd.f32 0.0, %v1926
      %v1928 = vpop.f32.mrf.mxu0
      %1929 = vmatprep.mubr.f32.mxu0 0.0
      %1930 = vmatmul.mubr.f32.gmra.mxu0 %v1081
      %v1931 = vpop.f32.mrf.mxu0
      %v1932 = vadd.f32 0.0, %v1931
      %v1933 = vpop.f32.mrf.mxu0
      %1934 = vmatprep.mubr.f32.mxu0 0.0
      %1935 = vmatmul.mubr.f32.gmra.mxu0 %v1083
      %v1936 = vpop.f32.mrf.mxu0
      %v1937 = vadd.f32 0.0, %v1936
      %v1938 = vpop.f32.mrf.mxu0
      %1939 = vmatprep.mubr.f32.mxu0 0.0
      %1940 = vmatmul.mubr.f32.gmra.mxu0 %v1718
      %v1941 = vpop.f32.mrf.mxu0
      %v1942 = vadd.f32 0.0, %v1941
      %v1943 = vpop.f32.mrf.mxu0
      %1944 = vmatprep.mubr.f32.mxu0 0.0
      %1945 = vmatmul.mubr.f32.gmra.mxu0 %v1720
      %v1946 = vpop.f32.mrf.mxu0
      %v1947 = vadd.f32 0.0, %v1946
      %v1948 = vpop.f32.mrf.mxu0
      %1949 = vdwg.mxu0
      %v1950 = vadd.f32 %v1686, %v1792
      %v1951 = vadd.f32 %v1687, %v1797
      %v1952 = vadd.f32 %v1688, %v1802
      %v1953 = vadd.f32 %v1689, %v1807
      %v1954 = vadd.f32 %v1690, %v1812
      %v1955 = vadd.f32 %v1691, %v1817
      %v1956 = vadd.f32 %v1692, %v1822
      %v1957 = vadd.f32 %v1693, %v1827
      %v1958 = vadd.f32 %v1694, %v1832
      %v1959 = vadd.f32 %v1695, %v1837
      %v1960 = vadd.f32 %v1696, %v1842
      %v1961 = vadd.f32 %v1697, %v1847
      %v1962 = vadd.f32 %v1698, %v1852
      %v1963 = vadd.f32 %v1699, %v1857
      %v1964 = vadd.f32 %v1700, %v1862
      %v1965 = vadd.f32 %v1701, %v1867
      %v1966 = vadd.f32 %v1702, %v1872
      %v1967 = vadd.f32 %v1703, %v1877
      %v1968 = vadd.f32 %v1704, %v1882
      %v1969 = vadd.f32 %v1705, %v1887
      %v1970 = vadd.f32 %v1706, %v1892
      %v1971 = vadd.f32 %v1707, %v1897
      %v1972 = vadd.f32 %v1708, %v1902
      %v1973 = vadd.f32 %v1709, %v1907
      %v1974 = vadd.f32 %v1710, %v1912
      %v1975 = vadd.f32 %v1711, %v1917
      %v1976 = vadd.f32 %v1712, %v1922
      %v1977 = vadd.f32 %v1713, %v1927
      %v1978 = vadd.f32 %v1714, %v1932
      %v1979 = vadd.f32 %v1715, %v1937
      %v1980 = vadd.f32 %v1716, %v1942
      %v1981 = vadd.f32 %v1717, %v1947
      %v1982 = vsel %vm727, %v684, 0
      %v1984 = vsel %vm727, %v686, 0
      %v1987 = vsel %vm792, %v488, 0
      %1989 = vmatprep.subr.mxu0 0.0
      %1990 = vmatpush1.msra.mxu0 0.0
      %1991 = vmatprep.subr.mxu0 0.0
      %1992 = vmatpush1.msra.mxu0 0.0
      %1993 = vmatprep.subr.mxu0 0.0
      %1994 = vmatpush1.msra.mxu0 0.0
      %1995 = vmatprep.subr.mxu0 0.0
      %1996 = vmatpush1.msra.mxu0 0.0
      %1997 = vmatprep.subr.mxu0 0.0
      %1998 = vmatpush1.msra.mxu0 0.0
      %1999 = vmatprep.subr.mxu0 0.0
      %2000 = vmatpush1.msra.mxu0 0.0
      %2001 = vmatprep.subr.mxu0 0.0
      %2002 = vmatpush1.msra.mxu0 0.0
      %2003 = vmatprep.subr.mxu0 0.0
      %2004 = vmatpush1.msra.mxu0 0.0
      %2005 = vmatprep.subr.mxu0 0.0
      %2006 = vmatpush1.msra.mxu0 0.0
      %2007 = vmatprep.subr.mxu0 0.0
      %2008 = vmatpush1.msra.mxu0 0.0
      %2009 = vmatprep.subr.mxu0 0.0
      %2010 = vmatpush1.msra.mxu0 0.0
      %2011 = vmatprep.subr.mxu0 0.0
      %2012 = vmatpush1.msra.mxu0 0.0
      %2013 = vmatprep.subr.mxu0 0.0
      %2014 = vmatpush1.msra.mxu0 0.0
      %2015 = vmatprep.subr.mxu0 0.0
      %2016 = vmatpush1.msra.mxu0 0.0
      %2017 = vmatprep.subr.mxu0 0.0
      %2018 = vmatpush1.msra.mxu0 0.0
      %2019 = vmatprep.subr.mxu0 0.0
      %2020 = vmatpush1.msra.mxu0 %v1987
      %2021 = vmatprep.subr.mxu0 0.0
      %2022 = vmatpush2.msra.mxu0 0.0
      %2023 = vmatprep.subr.mxu0 0.0
      %2024 = vmatpush2.msra.mxu0 0.0
      %2025 = vmatprep.subr.mxu0 0.0
      %2026 = vmatpush2.msra.mxu0 0.0
      %2027 = vmatprep.subr.mxu0 0.0
      %2028 = vmatpush2.msra.mxu0 0.0
      %2029 = vmatprep.subr.mxu0 0.0
      %2030 = vmatpush2.msra.mxu0 0.0
      %2031 = vmatprep.subr.mxu0 0.0
      %2032 = vmatpush2.msra.mxu0 0.0
      %2033 = vmatprep.subr.mxu0 0.0
      %2034 = vmatpush2.msra.mxu0 0.0
      %2035 = vmatprep.subr.mxu0 0.0
      %2036 = vmatpush2.msra.mxu0 0.0
      %2037 = vmatprep.subr.mxu0 0.0
      %2038 = vmatpush2.msra.mxu0 0.0
      %2039 = vmatprep.subr.mxu0 0.0
      %2040 = vmatpush2.msra.mxu0 0.0
      %2041 = vmatprep.subr.mxu0 0.0
      %2042 = vmatpush2.msra.mxu0 0.0
      %2043 = vmatprep.subr.mxu0 0.0
      %2044 = vmatpush2.msra.mxu0 0.0
      %2045 = vmatprep.subr.mxu0 0.0
      %2046 = vmatpush2.msra.mxu0 0.0
      %2047 = vmatprep.subr.mxu0 0.0
      %2048 = vmatpush2.msra.mxu0 0.0
      %2049 = vmatprep.subr.mxu0 0.0
      %2050 = vmatpush2.msra.mxu0 0.0
      %2051 = vmatprep.subr.mxu0 0.0
      %2052 = vmatpush2.msra.mxu0 0.0
      %2053 = vmatprep.mubr.f32.mxu0 0.0
      %2054 = vmatmul.mubr.f32.gmra.mxu0 %v732
      %v2055 = vpop.f32.mrf.mxu0
      %v2056 = vadd.f32 0.0, %v2055
      %v2057 = vpop.f32.mrf.mxu0
      %2058 = vmatprep.mubr.f32.mxu0 0.0
      %2059 = vmatmul.mubr.f32.gmra.mxu0 %v734
      %v2060 = vpop.f32.mrf.mxu0
      %v2061 = vadd.f32 0.0, %v2060
      %v2062 = vpop.f32.mrf.mxu0
      %2063 = vmatprep.mubr.f32.mxu0 0.0
      %2064 = vmatmul.mubr.f32.gmra.mxu0 %v736
      %v2065 = vpop.f32.mrf.mxu0
      %v2066 = vadd.f32 0.0, %v2065
      %v2067 = vpop.f32.mrf.mxu0
      %2068 = vmatprep.mubr.f32.mxu0 0.0
      %2069 = vmatmul.mubr.f32.gmra.mxu0 %v738
      %v2070 = vpop.f32.mrf.mxu0
      %v2071 = vadd.f32 0.0, %v2070
      %v2072 = vpop.f32.mrf.mxu0
      %2073 = vmatprep.mubr.f32.mxu0 0.0
      %2074 = vmatmul.mubr.f32.gmra.mxu0 %v740
      %v2075 = vpop.f32.mrf.mxu0
      %v2076 = vadd.f32 0.0, %v2075
      %v2077 = vpop.f32.mrf.mxu0
      %2078 = vmatprep.mubr.f32.mxu0 0.0
      %2079 = vmatmul.mubr.f32.gmra.mxu0 %v742
      %v2080 = vpop.f32.mrf.mxu0
      %v2081 = vadd.f32 0.0, %v2080
      %v2082 = vpop.f32.mrf.mxu0
      %2083 = vmatprep.mubr.f32.mxu0 0.0
      %2084 = vmatmul.mubr.f32.gmra.mxu0 %v744
      %v2085 = vpop.f32.mrf.mxu0
      %v2086 = vadd.f32 0.0, %v2085
      %v2087 = vpop.f32.mrf.mxu0
      %2088 = vmatprep.mubr.f32.mxu0 0.0
      %2089 = vmatmul.mubr.f32.gmra.mxu0 %v746
      %v2090 = vpop.f32.mrf.mxu0
      %v2091 = vadd.f32 0.0, %v2090
      %v2092 = vpop.f32.mrf.mxu0
      %2093 = vmatprep.mubr.f32.mxu0 0.0
      %2094 = vmatmul.mubr.f32.gmra.mxu0 %v748
      %v2095 = vpop.f32.mrf.mxu0
      %v2096 = vadd.f32 0.0, %v2095
      %v2097 = vpop.f32.mrf.mxu0
      %2098 = vmatprep.mubr.f32.mxu0 0.0
      %2099 = vmatmul.mubr.f32.gmra.mxu0 %v750
      %v2100 = vpop.f32.mrf.mxu0
      %v2101 = vadd.f32 0.0, %v2100
      %v2102 = vpop.f32.mrf.mxu0
      %2103 = vmatprep.mubr.f32.mxu0 0.0
      %2104 = vmatmul.mubr.f32.gmra.mxu0 %v752
      %v2105 = vpop.f32.mrf.mxu0
      %v2106 = vadd.f32 0.0, %v2105
      %v2107 = vpop.f32.mrf.mxu0
      %2108 = vmatprep.mubr.f32.mxu0 0.0
      %2109 = vmatmul.mubr.f32.gmra.mxu0 %v754
      %v2110 = vpop.f32.mrf.mxu0
      %v2111 = vadd.f32 0.0, %v2110
      %v2112 = vpop.f32.mrf.mxu0
      %2113 = vmatprep.mubr.f32.mxu0 0.0
      %2114 = vmatmul.mubr.f32.gmra.mxu0 %v756
      %v2115 = vpop.f32.mrf.mxu0
      %v2116 = vadd.f32 0.0, %v2115
      %v2117 = vpop.f32.mrf.mxu0
      %2118 = vmatprep.mubr.f32.mxu0 0.0
      %2119 = vmatmul.mubr.f32.gmra.mxu0 %v758
      %v2120 = vpop.f32.mrf.mxu0
      %v2121 = vadd.f32 0.0, %v2120
      %v2122 = vpop.f32.mrf.mxu0
      %2123 = vmatprep.mubr.f32.mxu0 0.0
      %2124 = vmatmul.mubr.f32.gmra.mxu0 %v760
      %v2125 = vpop.f32.mrf.mxu0
      %v2126 = vadd.f32 0.0, %v2125
      %v2127 = vpop.f32.mrf.mxu0
      %2128 = vmatprep.mubr.f32.mxu0 0.0
      %2129 = vmatmul.mubr.f32.gmra.mxu0 %v762
      %v2130 = vpop.f32.mrf.mxu0
      %v2131 = vadd.f32 0.0, %v2130
      %v2132 = vpop.f32.mrf.mxu0
      %2133 = vmatprep.mubr.f32.mxu0 0.0
      %2134 = vmatmul.mubr.f32.gmra.mxu0 %v764
      %v2135 = vpop.f32.mrf.mxu0
      %v2136 = vadd.f32 0.0, %v2135
      %v2137 = vpop.f32.mrf.mxu0
      %2138 = vmatprep.mubr.f32.mxu0 0.0
      %2139 = vmatmul.mubr.f32.gmra.mxu0 %v766
      %v2140 = vpop.f32.mrf.mxu0
      %v2141 = vadd.f32 0.0, %v2140
      %v2142 = vpop.f32.mrf.mxu0
      %2143 = vmatprep.mubr.f32.mxu0 0.0
      %2144 = vmatmul.mubr.f32.gmra.mxu0 %v768
      %v2145 = vpop.f32.mrf.mxu0
      %v2146 = vadd.f32 0.0, %v2145
      %v2147 = vpop.f32.mrf.mxu0
      %2148 = vmatprep.mubr.f32.mxu0 0.0
      %2149 = vmatmul.mubr.f32.gmra.mxu0 %v770
      %v2150 = vpop.f32.mrf.mxu0
      %v2151 = vadd.f32 0.0, %v2150
      %v2152 = vpop.f32.mrf.mxu0
      %2153 = vmatprep.mubr.f32.mxu0 0.0
      %2154 = vmatmul.mubr.f32.gmra.mxu0 %v772
      %v2155 = vpop.f32.mrf.mxu0
      %v2156 = vadd.f32 0.0, %v2155
      %v2157 = vpop.f32.mrf.mxu0
      %2158 = vmatprep.mubr.f32.mxu0 0.0
      %2159 = vmatmul.mubr.f32.gmra.mxu0 %v774
      %v2160 = vpop.f32.mrf.mxu0
      %v2161 = vadd.f32 0.0, %v2160
      %v2162 = vpop.f32.mrf.mxu0
      %2163 = vmatprep.mubr.f32.mxu0 0.0
      %2164 = vmatmul.mubr.f32.gmra.mxu0 %v776
      %v2165 = vpop.f32.mrf.mxu0
      %v2166 = vadd.f32 0.0, %v2165
      %v2167 = vpop.f32.mrf.mxu0
      %2168 = vmatprep.mubr.f32.mxu0 0.0
      %2169 = vmatmul.mubr.f32.gmra.mxu0 %v778
      %v2170 = vpop.f32.mrf.mxu0
      %v2171 = vadd.f32 0.0, %v2170
      %v2172 = vpop.f32.mrf.mxu0
      %2173 = vmatprep.mubr.f32.mxu0 0.0
      %2174 = vmatmul.mubr.f32.gmra.mxu0 %v780
      %v2175 = vpop.f32.mrf.mxu0
      %v2176 = vadd.f32 0.0, %v2175
      %v2177 = vpop.f32.mrf.mxu0
      %2178 = vmatprep.mubr.f32.mxu0 0.0
      %2179 = vmatmul.mubr.f32.gmra.mxu0 %v782
      %v2180 = vpop.f32.mrf.mxu0
      %v2181 = vadd.f32 0.0, %v2180
      %v2182 = vpop.f32.mrf.mxu0
      %2183 = vmatprep.mubr.f32.mxu0 0.0
      %2184 = vmatmul.mubr.f32.gmra.mxu0 %v784
      %v2185 = vpop.f32.mrf.mxu0
      %v2186 = vadd.f32 0.0, %v2185
      %v2187 = vpop.f32.mrf.mxu0
      %2188 = vmatprep.mubr.f32.mxu0 0.0
      %2189 = vmatmul.mubr.f32.gmra.mxu0 %v786
      %v2190 = vpop.f32.mrf.mxu0
      %v2191 = vadd.f32 0.0, %v2190
      %v2192 = vpop.f32.mrf.mxu0
      %2193 = vmatprep.mubr.f32.mxu0 0.0
      %2194 = vmatmul.mubr.f32.gmra.mxu0 %v788
      %v2195 = vpop.f32.mrf.mxu0
      %v2196 = vadd.f32 0.0, %v2195
      %v2197 = vpop.f32.mrf.mxu0
      %2198 = vmatprep.mubr.f32.mxu0 0.0
      %2199 = vmatmul.mubr.f32.gmra.mxu0 %v790
      %v2200 = vpop.f32.mrf.mxu0
      %v2201 = vadd.f32 0.0, %v2200
      %v2202 = vpop.f32.mrf.mxu0
      %2203 = vmatprep.mubr.f32.mxu0 0.0
      %2204 = vmatmul.mubr.f32.gmra.mxu0 %v1982
      %v2205 = vpop.f32.mrf.mxu0
      %v2206 = vadd.f32 0.0, %v2205
      %v2207 = vpop.f32.mrf.mxu0
      %2208 = vmatprep.mubr.f32.mxu0 0.0
      %2209 = vmatmul.mubr.f32.gmra.mxu0 %v1984
      %v2210 = vpop.f32.mrf.mxu0
      %v2211 = vadd.f32 0.0, %v2210
      %v2212 = vpop.f32.mrf.mxu0
      %2213 = vdwg.mxu0
      %v2214 = vadd.f32 %v1950, %v2056
      %v2215 = vadd.f32 %v1951, %v2061
      %v2216 = vadd.f32 %v1952, %v2066
      %v2217 = vadd.f32 %v1953, %v2071
      %v2218 = vadd.f32 %v1954, %v2076
      %v2219 = vadd.f32 %v1955, %v2081
      %v2220 = vadd.f32 %v1956, %v2086
      %v2221 = vadd.f32 %v1957, %v2091
      %v2222 = vadd.f32 %v1958, %v2096
      %v2223 = vadd.f32 %v1959, %v2101
      %v2224 = vadd.f32 %v1960, %v2106
      %v2225 = vadd.f32 %v1961, %v2111
      %v2226 = vadd.f32 %v1962, %v2116
      %v2227 = vadd.f32 %v1963, %v2121
      %v2228 = vadd.f32 %v1964, %v2126
      %v2229 = vadd.f32 %v1965, %v2131
      %v2230 = vadd.f32 %v1966, %v2136
      %v2231 = vadd.f32 %v1967, %v2141
      %v2232 = vadd.f32 %v1968, %v2146
      %v2233 = vadd.f32 %v1969, %v2151
      %v2234 = vadd.f32 %v1970, %v2156
      %v2235 = vadd.f32 %v1971, %v2161
      %v2236 = vadd.f32 %v1972, %v2166
      %v2237 = vadd.f32 %v1973, %v2171
      %v2238 = vadd.f32 %v1974, %v2176
      %v2239 = vadd.f32 %v1975, %v2181
      %v2240 = vadd.f32 %v1976, %v2186
      %v2241 = vadd.f32 %v1977, %v2191
      %v2242 = vadd.f32 %v1978, %v2196
      %v2243 = vadd.f32 %v1979, %v2201
      %v2244 = vadd.f32 %v1980, %v2206
      %v2245 = vadd.f32 %v1981, %v2211
      %v2246 = vrot.slane %v552, 2
      %v2247 = vrot.slane %v553, 2
      %v2248 = vsel %vm1313, %v2246, %v2247
      %v2249 = vrot.slane %v554, 2
      %v2250 = vsel %vm1313, %v2247, %v2249
      %v2251 = vsel %vm727, %v2248, 0
      %v2253 = vsel %vm727, %v2250, 0
      %v2256 = vsel %vm792, %v489, 0
      %2258 = vmatprep.subr.mxu0 0.0
      %2259 = vmatpush1.msra.mxu0 0.0
      %2260 = vmatprep.subr.mxu0 0.0
      %2261 = vmatpush1.msra.mxu0 0.0
      %2262 = vmatprep.subr.mxu0 0.0
      %2263 = vmatpush1.msra.mxu0 0.0
      %2264 = vmatprep.subr.mxu0 0.0
      %2265 = vmatpush1.msra.mxu0 0.0
      %2266 = vmatprep.subr.mxu0 0.0
      %2267 = vmatpush1.msra.mxu0 0.0
      %2268 = vmatprep.subr.mxu0 0.0
      %2269 = vmatpush1.msra.mxu0 0.0
      %2270 = vmatprep.subr.mxu0 0.0
      %2271 = vmatpush1.msra.mxu0 0.0
      %2272 = vmatprep.subr.mxu0 0.0
      %2273 = vmatpush1.msra.mxu0 0.0
      %2274 = vmatprep.subr.mxu0 0.0
      %2275 = vmatpush1.msra.mxu0 0.0
      %2276 = vmatprep.subr.mxu0 0.0
      %2277 = vmatpush1.msra.mxu0 0.0
      %2278 = vmatprep.subr.mxu0 0.0
      %2279 = vmatpush1.msra.mxu0 0.0
      %2280 = vmatprep.subr.mxu0 0.0
      %2281 = vmatpush1.msra.mxu0 0.0
      %2282 = vmatprep.subr.mxu0 0.0
      %2283 = vmatpush1.msra.mxu0 0.0
      %2284 = vmatprep.subr.mxu0 0.0
      %2285 = vmatpush1.msra.mxu0 0.0
      %2286 = vmatprep.subr.mxu0 0.0
      %2287 = vmatpush1.msra.mxu0 0.0
      %2288 = vmatprep.subr.mxu0 0.0
      %2289 = vmatpush1.msra.mxu0 %v2256
      %2290 = vmatprep.subr.mxu0 0.0
      %2291 = vmatpush2.msra.mxu0 0.0
      %2292 = vmatprep.subr.mxu0 0.0
      %2293 = vmatpush2.msra.mxu0 0.0
      %2294 = vmatprep.subr.mxu0 0.0
      %2295 = vmatpush2.msra.mxu0 0.0
      %2296 = vmatprep.subr.mxu0 0.0
      %2297 = vmatpush2.msra.mxu0 0.0
      %2298 = vmatprep.subr.mxu0 0.0
      %2299 = vmatpush2.msra.mxu0 0.0
      %2300 = vmatprep.subr.mxu0 0.0
      %2301 = vmatpush2.msra.mxu0 0.0
      %2302 = vmatprep.subr.mxu0 0.0
      %2303 = vmatpush2.msra.mxu0 0.0
      %2304 = vmatprep.subr.mxu0 0.0
      %2305 = vmatpush2.msra.mxu0 0.0
      %2306 = vmatprep.subr.mxu0 0.0
      %2307 = vmatpush2.msra.mxu0 0.0
      %2308 = vmatprep.subr.mxu0 0.0
      %2309 = vmatpush2.msra.mxu0 0.0
      %2310 = vmatprep.subr.mxu0 0.0
      %2311 = vmatpush2.msra.mxu0 0.0
      %2312 = vmatprep.subr.mxu0 0.0
      %2313 = vmatpush2.msra.mxu0 0.0
      %2314 = vmatprep.subr.mxu0 0.0
      %2315 = vmatpush2.msra.mxu0 0.0
      %2316 = vmatprep.subr.mxu0 0.0
      %2317 = vmatpush2.msra.mxu0 0.0
      %2318 = vmatprep.subr.mxu0 0.0
      %2319 = vmatpush2.msra.mxu0 0.0
      %2320 = vmatprep.subr.mxu0 0.0
      %2321 = vmatpush2.msra.mxu0 0.0
      %2322 = vmatprep.mubr.f32.mxu0 0.0
      %2323 = vmatmul.mubr.f32.gmra.mxu0 %v1398
      %v2324 = vpop.f32.mrf.mxu0
      %v2325 = vadd.f32 0.0, %v2324
      %v2326 = vpop.f32.mrf.mxu0
      %2327 = vmatprep.mubr.f32.mxu0 0.0
      %2328 = vmatmul.mubr.f32.gmra.mxu0 %v1400
      %v2329 = vpop.f32.mrf.mxu0
      %v2330 = vadd.f32 0.0, %v2329
      %v2331 = vpop.f32.mrf.mxu0
      %2332 = vmatprep.mubr.f32.mxu0 0.0
      %2333 = vmatmul.mubr.f32.gmra.mxu0 %v1402
      %v2334 = vpop.f32.mrf.mxu0
      %v2335 = vadd.f32 0.0, %v2334
      %v2336 = vpop.f32.mrf.mxu0
      %2337 = vmatprep.mubr.f32.mxu0 0.0
      %2338 = vmatmul.mubr.f32.gmra.mxu0 %v1404
      %v2339 = vpop.f32.mrf.mxu0
      %v2340 = vadd.f32 0.0, %v2339
      %v2341 = vpop.f32.mrf.mxu0
      %2342 = vmatprep.mubr.f32.mxu0 0.0
      %2343 = vmatmul.mubr.f32.gmra.mxu0 %v1406
      %v2344 = vpop.f32.mrf.mxu0
      %v2345 = vadd.f32 0.0, %v2344
      %v2346 = vpop.f32.mrf.mxu0
      %2347 = vmatprep.mubr.f32.mxu0 0.0
      %2348 = vmatmul.mubr.f32.gmra.mxu0 %v1408
      %v2349 = vpop.f32.mrf.mxu0
      %v2350 = vadd.f32 0.0, %v2349
      %v2351 = vpop.f32.mrf.mxu0
      %2352 = vmatprep.mubr.f32.mxu0 0.0
      %2353 = vmatmul.mubr.f32.gmra.mxu0 %v1410
      %v2354 = vpop.f32.mrf.mxu0
      %v2355 = vadd.f32 0.0, %v2354
      %v2356 = vpop.f32.mrf.mxu0
      %2357 = vmatprep.mubr.f32.mxu0 0.0
      %2358 = vmatmul.mubr.f32.gmra.mxu0 %v1412
      %v2359 = vpop.f32.mrf.mxu0
      %v2360 = vadd.f32 0.0, %v2359
      %v2361 = vpop.f32.mrf.mxu0
      %2362 = vmatprep.mubr.f32.mxu0 0.0
      %2363 = vmatmul.mubr.f32.gmra.mxu0 %v1414
      %v2364 = vpop.f32.mrf.mxu0
      %v2365 = vadd.f32 0.0, %v2364
      %v2366 = vpop.f32.mrf.mxu0
      %2367 = vmatprep.mubr.f32.mxu0 0.0
      %2368 = vmatmul.mubr.f32.gmra.mxu0 %v1416
      %v2369 = vpop.f32.mrf.mxu0
      %v2370 = vadd.f32 0.0, %v2369
      %v2371 = vpop.f32.mrf.mxu0
      %2372 = vmatprep.mubr.f32.mxu0 0.0
      %2373 = vmatmul.mubr.f32.gmra.mxu0 %v1418
      %v2374 = vpop.f32.mrf.mxu0
      %v2375 = vadd.f32 0.0, %v2374
      %v2376 = vpop.f32.mrf.mxu0
      %2377 = vmatprep.mubr.f32.mxu0 0.0
      %2378 = vmatmul.mubr.f32.gmra.mxu0 %v1420
      %v2379 = vpop.f32.mrf.mxu0
      %v2380 = vadd.f32 0.0, %v2379
      %v2381 = vpop.f32.mrf.mxu0
      %2382 = vmatprep.mubr.f32.mxu0 0.0
      %2383 = vmatmul.mubr.f32.gmra.mxu0 %v1422
      %v2384 = vpop.f32.mrf.mxu0
      %v2385 = vadd.f32 0.0, %v2384
      %v2386 = vpop.f32.mrf.mxu0
      %2387 = vmatprep.mubr.f32.mxu0 0.0
      %2388 = vmatmul.mubr.f32.gmra.mxu0 %v1424
      %v2389 = vpop.f32.mrf.mxu0
      %v2390 = vadd.f32 0.0, %v2389
      %v2391 = vpop.f32.mrf.mxu0
      %2392 = vmatprep.mubr.f32.mxu0 0.0
      %2393 = vmatmul.mubr.f32.gmra.mxu0 %v1426
      %v2394 = vpop.f32.mrf.mxu0
      %v2395 = vadd.f32 0.0, %v2394
      %v2396 = vpop.f32.mrf.mxu0
      %2397 = vmatprep.mubr.f32.mxu0 0.0
      %2398 = vmatmul.mubr.f32.gmra.mxu0 %v1428
      %v2399 = vpop.f32.mrf.mxu0
      %v2400 = vadd.f32 0.0, %v2399
      %v2401 = vpop.f32.mrf.mxu0
      %2402 = vmatprep.mubr.f32.mxu0 0.0
      %2403 = vmatmul.mubr.f32.gmra.mxu0 %v1430
      %v2404 = vpop.f32.mrf.mxu0
      %v2405 = vadd.f32 0.0, %v2404
      %v2406 = vpop.f32.mrf.mxu0
      %2407 = vmatprep.mubr.f32.mxu0 0.0
      %2408 = vmatmul.mubr.f32.gmra.mxu0 %v1432
      %v2409 = vpop.f32.mrf.mxu0
      %v2410 = vadd.f32 0.0, %v2409
      %v2411 = vpop.f32.mrf.mxu0
      %2412 = vmatprep.mubr.f32.mxu0 0.0
      %2413 = vmatmul.mubr.f32.gmra.mxu0 %v1434
      %v2414 = vpop.f32.mrf.mxu0
      %v2415 = vadd.f32 0.0, %v2414
      %v2416 = vpop.f32.mrf.mxu0
      %2417 = vmatprep.mubr.f32.mxu0 0.0
      %2418 = vmatmul.mubr.f32.gmra.mxu0 %v1436
      %v2419 = vpop.f32.mrf.mxu0
      %v2420 = vadd.f32 0.0, %v2419
      %v2421 = vpop.f32.mrf.mxu0
      %2422 = vmatprep.mubr.f32.mxu0 0.0
      %2423 = vmatmul.mubr.f32.gmra.mxu0 %v1438
      %v2424 = vpop.f32.mrf.mxu0
      %v2425 = vadd.f32 0.0, %v2424
      %v2426 = vpop.f32.mrf.mxu0
      %2427 = vmatprep.mubr.f32.mxu0 0.0
      %2428 = vmatmul.mubr.f32.gmra.mxu0 %v1440
      %v2429 = vpop.f32.mrf.mxu0
      %v2430 = vadd.f32 0.0, %v2429
      %v2431 = vpop.f32.mrf.mxu0
      %2432 = vmatprep.mubr.f32.mxu0 0.0
      %2433 = vmatmul.mubr.f32.gmra.mxu0 %v1442
      %v2434 = vpop.f32.mrf.mxu0
      %v2435 = vadd.f32 0.0, %v2434
      %v2436 = vpop.f32.mrf.mxu0
      %2437 = vmatprep.mubr.f32.mxu0 0.0
      %2438 = vmatmul.mubr.f32.gmra.mxu0 %v1444
      %v2439 = vpop.f32.mrf.mxu0
      %v2440 = vadd.f32 0.0, %v2439
      %v2441 = vpop.f32.mrf.mxu0
      %2442 = vmatprep.mubr.f32.mxu0 0.0
      %2443 = vmatmul.mubr.f32.gmra.mxu0 %v1446
      %v2444 = vpop.f32.mrf.mxu0
      %v2445 = vadd.f32 0.0, %v2444
      %v2446 = vpop.f32.mrf.mxu0
      %2447 = vmatprep.mubr.f32.mxu0 0.0
      %2448 = vmatmul.mubr.f32.gmra.mxu0 %v1448
      %v2449 = vpop.f32.mrf.mxu0
      %v2450 = vadd.f32 0.0, %v2449
      %v2451 = vpop.f32.mrf.mxu0
      %2452 = vmatprep.mubr.f32.mxu0 0.0
      %2453 = vmatmul.mubr.f32.gmra.mxu0 %v1450
      %v2454 = vpop.f32.mrf.mxu0
      %v2455 = vadd.f32 0.0, %v2454
      %v2456 = vpop.f32.mrf.mxu0
      %2457 = vmatprep.mubr.f32.mxu0 0.0
      %2458 = vmatmul.mubr.f32.gmra.mxu0 %v1452
      %v2459 = vpop.f32.mrf.mxu0
      %v2460 = vadd.f32 0.0, %v2459
      %v2461 = vpop.f32.mrf.mxu0
      %2462 = vmatprep.mubr.f32.mxu0 0.0
      %2463 = vmatmul.mubr.f32.gmra.mxu0 %v1454
      %v2464 = vpop.f32.mrf.mxu0
      %v2465 = vadd.f32 0.0, %v2464
      %v2466 = vpop.f32.mrf.mxu0
      %2467 = vmatprep.mubr.f32.mxu0 0.0
      %2468 = vmatmul.mubr.f32.gmra.mxu0 %v1456
      %v2469 = vpop.f32.mrf.mxu0
      %v2470 = vadd.f32 0.0, %v2469
      %v2471 = vpop.f32.mrf.mxu0
      %2472 = vmatprep.mubr.f32.mxu0 0.0
      %2473 = vmatmul.mubr.f32.gmra.mxu0 %v2251
      %v2474 = vpop.f32.mrf.mxu0
      %v2475 = vadd.f32 0.0, %v2474
      %v2476 = vpop.f32.mrf.mxu0
      %2477 = vmatprep.mubr.f32.mxu0 0.0
      %2478 = vmatmul.mubr.f32.gmra.mxu0 %v2253
      %v2479 = vpop.f32.mrf.mxu0
      %v2480 = vadd.f32 0.0, %v2479
      %v2481 = vpop.f32.mrf.mxu0
      %2482 = vdwg.mxu0
      %v2483 = vadd.f32 %v2214, %v2325
      %v2484 = vadd.f32 %v2215, %v2330
      %v2485 = vadd.f32 %v2216, %v2335
      %v2486 = vadd.f32 %v2217, %v2340
      %v2487 = vadd.f32 %v2218, %v2345
      %v2488 = vadd.f32 %v2219, %v2350
      %v2489 = vadd.f32 %v2220, %v2355
      %v2490 = vadd.f32 %v2221, %v2360
      %v2491 = vadd.f32 %v2222, %v2365
      %v2492 = vadd.f32 %v2223, %v2370
      %v2493 = vadd.f32 %v2224, %v2375
      %v2494 = vadd.f32 %v2225, %v2380
      %v2495 = vadd.f32 %v2226, %v2385
      %v2496 = vadd.f32 %v2227, %v2390
      %v2497 = vadd.f32 %v2228, %v2395
      %v2498 = vadd.f32 %v2229, %v2400
      %v2499 = vadd.f32 %v2230, %v2405
      %v2500 = vadd.f32 %v2231, %v2410
      %v2501 = vadd.f32 %v2232, %v2415
      %v2502 = vadd.f32 %v2233, %v2420
      %v2503 = vadd.f32 %v2234, %v2425
      %v2504 = vadd.f32 %v2235, %v2430
      %v2505 = vadd.f32 %v2236, %v2435
      %v2506 = vadd.f32 %v2237, %v2440
      %v2507 = vadd.f32 %v2238, %v2445
      %v2508 = vadd.f32 %v2239, %v2450
      %v2509 = vadd.f32 %v2240, %v2455
      %v2510 = vadd.f32 %v2241, %v2460
      %v2511 = vadd.f32 %v2242, %v2465
      %v2512 = vadd.f32 %v2243, %v2470
      %v2513 = vadd.f32 %v2244, %v2475
      %v2514 = vadd.f32 %v2245, %v2480
      %v2516 = vsel %vm727, %v555, 0
      %v2519 = vsel %vm727, %v556, 0
      %v2522 = vsel %vm792, %v490, 0
      %2524 = vmatprep.subr.mxu0 0.0
      %2525 = vmatpush1.msra.mxu0 0.0
      %2526 = vmatprep.subr.mxu0 0.0
      %2527 = vmatpush1.msra.mxu0 0.0
      %2528 = vmatprep.subr.mxu0 0.0
      %2529 = vmatpush1.msra.mxu0 0.0
      %2530 = vmatprep.subr.mxu0 0.0
      %2531 = vmatpush1.msra.mxu0 0.0
      %2532 = vmatprep.subr.mxu0 0.0
      %2533 = vmatpush1.msra.mxu0 0.0
      %2534 = vmatprep.subr.mxu0 0.0
      %2535 = vmatpush1.msra.mxu0 0.0
      %2536 = vmatprep.subr.mxu0 0.0
      %2537 = vmatpush1.msra.mxu0 0.0
      %2538 = vmatprep.subr.mxu0 0.0
      %2539 = vmatpush1.msra.mxu0 0.0
      %2540 = vmatprep.subr.mxu0 0.0
      %2541 = vmatpush1.msra.mxu0 0.0
      %2542 = vmatprep.subr.mxu0 0.0
      %2543 = vmatpush1.msra.mxu0 0.0
      %2544 = vmatprep.subr.mxu0 0.0
      %2545 = vmatpush1.msra.mxu0 0.0
      %2546 = vmatprep.subr.mxu0 0.0
      %2547 = vmatpush1.msra.mxu0 0.0
      %2548 = vmatprep.subr.mxu0 0.0
      %2549 = vmatpush1.msra.mxu0 0.0
      %2550 = vmatprep.subr.mxu0 0.0
      %2551 = vmatpush1.msra.mxu0 0.0
      %2552 = vmatprep.subr.mxu0 0.0
      %2553 = vmatpush1.msra.mxu0 0.0
      %2554 = vmatprep.subr.mxu0 0.0
      %2555 = vmatpush1.msra.mxu0 %v2522
      %2556 = vmatprep.subr.mxu0 0.0
      %2557 = vmatpush2.msra.mxu0 0.0
      %2558 = vmatprep.subr.mxu0 0.0
      %2559 = vmatpush2.msra.mxu0 0.0
      %2560 = vmatprep.subr.mxu0 0.0
      %2561 = vmatpush2.msra.mxu0 0.0
      %2562 = vmatprep.subr.mxu0 0.0
      %2563 = vmatpush2.msra.mxu0 0.0
      %2564 = vmatprep.subr.mxu0 0.0
      %2565 = vmatpush2.msra.mxu0 0.0
      %2566 = vmatprep.subr.mxu0 0.0
      %2567 = vmatpush2.msra.mxu0 0.0
      %2568 = vmatprep.subr.mxu0 0.0
      %2569 = vmatpush2.msra.mxu0 0.0
      %2570 = vmatprep.subr.mxu0 0.0
      %2571 = vmatpush2.msra.mxu0 0.0
      %2572 = vmatprep.subr.mxu0 0.0
      %2573 = vmatpush2.msra.mxu0 0.0
      %2574 = vmatprep.subr.mxu0 0.0
      %2575 = vmatpush2.msra.mxu0 0.0
      %2576 = vmatprep.subr.mxu0 0.0
      %2577 = vmatpush2.msra.mxu0 0.0
      %2578 = vmatprep.subr.mxu0 0.0
      %2579 = vmatpush2.msra.mxu0 0.0
      %2580 = vmatprep.subr.mxu0 0.0
      %2581 = vmatpush2.msra.mxu0 0.0
      %2582 = vmatprep.subr.mxu0 0.0
      %2583 = vmatpush2.msra.mxu0 0.0
      %2584 = vmatprep.subr.mxu0 0.0
      %2585 = vmatpush2.msra.mxu0 0.0
      %2586 = vmatprep.subr.mxu0 0.0
      %2587 = vmatpush2.msra.mxu0 0.0
      %2588 = vmatprep.mubr.f32.mxu0 0.0
      %2589 = vmatmul.mubr.f32.gmra.mxu0 %v1029
      %v2590 = vpop.f32.mrf.mxu0
      %v2591 = vadd.f32 0.0, %v2590
      %v2592 = vpop.f32.mrf.mxu0
      %2593 = vmatprep.mubr.f32.mxu0 0.0
      %2594 = vmatmul.mubr.f32.gmra.mxu0 %v1031
      %v2595 = vpop.f32.mrf.mxu0
      %v2596 = vadd.f32 0.0, %v2595
      %v2597 = vpop.f32.mrf.mxu0
      %2598 = vmatprep.mubr.f32.mxu0 0.0
      %2599 = vmatmul.mubr.f32.gmra.mxu0 %v1033
      %v2600 = vpop.f32.mrf.mxu0
      %v2601 = vadd.f32 0.0, %v2600
      %v2602 = vpop.f32.mrf.mxu0
      %2603 = vmatprep.mubr.f32.mxu0 0.0
      %2604 = vmatmul.mubr.f32.gmra.mxu0 %v1035
      %v2605 = vpop.f32.mrf.mxu0
      %v2606 = vadd.f32 0.0, %v2605
      %v2607 = vpop.f32.mrf.mxu0
      %2608 = vmatprep.mubr.f32.mxu0 0.0
      %2609 = vmatmul.mubr.f32.gmra.mxu0 %v1037
      %v2610 = vpop.f32.mrf.mxu0
      %v2611 = vadd.f32 0.0, %v2610
      %v2612 = vpop.f32.mrf.mxu0
      %2613 = vmatprep.mubr.f32.mxu0 0.0
      %2614 = vmatmul.mubr.f32.gmra.mxu0 %v1039
      %v2615 = vpop.f32.mrf.mxu0
      %v2616 = vadd.f32 0.0, %v2615
      %v2617 = vpop.f32.mrf.mxu0
      %2618 = vmatprep.mubr.f32.mxu0 0.0
      %2619 = vmatmul.mubr.f32.gmra.mxu0 %v1041
      %v2620 = vpop.f32.mrf.mxu0
      %v2621 = vadd.f32 0.0, %v2620
      %v2622 = vpop.f32.mrf.mxu0
      %2623 = vmatprep.mubr.f32.mxu0 0.0
      %2624 = vmatmul.mubr.f32.gmra.mxu0 %v1043
      %v2625 = vpop.f32.mrf.mxu0
      %v2626 = vadd.f32 0.0, %v2625
      %v2627 = vpop.f32.mrf.mxu0
      %2628 = vmatprep.mubr.f32.mxu0 0.0
      %2629 = vmatmul.mubr.f32.gmra.mxu0 %v1045
      %v2630 = vpop.f32.mrf.mxu0
      %v2631 = vadd.f32 0.0, %v2630
      %v2632 = vpop.f32.mrf.mxu0
      %2633 = vmatprep.mubr.f32.mxu0 0.0
      %2634 = vmatmul.mubr.f32.gmra.mxu0 %v1047
      %v2635 = vpop.f32.mrf.mxu0
      %v2636 = vadd.f32 0.0, %v2635
      %v2637 = vpop.f32.mrf.mxu0
      %2638 = vmatprep.mubr.f32.mxu0 0.0
      %2639 = vmatmul.mubr.f32.gmra.mxu0 %v1049
      %v2640 = vpop.f32.mrf.mxu0
      %v2641 = vadd.f32 0.0, %v2640
      %v2642 = vpop.f32.mrf.mxu0
      %2643 = vmatprep.mubr.f32.mxu0 0.0
      %2644 = vmatmul.mubr.f32.gmra.mxu0 %v1051
      %v2645 = vpop.f32.mrf.mxu0
      %v2646 = vadd.f32 0.0, %v2645
      %v2647 = vpop.f32.mrf.mxu0
      %2648 = vmatprep.mubr.f32.mxu0 0.0
      %2649 = vmatmul.mubr.f32.gmra.mxu0 %v1053
      %v2650 = vpop.f32.mrf.mxu0
      %v2651 = vadd.f32 0.0, %v2650
      %v2652 = vpop.f32.mrf.mxu0
      %2653 = vmatprep.mubr.f32.mxu0 0.0
      %2654 = vmatmul.mubr.f32.gmra.mxu0 %v1055
      %v2655 = vpop.f32.mrf.mxu0
      %v2656 = vadd.f32 0.0, %v2655
      %v2657 = vpop.f32.mrf.mxu0
      %2658 = vmatprep.mubr.f32.mxu0 0.0
      %2659 = vmatmul.mubr.f32.gmra.mxu0 %v1057
      %v2660 = vpop.f32.mrf.mxu0
      %v2661 = vadd.f32 0.0, %v2660
      %v2662 = vpop.f32.mrf.mxu0
      %2663 = vmatprep.mubr.f32.mxu0 0.0
      %2664 = vmatmul.mubr.f32.gmra.mxu0 %v1059
      %v2665 = vpop.f32.mrf.mxu0
      %v2666 = vadd.f32 0.0, %v2665
      %v2667 = vpop.f32.mrf.mxu0
      %2668 = vmatprep.mubr.f32.mxu0 0.0
      %2669 = vmatmul.mubr.f32.gmra.mxu0 %v1061
      %v2670 = vpop.f32.mrf.mxu0
      %v2671 = vadd.f32 0.0, %v2670
      %v2672 = vpop.f32.mrf.mxu0
      %2673 = vmatprep.mubr.f32.mxu0 0.0
      %2674 = vmatmul.mubr.f32.gmra.mxu0 %v1063
      %v2675 = vpop.f32.mrf.mxu0
      %v2676 = vadd.f32 0.0, %v2675
      %v2677 = vpop.f32.mrf.mxu0
      %2678 = vmatprep.mubr.f32.mxu0 0.0
      %2679 = vmatmul.mubr.f32.gmra.mxu0 %v1065
      %v2680 = vpop.f32.mrf.mxu0
      %v2681 = vadd.f32 0.0, %v2680
      %v2682 = vpop.f32.mrf.mxu0
      %2683 = vmatprep.mubr.f32.mxu0 0.0
      %2684 = vmatmul.mubr.f32.gmra.mxu0 %v1067
      %v2685 = vpop.f32.mrf.mxu0
      %v2686 = vadd.f32 0.0, %v2685
      %v2687 = vpop.f32.mrf.mxu0
      %2688 = vmatprep.mubr.f32.mxu0 0.0
      %2689 = vmatmul.mubr.f32.gmra.mxu0 %v1069
      %v2690 = vpop.f32.mrf.mxu0
      %v2691 = vadd.f32 0.0, %v2690
      %v2692 = vpop.f32.mrf.mxu0
      %2693 = vmatprep.mubr.f32.mxu0 0.0
      %2694 = vmatmul.mubr.f32.gmra.mxu0 %v1071
      %v2695 = vpop.f32.mrf.mxu0
      %v2696 = vadd.f32 0.0, %v2695
      %v2697 = vpop.f32.mrf.mxu0
      %2698 = vmatprep.mubr.f32.mxu0 0.0
      %2699 = vmatmul.mubr.f32.gmra.mxu0 %v1073
      %v2700 = vpop.f32.mrf.mxu0
      %v2701 = vadd.f32 0.0, %v2700
      %v2702 = vpop.f32.mrf.mxu0
      %2703 = vmatprep.mubr.f32.mxu0 0.0
      %2704 = vmatmul.mubr.f32.gmra.mxu0 %v1075
      %v2705 = vpop.f32.mrf.mxu0
      %v2706 = vadd.f32 0.0, %v2705
      %v2707 = vpop.f32.mrf.mxu0
      %2708 = vmatprep.mubr.f32.mxu0 0.0
      %2709 = vmatmul.mubr.f32.gmra.mxu0 %v1077
      %v2710 = vpop.f32.mrf.mxu0
      %v2711 = vadd.f32 0.0, %v2710
      %v2712 = vpop.f32.mrf.mxu0
      %2713 = vmatprep.mubr.f32.mxu0 0.0
      %2714 = vmatmul.mubr.f32.gmra.mxu0 %v1079
      %v2715 = vpop.f32.mrf.mxu0
      %v2716 = vadd.f32 0.0, %v2715
      %v2717 = vpop.f32.mrf.mxu0
      %2718 = vmatprep.mubr.f32.mxu0 0.0
      %2719 = vmatmul.mubr.f32.gmra.mxu0 %v1081
      %v2720 = vpop.f32.mrf.mxu0
      %v2721 = vadd.f32 0.0, %v2720
      %v2722 = vpop.f32.mrf.mxu0
      %2723 = vmatprep.mubr.f32.mxu0 0.0
      %2724 = vmatmul.mubr.f32.gmra.mxu0 %v1083
      %v2725 = vpop.f32.mrf.mxu0
      %v2726 = vadd.f32 0.0, %v2725
      %v2727 = vpop.f32.mrf.mxu0
      %2728 = vmatprep.mubr.f32.mxu0 0.0
      %2729 = vmatmul.mubr.f32.gmra.mxu0 %v1718
      %v2730 = vpop.f32.mrf.mxu0
      %v2731 = vadd.f32 0.0, %v2730
      %v2732 = vpop.f32.mrf.mxu0
      %2733 = vmatprep.mubr.f32.mxu0 0.0
      %2734 = vmatmul.mubr.f32.gmra.mxu0 %v1720
      %v2735 = vpop.f32.mrf.mxu0
      %v2736 = vadd.f32 0.0, %v2735
      %v2737 = vpop.f32.mrf.mxu0
      %2738 = vmatprep.mubr.f32.mxu0 0.0
      %2739 = vmatmul.mubr.f32.gmra.mxu0 %v2516
      %v2740 = vpop.f32.mrf.mxu0
      %v2741 = vadd.f32 0.0, %v2740
      %v2742 = vpop.f32.mrf.mxu0
      %2743 = vmatprep.mubr.f32.mxu0 0.0
      %2744 = vmatmul.mubr.f32.gmra.mxu0 %v2519
      %v2745 = vpop.f32.mrf.mxu0
      %v2746 = vadd.f32 0.0, %v2745
      %v2747 = vpop.f32.mrf.mxu0
      %2748 = vdwg.mxu0
      %v2749 = vadd.f32 %v2483, %v2591
      %v2750 = vadd.f32 %v2484, %v2596
      %v2751 = vadd.f32 %v2485, %v2601
      %v2752 = vadd.f32 %v2486, %v2606
      %v2753 = vadd.f32 %v2487, %v2611
      %v2754 = vadd.f32 %v2488, %v2616
      %v2755 = vadd.f32 %v2489, %v2621
      %v2756 = vadd.f32 %v2490, %v2626
      %v2757 = vadd.f32 %v2491, %v2631
      %v2758 = vadd.f32 %v2492, %v2636
      %v2759 = vadd.f32 %v2493, %v2641
      %v2760 = vadd.f32 %v2494, %v2646
      %v2761 = vadd.f32 %v2495, %v2651
      %v2762 = vadd.f32 %v2496, %v2656
      %v2763 = vadd.f32 %v2497, %v2661
      %v2764 = vadd.f32 %v2498, %v2666
      %v2765 = vadd.f32 %v2499, %v2671
      %v2766 = vadd.f32 %v2500, %v2676
      %v2767 = vadd.f32 %v2501, %v2681
      %v2768 = vadd.f32 %v2502, %v2686
      %v2769 = vadd.f32 %v2503, %v2691
      %v2770 = vadd.f32 %v2504, %v2696
      %v2771 = vadd.f32 %v2505, %v2701
      %v2772 = vadd.f32 %v2506, %v2706
      %v2773 = vadd.f32 %v2507, %v2711
      %v2774 = vadd.f32 %v2508, %v2716
      %v2775 = vadd.f32 %v2509, %v2721
      %v2776 = vadd.f32 %v2510, %v2726
      %v2777 = vadd.f32 %v2511, %v2731
      %v2778 = vadd.f32 %v2512, %v2736
      %v2779 = vadd.f32 %v2513, %v2741
      %v2780 = vadd.f32 %v2514, %v2746
      %v2782 = vrot.slane %v555, 1
      %v2783 = vrot.slane %v556, 1
      %v2784 = vsel %vm606, %v2782, %v2783
      %v2785 = vrot.slane %v557, 1
      %v2786 = vsel %vm606, %v2783, %v2785
      %v2787 = vsel %vm727, %v2784, 0
      %v2789 = vsel %vm727, %v2786, 0
      %v2792 = vsel %vm792, %v491, 0
      %2794 = vmatprep.subr.mxu0 0.0
      %2795 = vmatpush1.msra.mxu0 0.0
      %2796 = vmatprep.subr.mxu0 0.0
      %2797 = vmatpush1.msra.mxu0 0.0
      %2798 = vmatprep.subr.mxu0 0.0
      %2799 = vmatpush1.msra.mxu0 0.0
      %2800 = vmatprep.subr.mxu0 0.0
      %2801 = vmatpush1.msra.mxu0 0.0
      %2802 = vmatprep.subr.mxu0 0.0
      %2803 = vmatpush1.msra.mxu0 0.0
      %2804 = vmatprep.subr.mxu0 0.0
      %2805 = vmatpush1.msra.mxu0 0.0
      %2806 = vmatprep.subr.mxu0 0.0
      %2807 = vmatpush1.msra.mxu0 0.0
      %2808 = vmatprep.subr.mxu0 0.0
      %2809 = vmatpush1.msra.mxu0 0.0
      %2810 = vmatprep.subr.mxu0 0.0
      %2811 = vmatpush1.msra.mxu0 0.0
      %2812 = vmatprep.subr.mxu0 0.0
      %2813 = vmatpush1.msra.mxu0 0.0
      %2814 = vmatprep.subr.mxu0 0.0
      %2815 = vmatpush1.msra.mxu0 0.0
      %2816 = vmatprep.subr.mxu0 0.0
      %2817 = vmatpush1.msra.mxu0 0.0
      %2818 = vmatprep.subr.mxu0 0.0
      %2819 = vmatpush1.msra.mxu0 0.0
      %2820 = vmatprep.subr.mxu0 0.0
      %2821 = vmatpush1.msra.mxu0 0.0
      %2822 = vmatprep.subr.mxu0 0.0
      %2823 = vmatpush1.msra.mxu0 0.0
      %2824 = vmatprep.subr.mxu0 0.0
      %2825 = vmatpush1.msra.mxu0 %v2792
      %2826 = vmatprep.subr.mxu0 0.0
      %2827 = vmatpush2.msra.mxu0 0.0
      %2828 = vmatprep.subr.mxu0 0.0
      %2829 = vmatpush2.msra.mxu0 0.0
      %2830 = vmatprep.subr.mxu0 0.0
      %2831 = vmatpush2.msra.mxu0 0.0
      %2832 = vmatprep.subr.mxu0 0.0
      %2833 = vmatpush2.msra.mxu0 0.0
      %2834 = vmatprep.subr.mxu0 0.0
      %2835 = vmatpush2.msra.mxu0 0.0
      %2836 = vmatprep.subr.mxu0 0.0
      %2837 = vmatpush2.msra.mxu0 0.0
      %2838 = vmatprep.subr.mxu0 0.0
      %2839 = vmatpush2.msra.mxu0 0.0
      %2840 = vmatprep.subr.mxu0 0.0
      %2841 = vmatpush2.msra.mxu0 0.0
      %2842 = vmatprep.subr.mxu0 0.0
      %2843 = vmatpush2.msra.mxu0 0.0
      %2844 = vmatprep.subr.mxu0 0.0
      %2845 = vmatpush2.msra.mxu0 0.0
      %2846 = vmatprep.subr.mxu0 0.0
      %2847 = vmatpush2.msra.mxu0 0.0
      %2848 = vmatprep.subr.mxu0 0.0
      %2849 = vmatpush2.msra.mxu0 0.0
      %2850 = vmatprep.subr.mxu0 0.0
      %2851 = vmatpush2.msra.mxu0 0.0
      %2852 = vmatprep.subr.mxu0 0.0
      %2853 = vmatpush2.msra.mxu0 0.0
      %2854 = vmatprep.subr.mxu0 0.0
      %2855 = vmatpush2.msra.mxu0 0.0
      %2856 = vmatprep.subr.mxu0 0.0
      %2857 = vmatpush2.msra.mxu0 0.0
      %2858 = vmatprep.mubr.f32.mxu0 0.0
      %2859 = vmatmul.mubr.f32.gmra.mxu0 %v736
      %v2860 = vpop.f32.mrf.mxu0
      %v2861 = vadd.f32 0.0, %v2860
      %v2862 = vpop.f32.mrf.mxu0
      %2863 = vmatprep.mubr.f32.mxu0 0.0
      %2864 = vmatmul.mubr.f32.gmra.mxu0 %v738
      %v2865 = vpop.f32.mrf.mxu0
      %v2866 = vadd.f32 0.0, %v2865
      %v2867 = vpop.f32.mrf.mxu0
      %2868 = vmatprep.mubr.f32.mxu0 0.0
      %2869 = vmatmul.mubr.f32.gmra.mxu0 %v740
      %v2870 = vpop.f32.mrf.mxu0
      %v2871 = vadd.f32 0.0, %v2870
      %v2872 = vpop.f32.mrf.mxu0
      %2873 = vmatprep.mubr.f32.mxu0 0.0
      %2874 = vmatmul.mubr.f32.gmra.mxu0 %v742
      %v2875 = vpop.f32.mrf.mxu0
      %v2876 = vadd.f32 0.0, %v2875
      %v2877 = vpop.f32.mrf.mxu0
      %2878 = vmatprep.mubr.f32.mxu0 0.0
      %2879 = vmatmul.mubr.f32.gmra.mxu0 %v744
      %v2880 = vpop.f32.mrf.mxu0
      %v2881 = vadd.f32 0.0, %v2880
      %v2882 = vpop.f32.mrf.mxu0
      %2883 = vmatprep.mubr.f32.mxu0 0.0
      %2884 = vmatmul.mubr.f32.gmra.mxu0 %v746
      %v2885 = vpop.f32.mrf.mxu0
      %v2886 = vadd.f32 0.0, %v2885
      %v2887 = vpop.f32.mrf.mxu0
      %2888 = vmatprep.mubr.f32.mxu0 0.0
      %2889 = vmatmul.mubr.f32.gmra.mxu0 %v748
      %v2890 = vpop.f32.mrf.mxu0
      %v2891 = vadd.f32 0.0, %v2890
      %v2892 = vpop.f32.mrf.mxu0
      %2893 = vmatprep.mubr.f32.mxu0 0.0
      %2894 = vmatmul.mubr.f32.gmra.mxu0 %v750
      %v2895 = vpop.f32.mrf.mxu0
      %v2896 = vadd.f32 0.0, %v2895
      %v2897 = vpop.f32.mrf.mxu0
      %2898 = vmatprep.mubr.f32.mxu0 0.0
      %2899 = vmatmul.mubr.f32.gmra.mxu0 %v752
      %v2900 = vpop.f32.mrf.mxu0
      %v2901 = vadd.f32 0.0, %v2900
      %v2902 = vpop.f32.mrf.mxu0
      %2903 = vmatprep.mubr.f32.mxu0 0.0
      %2904 = vmatmul.mubr.f32.gmra.mxu0 %v754
      %v2905 = vpop.f32.mrf.mxu0
      %v2906 = vadd.f32 0.0, %v2905
      %v2907 = vpop.f32.mrf.mxu0
      %2908 = vmatprep.mubr.f32.mxu0 0.0
      %2909 = vmatmul.mubr.f32.gmra.mxu0 %v756
      %v2910 = vpop.f32.mrf.mxu0
      %v2911 = vadd.f32 0.0, %v2910
      %v2912 = vpop.f32.mrf.mxu0
      %2913 = vmatprep.mubr.f32.mxu0 0.0
      %2914 = vmatmul.mubr.f32.gmra.mxu0 %v758
      %v2915 = vpop.f32.mrf.mxu0
      %v2916 = vadd.f32 0.0, %v2915
      %v2917 = vpop.f32.mrf.mxu0
      %2918 = vmatprep.mubr.f32.mxu0 0.0
      %2919 = vmatmul.mubr.f32.gmra.mxu0 %v760
      %v2920 = vpop.f32.mrf.mxu0
      %v2921 = vadd.f32 0.0, %v2920
      %v2922 = vpop.f32.mrf.mxu0
      %2923 = vmatprep.mubr.f32.mxu0 0.0
      %2924 = vmatmul.mubr.f32.gmra.mxu0 %v762
      %v2925 = vpop.f32.mrf.mxu0
      %v2926 = vadd.f32 0.0, %v2925
      %v2927 = vpop.f32.mrf.mxu0
      %2928 = vmatprep.mubr.f32.mxu0 0.0
      %2929 = vmatmul.mubr.f32.gmra.mxu0 %v764
      %v2930 = vpop.f32.mrf.mxu0
      %v2931 = vadd.f32 0.0, %v2930
      %v2932 = vpop.f32.mrf.mxu0
      %2933 = vmatprep.mubr.f32.mxu0 0.0
      %2934 = vmatmul.mubr.f32.gmra.mxu0 %v766
      %v2935 = vpop.f32.mrf.mxu0
      %v2936 = vadd.f32 0.0, %v2935
      %v2937 = vpop.f32.mrf.mxu0
      %2938 = vmatprep.mubr.f32.mxu0 0.0
      %2939 = vmatmul.mubr.f32.gmra.mxu0 %v768
      %v2940 = vpop.f32.mrf.mxu0
      %v2941 = vadd.f32 0.0, %v2940
      %v2942 = vpop.f32.mrf.mxu0
      %2943 = vmatprep.mubr.f32.mxu0 0.0
      %2944 = vmatmul.mubr.f32.gmra.mxu0 %v770
      %v2945 = vpop.f32.mrf.mxu0
      %v2946 = vadd.f32 0.0, %v2945
      %v2947 = vpop.f32.mrf.mxu0
      %2948 = vmatprep.mubr.f32.mxu0 0.0
      %2949 = vmatmul.mubr.f32.gmra.mxu0 %v772
      %v2950 = vpop.f32.mrf.mxu0
      %v2951 = vadd.f32 0.0, %v2950
      %v2952 = vpop.f32.mrf.mxu0
      %2953 = vmatprep.mubr.f32.mxu0 0.0
      %2954 = vmatmul.mubr.f32.gmra.mxu0 %v774
      %v2955 = vpop.f32.mrf.mxu0
      %v2956 = vadd.f32 0.0, %v2955
      %v2957 = vpop.f32.mrf.mxu0
      %2958 = vmatprep.mubr.f32.mxu0 0.0
      %2959 = vmatmul.mubr.f32.gmra.mxu0 %v776
      %v2960 = vpop.f32.mrf.mxu0
      %v2961 = vadd.f32 0.0, %v2960
      %v2962 = vpop.f32.mrf.mxu0
      %2963 = vmatprep.mubr.f32.mxu0 0.0
      %2964 = vmatmul.mubr.f32.gmra.mxu0 %v778
      %v2965 = vpop.f32.mrf.mxu0
      %v2966 = vadd.f32 0.0, %v2965
      %v2967 = vpop.f32.mrf.mxu0
      %2968 = vmatprep.mubr.f32.mxu0 0.0
      %2969 = vmatmul.mubr.f32.gmra.mxu0 %v780
      %v2970 = vpop.f32.mrf.mxu0
      %v2971 = vadd.f32 0.0, %v2970
      %v2972 = vpop.f32.mrf.mxu0
      %2973 = vmatprep.mubr.f32.mxu0 0.0
      %2974 = vmatmul.mubr.f32.gmra.mxu0 %v782
      %v2975 = vpop.f32.mrf.mxu0
      %v2976 = vadd.f32 0.0, %v2975
      %v2977 = vpop.f32.mrf.mxu0
      %2978 = vmatprep.mubr.f32.mxu0 0.0
      %2979 = vmatmul.mubr.f32.gmra.mxu0 %v784
      %v2980 = vpop.f32.mrf.mxu0
      %v2981 = vadd.f32 0.0, %v2980
      %v2982 = vpop.f32.mrf.mxu0
      %2983 = vmatprep.mubr.f32.mxu0 0.0
      %2984 = vmatmul.mubr.f32.gmra.mxu0 %v786
      %v2985 = vpop.f32.mrf.mxu0
      %v2986 = vadd.f32 0.0, %v2985
      %v2987 = vpop.f32.mrf.mxu0
      %2988 = vmatprep.mubr.f32.mxu0 0.0
      %2989 = vmatmul.mubr.f32.gmra.mxu0 %v788
      %v2990 = vpop.f32.mrf.mxu0
      %v2991 = vadd.f32 0.0, %v2990
      %v2992 = vpop.f32.mrf.mxu0
      %2993 = vmatprep.mubr.f32.mxu0 0.0
      %2994 = vmatmul.mubr.f32.gmra.mxu0 %v790
      %v2995 = vpop.f32.mrf.mxu0
      %v2996 = vadd.f32 0.0, %v2995
      %v2997 = vpop.f32.mrf.mxu0
      %2998 = vmatprep.mubr.f32.mxu0 0.0
      %2999 = vmatmul.mubr.f32.gmra.mxu0 %v1982
      %v3000 = vpop.f32.mrf.mxu0
      %v3001 = vadd.f32 0.0, %v3000
      %v3002 = vpop.f32.mrf.mxu0
      %3003 = vmatprep.mubr.f32.mxu0 0.0
      %3004 = vmatmul.mubr.f32.gmra.mxu0 %v1984
      %v3005 = vpop.f32.mrf.mxu0
      %v3006 = vadd.f32 0.0, %v3005
      %v3007 = vpop.f32.mrf.mxu0
      %3008 = vmatprep.mubr.f32.mxu0 0.0
      %3009 = vmatmul.mubr.f32.gmra.mxu0 %v2787
      %v3010 = vpop.f32.mrf.mxu0
      %v3011 = vadd.f32 0.0, %v3010
      %v3012 = vpop.f32.mrf.mxu0
      %3013 = vmatprep.mubr.f32.mxu0 0.0
      %3014 = vmatmul.mubr.f32.gmra.mxu0 %v2789
      %v3015 = vpop.f32.mrf.mxu0
      %v3016 = vadd.f32 0.0, %v3015
      %v3017 = vpop.f32.mrf.mxu0
      %3018 = vdwg.mxu0
      %v3019 = vadd.f32 %v2749, %v2861
      %v3020 = vadd.f32 %v2750, %v2866
      %v3021 = vadd.f32 %v2751, %v2871
      %v3022 = vadd.f32 %v2752, %v2876
      %v3023 = vadd.f32 %v2753, %v2881
      %v3024 = vadd.f32 %v2754, %v2886
      %v3025 = vadd.f32 %v2755, %v2891
      %v3026 = vadd.f32 %v2756, %v2896
      %v3027 = vadd.f32 %v2757, %v2901
      %v3028 = vadd.f32 %v2758, %v2906
      %v3029 = vadd.f32 %v2759, %v2911
      %v3030 = vadd.f32 %v2760, %v2916
      %v3031 = vadd.f32 %v2761, %v2921
      %v3032 = vadd.f32 %v2762, %v2926
      %v3033 = vadd.f32 %v2763, %v2931
      %v3034 = vadd.f32 %v2764, %v2936
      %v3035 = vadd.f32 %v2765, %v2941
      %v3036 = vadd.f32 %v2766, %v2946
      %v3037 = vadd.f32 %v2767, %v2951
      %v3038 = vadd.f32 %v2768, %v2956
      %v3039 = vadd.f32 %v2769, %v2961
      %v3040 = vadd.f32 %v2770, %v2966
      %v3041 = vadd.f32 %v2771, %v2971
      %v3042 = vadd.f32 %v2772, %v2976
      %v3043 = vadd.f32 %v2773, %v2981
      %v3044 = vadd.f32 %v2774, %v2986
      %v3045 = vadd.f32 %v2775, %v2991
      %v3046 = vadd.f32 %v2776, %v2996
      %v3047 = vadd.f32 %v2777, %v3001
      %v3048 = vadd.f32 %v2778, %v3006
      %v3049 = vadd.f32 %v2779, %v3011
      %v3050 = vadd.f32 %v2780, %v3016
      %v3051 = vrot.slane %v555, 2
      %v3052 = vrot.slane %v556, 2
      %v3053 = vsel %vm1313, %v3051, %v3052
      %v3054 = vrot.slane %v557, 2
      %v3055 = vsel %vm1313, %v3052, %v3054
      %v3056 = vsel %vm727, %v3053, 0
      %v3058 = vsel %vm727, %v3055, 0
      %v3061 = vsel %vm792, %v492, 0
      %3063 = vmatprep.subr.mxu0 0.0
      %3064 = vmatpush1.msra.mxu0 0.0
      %3065 = vmatprep.subr.mxu0 0.0
      %3066 = vmatpush1.msra.mxu0 0.0
      %3067 = vmatprep.subr.mxu0 0.0
      %3068 = vmatpush1.msra.mxu0 0.0
      %3069 = vmatprep.subr.mxu0 0.0
      %3070 = vmatpush1.msra.mxu0 0.0
      %3071 = vmatprep.subr.mxu0 0.0
      %3072 = vmatpush1.msra.mxu0 0.0
      %3073 = vmatprep.subr.mxu0 0.0
      %3074 = vmatpush1.msra.mxu0 0.0
      %3075 = vmatprep.subr.mxu0 0.0
      %3076 = vmatpush1.msra.mxu0 0.0
      %3077 = vmatprep.subr.mxu0 0.0
      %3078 = vmatpush1.msra.mxu0 0.0
      %3079 = vmatprep.subr.mxu0 0.0
      %3080 = vmatpush1.msra.mxu0 0.0
      %3081 = vmatprep.subr.mxu0 0.0
      %3082 = vmatpush1.msra.mxu0 0.0
      %3083 = vmatprep.subr.mxu0 0.0
      %3084 = vmatpush1.msra.mxu0 0.0
      %3085 = vmatprep.subr.mxu0 0.0
      %3086 = vmatpush1.msra.mxu0 0.0
      %3087 = vmatprep.subr.mxu0 0.0
      %3088 = vmatpush1.msra.mxu0 0.0
      %3089 = vmatprep.subr.mxu0 0.0
      %3090 = vmatpush1.msra.mxu0 0.0
      %3091 = vmatprep.subr.mxu0 0.0
      %3092 = vmatpush1.msra.mxu0 0.0
      %3093 = vmatprep.subr.mxu0 0.0
      %3094 = vmatpush1.msra.mxu0 %v3061
      %3095 = vmatprep.subr.mxu0 0.0
      %3096 = vmatpush2.msra.mxu0 0.0
      %3097 = vmatprep.subr.mxu0 0.0
      %3098 = vmatpush2.msra.mxu0 0.0
      %3099 = vmatprep.subr.mxu0 0.0
      %3100 = vmatpush2.msra.mxu0 0.0
      %3101 = vmatprep.subr.mxu0 0.0
      %3102 = vmatpush2.msra.mxu0 0.0
      %3103 = vmatprep.subr.mxu0 0.0
      %3104 = vmatpush2.msra.mxu0 0.0
      %3105 = vmatprep.subr.mxu0 0.0
      %3106 = vmatpush2.msra.mxu0 0.0
      %3107 = vmatprep.subr.mxu0 0.0
      %3108 = vmatpush2.msra.mxu0 0.0
      %3109 = vmatprep.subr.mxu0 0.0
      %3110 = vmatpush2.msra.mxu0 0.0
      %3111 = vmatprep.subr.mxu0 0.0
      %3112 = vmatpush2.msra.mxu0 0.0
      %3113 = vmatprep.subr.mxu0 0.0
      %3114 = vmatpush2.msra.mxu0 0.0
      %3115 = vmatprep.subr.mxu0 0.0
      %3116 = vmatpush2.msra.mxu0 0.0
      %3117 = vmatprep.subr.mxu0 0.0
      %3118 = vmatpush2.msra.mxu0 0.0
      %3119 = vmatprep.subr.mxu0 0.0
      %3120 = vmatpush2.msra.mxu0 0.0
      %3121 = vmatprep.subr.mxu0 0.0
      %3122 = vmatpush2.msra.mxu0 0.0
      %3123 = vmatprep.subr.mxu0 0.0
      %3124 = vmatpush2.msra.mxu0 0.0
      %3125 = vmatprep.subr.mxu0 0.0
      %3126 = vmatpush2.msra.mxu0 0.0
      %3127 = vmatprep.mubr.f32.mxu0 0.0
      %3128 = vmatmul.mubr.f32.gmra.mxu0 %v1402
      %v3129 = vpop.f32.mrf.mxu0
      %v3130 = vadd.f32 0.0, %v3129
      %v3131 = vpop.f32.mrf.mxu0
      %3132 = vmatprep.mubr.f32.mxu0 0.0
      %3133 = vmatmul.mubr.f32.gmra.mxu0 %v1404
      %v3134 = vpop.f32.mrf.mxu0
      %v3135 = vadd.f32 0.0, %v3134
      %v3136 = vpop.f32.mrf.mxu0
      %3137 = vmatprep.mubr.f32.mxu0 0.0
      %3138 = vmatmul.mubr.f32.gmra.mxu0 %v1406
      %v3139 = vpop.f32.mrf.mxu0
      %v3140 = vadd.f32 0.0, %v3139
      %v3141 = vpop.f32.mrf.mxu0
      %3142 = vmatprep.mubr.f32.mxu0 0.0
      %3143 = vmatmul.mubr.f32.gmra.mxu0 %v1408
      %v3144 = vpop.f32.mrf.mxu0
      %v3145 = vadd.f32 0.0, %v3144
      %v3146 = vpop.f32.mrf.mxu0
      %3147 = vmatprep.mubr.f32.mxu0 0.0
      %3148 = vmatmul.mubr.f32.gmra.mxu0 %v1410
      %v3149 = vpop.f32.mrf.mxu0
      %v3150 = vadd.f32 0.0, %v3149
      %v3151 = vpop.f32.mrf.mxu0
      %3152 = vmatprep.mubr.f32.mxu0 0.0
      %3153 = vmatmul.mubr.f32.gmra.mxu0 %v1412
      %v3154 = vpop.f32.mrf.mxu0
      %v3155 = vadd.f32 0.0, %v3154
      %v3156 = vpop.f32.mrf.mxu0
      %3157 = vmatprep.mubr.f32.mxu0 0.0
      %3158 = vmatmul.mubr.f32.gmra.mxu0 %v1414
      %v3159 = vpop.f32.mrf.mxu0
      %v3160 = vadd.f32 0.0, %v3159
      %v3161 = vpop.f32.mrf.mxu0
      %3162 = vmatprep.mubr.f32.mxu0 0.0
      %3163 = vmatmul.mubr.f32.gmra.mxu0 %v1416
      %v3164 = vpop.f32.mrf.mxu0
      %v3165 = vadd.f32 0.0, %v3164
      %v3166 = vpop.f32.mrf.mxu0
      %3167 = vmatprep.mubr.f32.mxu0 0.0
      %3168 = vmatmul.mubr.f32.gmra.mxu0 %v1418
      %v3169 = vpop.f32.mrf.mxu0
      %v3170 = vadd.f32 0.0, %v3169
      %v3171 = vpop.f32.mrf.mxu0
      %3172 = vmatprep.mubr.f32.mxu0 0.0
      %3173 = vmatmul.mubr.f32.gmra.mxu0 %v1420
      %v3174 = vpop.f32.mrf.mxu0
      %v3175 = vadd.f32 0.0, %v3174
      %v3176 = vpop.f32.mrf.mxu0
      %3177 = vmatprep.mubr.f32.mxu0 0.0
      %3178 = vmatmul.mubr.f32.gmra.mxu0 %v1422
      %v3179 = vpop.f32.mrf.mxu0
      %v3180 = vadd.f32 0.0, %v3179
      %v3181 = vpop.f32.mrf.mxu0
      %3182 = vmatprep.mubr.f32.mxu0 0.0
      %3183 = vmatmul.mubr.f32.gmra.mxu0 %v1424
      %v3184 = vpop.f32.mrf.mxu0
      %v3185 = vadd.f32 0.0, %v3184
      %v3186 = vpop.f32.mrf.mxu0
      %3187 = vmatprep.mubr.f32.mxu0 0.0
      %3188 = vmatmul.mubr.f32.gmra.mxu0 %v1426
      %v3189 = vpop.f32.mrf.mxu0
      %v3190 = vadd.f32 0.0, %v3189
      %v3191 = vpop.f32.mrf.mxu0
      %3192 = vmatprep.mubr.f32.mxu0 0.0
      %3193 = vmatmul.mubr.f32.gmra.mxu0 %v1428
      %v3194 = vpop.f32.mrf.mxu0
      %v3195 = vadd.f32 0.0, %v3194
      %v3196 = vpop.f32.mrf.mxu0
      %3197 = vmatprep.mubr.f32.mxu0 0.0
      %3198 = vmatmul.mubr.f32.gmra.mxu0 %v1430
      %v3199 = vpop.f32.mrf.mxu0
      %v3200 = vadd.f32 0.0, %v3199
      %v3201 = vpop.f32.mrf.mxu0
      %3202 = vmatprep.mubr.f32.mxu0 0.0
      %3203 = vmatmul.mubr.f32.gmra.mxu0 %v1432
      %v3204 = vpop.f32.mrf.mxu0
      %v3205 = vadd.f32 0.0, %v3204
      %v3206 = vpop.f32.mrf.mxu0
      %3207 = vmatprep.mubr.f32.mxu0 0.0
      %3208 = vmatmul.mubr.f32.gmra.mxu0 %v1434
      %v3209 = vpop.f32.mrf.mxu0
      %v3210 = vadd.f32 0.0, %v3209
      %v3211 = vpop.f32.mrf.mxu0
      %3212 = vmatprep.mubr.f32.mxu0 0.0
      %3213 = vmatmul.mubr.f32.gmra.mxu0 %v1436
      %v3214 = vpop.f32.mrf.mxu0
      %v3215 = vadd.f32 0.0, %v3214
      %v3216 = vpop.f32.mrf.mxu0
      %3217 = vmatprep.mubr.f32.mxu0 0.0
      %3218 = vmatmul.mubr.f32.gmra.mxu0 %v1438
      %v3219 = vpop.f32.mrf.mxu0
      %v3220 = vadd.f32 0.0, %v3219
      %v3221 = vpop.f32.mrf.mxu0
      %3222 = vmatprep.mubr.f32.mxu0 0.0
      %3223 = vmatmul.mubr.f32.gmra.mxu0 %v1440
      %v3224 = vpop.f32.mrf.mxu0
      %v3225 = vadd.f32 0.0, %v3224
      %v3226 = vpop.f32.mrf.mxu0
      %3227 = vmatprep.mubr.f32.mxu0 0.0
      %3228 = vmatmul.mubr.f32.gmra.mxu0 %v1442
      %v3229 = vpop.f32.mrf.mxu0
      %v3230 = vadd.f32 0.0, %v3229
      %v3231 = vpop.f32.mrf.mxu0
      %3232 = vmatprep.mubr.f32.mxu0 0.0
      %3233 = vmatmul.mubr.f32.gmra.mxu0 %v1444
      %v3234 = vpop.f32.mrf.mxu0
      %v3235 = vadd.f32 0.0, %v3234
      %v3236 = vpop.f32.mrf.mxu0
      %3237 = vmatprep.mubr.f32.mxu0 0.0
      %3238 = vmatmul.mubr.f32.gmra.mxu0 %v1446
      %v3239 = vpop.f32.mrf.mxu0
      %v3240 = vadd.f32 0.0, %v3239
      %v3241 = vpop.f32.mrf.mxu0
      %3242 = vmatprep.mubr.f32.mxu0 0.0
      %3243 = vmatmul.mubr.f32.gmra.mxu0 %v1448
      %v3244 = vpop.f32.mrf.mxu0
      %v3245 = vadd.f32 0.0, %v3244
      %v3246 = vpop.f32.mrf.mxu0
      %3247 = vmatprep.mubr.f32.mxu0 0.0
      %3248 = vmatmul.mubr.f32.gmra.mxu0 %v1450
      %v3249 = vpop.f32.mrf.mxu0
      %v3250 = vadd.f32 0.0, %v3249
      %v3251 = vpop.f32.mrf.mxu0
      %3252 = vmatprep.mubr.f32.mxu0 0.0
      %3253 = vmatmul.mubr.f32.gmra.mxu0 %v1452
      %v3254 = vpop.f32.mrf.mxu0
      %v3255 = vadd.f32 0.0, %v3254
      %v3256 = vpop.f32.mrf.mxu0
      %3257 = vmatprep.mubr.f32.mxu0 0.0
      %3258 = vmatmul.mubr.f32.gmra.mxu0 %v1454
      %v3259 = vpop.f32.mrf.mxu0
      %v3260 = vadd.f32 0.0, %v3259
      %v3261 = vpop.f32.mrf.mxu0
      %3262 = vmatprep.mubr.f32.mxu0 0.0
      %3263 = vmatmul.mubr.f32.gmra.mxu0 %v1456
      %v3264 = vpop.f32.mrf.mxu0
      %v3265 = vadd.f32 0.0, %v3264
      %v3266 = vpop.f32.mrf.mxu0
      %3267 = vmatprep.mubr.f32.mxu0 0.0
      %3268 = vmatmul.mubr.f32.gmra.mxu0 %v2251
      %v3269 = vpop.f32.mrf.mxu0
      %v3270 = vadd.f32 0.0, %v3269
      %v3271 = vpop.f32.mrf.mxu0
      %3272 = vmatprep.mubr.f32.mxu0 0.0
      %3273 = vmatmul.mubr.f32.gmra.mxu0 %v2253
      %v3274 = vpop.f32.mrf.mxu0
      %v3275 = vadd.f32 0.0, %v3274
      %v3276 = vpop.f32.mrf.mxu0
      %3277 = vmatprep.mubr.f32.mxu0 0.0
      %3278 = vmatmul.mubr.f32.gmra.mxu0 %v3056
      %v3279 = vpop.f32.mrf.mxu0
      %v3280 = vadd.f32 0.0, %v3279
      %v3281 = vpop.f32.mrf.mxu0
      %3282 = vmatprep.mubr.f32.mxu0 0.0
      %3283 = vmatmul.mubr.f32.gmra.mxu0 %v3058
      %v3284 = vpop.f32.mrf.mxu0
      %v3285 = vadd.f32 0.0, %v3284
      %v3286 = vpop.f32.mrf.mxu0
      %3287 = vdwg.mxu0
      %v3288 = vadd.f32 %v3019, %v3130
      %v3289 = vadd.f32 %v3020, %v3135
      %v3290 = vadd.f32 %v3021, %v3140
      %v3291 = vadd.f32 %v3022, %v3145
      %v3292 = vadd.f32 %v3023, %v3150
      %v3293 = vadd.f32 %v3024, %v3155
      %v3294 = vadd.f32 %v3025, %v3160
      %v3295 = vadd.f32 %v3026, %v3165
      %v3296 = vadd.f32 %v3027, %v3170
      %v3297 = vadd.f32 %v3028, %v3175
      %v3298 = vadd.f32 %v3029, %v3180
      %v3299 = vadd.f32 %v3030, %v3185
      %v3300 = vadd.f32 %v3031, %v3190
      %v3301 = vadd.f32 %v3032, %v3195
      %v3302 = vadd.f32 %v3033, %v3200
      %v3303 = vadd.f32 %v3034, %v3205
      %v3304 = vadd.f32 %v3035, %v3210
      %v3305 = vadd.f32 %v3036, %v3215
      %v3306 = vadd.f32 %v3037, %v3220
      %v3307 = vadd.f32 %v3038, %v3225
      %v3308 = vadd.f32 %v3039, %v3230
      %v3309 = vadd.f32 %v3040, %v3235
      %v3310 = vadd.f32 %v3041, %v3240
      %v3311 = vadd.f32 %v3042, %v3245
      %v3312 = vadd.f32 %v3043, %v3250
      %v3313 = vadd.f32 %v3044, %v3255
      %v3314 = vadd.f32 %v3045, %v3260
      %v3315 = vadd.f32 %v3046, %v3265
      %v3316 = vadd.f32 %v3047, %v3270
      %v3317 = vadd.f32 %v3048, %v3275
      %v3318 = vadd.f32 %v3049, %v3280
      %v3319 = vadd.f32 %v3050, %v3285
      %v3321 = vlaneseq
      %v3322 = vshrl.u32 %v3321, 7
      %v3323 = vsub.s32 0, %v3322
      %v3324 = vrot.slane %v502, %v3323
      %v3326 = vadd.f32 %v3288, %v3324
      %v3327 = vadd.f32 %v3289, %v3324
      %v3328 = vadd.f32 %v3290, %v3324
      %v3329 = vadd.f32 %v3291, %v3324
      %v3330 = vadd.f32 %v3292, %v3324
      %v3331 = vadd.f32 %v3293, %v3324
      %v3332 = vadd.f32 %v3294, %v3324
      %v3333 = vadd.f32 %v3295, %v3324
      %v3334 = vadd.f32 %v3296, %v3324
      %v3335 = vadd.f32 %v3297, %v3324
      %v3336 = vadd.f32 %v3298, %v3324
      %v3337 = vadd.f32 %v3299, %v3324
      %v3338 = vadd.f32 %v3300, %v3324
      %v3339 = vadd.f32 %v3301, %v3324
      %v3340 = vadd.f32 %v3302, %v3324
      %v3341 = vadd.f32 %v3303, %v3324
      %v3342 = vadd.f32 %v3304, %v3324
      %v3343 = vadd.f32 %v3305, %v3324
      %v3344 = vadd.f32 %v3306, %v3324
      %v3345 = vadd.f32 %v3307, %v3324
      %v3346 = vadd.f32 %v3308, %v3324
      %v3347 = vadd.f32 %v3309, %v3324
      %v3348 = vadd.f32 %v3310, %v3324
      %v3349 = vadd.f32 %v3311, %v3324
      %v3350 = vadd.f32 %v3312, %v3324
      %v3351 = vadd.f32 %v3313, %v3324
      %v3352 = vadd.f32 %v3314, %v3324
      %v3353 = vadd.f32 %v3315, %v3324
      %v3354 = vadd.f32 %v3316, %v3324
      %v3355 = vadd.f32 %v3317, %v3324
      %v3356 = vadd.f32 %v3318, %v3324
      %v3357 = vadd.f32 %v3319, %v3324
      %v3358 = vmax.f32 %v3326, 0.0
      %v3359 = vmax.f32 %v3327, 0.0
      %v3360 = vmax.f32 %v3328, 0.0
      %v3361 = vmax.f32 %v3329, 0.0
      %v3362 = vmax.f32 %v3330, 0.0
      %v3363 = vmax.f32 %v3331, 0.0
      %v3364 = vmax.f32 %v3332, 0.0
      %v3365 = vmax.f32 %v3333, 0.0
      %v3366 = vmax.f32 %v3334, 0.0
      %v3367 = vmax.f32 %v3335, 0.0
      %v3368 = vmax.f32 %v3336, 0.0
      %v3369 = vmax.f32 %v3337, 0.0
      %v3370 = vmax.f32 %v3338, 0.0
      %v3371 = vmax.f32 %v3339, 0.0
      %v3372 = vmax.f32 %v3340, 0.0
      %v3373 = vmax.f32 %v3341, 0.0
      %v3374 = vmax.f32 %v3342, 0.0
      %v3375 = vmax.f32 %v3343, 0.0
      %v3376 = vmax.f32 %v3344, 0.0
      %v3377 = vmax.f32 %v3345, 0.0
      %v3378 = vmax.f32 %v3346, 0.0
      %v3379 = vmax.f32 %v3347, 0.0
      %v3380 = vmax.f32 %v3348, 0.0
      %v3381 = vmax.f32 %v3349, 0.0
      %v3382 = vmax.f32 %v3350, 0.0
      %v3383 = vmax.f32 %v3351, 0.0
      %v3384 = vmax.f32 %v3352, 0.0
      %v3385 = vmax.f32 %v3353, 0.0
      %v3386 = vmax.f32 %v3354, 0.0
      %v3387 = vmax.f32 %v3355, 0.0
      %v3388 = vmax.f32 %v3356, 0.0
      %v3389 = vmax.f32 %v3357, 0.0
      %s3390 = scalar_lea.vmem [#allocation3], 24
      %3391 = vst.msk [vmem:[%s3390 + $0x1] sm:$0xff] %vm727, %v3358
      %3392 = vst.msk [vmem:[%s3390 + $0x9] sm:$0xff] %vm727, %v3359
      %3393 = vst.msk [vmem:[%s3390 + $0x19] sm:$0xff] %vm727, %v3360
      %3394 = vst.msk [vmem:[%s3390 + $0x21] sm:$0xff] %vm727, %v3361
      %3395 = vst.msk [vmem:[%s3390 + $0x31] sm:$0xff] %vm727, %v3362
      %3396 = vst.msk [vmem:[%s3390 + $0x39] sm:$0xff] %vm727, %v3363
      %3397 = vst.msk [vmem:[%s3390 + $0x49] sm:$0xff] %vm727, %v3364
      %3398 = vst.msk [vmem:[%s3390 + $0x51] sm:$0xff] %vm727, %v3365
      %3399 = vst.msk [vmem:[%s3390 + $0x61] sm:$0xff] %vm727, %v3366
      %3400 = vst.msk [vmem:[%s3390 + $0x69] sm:$0xff] %vm727, %v3367
      %3401 = vst.msk [vmem:[%s3390 + $0x79] sm:$0xff] %vm727, %v3368
      %3402 = vst.msk [vmem:[%s3390 + $0x81] sm:$0xff] %vm727, %v3369
      %3403 = vst.msk [vmem:[%s3390 + $0x91] sm:$0xff] %vm727, %v3370
      %3404 = vst.msk [vmem:[%s3390 + $0x99] sm:$0xff] %vm727, %v3371
      %3405 = vst.msk [vmem:[%s3390 + $0xa9] sm:$0xff] %vm727, %v3372
      %3406 = vst.msk [vmem:[%s3390 + $0xb1] sm:$0xff] %vm727, %v3373
      %3407 = vst.msk [vmem:[%s3390 + $0xc1] sm:$0xff] %vm727, %v3374
      %3408 = vst.msk [vmem:[%s3390 + $0xc9] sm:$0xff] %vm727, %v3375
      %3409 = vst.msk [vmem:[%s3390 + $0xd9] sm:$0xff] %vm727, %v3376
      %3410 = vst.msk [vmem:[%s3390 + $0xe1] sm:$0xff] %vm727, %v3377
      %3411 = vst.msk [vmem:[%s3390 + $0xf1] sm:$0xff] %vm727, %v3378
      %3412 = vst.msk [vmem:[%s3390 + $0xf9] sm:$0xff] %vm727, %v3379
      %3413 = vst.msk [vmem:[%s3390 + $0x109] sm:$0xff] %vm727, %v3380
      %3414 = vst.msk [vmem:[%s3390 + $0x111] sm:$0xff] %vm727, %v3381
      %3415 = vst.msk [vmem:[%s3390 + $0x121] sm:$0xff] %vm727, %v3382
      %3416 = vst.msk [vmem:[%s3390 + $0x129] sm:$0xff] %vm727, %v3383
      %3417 = vst.msk [vmem:[%s3390 + $0x139] sm:$0xff] %vm727, %v3384
      %3418 = vst.msk [vmem:[%s3390 + $0x141] sm:$0xff] %vm727, %v3385
      %3419 = vst.msk [vmem:[%s3390 + $0x151] sm:$0xff] %vm727, %v3386
      %3420 = vst.msk [vmem:[%s3390 + $0x159] sm:$0xff] %vm727, %v3387
      %3421 = vst.msk [vmem:[%s3390 + $0x169] sm:$0xff] %vm727, %v3388
      %3422 = vst.msk [vmem:[%s3390 + $0x171] sm:$0xff] %vm727, %v3389
      %v3423 = vld [vmem:[#allocation3] sm:$0xff]
      %v3424 = vld [vmem:[#allocation3 + $0x8] sm:$0xff]
      %v3425 = vld [vmem:[#allocation3 + $0x10] sm:$0x3]
      %v3426 = vld [vmem:[#allocation3 + $0x18] sm:$0xff]
      %v3427 = vld [vmem:[#allocation3 + $0x20] sm:$0xff]
      %v3428 = vld [vmem:[#allocation3 + $0x28] sm:$0x3]
      %v3429 = vld [vmem:[#allocation3 + $0x30] sm:$0xff]
      %v3430 = vld [vmem:[#allocation3 + $0x38] sm:$0xff]
      %v3431 = vld [vmem:[#allocation3 + $0x40] sm:$0x3]
      %v3432 = vld [vmem:[#allocation3 + $0x48] sm:$0xff]
      %v3433 = vld [vmem:[#allocation3 + $0x50] sm:$0xff]
      %v3434 = vld [vmem:[#allocation3 + $0x58] sm:$0x3]
      %v3435 = vld [vmem:[#allocation3 + $0x60] sm:$0xff]
      %v3436 = vld [vmem:[#allocation3 + $0x68] sm:$0xff]
      %v3437 = vld [vmem:[#allocation3 + $0x70] sm:$0x3]
      %v3438 = vld [vmem:[#allocation3 + $0x78] sm:$0xff]
      %v3439 = vld [vmem:[#allocation3 + $0x80] sm:$0xff]
      %v3440 = vld [vmem:[#allocation3 + $0x88] sm:$0x3]
      %v3441 = vld [vmem:[#allocation3 + $0x90] sm:$0xff]
      %v3442 = vld [vmem:[#allocation3 + $0x98] sm:$0xff]
      %v3443 = vld [vmem:[#allocation3 + $0xa0] sm:$0x3]
      %v3444 = vld [vmem:[#allocation3 + $0xa8] sm:$0xff]
      %v3445 = vld [vmem:[#allocation3 + $0xb0] sm:$0xff]
      %v3446 = vld [vmem:[#allocation3 + $0xb8] sm:$0x3]
      %v3447 = vld [vmem:[#allocation3 + $0xc0] sm:$0xff]
      %v3448 = vld [vmem:[#allocation3 + $0xc8] sm:$0xff]
      %v3449 = vld [vmem:[#allocation3 + $0xd0] sm:$0x3]
      %v3450 = vld [vmem:[#allocation3 + $0xd8] sm:$0xff]
      %v3451 = vld [vmem:[#allocation3 + $0xe0] sm:$0xff]
      %v3452 = vld [vmem:[#allocation3 + $0xe8] sm:$0x3]
      %v3453 = vld [vmem:[#allocation3 + $0xf0] sm:$0xff]
      %v3454 = vld [vmem:[#allocation3 + $0xf8] sm:$0xff]
      %v3455 = vld [vmem:[#allocation3 + $0x100] sm:$0x3]
      %v3456 = vld [vmem:[#allocation3 + $0x108] sm:$0xff]
      %v3457 = vld [vmem:[#allocation3 + $0x110] sm:$0xff]
      %v3458 = vld [vmem:[#allocation3 + $0x118] sm:$0x3]
      %v3459 = vld [vmem:[#allocation3 + $0x120] sm:$0xff]
      %v3460 = vld [vmem:[#allocation3 + $0x128] sm:$0xff]
      %v3461 = vld [vmem:[#allocation3 + $0x130] sm:$0x3]
      %v3462 = vld [vmem:[#allocation3 + $0x138] sm:$0xff]
      %v3463 = vld [vmem:[#allocation3 + $0x140] sm:$0xff]
      %v3464 = vld [vmem:[#allocation3 + $0x148] sm:$0x3]
      %v3465 = vld [vmem:[#allocation3 + $0x150] sm:$0xff]
      %v3466 = vld [vmem:[#allocation3 + $0x158] sm:$0xff]
      %v3467 = vld [vmem:[#allocation3 + $0x160] sm:$0x3]
      %v3468 = vld [vmem:[#allocation3 + $0x168] sm:$0xff]
      %v3469 = vld [vmem:[#allocation3 + $0x170] sm:$0xff]
      %v3470 = vld [vmem:[#allocation3 + $0x178] sm:$0x3]
      %v3471 = vld [vmem:[#allocation3 + $0x180] sm:$0xff]
      %v3472 = vld [vmem:[#allocation3 + $0x188] sm:$0xff]
      %v3473 = vld [vmem:[#allocation3 + $0x190] sm:$0x3]
      %v3474 = vld [vmem:[#allocation3 + $0x198] sm:$0xff]
      %v3475 = vld [vmem:[#allocation3 + $0x1a0] sm:$0xff]
      %v3476 = vld [vmem:[#allocation3 + $0x1a8] sm:$0x3]
      %v3525 = vrot.slane %v3423, 1
      %v3526 = vrot.slane %v3424, 1
      %v3527 = vsel %vm606, %v3525, %v3526
      %v3528 = vrot.slane %v3425, 1
      %v3529 = vsel %vm606, %v3526, %v3528
      %v3530 = vrot.slane %v3426, 1
      %v3531 = vrot.slane %v3427, 1
      %v3532 = vsel %vm606, %v3530, %v3531
      %v3533 = vrot.slane %v3428, 1
      %v3534 = vsel %vm606, %v3531, %v3533
      %v3535 = vrot.slane %v3429, 1
      %v3536 = vrot.slane %v3430, 1
      %v3537 = vsel %vm606, %v3535, %v3536
      %v3538 = vrot.slane %v3431, 1
      %v3539 = vsel %vm606, %v3536, %v3538
      %v3540 = vrot.slane %v3432, 1
      %v3541 = vrot.slane %v3433, 1
      %v3542 = vsel %vm606, %v3540, %v3541
      %v3543 = vrot.slane %v3434, 1
      %v3544 = vsel %vm606, %v3541, %v3543
      %v3545 = vrot.slane %v3435, 1
      %v3546 = vrot.slane %v3436, 1
      %v3547 = vsel %vm606, %v3545, %v3546
      %v3548 = vrot.slane %v3437, 1
      %v3549 = vsel %vm606, %v3546, %v3548
      %v3550 = vrot.slane %v3438, 1
      %v3551 = vrot.slane %v3439, 1
      %v3552 = vsel %vm606, %v3550, %v3551
      %v3553 = vrot.slane %v3440, 1
      %v3554 = vsel %vm606, %v3551, %v3553
      %v3555 = vrot.slane %v3441, 1
      %v3556 = vrot.slane %v3442, 1
      %v3557 = vsel %vm606, %v3555, %v3556
      %v3558 = vrot.slane %v3443, 1
      %v3559 = vsel %vm606, %v3556, %v3558
      %v3560 = vrot.slane %v3444, 1
      %v3561 = vrot.slane %v3445, 1
      %v3562 = vsel %vm606, %v3560, %v3561
      %v3563 = vrot.slane %v3446, 1
      %v3564 = vsel %vm606, %v3561, %v3563
      %v3565 = vrot.slane %v3447, 1
      %v3566 = vrot.slane %v3448, 1
      %v3567 = vsel %vm606, %v3565, %v3566
      %v3568 = vrot.slane %v3449, 1
      %v3569 = vsel %vm606, %v3566, %v3568
      %v3570 = vrot.slane %v3450, 1
      %v3571 = vrot.slane %v3451, 1
      %v3572 = vsel %vm606, %v3570, %v3571
      %v3573 = vrot.slane %v3452, 1
      %v3574 = vsel %vm606, %v3571, %v3573
      %v3575 = vrot.slane %v3453, 1
      %v3576 = vrot.slane %v3454, 1
      %v3577 = vsel %vm606, %v3575, %v3576
      %v3578 = vrot.slane %v3455, 1
      %v3579 = vsel %vm606, %v3576, %v3578
      %v3580 = vrot.slane %v3456, 1
      %v3581 = vrot.slane %v3457, 1
      %v3582 = vsel %vm606, %v3580, %v3581
      %v3583 = vrot.slane %v3458, 1
      %v3584 = vsel %vm606, %v3581, %v3583
      %v3585 = vrot.slane %v3459, 1
      %v3586 = vrot.slane %v3460, 1
      %v3587 = vsel %vm606, %v3585, %v3586
      %v3588 = vrot.slane %v3461, 1
      %v3589 = vsel %vm606, %v3586, %v3588
      %v3590 = vrot.slane %v3462, 1
      %v3591 = vrot.slane %v3463, 1
      %v3592 = vsel %vm606, %v3590, %v3591
      %v3593 = vrot.slane %v3464, 1
      %v3594 = vsel %vm606, %v3591, %v3593
      %v3595 = vrot.slane %v3465, 1
      %v3596 = vrot.slane %v3466, 1
      %v3597 = vsel %vm606, %v3595, %v3596
      %v3598 = vrot.slane %v3467, 1
      %v3599 = vsel %vm606, %v3596, %v3598
      %v3600 = vrot.slane %v3468, 1
      %v3601 = vrot.slane %v3469, 1
      %v3602 = vsel %vm606, %v3600, %v3601
      %v3603 = vrot.slane %v3470, 1
      %v3604 = vsel %vm606, %v3601, %v3603
      %v3605 = vsel %vm727, %v3527, 0
      %v3607 = vsel %vm727, %v3529, 0
      %v3609 = vsel %vm727, %v3532, 0
      %v3611 = vsel %vm727, %v3534, 0
      %v3613 = vsel %vm727, %v3537, 0
      %v3615 = vsel %vm727, %v3539, 0
      %v3617 = vsel %vm727, %v3542, 0
      %v3619 = vsel %vm727, %v3544, 0
      %v3621 = vsel %vm727, %v3547, 0
      %v3623 = vsel %vm727, %v3549, 0
      %v3625 = vsel %vm727, %v3552, 0
      %v3627 = vsel %vm727, %v3554, 0
      %v3629 = vsel %vm727, %v3557, 0
      %v3631 = vsel %vm727, %v3559, 0
      %v3633 = vsel %vm727, %v3562, 0
      %v3635 = vsel %vm727, %v3564, 0
      %v3637 = vsel %vm727, %v3567, 0
      %v3639 = vsel %vm727, %v3569, 0
      %v3641 = vsel %vm727, %v3572, 0
      %v3643 = vsel %vm727, %v3574, 0
      %v3645 = vsel %vm727, %v3577, 0
      %v3647 = vsel %vm727, %v3579, 0
      %v3649 = vsel %vm727, %v3582, 0
      %v3651 = vsel %vm727, %v3584, 0
      %v3653 = vsel %vm727, %v3587, 0
      %v3655 = vsel %vm727, %v3589, 0
      %v3657 = vsel %vm727, %v3592, 0
      %v3659 = vsel %vm727, %v3594, 0
      %v3661 = vsel %vm727, %v3597, 0
      %v3663 = vsel %vm727, %v3599, 0
      %v3665 = vsel %vm727, %v3602, 0
      %v3667 = vsel %vm727, %v3604, 0
      %v3670 = vsel %vm792, %v494, 0
      %3672 = vmatprep.subr.mxu0 0.0
      %3673 = vmatpush1.msra.mxu0 0.0
      %3674 = vmatprep.subr.mxu0 0.0
      %3675 = vmatpush1.msra.mxu0 0.0
      %3676 = vmatprep.subr.mxu0 0.0
      %3677 = vmatpush1.msra.mxu0 0.0
      %3678 = vmatprep.subr.mxu0 0.0
      %3679 = vmatpush1.msra.mxu0 0.0
      %3680 = vmatprep.subr.mxu0 0.0
      %3681 = vmatpush1.msra.mxu0 0.0
      %3682 = vmatprep.subr.mxu0 0.0
      %3683 = vmatpush1.msra.mxu0 0.0
      %3684 = vmatprep.subr.mxu0 0.0
      %3685 = vmatpush1.msra.mxu0 0.0
      %3686 = vmatprep.subr.mxu0 0.0
      %3687 = vmatpush1.msra.mxu0 0.0
      %3688 = vmatprep.subr.mxu0 0.0
      %3689 = vmatpush1.msra.mxu0 0.0
      %3690 = vmatprep.subr.mxu0 0.0
      %3691 = vmatpush1.msra.mxu0 0.0
      %3692 = vmatprep.subr.mxu0 0.0
      %3693 = vmatpush1.msra.mxu0 0.0
      %3694 = vmatprep.subr.mxu0 0.0
      %3695 = vmatpush1.msra.mxu0 0.0
      %3696 = vmatprep.subr.mxu0 0.0
      %3697 = vmatpush1.msra.mxu0 0.0
      %3698 = vmatprep.subr.mxu0 0.0
      %3699 = vmatpush1.msra.mxu0 0.0
      %3700 = vmatprep.subr.mxu0 0.0
      %3701 = vmatpush1.msra.mxu0 0.0
      %3702 = vmatprep.subr.mxu0 0.0
      %3703 = vmatpush1.msra.mxu0 %v3670
      %3704 = vmatprep.subr.mxu0 0.0
      %3705 = vmatpush2.msra.mxu0 0.0
      %3706 = vmatprep.subr.mxu0 0.0
      %3707 = vmatpush2.msra.mxu0 0.0
      %3708 = vmatprep.subr.mxu0 0.0
      %3709 = vmatpush2.msra.mxu0 0.0
      %3710 = vmatprep.subr.mxu0 0.0
      %3711 = vmatpush2.msra.mxu0 0.0
      %3712 = vmatprep.subr.mxu0 0.0
      %3713 = vmatpush2.msra.mxu0 0.0
      %3714 = vmatprep.subr.mxu0 0.0
      %3715 = vmatpush2.msra.mxu0 0.0
      %3716 = vmatprep.subr.mxu0 0.0
      %3717 = vmatpush2.msra.mxu0 0.0
      %3718 = vmatprep.subr.mxu0 0.0
      %3719 = vmatpush2.msra.mxu0 0.0
      %3720 = vmatprep.subr.mxu0 0.0
      %3721 = vmatpush2.msra.mxu0 0.0
      %3722 = vmatprep.subr.mxu0 0.0
      %3723 = vmatpush2.msra.mxu0 0.0
      %3724 = vmatprep.subr.mxu0 0.0
      %3725 = vmatpush2.msra.mxu0 0.0
      %3726 = vmatprep.subr.mxu0 0.0
      %3727 = vmatpush2.msra.mxu0 0.0
      %3728 = vmatprep.subr.mxu0 0.0
      %3729 = vmatpush2.msra.mxu0 0.0
      %3730 = vmatprep.subr.mxu0 0.0
      %3731 = vmatpush2.msra.mxu0 0.0
      %3732 = vmatprep.subr.mxu0 0.0
      %3733 = vmatpush2.msra.mxu0 0.0
      %3734 = vmatprep.subr.mxu0 0.0
      %3735 = vmatpush2.msra.mxu0 0.0
      %3736 = vmatprep.mubr.f32.mxu0 0.0
      %3737 = vmatmul.mubr.f32.gmra.mxu0 %v3605
      %v3738 = vpop.f32.mrf.mxu0
      %v3739 = vadd.f32 0.0, %v3738
      %v3740 = vpop.f32.mrf.mxu0
      %3741 = vmatprep.mubr.f32.mxu0 0.0
      %3742 = vmatmul.mubr.f32.gmra.mxu0 %v3607
      %v3743 = vpop.f32.mrf.mxu0
      %v3744 = vadd.f32 0.0, %v3743
      %v3745 = vpop.f32.mrf.mxu0
      %3746 = vmatprep.mubr.f32.mxu0 0.0
      %3747 = vmatmul.mubr.f32.gmra.mxu0 %v3609
      %v3748 = vpop.f32.mrf.mxu0
      %v3749 = vadd.f32 0.0, %v3748
      %v3750 = vpop.f32.mrf.mxu0
      %3751 = vmatprep.mubr.f32.mxu0 0.0
      %3752 = vmatmul.mubr.f32.gmra.mxu0 %v3611
      %v3753 = vpop.f32.mrf.mxu0
      %v3754 = vadd.f32 0.0, %v3753
      %v3755 = vpop.f32.mrf.mxu0
      %3756 = vmatprep.mubr.f32.mxu0 0.0
      %3757 = vmatmul.mubr.f32.gmra.mxu0 %v3613
      %v3758 = vpop.f32.mrf.mxu0
      %v3759 = vadd.f32 0.0, %v3758
      %v3760 = vpop.f32.mrf.mxu0
      %3761 = vmatprep.mubr.f32.mxu0 0.0
      %3762 = vmatmul.mubr.f32.gmra.mxu0 %v3615
      %v3763 = vpop.f32.mrf.mxu0
      %v3764 = vadd.f32 0.0, %v3763
      %v3765 = vpop.f32.mrf.mxu0
      %3766 = vmatprep.mubr.f32.mxu0 0.0
      %3767 = vmatmul.mubr.f32.gmra.mxu0 %v3617
      %v3768 = vpop.f32.mrf.mxu0
      %v3769 = vadd.f32 0.0, %v3768
      %v3770 = vpop.f32.mrf.mxu0
      %3771 = vmatprep.mubr.f32.mxu0 0.0
      %3772 = vmatmul.mubr.f32.gmra.mxu0 %v3619
      %v3773 = vpop.f32.mrf.mxu0
      %v3774 = vadd.f32 0.0, %v3773
      %v3775 = vpop.f32.mrf.mxu0
      %3776 = vmatprep.mubr.f32.mxu0 0.0
      %3777 = vmatmul.mubr.f32.gmra.mxu0 %v3621
      %v3778 = vpop.f32.mrf.mxu0
      %v3779 = vadd.f32 0.0, %v3778
      %v3780 = vpop.f32.mrf.mxu0
      %3781 = vmatprep.mubr.f32.mxu0 0.0
      %3782 = vmatmul.mubr.f32.gmra.mxu0 %v3623
      %v3783 = vpop.f32.mrf.mxu0
      %v3784 = vadd.f32 0.0, %v3783
      %v3785 = vpop.f32.mrf.mxu0
      %3786 = vmatprep.mubr.f32.mxu0 0.0
      %3787 = vmatmul.mubr.f32.gmra.mxu0 %v3625
      %v3788 = vpop.f32.mrf.mxu0
      %v3789 = vadd.f32 0.0, %v3788
      %v3790 = vpop.f32.mrf.mxu0
      %3791 = vmatprep.mubr.f32.mxu0 0.0
      %3792 = vmatmul.mubr.f32.gmra.mxu0 %v3627
      %v3793 = vpop.f32.mrf.mxu0
      %v3794 = vadd.f32 0.0, %v3793
      %v3795 = vpop.f32.mrf.mxu0
      %3796 = vmatprep.mubr.f32.mxu0 0.0
      %3797 = vmatmul.mubr.f32.gmra.mxu0 %v3629
      %v3798 = vpop.f32.mrf.mxu0
      %v3799 = vadd.f32 0.0, %v3798
      %v3800 = vpop.f32.mrf.mxu0
      %3801 = vmatprep.mubr.f32.mxu0 0.0
      %3802 = vmatmul.mubr.f32.gmra.mxu0 %v3631
      %v3803 = vpop.f32.mrf.mxu0
      %v3804 = vadd.f32 0.0, %v3803
      %v3805 = vpop.f32.mrf.mxu0
      %3806 = vmatprep.mubr.f32.mxu0 0.0
      %3807 = vmatmul.mubr.f32.gmra.mxu0 %v3633
      %v3808 = vpop.f32.mrf.mxu0
      %v3809 = vadd.f32 0.0, %v3808
      %v3810 = vpop.f32.mrf.mxu0
      %3811 = vmatprep.mubr.f32.mxu0 0.0
      %3812 = vmatmul.mubr.f32.gmra.mxu0 %v3635
      %v3813 = vpop.f32.mrf.mxu0
      %v3814 = vadd.f32 0.0, %v3813
      %v3815 = vpop.f32.mrf.mxu0
      %3816 = vmatprep.mubr.f32.mxu0 0.0
      %3817 = vmatmul.mubr.f32.gmra.mxu0 %v3637
      %v3818 = vpop.f32.mrf.mxu0
      %v3819 = vadd.f32 0.0, %v3818
      %v3820 = vpop.f32.mrf.mxu0
      %3821 = vmatprep.mubr.f32.mxu0 0.0
      %3822 = vmatmul.mubr.f32.gmra.mxu0 %v3639
      %v3823 = vpop.f32.mrf.mxu0
      %v3824 = vadd.f32 0.0, %v3823
      %v3825 = vpop.f32.mrf.mxu0
      %3826 = vmatprep.mubr.f32.mxu0 0.0
      %3827 = vmatmul.mubr.f32.gmra.mxu0 %v3641
      %v3828 = vpop.f32.mrf.mxu0
      %v3829 = vadd.f32 0.0, %v3828
      %v3830 = vpop.f32.mrf.mxu0
      %3831 = vmatprep.mubr.f32.mxu0 0.0
      %3832 = vmatmul.mubr.f32.gmra.mxu0 %v3643
      %v3833 = vpop.f32.mrf.mxu0
      %v3834 = vadd.f32 0.0, %v3833
      %v3835 = vpop.f32.mrf.mxu0
      %3836 = vmatprep.mubr.f32.mxu0 0.0
      %3837 = vmatmul.mubr.f32.gmra.mxu0 %v3645
      %v3838 = vpop.f32.mrf.mxu0
      %v3839 = vadd.f32 0.0, %v3838
      %v3840 = vpop.f32.mrf.mxu0
      %3841 = vmatprep.mubr.f32.mxu0 0.0
      %3842 = vmatmul.mubr.f32.gmra.mxu0 %v3647
      %v3843 = vpop.f32.mrf.mxu0
      %v3844 = vadd.f32 0.0, %v3843
      %v3845 = vpop.f32.mrf.mxu0
      %3846 = vmatprep.mubr.f32.mxu0 0.0
      %3847 = vmatmul.mubr.f32.gmra.mxu0 %v3649
      %v3848 = vpop.f32.mrf.mxu0
      %v3849 = vadd.f32 0.0, %v3848
      %v3850 = vpop.f32.mrf.mxu0
      %3851 = vmatprep.mubr.f32.mxu0 0.0
      %3852 = vmatmul.mubr.f32.gmra.mxu0 %v3651
      %v3853 = vpop.f32.mrf.mxu0
      %v3854 = vadd.f32 0.0, %v3853
      %v3855 = vpop.f32.mrf.mxu0
      %3856 = vmatprep.mubr.f32.mxu0 0.0
      %3857 = vmatmul.mubr.f32.gmra.mxu0 %v3653
      %v3858 = vpop.f32.mrf.mxu0
      %v3859 = vadd.f32 0.0, %v3858
      %v3860 = vpop.f32.mrf.mxu0
      %3861 = vmatprep.mubr.f32.mxu0 0.0
      %3862 = vmatmul.mubr.f32.gmra.mxu0 %v3655
      %v3863 = vpop.f32.mrf.mxu0
      %v3864 = vadd.f32 0.0, %v3863
      %v3865 = vpop.f32.mrf.mxu0
      %3866 = vmatprep.mubr.f32.mxu0 0.0
      %3867 = vmatmul.mubr.f32.gmra.mxu0 %v3657
      %v3868 = vpop.f32.mrf.mxu0
      %v3869 = vadd.f32 0.0, %v3868
      %v3870 = vpop.f32.mrf.mxu0
      %3871 = vmatprep.mubr.f32.mxu0 0.0
      %3872 = vmatmul.mubr.f32.gmra.mxu0 %v3659
      %v3873 = vpop.f32.mrf.mxu0
      %v3874 = vadd.f32 0.0, %v3873
      %v3875 = vpop.f32.mrf.mxu0
      %3876 = vmatprep.mubr.f32.mxu0 0.0
      %3877 = vmatmul.mubr.f32.gmra.mxu0 %v3661
      %v3878 = vpop.f32.mrf.mxu0
      %v3879 = vadd.f32 0.0, %v3878
      %v3880 = vpop.f32.mrf.mxu0
      %3881 = vmatprep.mubr.f32.mxu0 0.0
      %3882 = vmatmul.mubr.f32.gmra.mxu0 %v3663
      %v3883 = vpop.f32.mrf.mxu0
      %v3884 = vadd.f32 0.0, %v3883
      %v3885 = vpop.f32.mrf.mxu0
      %3886 = vmatprep.mubr.f32.mxu0 0.0
      %3887 = vmatmul.mubr.f32.gmra.mxu0 %v3665
      %v3888 = vpop.f32.mrf.mxu0
      %v3889 = vadd.f32 0.0, %v3888
      %v3890 = vpop.f32.mrf.mxu0
      %3891 = vmatprep.mubr.f32.mxu0 0.0
      %3892 = vmatmul.mubr.f32.gmra.mxu0 %v3667
      %v3893 = vpop.f32.mrf.mxu0
      %v3894 = vadd.f32 0.0, %v3893
      %v3895 = vpop.f32.mrf.mxu0
      %3896 = vdwg.mxu0
      %v3897 = vsel %vm727, %v3423, 0
      %v3899 = vsel %vm727, %v3424, 0
      %v3901 = vsel %vm727, %v3426, 0
      %v3903 = vsel %vm727, %v3427, 0
      %v3905 = vsel %vm727, %v3429, 0
      %v3907 = vsel %vm727, %v3430, 0
      %v3909 = vsel %vm727, %v3432, 0
      %v3911 = vsel %vm727, %v3433, 0
      %v3913 = vsel %vm727, %v3435, 0
      %v3915 = vsel %vm727, %v3436, 0
      %v3917 = vsel %vm727, %v3438, 0
      %v3919 = vsel %vm727, %v3439, 0
      %v3921 = vsel %vm727, %v3441, 0
      %v3923 = vsel %vm727, %v3442, 0
      %v3925 = vsel %vm727, %v3444, 0
      %v3927 = vsel %vm727, %v3445, 0
      %v3929 = vsel %vm727, %v3447, 0
      %v3931 = vsel %vm727, %v3448, 0
      %v3933 = vsel %vm727, %v3450, 0
      %v3935 = vsel %vm727, %v3451, 0
      %v3937 = vsel %vm727, %v3453, 0
      %v3939 = vsel %vm727, %v3454, 0
      %v3941 = vsel %vm727, %v3456, 0
      %v3943 = vsel %vm727, %v3457, 0
      %v3945 = vsel %vm727, %v3459, 0
      %v3947 = vsel %vm727, %v3460, 0
      %v3949 = vsel %vm727, %v3462, 0
      %v3951 = vsel %vm727, %v3463, 0
      %v3953 = vsel %vm727, %v3465, 0
      %v3955 = vsel %vm727, %v3466, 0
      %v3957 = vsel %vm727, %v3468, 0
      %v3959 = vsel %vm727, %v3469, 0
      %v3962 = vsel %vm792, %v493, 0
      %3964 = vmatprep.subr.mxu0 0.0
      %3965 = vmatpush1.msra.mxu0 0.0
      %3966 = vmatprep.subr.mxu0 0.0
      %3967 = vmatpush1.msra.mxu0 0.0
      %3968 = vmatprep.subr.mxu0 0.0
      %3969 = vmatpush1.msra.mxu0 0.0
      %3970 = vmatprep.subr.mxu0 0.0
      %3971 = vmatpush1.msra.mxu0 0.0
      %3972 = vmatprep.subr.mxu0 0.0
      %3973 = vmatpush1.msra.mxu0 0.0
      %3974 = vmatprep.subr.mxu0 0.0
      %3975 = vmatpush1.msra.mxu0 0.0
      %3976 = vmatprep.subr.mxu0 0.0
      %3977 = vmatpush1.msra.mxu0 0.0
      %3978 = vmatprep.subr.mxu0 0.0
      %3979 = vmatpush1.msra.mxu0 0.0
      %3980 = vmatprep.subr.mxu0 0.0
      %3981 = vmatpush1.msra.mxu0 0.0
      %3982 = vmatprep.subr.mxu0 0.0
      %3983 = vmatpush1.msra.mxu0 0.0
      %3984 = vmatprep.subr.mxu0 0.0
      %3985 = vmatpush1.msra.mxu0 0.0
      %3986 = vmatprep.subr.mxu0 0.0
      %3987 = vmatpush1.msra.mxu0 0.0
      %3988 = vmatprep.subr.mxu0 0.0
      %3989 = vmatpush1.msra.mxu0 0.0
      %3990 = vmatprep.subr.mxu0 0.0
      %3991 = vmatpush1.msra.mxu0 0.0
      %3992 = vmatprep.subr.mxu0 0.0
      %3993 = vmatpush1.msra.mxu0 0.0
      %3994 = vmatprep.subr.mxu0 0.0
      %3995 = vmatpush1.msra.mxu0 %v3962
      %3996 = vmatprep.subr.mxu0 0.0
      %3997 = vmatpush2.msra.mxu0 0.0
      %3998 = vmatprep.subr.mxu0 0.0
      %3999 = vmatpush2.msra.mxu0 0.0
      %4000 = vmatprep.subr.mxu0 0.0
      %4001 = vmatpush2.msra.mxu0 0.0
      %4002 = vmatprep.subr.mxu0 0.0
      %4003 = vmatpush2.msra.mxu0 0.0
      %4004 = vmatprep.subr.mxu0 0.0
      %4005 = vmatpush2.msra.mxu0 0.0
      %4006 = vmatprep.subr.mxu0 0.0
      %4007 = vmatpush2.msra.mxu0 0.0
      %4008 = vmatprep.subr.mxu0 0.0
      %4009 = vmatpush2.msra.mxu0 0.0
      %4010 = vmatprep.subr.mxu0 0.0
      %4011 = vmatpush2.msra.mxu0 0.0
      %4012 = vmatprep.subr.mxu0 0.0
      %4013 = vmatpush2.msra.mxu0 0.0
      %4014 = vmatprep.subr.mxu0 0.0
      %4015 = vmatpush2.msra.mxu0 0.0
      %4016 = vmatprep.subr.mxu0 0.0
      %4017 = vmatpush2.msra.mxu0 0.0
      %4018 = vmatprep.subr.mxu0 0.0
      %4019 = vmatpush2.msra.mxu0 0.0
      %4020 = vmatprep.subr.mxu0 0.0
      %4021 = vmatpush2.msra.mxu0 0.0
      %4022 = vmatprep.subr.mxu0 0.0
      %4023 = vmatpush2.msra.mxu0 0.0
      %4024 = vmatprep.subr.mxu0 0.0
      %4025 = vmatpush2.msra.mxu0 0.0
      %4026 = vmatprep.subr.mxu0 0.0
      %4027 = vmatpush2.msra.mxu0 0.0
      %4028 = vmatprep.mubr.f32.mxu0 0.0
      %4029 = vmatmul.mubr.f32.gmra.mxu0 %v3897
      %v4030 = vpop.f32.mrf.mxu0
      %v4031 = vadd.f32 %v3739, %v4030
      %v4032 = vpop.f32.mrf.mxu0
      %4033 = vmatprep.mubr.f32.mxu0 0.0
      %4034 = vmatmul.mubr.f32.gmra.mxu0 %v3899
      %v4035 = vpop.f32.mrf.mxu0
      %v4036 = vadd.f32 %v3744, %v4035
      %v4037 = vpop.f32.mrf.mxu0
      %4038 = vmatprep.mubr.f32.mxu0 0.0
      %4039 = vmatmul.mubr.f32.gmra.mxu0 %v3901
      %v4040 = vpop.f32.mrf.mxu0
      %v4041 = vadd.f32 %v3749, %v4040
      %v4042 = vpop.f32.mrf.mxu0
      %4043 = vmatprep.mubr.f32.mxu0 0.0
      %4044 = vmatmul.mubr.f32.gmra.mxu0 %v3903
      %v4045 = vpop.f32.mrf.mxu0
      %v4046 = vadd.f32 %v3754, %v4045
      %v4047 = vpop.f32.mrf.mxu0
      %4048 = vmatprep.mubr.f32.mxu0 0.0
      %4049 = vmatmul.mubr.f32.gmra.mxu0 %v3905
      %v4050 = vpop.f32.mrf.mxu0
      %v4051 = vadd.f32 %v3759, %v4050
      %v4052 = vpop.f32.mrf.mxu0
      %4053 = vmatprep.mubr.f32.mxu0 0.0
      %4054 = vmatmul.mubr.f32.gmra.mxu0 %v3907
      %v4055 = vpop.f32.mrf.mxu0
      %v4056 = vadd.f32 %v3764, %v4055
      %v4057 = vpop.f32.mrf.mxu0
      %4058 = vmatprep.mubr.f32.mxu0 0.0
      %4059 = vmatmul.mubr.f32.gmra.mxu0 %v3909
      %v4060 = vpop.f32.mrf.mxu0
      %v4061 = vadd.f32 %v3769, %v4060
      %v4062 = vpop.f32.mrf.mxu0
      %4063 = vmatprep.mubr.f32.mxu0 0.0
      %4064 = vmatmul.mubr.f32.gmra.mxu0 %v3911
      %v4065 = vpop.f32.mrf.mxu0
      %v4066 = vadd.f32 %v3774, %v4065
      %v4067 = vpop.f32.mrf.mxu0
      %4068 = vmatprep.mubr.f32.mxu0 0.0
      %4069 = vmatmul.mubr.f32.gmra.mxu0 %v3913
      %v4070 = vpop.f32.mrf.mxu0
      %v4071 = vadd.f32 %v3779, %v4070
      %v4072 = vpop.f32.mrf.mxu0
      %4073 = vmatprep.mubr.f32.mxu0 0.0
      %4074 = vmatmul.mubr.f32.gmra.mxu0 %v3915
      %v4075 = vpop.f32.mrf.mxu0
      %v4076 = vadd.f32 %v3784, %v4075
      %v4077 = vpop.f32.mrf.mxu0
      %4078 = vmatprep.mubr.f32.mxu0 0.0
      %4079 = vmatmul.mubr.f32.gmra.mxu0 %v3917
      %v4080 = vpop.f32.mrf.mxu0
      %v4081 = vadd.f32 %v3789, %v4080
      %v4082 = vpop.f32.mrf.mxu0
      %4083 = vmatprep.mubr.f32.mxu0 0.0
      %4084 = vmatmul.mubr.f32.gmra.mxu0 %v3919
      %v4085 = vpop.f32.mrf.mxu0
      %v4086 = vadd.f32 %v3794, %v4085
      %v4087 = vpop.f32.mrf.mxu0
      %4088 = vmatprep.mubr.f32.mxu0 0.0
      %4089 = vmatmul.mubr.f32.gmra.mxu0 %v3921
      %v4090 = vpop.f32.mrf.mxu0
      %v4091 = vadd.f32 %v3799, %v4090
      %v4092 = vpop.f32.mrf.mxu0
      %4093 = vmatprep.mubr.f32.mxu0 0.0
      %4094 = vmatmul.mubr.f32.gmra.mxu0 %v3923
      %v4095 = vpop.f32.mrf.mxu0
      %v4096 = vadd.f32 %v3804, %v4095
      %v4097 = vpop.f32.mrf.mxu0
      %4098 = vmatprep.mubr.f32.mxu0 0.0
      %4099 = vmatmul.mubr.f32.gmra.mxu0 %v3925
      %v4100 = vpop.f32.mrf.mxu0
      %v4101 = vadd.f32 %v3809, %v4100
      %v4102 = vpop.f32.mrf.mxu0
      %4103 = vmatprep.mubr.f32.mxu0 0.0
      %4104 = vmatmul.mubr.f32.gmra.mxu0 %v3927
      %v4105 = vpop.f32.mrf.mxu0
      %v4106 = vadd.f32 %v3814, %v4105
      %v4107 = vpop.f32.mrf.mxu0
      %4108 = vmatprep.mubr.f32.mxu0 0.0
      %4109 = vmatmul.mubr.f32.gmra.mxu0 %v3929
      %v4110 = vpop.f32.mrf.mxu0
      %v4111 = vadd.f32 %v3819, %v4110
      %v4112 = vpop.f32.mrf.mxu0
      %4113 = vmatprep.mubr.f32.mxu0 0.0
      %4114 = vmatmul.mubr.f32.gmra.mxu0 %v3931
      %v4115 = vpop.f32.mrf.mxu0
      %v4116 = vadd.f32 %v3824, %v4115
      %v4117 = vpop.f32.mrf.mxu0
      %4118 = vmatprep.mubr.f32.mxu0 0.0
      %4119 = vmatmul.mubr.f32.gmra.mxu0 %v3933
      %v4120 = vpop.f32.mrf.mxu0
      %v4121 = vadd.f32 %v3829, %v4120
      %v4122 = vpop.f32.mrf.mxu0
      %4123 = vmatprep.mubr.f32.mxu0 0.0
      %4124 = vmatmul.mubr.f32.gmra.mxu0 %v3935
      %v4125 = vpop.f32.mrf.mxu0
      %v4126 = vadd.f32 %v3834, %v4125
      %v4127 = vpop.f32.mrf.mxu0
      %4128 = vmatprep.mubr.f32.mxu0 0.0
      %4129 = vmatmul.mubr.f32.gmra.mxu0 %v3937
      %v4130 = vpop.f32.mrf.mxu0
      %v4131 = vadd.f32 %v3839, %v4130
      %v4132 = vpop.f32.mrf.mxu0
      %4133 = vmatprep.mubr.f32.mxu0 0.0
      %4134 = vmatmul.mubr.f32.gmra.mxu0 %v3939
      %v4135 = vpop.f32.mrf.mxu0
      %v4136 = vadd.f32 %v3844, %v4135
      %v4137 = vpop.f32.mrf.mxu0
      %4138 = vmatprep.mubr.f32.mxu0 0.0
      %4139 = vmatmul.mubr.f32.gmra.mxu0 %v3941
      %v4140 = vpop.f32.mrf.mxu0
      %v4141 = vadd.f32 %v3849, %v4140
      %v4142 = vpop.f32.mrf.mxu0
      %4143 = vmatprep.mubr.f32.mxu0 0.0
      %4144 = vmatmul.mubr.f32.gmra.mxu0 %v3943
      %v4145 = vpop.f32.mrf.mxu0
      %v4146 = vadd.f32 %v3854, %v4145
      %v4147 = vpop.f32.mrf.mxu0
      %4148 = vmatprep.mubr.f32.mxu0 0.0
      %4149 = vmatmul.mubr.f32.gmra.mxu0 %v3945
      %v4150 = vpop.f32.mrf.mxu0
      %v4151 = vadd.f32 %v3859, %v4150
      %v4152 = vpop.f32.mrf.mxu0
      %4153 = vmatprep.mubr.f32.mxu0 0.0
      %4154 = vmatmul.mubr.f32.gmra.mxu0 %v3947
      %v4155 = vpop.f32.mrf.mxu0
      %v4156 = vadd.f32 %v3864, %v4155
      %v4157 = vpop.f32.mrf.mxu0
      %4158 = vmatprep.mubr.f32.mxu0 0.0
      %4159 = vmatmul.mubr.f32.gmra.mxu0 %v3949
      %v4160 = vpop.f32.mrf.mxu0
      %v4161 = vadd.f32 %v3869, %v4160
      %v4162 = vpop.f32.mrf.mxu0
      %4163 = vmatprep.mubr.f32.mxu0 0.0
      %4164 = vmatmul.mubr.f32.gmra.mxu0 %v3951
      %v4165 = vpop.f32.mrf.mxu0
      %v4166 = vadd.f32 %v3874, %v4165
      %v4167 = vpop.f32.mrf.mxu0
      %4168 = vmatprep.mubr.f32.mxu0 0.0
      %4169 = vmatmul.mubr.f32.gmra.mxu0 %v3953
      %v4170 = vpop.f32.mrf.mxu0
      %v4171 = vadd.f32 %v3879, %v4170
      %v4172 = vpop.f32.mrf.mxu0
      %4173 = vmatprep.mubr.f32.mxu0 0.0
      %4174 = vmatmul.mubr.f32.gmra.mxu0 %v3955
      %v4175 = vpop.f32.mrf.mxu0
      %v4176 = vadd.f32 %v3884, %v4175
      %v4177 = vpop.f32.mrf.mxu0
      %4178 = vmatprep.mubr.f32.mxu0 0.0
      %4179 = vmatmul.mubr.f32.gmra.mxu0 %v3957
      %v4180 = vpop.f32.mrf.mxu0
      %v4181 = vadd.f32 %v3889, %v4180
      %v4182 = vpop.f32.mrf.mxu0
      %4183 = vmatprep.mubr.f32.mxu0 0.0
      %4184 = vmatmul.mubr.f32.gmra.mxu0 %v3959
      %v4185 = vpop.f32.mrf.mxu0
      %v4186 = vadd.f32 %v3894, %v4185
      %v4187 = vpop.f32.mrf.mxu0
      %4188 = vdwg.mxu0
      %v4189 = vrot.slane %v3423, 2
      %v4190 = vrot.slane %v3424, 2
      %v4191 = vsel %vm1313, %v4189, %v4190
      %v4192 = vrot.slane %v3425, 2
      %v4193 = vsel %vm1313, %v4190, %v4192
      %v4194 = vrot.slane %v3426, 2
      %v4195 = vrot.slane %v3427, 2
      %v4196 = vsel %vm1313, %v4194, %v4195
      %v4197 = vrot.slane %v3428, 2
      %v4198 = vsel %vm1313, %v4195, %v4197
      %v4199 = vrot.slane %v3429, 2
      %v4200 = vrot.slane %v3430, 2
      %v4201 = vsel %vm1313, %v4199, %v4200
      %v4202 = vrot.slane %v3431, 2
      %v4203 = vsel %vm1313, %v4200, %v4202
      %v4204 = vrot.slane %v3432, 2
      %v4205 = vrot.slane %v3433, 2
      %v4206 = vsel %vm1313, %v4204, %v4205
      %v4207 = vrot.slane %v3434, 2
      %v4208 = vsel %vm1313, %v4205, %v4207
      %v4209 = vrot.slane %v3435, 2
      %v4210 = vrot.slane %v3436, 2
      %v4211 = vsel %vm1313, %v4209, %v4210
      %v4212 = vrot.slane %v3437, 2
      %v4213 = vsel %vm1313, %v4210, %v4212
      %v4214 = vrot.slane %v3438, 2
      %v4215 = vrot.slane %v3439, 2
      %v4216 = vsel %vm1313, %v4214, %v4215
      %v4217 = vrot.slane %v3440, 2
      %v4218 = vsel %vm1313, %v4215, %v4217
      %v4219 = vrot.slane %v3441, 2
      %v4220 = vrot.slane %v3442, 2
      %v4221 = vsel %vm1313, %v4219, %v4220
      %v4222 = vrot.slane %v3443, 2
      %v4223 = vsel %vm1313, %v4220, %v4222
      %v4224 = vrot.slane %v3444, 2
      %v4225 = vrot.slane %v3445, 2
      %v4226 = vsel %vm1313, %v4224, %v4225
      %v4227 = vrot.slane %v3446, 2
      %v4228 = vsel %vm1313, %v4225, %v4227
      %v4229 = vrot.slane %v3447, 2
      %v4230 = vrot.slane %v3448, 2
      %v4231 = vsel %vm1313, %v4229, %v4230
      %v4232 = vrot.slane %v3449, 2
      %v4233 = vsel %vm1313, %v4230, %v4232
      %v4234 = vrot.slane %v3450, 2
      %v4235 = vrot.slane %v3451, 2
      %v4236 = vsel %vm1313, %v4234, %v4235
      %v4237 = vrot.slane %v3452, 2
      %v4238 = vsel %vm1313, %v4235, %v4237
      %v4239 = vrot.slane %v3453, 2
      %v4240 = vrot.slane %v3454, 2
      %v4241 = vsel %vm1313, %v4239, %v4240
      %v4242 = vrot.slane %v3455, 2
      %v4243 = vsel %vm1313, %v4240, %v4242
      %v4244 = vrot.slane %v3456, 2
      %v4245 = vrot.slane %v3457, 2
      %v4246 = vsel %vm1313, %v4244, %v4245
      %v4247 = vrot.slane %v3458, 2
      %v4248 = vsel %vm1313, %v4245, %v4247
      %v4249 = vrot.slane %v3459, 2
      %v4250 = vrot.slane %v3460, 2
      %v4251 = vsel %vm1313, %v4249, %v4250
      %v4252 = vrot.slane %v3461, 2
      %v4253 = vsel %vm1313, %v4250, %v4252
      %v4254 = vrot.slane %v3462, 2
      %v4255 = vrot.slane %v3463, 2
      %v4256 = vsel %vm1313, %v4254, %v4255
      %v4257 = vrot.slane %v3464, 2
      %v4258 = vsel %vm1313, %v4255, %v4257
      %v4259 = vrot.slane %v3465, 2
      %v4260 = vrot.slane %v3466, 2
      %v4261 = vsel %vm1313, %v4259, %v4260
      %v4262 = vrot.slane %v3467, 2
      %v4263 = vsel %vm1313, %v4260, %v4262
      %v4264 = vrot.slane %v3468, 2
      %v4265 = vrot.slane %v3469, 2
      %v4266 = vsel %vm1313, %v4264, %v4265
      %v4267 = vrot.slane %v3470, 2
      %v4268 = vsel %vm1313, %v4265, %v4267
      %v4269 = vsel %vm727, %v4191, 0
      %v4271 = vsel %vm727, %v4193, 0
      %v4273 = vsel %vm727, %v4196, 0
      %v4275 = vsel %vm727, %v4198, 0
      %v4277 = vsel %vm727, %v4201, 0
      %v4279 = vsel %vm727, %v4203, 0
      %v4281 = vsel %vm727, %v4206, 0
      %v4283 = vsel %vm727, %v4208, 0
      %v4285 = vsel %vm727, %v4211, 0
      %v4287 = vsel %vm727, %v4213, 0
      %v4289 = vsel %vm727, %v4216, 0
      %v4291 = vsel %vm727, %v4218, 0
      %v4293 = vsel %vm727, %v4221, 0
      %v4295 = vsel %vm727, %v4223, 0
      %v4297 = vsel %vm727, %v4226, 0
      %v4299 = vsel %vm727, %v4228, 0
      %v4301 = vsel %vm727, %v4231, 0
      %v4303 = vsel %vm727, %v4233, 0
      %v4305 = vsel %vm727, %v4236, 0
      %v4307 = vsel %vm727, %v4238, 0
      %v4309 = vsel %vm727, %v4241, 0
      %v4311 = vsel %vm727, %v4243, 0
      %v4313 = vsel %vm727, %v4246, 0
      %v4315 = vsel %vm727, %v4248, 0
      %v4317 = vsel %vm727, %v4251, 0
      %v4319 = vsel %vm727, %v4253, 0
      %v4321 = vsel %vm727, %v4256, 0
      %v4323 = vsel %vm727, %v4258, 0
      %v4325 = vsel %vm727, %v4261, 0
      %v4327 = vsel %vm727, %v4263, 0
      %v4329 = vsel %vm727, %v4266, 0
      %v4331 = vsel %vm727, %v4268, 0
      %v4334 = vsel %vm792, %v495, 0
      %4336 = vmatprep.subr.mxu0 0.0
      %4337 = vmatpush1.msra.mxu0 0.0
      %4338 = vmatprep.subr.mxu0 0.0
      %4339 = vmatpush1.msra.mxu0 0.0
      %4340 = vmatprep.subr.mxu0 0.0
      %4341 = vmatpush1.msra.mxu0 0.0
      %4342 = vmatprep.subr.mxu0 0.0
      %4343 = vmatpush1.msra.mxu0 0.0
      %4344 = vmatprep.subr.mxu0 0.0
      %4345 = vmatpush1.msra.mxu0 0.0
      %4346 = vmatprep.subr.mxu0 0.0
      %4347 = vmatpush1.msra.mxu0 0.0
      %4348 = vmatprep.subr.mxu0 0.0
      %4349 = vmatpush1.msra.mxu0 0.0
      %4350 = vmatprep.subr.mxu0 0.0
      %4351 = vmatpush1.msra.mxu0 0.0
      %4352 = vmatprep.subr.mxu0 0.0
      %4353 = vmatpush1.msra.mxu0 0.0
      %4354 = vmatprep.subr.mxu0 0.0
      %4355 = vmatpush1.msra.mxu0 0.0
      %4356 = vmatprep.subr.mxu0 0.0
      %4357 = vmatpush1.msra.mxu0 0.0
      %4358 = vmatprep.subr.mxu0 0.0
      %4359 = vmatpush1.msra.mxu0 0.0
      %4360 = vmatprep.subr.mxu0 0.0
      %4361 = vmatpush1.msra.mxu0 0.0
      %4362 = vmatprep.subr.mxu0 0.0
      %4363 = vmatpush1.msra.mxu0 0.0
      %4364 = vmatprep.subr.mxu0 0.0
      %4365 = vmatpush1.msra.mxu0 0.0
      %4366 = vmatprep.subr.mxu0 0.0
      %4367 = vmatpush1.msra.mxu0 %v4334
      %4368 = vmatprep.subr.mxu0 0.0
      %4369 = vmatpush2.msra.mxu0 0.0
      %4370 = vmatprep.subr.mxu0 0.0
      %4371 = vmatpush2.msra.mxu0 0.0
      %4372 = vmatprep.subr.mxu0 0.0
      %4373 = vmatpush2.msra.mxu0 0.0
      %4374 = vmatprep.subr.mxu0 0.0
      %4375 = vmatpush2.msra.mxu0 0.0
      %4376 = vmatprep.subr.mxu0 0.0
      %4377 = vmatpush2.msra.mxu0 0.0
      %4378 = vmatprep.subr.mxu0 0.0
      %4379 = vmatpush2.msra.mxu0 0.0
      %4380 = vmatprep.subr.mxu0 0.0
      %4381 = vmatpush2.msra.mxu0 0.0
      %4382 = vmatprep.subr.mxu0 0.0
      %4383 = vmatpush2.msra.mxu0 0.0
      %4384 = vmatprep.subr.mxu0 0.0
      %4385 = vmatpush2.msra.mxu0 0.0
      %4386 = vmatprep.subr.mxu0 0.0
      %4387 = vmatpush2.msra.mxu0 0.0
      %4388 = vmatprep.subr.mxu0 0.0
      %4389 = vmatpush2.msra.mxu0 0.0
      %4390 = vmatprep.subr.mxu0 0.0
      %4391 = vmatpush2.msra.mxu0 0.0
      %4392 = vmatprep.subr.mxu0 0.0
      %4393 = vmatpush2.msra.mxu0 0.0
      %4394 = vmatprep.subr.mxu0 0.0
      %4395 = vmatpush2.msra.mxu0 0.0
      %4396 = vmatprep.subr.mxu0 0.0
      %4397 = vmatpush2.msra.mxu0 0.0
      %4398 = vmatprep.subr.mxu0 0.0
      %4399 = vmatpush2.msra.mxu0 0.0
      %4400 = vmatprep.mubr.f32.mxu0 0.0
      %4401 = vmatmul.mubr.f32.gmra.mxu0 %v4269
      %v4402 = vpop.f32.mrf.mxu0
      %v4403 = vadd.f32 0.0, %v4402
      %v4404 = vpop.f32.mrf.mxu0
      %4405 = vmatprep.mubr.f32.mxu0 0.0
      %4406 = vmatmul.mubr.f32.gmra.mxu0 %v4271
      %v4407 = vpop.f32.mrf.mxu0
      %v4408 = vadd.f32 0.0, %v4407
      %v4409 = vpop.f32.mrf.mxu0
      %4410 = vmatprep.mubr.f32.mxu0 0.0
      %4411 = vmatmul.mubr.f32.gmra.mxu0 %v4273
      %v4412 = vpop.f32.mrf.mxu0
      %v4413 = vadd.f32 0.0, %v4412
      %v4414 = vpop.f32.mrf.mxu0
      %4415 = vmatprep.mubr.f32.mxu0 0.0
      %4416 = vmatmul.mubr.f32.gmra.mxu0 %v4275
      %v4417 = vpop.f32.mrf.mxu0
      %v4418 = vadd.f32 0.0, %v4417
      %v4419 = vpop.f32.mrf.mxu0
      %4420 = vmatprep.mubr.f32.mxu0 0.0
      %4421 = vmatmul.mubr.f32.gmra.mxu0 %v4277
      %v4422 = vpop.f32.mrf.mxu0
      %v4423 = vadd.f32 0.0, %v4422
      %v4424 = vpop.f32.mrf.mxu0
      %4425 = vmatprep.mubr.f32.mxu0 0.0
      %4426 = vmatmul.mubr.f32.gmra.mxu0 %v4279
      %v4427 = vpop.f32.mrf.mxu0
      %v4428 = vadd.f32 0.0, %v4427
      %v4429 = vpop.f32.mrf.mxu0
      %4430 = vmatprep.mubr.f32.mxu0 0.0
      %4431 = vmatmul.mubr.f32.gmra.mxu0 %v4281
      %v4432 = vpop.f32.mrf.mxu0
      %v4433 = vadd.f32 0.0, %v4432
      %v4434 = vpop.f32.mrf.mxu0
      %4435 = vmatprep.mubr.f32.mxu0 0.0
      %4436 = vmatmul.mubr.f32.gmra.mxu0 %v4283
      %v4437 = vpop.f32.mrf.mxu0
      %v4438 = vadd.f32 0.0, %v4437
      %v4439 = vpop.f32.mrf.mxu0
      %4440 = vmatprep.mubr.f32.mxu0 0.0
      %4441 = vmatmul.mubr.f32.gmra.mxu0 %v4285
      %v4442 = vpop.f32.mrf.mxu0
      %v4443 = vadd.f32 0.0, %v4442
      %v4444 = vpop.f32.mrf.mxu0
      %4445 = vmatprep.mubr.f32.mxu0 0.0
      %4446 = vmatmul.mubr.f32.gmra.mxu0 %v4287
      %v4447 = vpop.f32.mrf.mxu0
      %v4448 = vadd.f32 0.0, %v4447
      %v4449 = vpop.f32.mrf.mxu0
      %4450 = vmatprep.mubr.f32.mxu0 0.0
      %4451 = vmatmul.mubr.f32.gmra.mxu0 %v4289
      %v4452 = vpop.f32.mrf.mxu0
      %v4453 = vadd.f32 0.0, %v4452
      %v4454 = vpop.f32.mrf.mxu0
      %4455 = vmatprep.mubr.f32.mxu0 0.0
      %4456 = vmatmul.mubr.f32.gmra.mxu0 %v4291
      %v4457 = vpop.f32.mrf.mxu0
      %v4458 = vadd.f32 0.0, %v4457
      %v4459 = vpop.f32.mrf.mxu0
      %4460 = vmatprep.mubr.f32.mxu0 0.0
      %4461 = vmatmul.mubr.f32.gmra.mxu0 %v4293
      %v4462 = vpop.f32.mrf.mxu0
      %v4463 = vadd.f32 0.0, %v4462
      %v4464 = vpop.f32.mrf.mxu0
      %4465 = vmatprep.mubr.f32.mxu0 0.0
      %4466 = vmatmul.mubr.f32.gmra.mxu0 %v4295
      %v4467 = vpop.f32.mrf.mxu0
      %v4468 = vadd.f32 0.0, %v4467
      %v4469 = vpop.f32.mrf.mxu0
      %4470 = vmatprep.mubr.f32.mxu0 0.0
      %4471 = vmatmul.mubr.f32.gmra.mxu0 %v4297
      %v4472 = vpop.f32.mrf.mxu0
      %v4473 = vadd.f32 0.0, %v4472
      %v4474 = vpop.f32.mrf.mxu0
      %4475 = vmatprep.mubr.f32.mxu0 0.0
      %4476 = vmatmul.mubr.f32.gmra.mxu0 %v4299
      %v4477 = vpop.f32.mrf.mxu0
      %v4478 = vadd.f32 0.0, %v4477
      %v4479 = vpop.f32.mrf.mxu0
      %4480 = vmatprep.mubr.f32.mxu0 0.0
      %4481 = vmatmul.mubr.f32.gmra.mxu0 %v4301
      %v4482 = vpop.f32.mrf.mxu0
      %v4483 = vadd.f32 0.0, %v4482
      %v4484 = vpop.f32.mrf.mxu0
      %4485 = vmatprep.mubr.f32.mxu0 0.0
      %4486 = vmatmul.mubr.f32.gmra.mxu0 %v4303
      %v4487 = vpop.f32.mrf.mxu0
      %v4488 = vadd.f32 0.0, %v4487
      %v4489 = vpop.f32.mrf.mxu0
      %4490 = vmatprep.mubr.f32.mxu0 0.0
      %4491 = vmatmul.mubr.f32.gmra.mxu0 %v4305
      %v4492 = vpop.f32.mrf.mxu0
      %v4493 = vadd.f32 0.0, %v4492
      %v4494 = vpop.f32.mrf.mxu0
      %4495 = vmatprep.mubr.f32.mxu0 0.0
      %4496 = vmatmul.mubr.f32.gmra.mxu0 %v4307
      %v4497 = vpop.f32.mrf.mxu0
      %v4498 = vadd.f32 0.0, %v4497
      %v4499 = vpop.f32.mrf.mxu0
      %4500 = vmatprep.mubr.f32.mxu0 0.0
      %4501 = vmatmul.mubr.f32.gmra.mxu0 %v4309
      %v4502 = vpop.f32.mrf.mxu0
      %v4503 = vadd.f32 0.0, %v4502
      %v4504 = vpop.f32.mrf.mxu0
      %4505 = vmatprep.mubr.f32.mxu0 0.0
      %4506 = vmatmul.mubr.f32.gmra.mxu0 %v4311
      %v4507 = vpop.f32.mrf.mxu0
      %v4508 = vadd.f32 0.0, %v4507
      %v4509 = vpop.f32.mrf.mxu0
      %4510 = vmatprep.mubr.f32.mxu0 0.0
      %4511 = vmatmul.mubr.f32.gmra.mxu0 %v4313
      %v4512 = vpop.f32.mrf.mxu0
      %v4513 = vadd.f32 0.0, %v4512
      %v4514 = vpop.f32.mrf.mxu0
      %4515 = vmatprep.mubr.f32.mxu0 0.0
      %4516 = vmatmul.mubr.f32.gmra.mxu0 %v4315
      %v4517 = vpop.f32.mrf.mxu0
      %v4518 = vadd.f32 0.0, %v4517
      %v4519 = vpop.f32.mrf.mxu0
      %4520 = vmatprep.mubr.f32.mxu0 0.0
      %4521 = vmatmul.mubr.f32.gmra.mxu0 %v4317
      %v4522 = vpop.f32.mrf.mxu0
      %v4523 = vadd.f32 0.0, %v4522
      %v4524 = vpop.f32.mrf.mxu0
      %4525 = vmatprep.mubr.f32.mxu0 0.0
      %4526 = vmatmul.mubr.f32.gmra.mxu0 %v4319
      %v4527 = vpop.f32.mrf.mxu0
      %v4528 = vadd.f32 0.0, %v4527
      %v4529 = vpop.f32.mrf.mxu0
      %4530 = vmatprep.mubr.f32.mxu0 0.0
      %4531 = vmatmul.mubr.f32.gmra.mxu0 %v4321
      %v4532 = vpop.f32.mrf.mxu0
      %v4533 = vadd.f32 0.0, %v4532
      %v4534 = vpop.f32.mrf.mxu0
      %4535 = vmatprep.mubr.f32.mxu0 0.0
      %4536 = vmatmul.mubr.f32.gmra.mxu0 %v4323
      %v4537 = vpop.f32.mrf.mxu0
      %v4538 = vadd.f32 0.0, %v4537
      %v4539 = vpop.f32.mrf.mxu0
      %4540 = vmatprep.mubr.f32.mxu0 0.0
      %4541 = vmatmul.mubr.f32.gmra.mxu0 %v4325
      %v4542 = vpop.f32.mrf.mxu0
      %v4543 = vadd.f32 0.0, %v4542
      %v4544 = vpop.f32.mrf.mxu0
      %4545 = vmatprep.mubr.f32.mxu0 0.0
      %4546 = vmatmul.mubr.f32.gmra.mxu0 %v4327
      %v4547 = vpop.f32.mrf.mxu0
      %v4548 = vadd.f32 0.0, %v4547
      %v4549 = vpop.f32.mrf.mxu0
      %4550 = vmatprep.mubr.f32.mxu0 0.0
      %4551 = vmatmul.mubr.f32.gmra.mxu0 %v4329
      %v4552 = vpop.f32.mrf.mxu0
      %v4553 = vadd.f32 0.0, %v4552
      %v4554 = vpop.f32.mrf.mxu0
      %4555 = vmatprep.mubr.f32.mxu0 0.0
      %4556 = vmatmul.mubr.f32.gmra.mxu0 %v4331
      %v4557 = vpop.f32.mrf.mxu0
      %v4558 = vadd.f32 0.0, %v4557
      %v4559 = vpop.f32.mrf.mxu0
      %4560 = vdwg.mxu0
      %v4561 = vadd.f32 %v4031, %v4403
      %v4562 = vadd.f32 %v4036, %v4408
      %v4563 = vadd.f32 %v4041, %v4413
      %v4564 = vadd.f32 %v4046, %v4418
      %v4565 = vadd.f32 %v4051, %v4423
      %v4566 = vadd.f32 %v4056, %v4428
      %v4567 = vadd.f32 %v4061, %v4433
      %v4568 = vadd.f32 %v4066, %v4438
      %v4569 = vadd.f32 %v4071, %v4443
      %v4570 = vadd.f32 %v4076, %v4448
      %v4571 = vadd.f32 %v4081, %v4453
      %v4572 = vadd.f32 %v4086, %v4458
      %v4573 = vadd.f32 %v4091, %v4463
      %v4574 = vadd.f32 %v4096, %v4468
      %v4575 = vadd.f32 %v4101, %v4473
      %v4576 = vadd.f32 %v4106, %v4478
      %v4577 = vadd.f32 %v4111, %v4483
      %v4578 = vadd.f32 %v4116, %v4488
      %v4579 = vadd.f32 %v4121, %v4493
      %v4580 = vadd.f32 %v4126, %v4498
      %v4581 = vadd.f32 %v4131, %v4503
      %v4582 = vadd.f32 %v4136, %v4508
      %v4583 = vadd.f32 %v4141, %v4513
      %v4584 = vadd.f32 %v4146, %v4518
      %v4585 = vadd.f32 %v4151, %v4523
      %v4586 = vadd.f32 %v4156, %v4528
      %v4587 = vadd.f32 %v4161, %v4533
      %v4588 = vadd.f32 %v4166, %v4538
      %v4589 = vadd.f32 %v4171, %v4543
      %v4590 = vadd.f32 %v4176, %v4548
      %v4591 = vadd.f32 %v4181, %v4553
      %v4592 = vadd.f32 %v4186, %v4558
      %v4594 = vsel %vm727, %v3471, 0
      %v4597 = vsel %vm727, %v3472, 0
      %v4600 = vsel %vm792, %v496, 0
      %4602 = vmatprep.subr.mxu0 0.0
      %4603 = vmatpush1.msra.mxu0 0.0
      %4604 = vmatprep.subr.mxu0 0.0
      %4605 = vmatpush1.msra.mxu0 0.0
      %4606 = vmatprep.subr.mxu0 0.0
      %4607 = vmatpush1.msra.mxu0 0.0
      %4608 = vmatprep.subr.mxu0 0.0
      %4609 = vmatpush1.msra.mxu0 0.0
      %4610 = vmatprep.subr.mxu0 0.0
      %4611 = vmatpush1.msra.mxu0 0.0
      %4612 = vmatprep.subr.mxu0 0.0
      %4613 = vmatpush1.msra.mxu0 0.0
      %4614 = vmatprep.subr.mxu0 0.0
      %4615 = vmatpush1.msra.mxu0 0.0
      %4616 = vmatprep.subr.mxu0 0.0
      %4617 = vmatpush1.msra.mxu0 0.0
      %4618 = vmatprep.subr.mxu0 0.0
      %4619 = vmatpush1.msra.mxu0 0.0
      %4620 = vmatprep.subr.mxu0 0.0
      %4621 = vmatpush1.msra.mxu0 0.0
      %4622 = vmatprep.subr.mxu0 0.0
      %4623 = vmatpush1.msra.mxu0 0.0
      %4624 = vmatprep.subr.mxu0 0.0
      %4625 = vmatpush1.msra.mxu0 0.0
      %4626 = vmatprep.subr.mxu0 0.0
      %4627 = vmatpush1.msra.mxu0 0.0
      %4628 = vmatprep.subr.mxu0 0.0
      %4629 = vmatpush1.msra.mxu0 0.0
      %4630 = vmatprep.subr.mxu0 0.0
      %4631 = vmatpush1.msra.mxu0 0.0
      %4632 = vmatprep.subr.mxu0 0.0
      %4633 = vmatpush1.msra.mxu0 %v4600
      %4634 = vmatprep.subr.mxu0 0.0
      %4635 = vmatpush2.msra.mxu0 0.0
      %4636 = vmatprep.subr.mxu0 0.0
      %4637 = vmatpush2.msra.mxu0 0.0
      %4638 = vmatprep.subr.mxu0 0.0
      %4639 = vmatpush2.msra.mxu0 0.0
      %4640 = vmatprep.subr.mxu0 0.0
      %4641 = vmatpush2.msra.mxu0 0.0
      %4642 = vmatprep.subr.mxu0 0.0
      %4643 = vmatpush2.msra.mxu0 0.0
      %4644 = vmatprep.subr.mxu0 0.0
      %4645 = vmatpush2.msra.mxu0 0.0
      %4646 = vmatprep.subr.mxu0 0.0
      %4647 = vmatpush2.msra.mxu0 0.0
      %4648 = vmatprep.subr.mxu0 0.0
      %4649 = vmatpush2.msra.mxu0 0.0
      %4650 = vmatprep.subr.mxu0 0.0
      %4651 = vmatpush2.msra.mxu0 0.0
      %4652 = vmatprep.subr.mxu0 0.0
      %4653 = vmatpush2.msra.mxu0 0.0
      %4654 = vmatprep.subr.mxu0 0.0
      %4655 = vmatpush2.msra.mxu0 0.0
      %4656 = vmatprep.subr.mxu0 0.0
      %4657 = vmatpush2.msra.mxu0 0.0
      %4658 = vmatprep.subr.mxu0 0.0
      %4659 = vmatpush2.msra.mxu0 0.0
      %4660 = vmatprep.subr.mxu0 0.0
      %4661 = vmatpush2.msra.mxu0 0.0
      %4662 = vmatprep.subr.mxu0 0.0
      %4663 = vmatpush2.msra.mxu0 0.0
      %4664 = vmatprep.subr.mxu0 0.0
      %4665 = vmatpush2.msra.mxu0 0.0
      %4666 = vmatprep.mubr.f32.mxu0 0.0
      %4667 = vmatmul.mubr.f32.gmra.mxu0 %v3901
      %v4668 = vpop.f32.mrf.mxu0
      %v4669 = vadd.f32 0.0, %v4668
      %v4670 = vpop.f32.mrf.mxu0
      %4671 = vmatprep.mubr.f32.mxu0 0.0
      %4672 = vmatmul.mubr.f32.gmra.mxu0 %v3903
      %v4673 = vpop.f32.mrf.mxu0
      %v4674 = vadd.f32 0.0, %v4673
      %v4675 = vpop.f32.mrf.mxu0
      %4676 = vmatprep.mubr.f32.mxu0 0.0
      %4677 = vmatmul.mubr.f32.gmra.mxu0 %v3905
      %v4678 = vpop.f32.mrf.mxu0
      %v4679 = vadd.f32 0.0, %v4678
      %v4680 = vpop.f32.mrf.mxu0
      %4681 = vmatprep.mubr.f32.mxu0 0.0
      %4682 = vmatmul.mubr.f32.gmra.mxu0 %v3907
      %v4683 = vpop.f32.mrf.mxu0
      %v4684 = vadd.f32 0.0, %v4683
      %v4685 = vpop.f32.mrf.mxu0
      %4686 = vmatprep.mubr.f32.mxu0 0.0
      %4687 = vmatmul.mubr.f32.gmra.mxu0 %v3909
      %v4688 = vpop.f32.mrf.mxu0
      %v4689 = vadd.f32 0.0, %v4688
      %v4690 = vpop.f32.mrf.mxu0
      %4691 = vmatprep.mubr.f32.mxu0 0.0
      %4692 = vmatmul.mubr.f32.gmra.mxu0 %v3911
      %v4693 = vpop.f32.mrf.mxu0
      %v4694 = vadd.f32 0.0, %v4693
      %v4695 = vpop.f32.mrf.mxu0
      %4696 = vmatprep.mubr.f32.mxu0 0.0
      %4697 = vmatmul.mubr.f32.gmra.mxu0 %v3913
      %v4698 = vpop.f32.mrf.mxu0
      %v4699 = vadd.f32 0.0, %v4698
      %v4700 = vpop.f32.mrf.mxu0
      %4701 = vmatprep.mubr.f32.mxu0 0.0
      %4702 = vmatmul.mubr.f32.gmra.mxu0 %v3915
      %v4703 = vpop.f32.mrf.mxu0
      %v4704 = vadd.f32 0.0, %v4703
      %v4705 = vpop.f32.mrf.mxu0
      %4706 = vmatprep.mubr.f32.mxu0 0.0
      %4707 = vmatmul.mubr.f32.gmra.mxu0 %v3917
      %v4708 = vpop.f32.mrf.mxu0
      %v4709 = vadd.f32 0.0, %v4708
      %v4710 = vpop.f32.mrf.mxu0
      %4711 = vmatprep.mubr.f32.mxu0 0.0
      %4712 = vmatmul.mubr.f32.gmra.mxu0 %v3919
      %v4713 = vpop.f32.mrf.mxu0
      %v4714 = vadd.f32 0.0, %v4713
      %v4715 = vpop.f32.mrf.mxu0
      %4716 = vmatprep.mubr.f32.mxu0 0.0
      %4717 = vmatmul.mubr.f32.gmra.mxu0 %v3921
      %v4718 = vpop.f32.mrf.mxu0
      %v4719 = vadd.f32 0.0, %v4718
      %v4720 = vpop.f32.mrf.mxu0
      %4721 = vmatprep.mubr.f32.mxu0 0.0
      %4722 = vmatmul.mubr.f32.gmra.mxu0 %v3923
      %v4723 = vpop.f32.mrf.mxu0
      %v4724 = vadd.f32 0.0, %v4723
      %v4725 = vpop.f32.mrf.mxu0
      %4726 = vmatprep.mubr.f32.mxu0 0.0
      %4727 = vmatmul.mubr.f32.gmra.mxu0 %v3925
      %v4728 = vpop.f32.mrf.mxu0
      %v4729 = vadd.f32 0.0, %v4728
      %v4730 = vpop.f32.mrf.mxu0
      %4731 = vmatprep.mubr.f32.mxu0 0.0
      %4732 = vmatmul.mubr.f32.gmra.mxu0 %v3927
      %v4733 = vpop.f32.mrf.mxu0
      %v4734 = vadd.f32 0.0, %v4733
      %v4735 = vpop.f32.mrf.mxu0
      %4736 = vmatprep.mubr.f32.mxu0 0.0
      %4737 = vmatmul.mubr.f32.gmra.mxu0 %v3929
      %v4738 = vpop.f32.mrf.mxu0
      %v4739 = vadd.f32 0.0, %v4738
      %v4740 = vpop.f32.mrf.mxu0
      %4741 = vmatprep.mubr.f32.mxu0 0.0
      %4742 = vmatmul.mubr.f32.gmra.mxu0 %v3931
      %v4743 = vpop.f32.mrf.mxu0
      %v4744 = vadd.f32 0.0, %v4743
      %v4745 = vpop.f32.mrf.mxu0
      %4746 = vmatprep.mubr.f32.mxu0 0.0
      %4747 = vmatmul.mubr.f32.gmra.mxu0 %v3933
      %v4748 = vpop.f32.mrf.mxu0
      %v4749 = vadd.f32 0.0, %v4748
      %v4750 = vpop.f32.mrf.mxu0
      %4751 = vmatprep.mubr.f32.mxu0 0.0
      %4752 = vmatmul.mubr.f32.gmra.mxu0 %v3935
      %v4753 = vpop.f32.mrf.mxu0
      %v4754 = vadd.f32 0.0, %v4753
      %v4755 = vpop.f32.mrf.mxu0
      %4756 = vmatprep.mubr.f32.mxu0 0.0
      %4757 = vmatmul.mubr.f32.gmra.mxu0 %v3937
      %v4758 = vpop.f32.mrf.mxu0
      %v4759 = vadd.f32 0.0, %v4758
      %v4760 = vpop.f32.mrf.mxu0
      %4761 = vmatprep.mubr.f32.mxu0 0.0
      %4762 = vmatmul.mubr.f32.gmra.mxu0 %v3939
      %v4763 = vpop.f32.mrf.mxu0
      %v4764 = vadd.f32 0.0, %v4763
      %v4765 = vpop.f32.mrf.mxu0
      %4766 = vmatprep.mubr.f32.mxu0 0.0
      %4767 = vmatmul.mubr.f32.gmra.mxu0 %v3941
      %v4768 = vpop.f32.mrf.mxu0
      %v4769 = vadd.f32 0.0, %v4768
      %v4770 = vpop.f32.mrf.mxu0
      %4771 = vmatprep.mubr.f32.mxu0 0.0
      %4772 = vmatmul.mubr.f32.gmra.mxu0 %v3943
      %v4773 = vpop.f32.mrf.mxu0
      %v4774 = vadd.f32 0.0, %v4773
      %v4775 = vpop.f32.mrf.mxu0
      %4776 = vmatprep.mubr.f32.mxu0 0.0
      %4777 = vmatmul.mubr.f32.gmra.mxu0 %v3945
      %v4778 = vpop.f32.mrf.mxu0
      %v4779 = vadd.f32 0.0, %v4778
      %v4780 = vpop.f32.mrf.mxu0
      %4781 = vmatprep.mubr.f32.mxu0 0.0
      %4782 = vmatmul.mubr.f32.gmra.mxu0 %v3947
      %v4783 = vpop.f32.mrf.mxu0
      %v4784 = vadd.f32 0.0, %v4783
      %v4785 = vpop.f32.mrf.mxu0
      %4786 = vmatprep.mubr.f32.mxu0 0.0
      %4787 = vmatmul.mubr.f32.gmra.mxu0 %v3949
      %v4788 = vpop.f32.mrf.mxu0
      %v4789 = vadd.f32 0.0, %v4788
      %v4790 = vpop.f32.mrf.mxu0
      %4791 = vmatprep.mubr.f32.mxu0 0.0
      %4792 = vmatmul.mubr.f32.gmra.mxu0 %v3951
      %v4793 = vpop.f32.mrf.mxu0
      %v4794 = vadd.f32 0.0, %v4793
      %v4795 = vpop.f32.mrf.mxu0
      %4796 = vmatprep.mubr.f32.mxu0 0.0
      %4797 = vmatmul.mubr.f32.gmra.mxu0 %v3953
      %v4798 = vpop.f32.mrf.mxu0
      %v4799 = vadd.f32 0.0, %v4798
      %v4800 = vpop.f32.mrf.mxu0
      %4801 = vmatprep.mubr.f32.mxu0 0.0
      %4802 = vmatmul.mubr.f32.gmra.mxu0 %v3955
      %v4803 = vpop.f32.mrf.mxu0
      %v4804 = vadd.f32 0.0, %v4803
      %v4805 = vpop.f32.mrf.mxu0
      %4806 = vmatprep.mubr.f32.mxu0 0.0
      %4807 = vmatmul.mubr.f32.gmra.mxu0 %v3957
      %v4808 = vpop.f32.mrf.mxu0
      %v4809 = vadd.f32 0.0, %v4808
      %v4810 = vpop.f32.mrf.mxu0
      %4811 = vmatprep.mubr.f32.mxu0 0.0
      %4812 = vmatmul.mubr.f32.gmra.mxu0 %v3959
      %v4813 = vpop.f32.mrf.mxu0
      %v4814 = vadd.f32 0.0, %v4813
      %v4815 = vpop.f32.mrf.mxu0
      %4816 = vmatprep.mubr.f32.mxu0 0.0
      %4817 = vmatmul.mubr.f32.gmra.mxu0 %v4594
      %v4818 = vpop.f32.mrf.mxu0
      %v4819 = vadd.f32 0.0, %v4818
      %v4820 = vpop.f32.mrf.mxu0
      %4821 = vmatprep.mubr.f32.mxu0 0.0
      %4822 = vmatmul.mubr.f32.gmra.mxu0 %v4597
      %v4823 = vpop.f32.mrf.mxu0
      %v4824 = vadd.f32 0.0, %v4823
      %v4825 = vpop.f32.mrf.mxu0
      %4826 = vdwg.mxu0
      %v4827 = vadd.f32 %v4561, %v4669
      %v4828 = vadd.f32 %v4562, %v4674
      %v4829 = vadd.f32 %v4563, %v4679
      %v4830 = vadd.f32 %v4564, %v4684
      %v4831 = vadd.f32 %v4565, %v4689
      %v4832 = vadd.f32 %v4566, %v4694
      %v4833 = vadd.f32 %v4567, %v4699
      %v4834 = vadd.f32 %v4568, %v4704
      %v4835 = vadd.f32 %v4569, %v4709
      %v4836 = vadd.f32 %v4570, %v4714
      %v4837 = vadd.f32 %v4571, %v4719
      %v4838 = vadd.f32 %v4572, %v4724
      %v4839 = vadd.f32 %v4573, %v4729
      %v4840 = vadd.f32 %v4574, %v4734
      %v4841 = vadd.f32 %v4575, %v4739
      %v4842 = vadd.f32 %v4576, %v4744
      %v4843 = vadd.f32 %v4577, %v4749
      %v4844 = vadd.f32 %v4578, %v4754
      %v4845 = vadd.f32 %v4579, %v4759
      %v4846 = vadd.f32 %v4580, %v4764
      %v4847 = vadd.f32 %v4581, %v4769
      %v4848 = vadd.f32 %v4582, %v4774
      %v4849 = vadd.f32 %v4583, %v4779
      %v4850 = vadd.f32 %v4584, %v4784
      %v4851 = vadd.f32 %v4585, %v4789
      %v4852 = vadd.f32 %v4586, %v4794
      %v4853 = vadd.f32 %v4587, %v4799
      %v4854 = vadd.f32 %v4588, %v4804
      %v4855 = vadd.f32 %v4589, %v4809
      %v4856 = vadd.f32 %v4590, %v4814
      %v4857 = vadd.f32 %v4591, %v4819
      %v4858 = vadd.f32 %v4592, %v4824
      %v4860 = vrot.slane %v3471, 1
      %v4861 = vrot.slane %v3472, 1
      %v4862 = vsel %vm606, %v4860, %v4861
      %v4863 = vrot.slane %v3473, 1
      %v4864 = vsel %vm606, %v4861, %v4863
      %v4865 = vsel %vm727, %v4862, 0
      %v4867 = vsel %vm727, %v4864, 0
      %v4870 = vsel %vm792, %v497, 0
      %4872 = vmatprep.subr.mxu0 0.0
      %4873 = vmatpush1.msra.mxu0 0.0
      %4874 = vmatprep.subr.mxu0 0.0
      %4875 = vmatpush1.msra.mxu0 0.0
      %4876 = vmatprep.subr.mxu0 0.0
      %4877 = vmatpush1.msra.mxu0 0.0
      %4878 = vmatprep.subr.mxu0 0.0
      %4879 = vmatpush1.msra.mxu0 0.0
      %4880 = vmatprep.subr.mxu0 0.0
      %4881 = vmatpush1.msra.mxu0 0.0
      %4882 = vmatprep.subr.mxu0 0.0
      %4883 = vmatpush1.msra.mxu0 0.0
      %4884 = vmatprep.subr.mxu0 0.0
      %4885 = vmatpush1.msra.mxu0 0.0
      %4886 = vmatprep.subr.mxu0 0.0
      %4887 = vmatpush1.msra.mxu0 0.0
      %4888 = vmatprep.subr.mxu0 0.0
      %4889 = vmatpush1.msra.mxu0 0.0
      %4890 = vmatprep.subr.mxu0 0.0
      %4891 = vmatpush1.msra.mxu0 0.0
      %4892 = vmatprep.subr.mxu0 0.0
      %4893 = vmatpush1.msra.mxu0 0.0
      %4894 = vmatprep.subr.mxu0 0.0
      %4895 = vmatpush1.msra.mxu0 0.0
      %4896 = vmatprep.subr.mxu0 0.0
      %4897 = vmatpush1.msra.mxu0 0.0
      %4898 = vmatprep.subr.mxu0 0.0
      %4899 = vmatpush1.msra.mxu0 0.0
      %4900 = vmatprep.subr.mxu0 0.0
      %4901 = vmatpush1.msra.mxu0 0.0
      %4902 = vmatprep.subr.mxu0 0.0
      %4903 = vmatpush1.msra.mxu0 %v4870
      %4904 = vmatprep.subr.mxu0 0.0
      %4905 = vmatpush2.msra.mxu0 0.0
      %4906 = vmatprep.subr.mxu0 0.0
      %4907 = vmatpush2.msra.mxu0 0.0
      %4908 = vmatprep.subr.mxu0 0.0
      %4909 = vmatpush2.msra.mxu0 0.0
      %4910 = vmatprep.subr.mxu0 0.0
      %4911 = vmatpush2.msra.mxu0 0.0
      %4912 = vmatprep.subr.mxu0 0.0
      %4913 = vmatpush2.msra.mxu0 0.0
      %4914 = vmatprep.subr.mxu0 0.0
      %4915 = vmatpush2.msra.mxu0 0.0
      %4916 = vmatprep.subr.mxu0 0.0
      %4917 = vmatpush2.msra.mxu0 0.0
      %4918 = vmatprep.subr.mxu0 0.0
      %4919 = vmatpush2.msra.mxu0 0.0
      %4920 = vmatprep.subr.mxu0 0.0
      %4921 = vmatpush2.msra.mxu0 0.0
      %4922 = vmatprep.subr.mxu0 0.0
      %4923 = vmatpush2.msra.mxu0 0.0
      %4924 = vmatprep.subr.mxu0 0.0
      %4925 = vmatpush2.msra.mxu0 0.0
      %4926 = vmatprep.subr.mxu0 0.0
      %4927 = vmatpush2.msra.mxu0 0.0
      %4928 = vmatprep.subr.mxu0 0.0
      %4929 = vmatpush2.msra.mxu0 0.0
      %4930 = vmatprep.subr.mxu0 0.0
      %4931 = vmatpush2.msra.mxu0 0.0
      %4932 = vmatprep.subr.mxu0 0.0
      %4933 = vmatpush2.msra.mxu0 0.0
      %4934 = vmatprep.subr.mxu0 0.0
      %4935 = vmatpush2.msra.mxu0 0.0
      %4936 = vmatprep.mubr.f32.mxu0 0.0
      %4937 = vmatmul.mubr.f32.gmra.mxu0 %v3609
      %v4938 = vpop.f32.mrf.mxu0
      %v4939 = vadd.f32 0.0, %v4938
      %v4940 = vpop.f32.mrf.mxu0
      %4941 = vmatprep.mubr.f32.mxu0 0.0
      %4942 = vmatmul.mubr.f32.gmra.mxu0 %v3611
      %v4943 = vpop.f32.mrf.mxu0
      %v4944 = vadd.f32 0.0, %v4943
      %v4945 = vpop.f32.mrf.mxu0
      %4946 = vmatprep.mubr.f32.mxu0 0.0
      %4947 = vmatmul.mubr.f32.gmra.mxu0 %v3613
      %v4948 = vpop.f32.mrf.mxu0
      %v4949 = vadd.f32 0.0, %v4948
      %v4950 = vpop.f32.mrf.mxu0
      %4951 = vmatprep.mubr.f32.mxu0 0.0
      %4952 = vmatmul.mubr.f32.gmra.mxu0 %v3615
      %v4953 = vpop.f32.mrf.mxu0
      %v4954 = vadd.f32 0.0, %v4953
      %v4955 = vpop.f32.mrf.mxu0
      %4956 = vmatprep.mubr.f32.mxu0 0.0
      %4957 = vmatmul.mubr.f32.gmra.mxu0 %v3617
      %v4958 = vpop.f32.mrf.mxu0
      %v4959 = vadd.f32 0.0, %v4958
      %v4960 = vpop.f32.mrf.mxu0
      %4961 = vmatprep.mubr.f32.mxu0 0.0
      %4962 = vmatmul.mubr.f32.gmra.mxu0 %v3619
      %v4963 = vpop.f32.mrf.mxu0
      %v4964 = vadd.f32 0.0, %v4963
      %v4965 = vpop.f32.mrf.mxu0
      %4966 = vmatprep.mubr.f32.mxu0 0.0
      %4967 = vmatmul.mubr.f32.gmra.mxu0 %v3621
      %v4968 = vpop.f32.mrf.mxu0
      %v4969 = vadd.f32 0.0, %v4968
      %v4970 = vpop.f32.mrf.mxu0
      %4971 = vmatprep.mubr.f32.mxu0 0.0
      %4972 = vmatmul.mubr.f32.gmra.mxu0 %v3623
      %v4973 = vpop.f32.mrf.mxu0
      %v4974 = vadd.f32 0.0, %v4973
      %v4975 = vpop.f32.mrf.mxu0
      %4976 = vmatprep.mubr.f32.mxu0 0.0
      %4977 = vmatmul.mubr.f32.gmra.mxu0 %v3625
      %v4978 = vpop.f32.mrf.mxu0
      %v4979 = vadd.f32 0.0, %v4978
      %v4980 = vpop.f32.mrf.mxu0
      %4981 = vmatprep.mubr.f32.mxu0 0.0
      %4982 = vmatmul.mubr.f32.gmra.mxu0 %v3627
      %v4983 = vpop.f32.mrf.mxu0
      %v4984 = vadd.f32 0.0, %v4983
      %v4985 = vpop.f32.mrf.mxu0
      %4986 = vmatprep.mubr.f32.mxu0 0.0
      %4987 = vmatmul.mubr.f32.gmra.mxu0 %v3629
      %v4988 = vpop.f32.mrf.mxu0
      %v4989 = vadd.f32 0.0, %v4988
      %v4990 = vpop.f32.mrf.mxu0
      %4991 = vmatprep.mubr.f32.mxu0 0.0
      %4992 = vmatmul.mubr.f32.gmra.mxu0 %v3631
      %v4993 = vpop.f32.mrf.mxu0
      %v4994 = vadd.f32 0.0, %v4993
      %v4995 = vpop.f32.mrf.mxu0
      %4996 = vmatprep.mubr.f32.mxu0 0.0
      %4997 = vmatmul.mubr.f32.gmra.mxu0 %v3633
      %v4998 = vpop.f32.mrf.mxu0
      %v4999 = vadd.f32 0.0, %v4998
      %v5000 = vpop.f32.mrf.mxu0
      %5001 = vmatprep.mubr.f32.mxu0 0.0
      %5002 = vmatmul.mubr.f32.gmra.mxu0 %v3635
      %v5003 = vpop.f32.mrf.mxu0
      %v5004 = vadd.f32 0.0, %v5003
      %v5005 = vpop.f32.mrf.mxu0
      %5006 = vmatprep.mubr.f32.mxu0 0.0
      %5007 = vmatmul.mubr.f32.gmra.mxu0 %v3637
      %v5008 = vpop.f32.mrf.mxu0
      %v5009 = vadd.f32 0.0, %v5008
      %v5010 = vpop.f32.mrf.mxu0
      %5011 = vmatprep.mubr.f32.mxu0 0.0
      %5012 = vmatmul.mubr.f32.gmra.mxu0 %v3639
      %v5013 = vpop.f32.mrf.mxu0
      %v5014 = vadd.f32 0.0, %v5013
      %v5015 = vpop.f32.mrf.mxu0
      %5016 = vmatprep.mubr.f32.mxu0 0.0
      %5017 = vmatmul.mubr.f32.gmra.mxu0 %v3641
      %v5018 = vpop.f32.mrf.mxu0
      %v5019 = vadd.f32 0.0, %v5018
      %v5020 = vpop.f32.mrf.mxu0
      %5021 = vmatprep.mubr.f32.mxu0 0.0
      %5022 = vmatmul.mubr.f32.gmra.mxu0 %v3643
      %v5023 = vpop.f32.mrf.mxu0
      %v5024 = vadd.f32 0.0, %v5023
      %v5025 = vpop.f32.mrf.mxu0
      %5026 = vmatprep.mubr.f32.mxu0 0.0
      %5027 = vmatmul.mubr.f32.gmra.mxu0 %v3645
      %v5028 = vpop.f32.mrf.mxu0
      %v5029 = vadd.f32 0.0, %v5028
      %v5030 = vpop.f32.mrf.mxu0
      %5031 = vmatprep.mubr.f32.mxu0 0.0
      %5032 = vmatmul.mubr.f32.gmra.mxu0 %v3647
      %v5033 = vpop.f32.mrf.mxu0
      %v5034 = vadd.f32 0.0, %v5033
      %v5035 = vpop.f32.mrf.mxu0
      %5036 = vmatprep.mubr.f32.mxu0 0.0
      %5037 = vmatmul.mubr.f32.gmra.mxu0 %v3649
      %v5038 = vpop.f32.mrf.mxu0
      %v5039 = vadd.f32 0.0, %v5038
      %v5040 = vpop.f32.mrf.mxu0
      %5041 = vmatprep.mubr.f32.mxu0 0.0
      %5042 = vmatmul.mubr.f32.gmra.mxu0 %v3651
      %v5043 = vpop.f32.mrf.mxu0
      %v5044 = vadd.f32 0.0, %v5043
      %v5045 = vpop.f32.mrf.mxu0
      %5046 = vmatprep.mubr.f32.mxu0 0.0
      %5047 = vmatmul.mubr.f32.gmra.mxu0 %v3653
      %v5048 = vpop.f32.mrf.mxu0
      %v5049 = vadd.f32 0.0, %v5048
      %v5050 = vpop.f32.mrf.mxu0
      %5051 = vmatprep.mubr.f32.mxu0 0.0
      %5052 = vmatmul.mubr.f32.gmra.mxu0 %v3655
      %v5053 = vpop.f32.mrf.mxu0
      %v5054 = vadd.f32 0.0, %v5053
      %v5055 = vpop.f32.mrf.mxu0
      %5056 = vmatprep.mubr.f32.mxu0 0.0
      %5057 = vmatmul.mubr.f32.gmra.mxu0 %v3657
      %v5058 = vpop.f32.mrf.mxu0
      %v5059 = vadd.f32 0.0, %v5058
      %v5060 = vpop.f32.mrf.mxu0
      %5061 = vmatprep.mubr.f32.mxu0 0.0
      %5062 = vmatmul.mubr.f32.gmra.mxu0 %v3659
      %v5063 = vpop.f32.mrf.mxu0
      %v5064 = vadd.f32 0.0, %v5063
      %v5065 = vpop.f32.mrf.mxu0
      %5066 = vmatprep.mubr.f32.mxu0 0.0
      %5067 = vmatmul.mubr.f32.gmra.mxu0 %v3661
      %v5068 = vpop.f32.mrf.mxu0
      %v5069 = vadd.f32 0.0, %v5068
      %v5070 = vpop.f32.mrf.mxu0
      %5071 = vmatprep.mubr.f32.mxu0 0.0
      %5072 = vmatmul.mubr.f32.gmra.mxu0 %v3663
      %v5073 = vpop.f32.mrf.mxu0
      %v5074 = vadd.f32 0.0, %v5073
      %v5075 = vpop.f32.mrf.mxu0
      %5076 = vmatprep.mubr.f32.mxu0 0.0
      %5077 = vmatmul.mubr.f32.gmra.mxu0 %v3665
      %v5078 = vpop.f32.mrf.mxu0
      %v5079 = vadd.f32 0.0, %v5078
      %v5080 = vpop.f32.mrf.mxu0
      %5081 = vmatprep.mubr.f32.mxu0 0.0
      %5082 = vmatmul.mubr.f32.gmra.mxu0 %v3667
      %v5083 = vpop.f32.mrf.mxu0
      %v5084 = vadd.f32 0.0, %v5083
      %v5085 = vpop.f32.mrf.mxu0
      %5086 = vmatprep.mubr.f32.mxu0 0.0
      %5087 = vmatmul.mubr.f32.gmra.mxu0 %v4865
      %v5088 = vpop.f32.mrf.mxu0
      %v5089 = vadd.f32 0.0, %v5088
      %v5090 = vpop.f32.mrf.mxu0
      %5091 = vmatprep.mubr.f32.mxu0 0.0
      %5092 = vmatmul.mubr.f32.gmra.mxu0 %v4867
      %v5093 = vpop.f32.mrf.mxu0
      %v5094 = vadd.f32 0.0, %v5093
      %v5095 = vpop.f32.mrf.mxu0
      %5096 = vdwg.mxu0
      %v5097 = vadd.f32 %v4827, %v4939
      %v5098 = vadd.f32 %v4828, %v4944
      %v5099 = vadd.f32 %v4829, %v4949
      %v5100 = vadd.f32 %v4830, %v4954
      %v5101 = vadd.f32 %v4831, %v4959
      %v5102 = vadd.f32 %v4832, %v4964
      %v5103 = vadd.f32 %v4833, %v4969
      %v5104 = vadd.f32 %v4834, %v4974
      %v5105 = vadd.f32 %v4835, %v4979
      %v5106 = vadd.f32 %v4836, %v4984
      %v5107 = vadd.f32 %v4837, %v4989
      %v5108 = vadd.f32 %v4838, %v4994
      %v5109 = vadd.f32 %v4839, %v4999
      %v5110 = vadd.f32 %v4840, %v5004
      %v5111 = vadd.f32 %v4841, %v5009
      %v5112 = vadd.f32 %v4842, %v5014
      %v5113 = vadd.f32 %v4843, %v5019
      %v5114 = vadd.f32 %v4844, %v5024
      %v5115 = vadd.f32 %v4845, %v5029
      %v5116 = vadd.f32 %v4846, %v5034
      %v5117 = vadd.f32 %v4847, %v5039
      %v5118 = vadd.f32 %v4848, %v5044
      %v5119 = vadd.f32 %v4849, %v5049
      %v5120 = vadd.f32 %v4850, %v5054
      %v5121 = vadd.f32 %v4851, %v5059
      %v5122 = vadd.f32 %v4852, %v5064
      %v5123 = vadd.f32 %v4853, %v5069
      %v5124 = vadd.f32 %v4854, %v5074
      %v5125 = vadd.f32 %v4855, %v5079
      %v5126 = vadd.f32 %v4856, %v5084
      %v5127 = vadd.f32 %v4857, %v5089
      %v5128 = vadd.f32 %v4858, %v5094
      %v5129 = vrot.slane %v3471, 2
      %v5130 = vrot.slane %v3472, 2
      %v5131 = vsel %vm1313, %v5129, %v5130
      %v5132 = vrot.slane %v3473, 2
      %v5133 = vsel %vm1313, %v5130, %v5132
      %v5134 = vsel %vm727, %v5131, 0
      %v5136 = vsel %vm727, %v5133, 0
      %v5139 = vsel %vm792, %v498, 0
      %5141 = vmatprep.subr.mxu0 0.0
      %5142 = vmatpush1.msra.mxu0 0.0
      %5143 = vmatprep.subr.mxu0 0.0
      %5144 = vmatpush1.msra.mxu0 0.0
      %5145 = vmatprep.subr.mxu0 0.0
      %5146 = vmatpush1.msra.mxu0 0.0
      %5147 = vmatprep.subr.mxu0 0.0
      %5148 = vmatpush1.msra.mxu0 0.0
      %5149 = vmatprep.subr.mxu0 0.0
      %5150 = vmatpush1.msra.mxu0 0.0
      %5151 = vmatprep.subr.mxu0 0.0
      %5152 = vmatpush1.msra.mxu0 0.0
      %5153 = vmatprep.subr.mxu0 0.0
      %5154 = vmatpush1.msra.mxu0 0.0
      %5155 = vmatprep.subr.mxu0 0.0
      %5156 = vmatpush1.msra.mxu0 0.0
      %5157 = vmatprep.subr.mxu0 0.0
      %5158 = vmatpush1.msra.mxu0 0.0
      %5159 = vmatprep.subr.mxu0 0.0
      %5160 = vmatpush1.msra.mxu0 0.0
      %5161 = vmatprep.subr.mxu0 0.0
      %5162 = vmatpush1.msra.mxu0 0.0
      %5163 = vmatprep.subr.mxu0 0.0
      %5164 = vmatpush1.msra.mxu0 0.0
      %5165 = vmatprep.subr.mxu0 0.0
      %5166 = vmatpush1.msra.mxu0 0.0
      %5167 = vmatprep.subr.mxu0 0.0
      %5168 = vmatpush1.msra.mxu0 0.0
      %5169 = vmatprep.subr.mxu0 0.0
      %5170 = vmatpush1.msra.mxu0 0.0
      %5171 = vmatprep.subr.mxu0 0.0
      %5172 = vmatpush1.msra.mxu0 %v5139
      %5173 = vmatprep.subr.mxu0 0.0
      %5174 = vmatpush2.msra.mxu0 0.0
      %5175 = vmatprep.subr.mxu0 0.0
      %5176 = vmatpush2.msra.mxu0 0.0
      %5177 = vmatprep.subr.mxu0 0.0
      %5178 = vmatpush2.msra.mxu0 0.0
      %5179 = vmatprep.subr.mxu0 0.0
      %5180 = vmatpush2.msra.mxu0 0.0
      %5181 = vmatprep.subr.mxu0 0.0
      %5182 = vmatpush2.msra.mxu0 0.0
      %5183 = vmatprep.subr.mxu0 0.0
      %5184 = vmatpush2.msra.mxu0 0.0
      %5185 = vmatprep.subr.mxu0 0.0
      %5186 = vmatpush2.msra.mxu0 0.0
      %5187 = vmatprep.subr.mxu0 0.0
      %5188 = vmatpush2.msra.mxu0 0.0
      %5189 = vmatprep.subr.mxu0 0.0
      %5190 = vmatpush2.msra.mxu0 0.0
      %5191 = vmatprep.subr.mxu0 0.0
      %5192 = vmatpush2.msra.mxu0 0.0
      %5193 = vmatprep.subr.mxu0 0.0
      %5194 = vmatpush2.msra.mxu0 0.0
      %5195 = vmatprep.subr.mxu0 0.0
      %5196 = vmatpush2.msra.mxu0 0.0
      %5197 = vmatprep.subr.mxu0 0.0
      %5198 = vmatpush2.msra.mxu0 0.0
      %5199 = vmatprep.subr.mxu0 0.0
      %5200 = vmatpush2.msra.mxu0 0.0
      %5201 = vmatprep.subr.mxu0 0.0
      %5202 = vmatpush2.msra.mxu0 0.0
      %5203 = vmatprep.subr.mxu0 0.0
      %5204 = vmatpush2.msra.mxu0 0.0
      %5205 = vmatprep.mubr.f32.mxu0 0.0
      %5206 = vmatmul.mubr.f32.gmra.mxu0 %v4273
      %v5207 = vpop.f32.mrf.mxu0
      %v5208 = vadd.f32 0.0, %v5207
      %v5209 = vpop.f32.mrf.mxu0
      %5210 = vmatprep.mubr.f32.mxu0 0.0
      %5211 = vmatmul.mubr.f32.gmra.mxu0 %v4275
      %v5212 = vpop.f32.mrf.mxu0
      %v5213 = vadd.f32 0.0, %v5212
      %v5214 = vpop.f32.mrf.mxu0
      %5215 = vmatprep.mubr.f32.mxu0 0.0
      %5216 = vmatmul.mubr.f32.gmra.mxu0 %v4277
      %v5217 = vpop.f32.mrf.mxu0
      %v5218 = vadd.f32 0.0, %v5217
      %v5219 = vpop.f32.mrf.mxu0
      %5220 = vmatprep.mubr.f32.mxu0 0.0
      %5221 = vmatmul.mubr.f32.gmra.mxu0 %v4279
      %v5222 = vpop.f32.mrf.mxu0
      %v5223 = vadd.f32 0.0, %v5222
      %v5224 = vpop.f32.mrf.mxu0
      %5225 = vmatprep.mubr.f32.mxu0 0.0
      %5226 = vmatmul.mubr.f32.gmra.mxu0 %v4281
      %v5227 = vpop.f32.mrf.mxu0
      %v5228 = vadd.f32 0.0, %v5227
      %v5229 = vpop.f32.mrf.mxu0
      %5230 = vmatprep.mubr.f32.mxu0 0.0
      %5231 = vmatmul.mubr.f32.gmra.mxu0 %v4283
      %v5232 = vpop.f32.mrf.mxu0
      %v5233 = vadd.f32 0.0, %v5232
      %v5234 = vpop.f32.mrf.mxu0
      %5235 = vmatprep.mubr.f32.mxu0 0.0
      %5236 = vmatmul.mubr.f32.gmra.mxu0 %v4285
      %v5237 = vpop.f32.mrf.mxu0
      %v5238 = vadd.f32 0.0, %v5237
      %v5239 = vpop.f32.mrf.mxu0
      %5240 = vmatprep.mubr.f32.mxu0 0.0
      %5241 = vmatmul.mubr.f32.gmra.mxu0 %v4287
      %v5242 = vpop.f32.mrf.mxu0
      %v5243 = vadd.f32 0.0, %v5242
      %v5244 = vpop.f32.mrf.mxu0
      %5245 = vmatprep.mubr.f32.mxu0 0.0
      %5246 = vmatmul.mubr.f32.gmra.mxu0 %v4289
      %v5247 = vpop.f32.mrf.mxu0
      %v5248 = vadd.f32 0.0, %v5247
      %v5249 = vpop.f32.mrf.mxu0
      %5250 = vmatprep.mubr.f32.mxu0 0.0
      %5251 = vmatmul.mubr.f32.gmra.mxu0 %v4291
      %v5252 = vpop.f32.mrf.mxu0
      %v5253 = vadd.f32 0.0, %v5252
      %v5254 = vpop.f32.mrf.mxu0
      %5255 = vmatprep.mubr.f32.mxu0 0.0
      %5256 = vmatmul.mubr.f32.gmra.mxu0 %v4293
      %v5257 = vpop.f32.mrf.mxu0
      %v5258 = vadd.f32 0.0, %v5257
      %v5259 = vpop.f32.mrf.mxu0
      %5260 = vmatprep.mubr.f32.mxu0 0.0
      %5261 = vmatmul.mubr.f32.gmra.mxu0 %v4295
      %v5262 = vpop.f32.mrf.mxu0
      %v5263 = vadd.f32 0.0, %v5262
      %v5264 = vpop.f32.mrf.mxu0
      %5265 = vmatprep.mubr.f32.mxu0 0.0
      %5266 = vmatmul.mubr.f32.gmra.mxu0 %v4297
      %v5267 = vpop.f32.mrf.mxu0
      %v5268 = vadd.f32 0.0, %v5267
      %v5269 = vpop.f32.mrf.mxu0
      %5270 = vmatprep.mubr.f32.mxu0 0.0
      %5271 = vmatmul.mubr.f32.gmra.mxu0 %v4299
      %v5272 = vpop.f32.mrf.mxu0
      %v5273 = vadd.f32 0.0, %v5272
      %v5274 = vpop.f32.mrf.mxu0
      %5275 = vmatprep.mubr.f32.mxu0 0.0
      %5276 = vmatmul.mubr.f32.gmra.mxu0 %v4301
      %v5277 = vpop.f32.mrf.mxu0
      %v5278 = vadd.f32 0.0, %v5277
      %v5279 = vpop.f32.mrf.mxu0
      %5280 = vmatprep.mubr.f32.mxu0 0.0
      %5281 = vmatmul.mubr.f32.gmra.mxu0 %v4303
      %v5282 = vpop.f32.mrf.mxu0
      %v5283 = vadd.f32 0.0, %v5282
      %v5284 = vpop.f32.mrf.mxu0
      %5285 = vmatprep.mubr.f32.mxu0 0.0
      %5286 = vmatmul.mubr.f32.gmra.mxu0 %v4305
      %v5287 = vpop.f32.mrf.mxu0
      %v5288 = vadd.f32 0.0, %v5287
      %v5289 = vpop.f32.mrf.mxu0
      %5290 = vmatprep.mubr.f32.mxu0 0.0
      %5291 = vmatmul.mubr.f32.gmra.mxu0 %v4307
      %v5292 = vpop.f32.mrf.mxu0
      %v5293 = vadd.f32 0.0, %v5292
      %v5294 = vpop.f32.mrf.mxu0
      %5295 = vmatprep.mubr.f32.mxu0 0.0
      %5296 = vmatmul.mubr.f32.gmra.mxu0 %v4309
      %v5297 = vpop.f32.mrf.mxu0
      %v5298 = vadd.f32 0.0, %v5297
      %v5299 = vpop.f32.mrf.mxu0
      %5300 = vmatprep.mubr.f32.mxu0 0.0
      %5301 = vmatmul.mubr.f32.gmra.mxu0 %v4311
      %v5302 = vpop.f32.mrf.mxu0
      %v5303 = vadd.f32 0.0, %v5302
      %v5304 = vpop.f32.mrf.mxu0
      %5305 = vmatprep.mubr.f32.mxu0 0.0
      %5306 = vmatmul.mubr.f32.gmra.mxu0 %v4313
      %v5307 = vpop.f32.mrf.mxu0
      %v5308 = vadd.f32 0.0, %v5307
      %v5309 = vpop.f32.mrf.mxu0
      %5310 = vmatprep.mubr.f32.mxu0 0.0
      %5311 = vmatmul.mubr.f32.gmra.mxu0 %v4315
      %v5312 = vpop.f32.mrf.mxu0
      %v5313 = vadd.f32 0.0, %v5312
      %v5314 = vpop.f32.mrf.mxu0
      %5315 = vmatprep.mubr.f32.mxu0 0.0
      %5316 = vmatmul.mubr.f32.gmra.mxu0 %v4317
      %v5317 = vpop.f32.mrf.mxu0
      %v5318 = vadd.f32 0.0, %v5317
      %v5319 = vpop.f32.mrf.mxu0
      %5320 = vmatprep.mubr.f32.mxu0 0.0
      %5321 = vmatmul.mubr.f32.gmra.mxu0 %v4319
      %v5322 = vpop.f32.mrf.mxu0
      %v5323 = vadd.f32 0.0, %v5322
      %v5324 = vpop.f32.mrf.mxu0
      %5325 = vmatprep.mubr.f32.mxu0 0.0
      %5326 = vmatmul.mubr.f32.gmra.mxu0 %v4321
      %v5327 = vpop.f32.mrf.mxu0
      %v5328 = vadd.f32 0.0, %v5327
      %v5329 = vpop.f32.mrf.mxu0
      %5330 = vmatprep.mubr.f32.mxu0 0.0
      %5331 = vmatmul.mubr.f32.gmra.mxu0 %v4323
      %v5332 = vpop.f32.mrf.mxu0
      %v5333 = vadd.f32 0.0, %v5332
      %v5334 = vpop.f32.mrf.mxu0
      %5335 = vmatprep.mubr.f32.mxu0 0.0
      %5336 = vmatmul.mubr.f32.gmra.mxu0 %v4325
      %v5337 = vpop.f32.mrf.mxu0
      %v5338 = vadd.f32 0.0, %v5337
      %v5339 = vpop.f32.mrf.mxu0
      %5340 = vmatprep.mubr.f32.mxu0 0.0
      %5341 = vmatmul.mubr.f32.gmra.mxu0 %v4327
      %v5342 = vpop.f32.mrf.mxu0
      %v5343 = vadd.f32 0.0, %v5342
      %v5344 = vpop.f32.mrf.mxu0
      %5345 = vmatprep.mubr.f32.mxu0 0.0
      %5346 = vmatmul.mubr.f32.gmra.mxu0 %v4329
      %v5347 = vpop.f32.mrf.mxu0
      %v5348 = vadd.f32 0.0, %v5347
      %v5349 = vpop.f32.mrf.mxu0
      %5350 = vmatprep.mubr.f32.mxu0 0.0
      %5351 = vmatmul.mubr.f32.gmra.mxu0 %v4331
      %v5352 = vpop.f32.mrf.mxu0
      %v5353 = vadd.f32 0.0, %v5352
      %v5354 = vpop.f32.mrf.mxu0
      %5355 = vmatprep.mubr.f32.mxu0 0.0
      %5356 = vmatmul.mubr.f32.gmra.mxu0 %v5134
      %v5357 = vpop.f32.mrf.mxu0
      %v5358 = vadd.f32 0.0, %v5357
      %v5359 = vpop.f32.mrf.mxu0
      %5360 = vmatprep.mubr.f32.mxu0 0.0
      %5361 = vmatmul.mubr.f32.gmra.mxu0 %v5136
      %v5362 = vpop.f32.mrf.mxu0
      %v5363 = vadd.f32 0.0, %v5362
      %v5364 = vpop.f32.mrf.mxu0
      %5365 = vdwg.mxu0
      %v5366 = vadd.f32 %v5097, %v5208
      %v5367 = vadd.f32 %v5098, %v5213
      %v5368 = vadd.f32 %v5099, %v5218
      %v5369 = vadd.f32 %v5100, %v5223
      %v5370 = vadd.f32 %v5101, %v5228
      %v5371 = vadd.f32 %v5102, %v5233
      %v5372 = vadd.f32 %v5103, %v5238
      %v5373 = vadd.f32 %v5104, %v5243
      %v5374 = vadd.f32 %v5105, %v5248
      %v5375 = vadd.f32 %v5106, %v5253
      %v5376 = vadd.f32 %v5107, %v5258
      %v5377 = vadd.f32 %v5108, %v5263
      %v5378 = vadd.f32 %v5109, %v5268
      %v5379 = vadd.f32 %v5110, %v5273
      %v5380 = vadd.f32 %v5111, %v5278
      %v5381 = vadd.f32 %v5112, %v5283
      %v5382 = vadd.f32 %v5113, %v5288
      %v5383 = vadd.f32 %v5114, %v5293
      %v5384 = vadd.f32 %v5115, %v5298
      %v5385 = vadd.f32 %v5116, %v5303
      %v5386 = vadd.f32 %v5117, %v5308
      %v5387 = vadd.f32 %v5118, %v5313
      %v5388 = vadd.f32 %v5119, %v5318
      %v5389 = vadd.f32 %v5120, %v5323
      %v5390 = vadd.f32 %v5121, %v5328
      %v5391 = vadd.f32 %v5122, %v5333
      %v5392 = vadd.f32 %v5123, %v5338
      %v5393 = vadd.f32 %v5124, %v5343
      %v5394 = vadd.f32 %v5125, %v5348
      %v5395 = vadd.f32 %v5126, %v5353
      %v5396 = vadd.f32 %v5127, %v5358
      %v5397 = vadd.f32 %v5128, %v5363
      %v5399 = vsel %vm727, %v3474, 0
      %v5402 = vsel %vm727, %v3475, 0
      %v5405 = vsel %vm792, %v499, 0
      %5407 = vmatprep.subr.mxu0 0.0
      %5408 = vmatpush1.msra.mxu0 0.0
      %5409 = vmatprep.subr.mxu0 0.0
      %5410 = vmatpush1.msra.mxu0 0.0
      %5411 = vmatprep.subr.mxu0 0.0
      %5412 = vmatpush1.msra.mxu0 0.0
      %5413 = vmatprep.subr.mxu0 0.0
      %5414 = vmatpush1.msra.mxu0 0.0
      %5415 = vmatprep.subr.mxu0 0.0
      %5416 = vmatpush1.msra.mxu0 0.0
      %5417 = vmatprep.subr.mxu0 0.0
      %5418 = vmatpush1.msra.mxu0 0.0
      %5419 = vmatprep.subr.mxu0 0.0
      %5420 = vmatpush1.msra.mxu0 0.0
      %5421 = vmatprep.subr.mxu0 0.0
      %5422 = vmatpush1.msra.mxu0 0.0
      %5423 = vmatprep.subr.mxu0 0.0
      %5424 = vmatpush1.msra.mxu0 0.0
      %5425 = vmatprep.subr.mxu0 0.0
      %5426 = vmatpush1.msra.mxu0 0.0
      %5427 = vmatprep.subr.mxu0 0.0
      %5428 = vmatpush1.msra.mxu0 0.0
      %5429 = vmatprep.subr.mxu0 0.0
      %5430 = vmatpush1.msra.mxu0 0.0
      %5431 = vmatprep.subr.mxu0 0.0
      %5432 = vmatpush1.msra.mxu0 0.0
      %5433 = vmatprep.subr.mxu0 0.0
      %5434 = vmatpush1.msra.mxu0 0.0
      %5435 = vmatprep.subr.mxu0 0.0
      %5436 = vmatpush1.msra.mxu0 0.0
      %5437 = vmatprep.subr.mxu0 0.0
      %5438 = vmatpush1.msra.mxu0 %v5405
      %5439 = vmatprep.subr.mxu0 0.0
      %5440 = vmatpush2.msra.mxu0 0.0
      %5441 = vmatprep.subr.mxu0 0.0
      %5442 = vmatpush2.msra.mxu0 0.0
      %5443 = vmatprep.subr.mxu0 0.0
      %5444 = vmatpush2.msra.mxu0 0.0
      %5445 = vmatprep.subr.mxu0 0.0
      %5446 = vmatpush2.msra.mxu0 0.0
      %5447 = vmatprep.subr.mxu0 0.0
      %5448 = vmatpush2.msra.mxu0 0.0
      %5449 = vmatprep.subr.mxu0 0.0
      %5450 = vmatpush2.msra.mxu0 0.0
      %5451 = vmatprep.subr.mxu0 0.0
      %5452 = vmatpush2.msra.mxu0 0.0
      %5453 = vmatprep.subr.mxu0 0.0
      %5454 = vmatpush2.msra.mxu0 0.0
      %5455 = vmatprep.subr.mxu0 0.0
      %5456 = vmatpush2.msra.mxu0 0.0
      %5457 = vmatprep.subr.mxu0 0.0
      %5458 = vmatpush2.msra.mxu0 0.0
      %5459 = vmatprep.subr.mxu0 0.0
      %5460 = vmatpush2.msra.mxu0 0.0
      %5461 = vmatprep.subr.mxu0 0.0
      %5462 = vmatpush2.msra.mxu0 0.0
      %5463 = vmatprep.subr.mxu0 0.0
      %5464 = vmatpush2.msra.mxu0 0.0
      %5465 = vmatprep.subr.mxu0 0.0
      %5466 = vmatpush2.msra.mxu0 0.0
      %5467 = vmatprep.subr.mxu0 0.0
      %5468 = vmatpush2.msra.mxu0 0.0
      %5469 = vmatprep.subr.mxu0 0.0
      %5470 = vmatpush2.msra.mxu0 0.0
      %5471 = vmatprep.mubr.f32.mxu0 0.0
      %5472 = vmatmul.mubr.f32.gmra.mxu0 %v3905
      %v5473 = vpop.f32.mrf.mxu0
      %v5474 = vadd.f32 0.0, %v5473
      %v5475 = vpop.f32.mrf.mxu0
      %5476 = vmatprep.mubr.f32.mxu0 0.0
      %5477 = vmatmul.mubr.f32.gmra.mxu0 %v3907
      %v5478 = vpop.f32.mrf.mxu0
      %v5479 = vadd.f32 0.0, %v5478
      %v5480 = vpop.f32.mrf.mxu0
      %5481 = vmatprep.mubr.f32.mxu0 0.0
      %5482 = vmatmul.mubr.f32.gmra.mxu0 %v3909
      %v5483 = vpop.f32.mrf.mxu0
      %v5484 = vadd.f32 0.0, %v5483
      %v5485 = vpop.f32.mrf.mxu0
      %5486 = vmatprep.mubr.f32.mxu0 0.0
      %5487 = vmatmul.mubr.f32.gmra.mxu0 %v3911
      %v5488 = vpop.f32.mrf.mxu0
      %v5489 = vadd.f32 0.0, %v5488
      %v5490 = vpop.f32.mrf.mxu0
      %5491 = vmatprep.mubr.f32.mxu0 0.0
      %5492 = vmatmul.mubr.f32.gmra.mxu0 %v3913
      %v5493 = vpop.f32.mrf.mxu0
      %v5494 = vadd.f32 0.0, %v5493
      %v5495 = vpop.f32.mrf.mxu0
      %5496 = vmatprep.mubr.f32.mxu0 0.0
      %5497 = vmatmul.mubr.f32.gmra.mxu0 %v3915
      %v5498 = vpop.f32.mrf.mxu0
      %v5499 = vadd.f32 0.0, %v5498
      %v5500 = vpop.f32.mrf.mxu0
      %5501 = vmatprep.mubr.f32.mxu0 0.0
      %5502 = vmatmul.mubr.f32.gmra.mxu0 %v3917
      %v5503 = vpop.f32.mrf.mxu0
      %v5504 = vadd.f32 0.0, %v5503
      %v5505 = vpop.f32.mrf.mxu0
      %5506 = vmatprep.mubr.f32.mxu0 0.0
      %5507 = vmatmul.mubr.f32.gmra.mxu0 %v3919
      %v5508 = vpop.f32.mrf.mxu0
      %v5509 = vadd.f32 0.0, %v5508
      %v5510 = vpop.f32.mrf.mxu0
      %5511 = vmatprep.mubr.f32.mxu0 0.0
      %5512 = vmatmul.mubr.f32.gmra.mxu0 %v3921
      %v5513 = vpop.f32.mrf.mxu0
      %v5514 = vadd.f32 0.0, %v5513
      %v5515 = vpop.f32.mrf.mxu0
      %5516 = vmatprep.mubr.f32.mxu0 0.0
      %5517 = vmatmul.mubr.f32.gmra.mxu0 %v3923
      %v5518 = vpop.f32.mrf.mxu0
      %v5519 = vadd.f32 0.0, %v5518
      %v5520 = vpop.f32.mrf.mxu0
      %5521 = vmatprep.mubr.f32.mxu0 0.0
      %5522 = vmatmul.mubr.f32.gmra.mxu0 %v3925
      %v5523 = vpop.f32.mrf.mxu0
      %v5524 = vadd.f32 0.0, %v5523
      %v5525 = vpop.f32.mrf.mxu0
      %5526 = vmatprep.mubr.f32.mxu0 0.0
      %5527 = vmatmul.mubr.f32.gmra.mxu0 %v3927
      %v5528 = vpop.f32.mrf.mxu0
      %v5529 = vadd.f32 0.0, %v5528
      %v5530 = vpop.f32.mrf.mxu0
      %5531 = vmatprep.mubr.f32.mxu0 0.0
      %5532 = vmatmul.mubr.f32.gmra.mxu0 %v3929
      %v5533 = vpop.f32.mrf.mxu0
      %v5534 = vadd.f32 0.0, %v5533
      %v5535 = vpop.f32.mrf.mxu0
      %5536 = vmatprep.mubr.f32.mxu0 0.0
      %5537 = vmatmul.mubr.f32.gmra.mxu0 %v3931
      %v5538 = vpop.f32.mrf.mxu0
      %v5539 = vadd.f32 0.0, %v5538
      %v5540 = vpop.f32.mrf.mxu0
      %5541 = vmatprep.mubr.f32.mxu0 0.0
      %5542 = vmatmul.mubr.f32.gmra.mxu0 %v3933
      %v5543 = vpop.f32.mrf.mxu0
      %v5544 = vadd.f32 0.0, %v5543
      %v5545 = vpop.f32.mrf.mxu0
      %5546 = vmatprep.mubr.f32.mxu0 0.0
      %5547 = vmatmul.mubr.f32.gmra.mxu0 %v3935
      %v5548 = vpop.f32.mrf.mxu0
      %v5549 = vadd.f32 0.0, %v5548
      %v5550 = vpop.f32.mrf.mxu0
      %5551 = vmatprep.mubr.f32.mxu0 0.0
      %5552 = vmatmul.mubr.f32.gmra.mxu0 %v3937
      %v5553 = vpop.f32.mrf.mxu0
      %v5554 = vadd.f32 0.0, %v5553
      %v5555 = vpop.f32.mrf.mxu0
      %5556 = vmatprep.mubr.f32.mxu0 0.0
      %5557 = vmatmul.mubr.f32.gmra.mxu0 %v3939
      %v5558 = vpop.f32.mrf.mxu0
      %v5559 = vadd.f32 0.0, %v5558
      %v5560 = vpop.f32.mrf.mxu0
      %5561 = vmatprep.mubr.f32.mxu0 0.0
      %5562 = vmatmul.mubr.f32.gmra.mxu0 %v3941
      %v5563 = vpop.f32.mrf.mxu0
      %v5564 = vadd.f32 0.0, %v5563
      %v5565 = vpop.f32.mrf.mxu0
      %5566 = vmatprep.mubr.f32.mxu0 0.0
      %5567 = vmatmul.mubr.f32.gmra.mxu0 %v3943
      %v5568 = vpop.f32.mrf.mxu0
      %v5569 = vadd.f32 0.0, %v5568
      %v5570 = vpop.f32.mrf.mxu0
      %5571 = vmatprep.mubr.f32.mxu0 0.0
      %5572 = vmatmul.mubr.f32.gmra.mxu0 %v3945
      %v5573 = vpop.f32.mrf.mxu0
      %v5574 = vadd.f32 0.0, %v5573
      %v5575 = vpop.f32.mrf.mxu0
      %5576 = vmatprep.mubr.f32.mxu0 0.0
      %5577 = vmatmul.mubr.f32.gmra.mxu0 %v3947
      %v5578 = vpop.f32.mrf.mxu0
      %v5579 = vadd.f32 0.0, %v5578
      %v5580 = vpop.f32.mrf.mxu0
      %5581 = vmatprep.mubr.f32.mxu0 0.0
      %5582 = vmatmul.mubr.f32.gmra.mxu0 %v3949
      %v5583 = vpop.f32.mrf.mxu0
      %v5584 = vadd.f32 0.0, %v5583
      %v5585 = vpop.f32.mrf.mxu0
      %5586 = vmatprep.mubr.f32.mxu0 0.0
      %5587 = vmatmul.mubr.f32.gmra.mxu0 %v3951
      %v5588 = vpop.f32.mrf.mxu0
      %v5589 = vadd.f32 0.0, %v5588
      %v5590 = vpop.f32.mrf.mxu0
      %5591 = vmatprep.mubr.f32.mxu0 0.0
      %5592 = vmatmul.mubr.f32.gmra.mxu0 %v3953
      %v5593 = vpop.f32.mrf.mxu0
      %v5594 = vadd.f32 0.0, %v5593
      %v5595 = vpop.f32.mrf.mxu0
      %5596 = vmatprep.mubr.f32.mxu0 0.0
      %5597 = vmatmul.mubr.f32.gmra.mxu0 %v3955
      %v5598 = vpop.f32.mrf.mxu0
      %v5599 = vadd.f32 0.0, %v5598
      %v5600 = vpop.f32.mrf.mxu0
      %5601 = vmatprep.mubr.f32.mxu0 0.0
      %5602 = vmatmul.mubr.f32.gmra.mxu0 %v3957
      %v5603 = vpop.f32.mrf.mxu0
      %v5604 = vadd.f32 0.0, %v5603
      %v5605 = vpop.f32.mrf.mxu0
      %5606 = vmatprep.mubr.f32.mxu0 0.0
      %5607 = vmatmul.mubr.f32.gmra.mxu0 %v3959
      %v5608 = vpop.f32.mrf.mxu0
      %v5609 = vadd.f32 0.0, %v5608
      %v5610 = vpop.f32.mrf.mxu0
      %5611 = vmatprep.mubr.f32.mxu0 0.0
      %5612 = vmatmul.mubr.f32.gmra.mxu0 %v4594
      %v5613 = vpop.f32.mrf.mxu0
      %v5614 = vadd.f32 0.0, %v5613
      %v5615 = vpop.f32.mrf.mxu0
      %5616 = vmatprep.mubr.f32.mxu0 0.0
      %5617 = vmatmul.mubr.f32.gmra.mxu0 %v4597
      %v5618 = vpop.f32.mrf.mxu0
      %v5619 = vadd.f32 0.0, %v5618
      %v5620 = vpop.f32.mrf.mxu0
      %5621 = vmatprep.mubr.f32.mxu0 0.0
      %5622 = vmatmul.mubr.f32.gmra.mxu0 %v5399
      %v5623 = vpop.f32.mrf.mxu0
      %v5624 = vadd.f32 0.0, %v5623
      %v5625 = vpop.f32.mrf.mxu0
      %5626 = vmatprep.mubr.f32.mxu0 0.0
      %5627 = vmatmul.mubr.f32.gmra.mxu0 %v5402
      %v5628 = vpop.f32.mrf.mxu0
      %v5629 = vadd.f32 0.0, %v5628
      %v5630 = vpop.f32.mrf.mxu0
      %5631 = vdwg.mxu0
      %v5632 = vadd.f32 %v5366, %v5474
      %v5633 = vadd.f32 %v5367, %v5479
      %v5634 = vadd.f32 %v5368, %v5484
      %v5635 = vadd.f32 %v5369, %v5489
      %v5636 = vadd.f32 %v5370, %v5494
      %v5637 = vadd.f32 %v5371, %v5499
      %v5638 = vadd.f32 %v5372, %v5504
      %v5639 = vadd.f32 %v5373, %v5509
      %v5640 = vadd.f32 %v5374, %v5514
      %v5641 = vadd.f32 %v5375, %v5519
      %v5642 = vadd.f32 %v5376, %v5524
      %v5643 = vadd.f32 %v5377, %v5529
      %v5644 = vadd.f32 %v5378, %v5534
      %v5645 = vadd.f32 %v5379, %v5539
      %v5646 = vadd.f32 %v5380, %v5544
      %v5647 = vadd.f32 %v5381, %v5549
      %v5648 = vadd.f32 %v5382, %v5554
      %v5649 = vadd.f32 %v5383, %v5559
      %v5650 = vadd.f32 %v5384, %v5564
      %v5651 = vadd.f32 %v5385, %v5569
      %v5652 = vadd.f32 %v5386, %v5574
      %v5653 = vadd.f32 %v5387, %v5579
      %v5654 = vadd.f32 %v5388, %v5584
      %v5655 = vadd.f32 %v5389, %v5589
      %v5656 = vadd.f32 %v5390, %v5594
      %v5657 = vadd.f32 %v5391, %v5599
      %v5658 = vadd.f32 %v5392, %v5604
      %v5659 = vadd.f32 %v5393, %v5609
      %v5660 = vadd.f32 %v5394, %v5614
      %v5661 = vadd.f32 %v5395, %v5619
      %v5662 = vadd.f32 %v5396, %v5624
      %v5663 = vadd.f32 %v5397, %v5629
      %v5665 = vrot.slane %v3474, 1
      %v5666 = vrot.slane %v3475, 1
      %v5667 = vsel %vm606, %v5665, %v5666
      %v5668 = vrot.slane %v3476, 1
      %v5669 = vsel %vm606, %v5666, %v5668
      %v5670 = vsel %vm727, %v5667, 0
      %v5672 = vsel %vm727, %v5669, 0
      %v5675 = vsel %vm792, %v500, 0
      %5677 = vmatprep.subr.mxu0 0.0
      %5678 = vmatpush1.msra.mxu0 0.0
      %5679 = vmatprep.subr.mxu0 0.0
      %5680 = vmatpush1.msra.mxu0 0.0
      %5681 = vmatprep.subr.mxu0 0.0
      %5682 = vmatpush1.msra.mxu0 0.0
      %5683 = vmatprep.subr.mxu0 0.0
      %5684 = vmatpush1.msra.mxu0 0.0
      %5685 = vmatprep.subr.mxu0 0.0
      %5686 = vmatpush1.msra.mxu0 0.0
      %5687 = vmatprep.subr.mxu0 0.0
      %5688 = vmatpush1.msra.mxu0 0.0
      %5689 = vmatprep.subr.mxu0 0.0
      %5690 = vmatpush1.msra.mxu0 0.0
      %5691 = vmatprep.subr.mxu0 0.0
      %5692 = vmatpush1.msra.mxu0 0.0
      %5693 = vmatprep.subr.mxu0 0.0
      %5694 = vmatpush1.msra.mxu0 0.0
      %5695 = vmatprep.subr.mxu0 0.0
      %5696 = vmatpush1.msra.mxu0 0.0
      %5697 = vmatprep.subr.mxu0 0.0
      %5698 = vmatpush1.msra.mxu0 0.0
      %5699 = vmatprep.subr.mxu0 0.0
      %5700 = vmatpush1.msra.mxu0 0.0
      %5701 = vmatprep.subr.mxu0 0.0
      %5702 = vmatpush1.msra.mxu0 0.0
      %5703 = vmatprep.subr.mxu0 0.0
      %5704 = vmatpush1.msra.mxu0 0.0
      %5705 = vmatprep.subr.mxu0 0.0
      %5706 = vmatpush1.msra.mxu0 0.0
      %5707 = vmatprep.subr.mxu0 0.0
      %5708 = vmatpush1.msra.mxu0 %v5675
      %5709 = vmatprep.subr.mxu0 0.0
      %5710 = vmatpush2.msra.mxu0 0.0
      %5711 = vmatprep.subr.mxu0 0.0
      %5712 = vmatpush2.msra.mxu0 0.0
      %5713 = vmatprep.subr.mxu0 0.0
      %5714 = vmatpush2.msra.mxu0 0.0
      %5715 = vmatprep.subr.mxu0 0.0
      %5716 = vmatpush2.msra.mxu0 0.0
      %5717 = vmatprep.subr.mxu0 0.0
      %5718 = vmatpush2.msra.mxu0 0.0
      %5719 = vmatprep.subr.mxu0 0.0
      %5720 = vmatpush2.msra.mxu0 0.0
      %5721 = vmatprep.subr.mxu0 0.0
      %5722 = vmatpush2.msra.mxu0 0.0
      %5723 = vmatprep.subr.mxu0 0.0
      %5724 = vmatpush2.msra.mxu0 0.0
      %5725 = vmatprep.subr.mxu0 0.0
      %5726 = vmatpush2.msra.mxu0 0.0
      %5727 = vmatprep.subr.mxu0 0.0
      %5728 = vmatpush2.msra.mxu0 0.0
      %5729 = vmatprep.subr.mxu0 0.0
      %5730 = vmatpush2.msra.mxu0 0.0
      %5731 = vmatprep.subr.mxu0 0.0
      %5732 = vmatpush2.msra.mxu0 0.0
      %5733 = vmatprep.subr.mxu0 0.0
      %5734 = vmatpush2.msra.mxu0 0.0
      %5735 = vmatprep.subr.mxu0 0.0
      %5736 = vmatpush2.msra.mxu0 0.0
      %5737 = vmatprep.subr.mxu0 0.0
      %5738 = vmatpush2.msra.mxu0 0.0
      %5739 = vmatprep.subr.mxu0 0.0
      %5740 = vmatpush2.msra.mxu0 0.0
      %5741 = vmatprep.mubr.f32.mxu0 0.0
      %5742 = vmatmul.mubr.f32.gmra.mxu0 %v3613
      %v5743 = vpop.f32.mrf.mxu0
      %v5744 = vadd.f32 0.0, %v5743
      %v5745 = vpop.f32.mrf.mxu0
      %5746 = vmatprep.mubr.f32.mxu0 0.0
      %5747 = vmatmul.mubr.f32.gmra.mxu0 %v3615
      %v5748 = vpop.f32.mrf.mxu0
      %v5749 = vadd.f32 0.0, %v5748
      %v5750 = vpop.f32.mrf.mxu0
      %5751 = vmatprep.mubr.f32.mxu0 0.0
      %5752 = vmatmul.mubr.f32.gmra.mxu0 %v3617
      %v5753 = vpop.f32.mrf.mxu0
      %v5754 = vadd.f32 0.0, %v5753
      %v5755 = vpop.f32.mrf.mxu0
      %5756 = vmatprep.mubr.f32.mxu0 0.0
      %5757 = vmatmul.mubr.f32.gmra.mxu0 %v3619
      %v5758 = vpop.f32.mrf.mxu0
      %v5759 = vadd.f32 0.0, %v5758
      %v5760 = vpop.f32.mrf.mxu0
      %5761 = vmatprep.mubr.f32.mxu0 0.0
      %5762 = vmatmul.mubr.f32.gmra.mxu0 %v3621
      %v5763 = vpop.f32.mrf.mxu0
      %v5764 = vadd.f32 0.0, %v5763
      %v5765 = vpop.f32.mrf.mxu0
      %5766 = vmatprep.mubr.f32.mxu0 0.0
      %5767 = vmatmul.mubr.f32.gmra.mxu0 %v3623
      %v5768 = vpop.f32.mrf.mxu0
      %v5769 = vadd.f32 0.0, %v5768
      %v5770 = vpop.f32.mrf.mxu0
      %5771 = vmatprep.mubr.f32.mxu0 0.0
      %5772 = vmatmul.mubr.f32.gmra.mxu0 %v3625
      %v5773 = vpop.f32.mrf.mxu0
      %v5774 = vadd.f32 0.0, %v5773
      %v5775 = vpop.f32.mrf.mxu0
      %5776 = vmatprep.mubr.f32.mxu0 0.0
      %5777 = vmatmul.mubr.f32.gmra.mxu0 %v3627
      %v5778 = vpop.f32.mrf.mxu0
      %v5779 = vadd.f32 0.0, %v5778
      %v5780 = vpop.f32.mrf.mxu0
      %5781 = vmatprep.mubr.f32.mxu0 0.0
      %5782 = vmatmul.mubr.f32.gmra.mxu0 %v3629
      %v5783 = vpop.f32.mrf.mxu0
      %v5784 = vadd.f32 0.0, %v5783
      %v5785 = vpop.f32.mrf.mxu0
      %5786 = vmatprep.mubr.f32.mxu0 0.0
      %5787 = vmatmul.mubr.f32.gmra.mxu0 %v3631
      %v5788 = vpop.f32.mrf.mxu0
      %v5789 = vadd.f32 0.0, %v5788
      %v5790 = vpop.f32.mrf.mxu0
      %5791 = vmatprep.mubr.f32.mxu0 0.0
      %5792 = vmatmul.mubr.f32.gmra.mxu0 %v3633
      %v5793 = vpop.f32.mrf.mxu0
      %v5794 = vadd.f32 0.0, %v5793
      %v5795 = vpop.f32.mrf.mxu0
      %5796 = vmatprep.mubr.f32.mxu0 0.0
      %5797 = vmatmul.mubr.f32.gmra.mxu0 %v3635
      %v5798 = vpop.f32.mrf.mxu0
      %v5799 = vadd.f32 0.0, %v5798
      %v5800 = vpop.f32.mrf.mxu0
      %5801 = vmatprep.mubr.f32.mxu0 0.0
      %5802 = vmatmul.mubr.f32.gmra.mxu0 %v3637
      %v5803 = vpop.f32.mrf.mxu0
      %v5804 = vadd.f32 0.0, %v5803
      %v5805 = vpop.f32.mrf.mxu0
      %5806 = vmatprep.mubr.f32.mxu0 0.0
      %5807 = vmatmul.mubr.f32.gmra.mxu0 %v3639
      %v5808 = vpop.f32.mrf.mxu0
      %v5809 = vadd.f32 0.0, %v5808
      %v5810 = vpop.f32.mrf.mxu0
      %5811 = vmatprep.mubr.f32.mxu0 0.0
      %5812 = vmatmul.mubr.f32.gmra.mxu0 %v3641
      %v5813 = vpop.f32.mrf.mxu0
      %v5814 = vadd.f32 0.0, %v5813
      %v5815 = vpop.f32.mrf.mxu0
      %5816 = vmatprep.mubr.f32.mxu0 0.0
      %5817 = vmatmul.mubr.f32.gmra.mxu0 %v3643
      %v5818 = vpop.f32.mrf.mxu0
      %v5819 = vadd.f32 0.0, %v5818
      %v5820 = vpop.f32.mrf.mxu0
      %5821 = vmatprep.mubr.f32.mxu0 0.0
      %5822 = vmatmul.mubr.f32.gmra.mxu0 %v3645
      %v5823 = vpop.f32.mrf.mxu0
      %v5824 = vadd.f32 0.0, %v5823
      %v5825 = vpop.f32.mrf.mxu0
      %5826 = vmatprep.mubr.f32.mxu0 0.0
      %5827 = vmatmul.mubr.f32.gmra.mxu0 %v3647
      %v5828 = vpop.f32.mrf.mxu0
      %v5829 = vadd.f32 0.0, %v5828
      %v5830 = vpop.f32.mrf.mxu0
      %5831 = vmatprep.mubr.f32.mxu0 0.0
      %5832 = vmatmul.mubr.f32.gmra.mxu0 %v3649
      %v5833 = vpop.f32.mrf.mxu0
      %v5834 = vadd.f32 0.0, %v5833
      %v5835 = vpop.f32.mrf.mxu0
      %5836 = vmatprep.mubr.f32.mxu0 0.0
      %5837 = vmatmul.mubr.f32.gmra.mxu0 %v3651
      %v5838 = vpop.f32.mrf.mxu0
      %v5839 = vadd.f32 0.0, %v5838
      %v5840 = vpop.f32.mrf.mxu0
      %5841 = vmatprep.mubr.f32.mxu0 0.0
      %5842 = vmatmul.mubr.f32.gmra.mxu0 %v3653
      %v5843 = vpop.f32.mrf.mxu0
      %v5844 = vadd.f32 0.0, %v5843
      %v5845 = vpop.f32.mrf.mxu0
      %5846 = vmatprep.mubr.f32.mxu0 0.0
      %5847 = vmatmul.mubr.f32.gmra.mxu0 %v3655
      %v5848 = vpop.f32.mrf.mxu0
      %v5849 = vadd.f32 0.0, %v5848
      %v5850 = vpop.f32.mrf.mxu0
      %5851 = vmatprep.mubr.f32.mxu0 0.0
      %5852 = vmatmul.mubr.f32.gmra.mxu0 %v3657
      %v5853 = vpop.f32.mrf.mxu0
      %v5854 = vadd.f32 0.0, %v5853
      %v5855 = vpop.f32.mrf.mxu0
      %5856 = vmatprep.mubr.f32.mxu0 0.0
      %5857 = vmatmul.mubr.f32.gmra.mxu0 %v3659
      %v5858 = vpop.f32.mrf.mxu0
      %v5859 = vadd.f32 0.0, %v5858
      %v5860 = vpop.f32.mrf.mxu0
      %5861 = vmatprep.mubr.f32.mxu0 0.0
      %5862 = vmatmul.mubr.f32.gmra.mxu0 %v3661
      %v5863 = vpop.f32.mrf.mxu0
      %v5864 = vadd.f32 0.0, %v5863
      %v5865 = vpop.f32.mrf.mxu0
      %5866 = vmatprep.mubr.f32.mxu0 0.0
      %5867 = vmatmul.mubr.f32.gmra.mxu0 %v3663
      %v5868 = vpop.f32.mrf.mxu0
      %v5869 = vadd.f32 0.0, %v5868
      %v5870 = vpop.f32.mrf.mxu0
      %5871 = vmatprep.mubr.f32.mxu0 0.0
      %5872 = vmatmul.mubr.f32.gmra.mxu0 %v3665
      %v5873 = vpop.f32.mrf.mxu0
      %v5874 = vadd.f32 0.0, %v5873
      %v5875 = vpop.f32.mrf.mxu0
      %5876 = vmatprep.mubr.f32.mxu0 0.0
      %5877 = vmatmul.mubr.f32.gmra.mxu0 %v3667
      %v5878 = vpop.f32.mrf.mxu0
      %v5879 = vadd.f32 0.0, %v5878
      %v5880 = vpop.f32.mrf.mxu0
      %5881 = vmatprep.mubr.f32.mxu0 0.0
      %5882 = vmatmul.mubr.f32.gmra.mxu0 %v4865
      %v5883 = vpop.f32.mrf.mxu0
      %v5884 = vadd.f32 0.0, %v5883
      %v5885 = vpop.f32.mrf.mxu0
      %5886 = vmatprep.mubr.f32.mxu0 0.0
      %5887 = vmatmul.mubr.f32.gmra.mxu0 %v4867
      %v5888 = vpop.f32.mrf.mxu0
      %v5889 = vadd.f32 0.0, %v5888
      %v5890 = vpop.f32.mrf.mxu0
      %5891 = vmatprep.mubr.f32.mxu0 0.0
      %5892 = vmatmul.mubr.f32.gmra.mxu0 %v5670
      %v5893 = vpop.f32.mrf.mxu0
      %v5894 = vadd.f32 0.0, %v5893
      %v5895 = vpop.f32.mrf.mxu0
      %5896 = vmatprep.mubr.f32.mxu0 0.0
      %5897 = vmatmul.mubr.f32.gmra.mxu0 %v5672
      %v5898 = vpop.f32.mrf.mxu0
      %v5899 = vadd.f32 0.0, %v5898
      %v5900 = vpop.f32.mrf.mxu0
      %5901 = vdwg.mxu0
      %v5902 = vadd.f32 %v5632, %v5744
      %v5903 = vadd.f32 %v5633, %v5749
      %v5904 = vadd.f32 %v5634, %v5754
      %v5905 = vadd.f32 %v5635, %v5759
      %v5906 = vadd.f32 %v5636, %v5764
      %v5907 = vadd.f32 %v5637, %v5769
      %v5908 = vadd.f32 %v5638, %v5774
      %v5909 = vadd.f32 %v5639, %v5779
      %v5910 = vadd.f32 %v5640, %v5784
      %v5911 = vadd.f32 %v5641, %v5789
      %v5912 = vadd.f32 %v5642, %v5794
      %v5913 = vadd.f32 %v5643, %v5799
      %v5914 = vadd.f32 %v5644, %v5804
      %v5915 = vadd.f32 %v5645, %v5809
      %v5916 = vadd.f32 %v5646, %v5814
      %v5917 = vadd.f32 %v5647, %v5819
      %v5918 = vadd.f32 %v5648, %v5824
      %v5919 = vadd.f32 %v5649, %v5829
      %v5920 = vadd.f32 %v5650, %v5834
      %v5921 = vadd.f32 %v5651, %v5839
      %v5922 = vadd.f32 %v5652, %v5844
      %v5923 = vadd.f32 %v5653, %v5849
      %v5924 = vadd.f32 %v5654, %v5854
      %v5925 = vadd.f32 %v5655, %v5859
      %v5926 = vadd.f32 %v5656, %v5864
      %v5927 = vadd.f32 %v5657, %v5869
      %v5928 = vadd.f32 %v5658, %v5874
      %v5929 = vadd.f32 %v5659, %v5879
      %v5930 = vadd.f32 %v5660, %v5884
      %v5931 = vadd.f32 %v5661, %v5889
      %v5932 = vadd.f32 %v5662, %v5894
      %v5933 = vadd.f32 %v5663, %v5899
      %v5934 = vrot.slane %v3474, 2
      %v5935 = vrot.slane %v3475, 2
      %v5936 = vsel %vm1313, %v5934, %v5935
      %v5937 = vrot.slane %v3476, 2
      %v5938 = vsel %vm1313, %v5935, %v5937
      %v5939 = vsel %vm727, %v5936, 0
      %v5941 = vsel %vm727, %v5938, 0
      %v5944 = vsel %vm792, %v501, 0
      %5946 = vmatprep.subr.mxu0 0.0
      %5947 = vmatpush1.msra.mxu0 0.0
      %5948 = vmatprep.subr.mxu0 0.0
      %5949 = vmatpush1.msra.mxu0 0.0
      %5950 = vmatprep.subr.mxu0 0.0
      %5951 = vmatpush1.msra.mxu0 0.0
      %5952 = vmatprep.subr.mxu0 0.0
      %5953 = vmatpush1.msra.mxu0 0.0
      %5954 = vmatprep.subr.mxu0 0.0
      %5955 = vmatpush1.msra.mxu0 0.0
      %5956 = vmatprep.subr.mxu0 0.0
      %5957 = vmatpush1.msra.mxu0 0.0
      %5958 = vmatprep.subr.mxu0 0.0
      %5959 = vmatpush1.msra.mxu0 0.0
      %5960 = vmatprep.subr.mxu0 0.0
      %5961 = vmatpush1.msra.mxu0 0.0
      %5962 = vmatprep.subr.mxu0 0.0
      %5963 = vmatpush1.msra.mxu0 0.0
      %5964 = vmatprep.subr.mxu0 0.0
      %5965 = vmatpush1.msra.mxu0 0.0
      %5966 = vmatprep.subr.mxu0 0.0
      %5967 = vmatpush1.msra.mxu0 0.0
      %5968 = vmatprep.subr.mxu0 0.0
      %5969 = vmatpush1.msra.mxu0 0.0
      %5970 = vmatprep.subr.mxu0 0.0
      %5971 = vmatpush1.msra.mxu0 0.0
      %5972 = vmatprep.subr.mxu0 0.0
      %5973 = vmatpush1.msra.mxu0 0.0
      %5974 = vmatprep.subr.mxu0 0.0
      %5975 = vmatpush1.msra.mxu0 0.0
      %5976 = vmatprep.subr.mxu0 0.0
      %5977 = vmatpush1.msra.mxu0 %v5944
      %5978 = vmatprep.subr.mxu0 0.0
      %5979 = vmatpush2.msra.mxu0 0.0
      %5980 = vmatprep.subr.mxu0 0.0
      %5981 = vmatpush2.msra.mxu0 0.0
      %5982 = vmatprep.subr.mxu0 0.0
      %5983 = vmatpush2.msra.mxu0 0.0
      %5984 = vmatprep.subr.mxu0 0.0
      %5985 = vmatpush2.msra.mxu0 0.0
      %5986 = vmatprep.subr.mxu0 0.0
      %5987 = vmatpush2.msra.mxu0 0.0
      %5988 = vmatprep.subr.mxu0 0.0
      %5989 = vmatpush2.msra.mxu0 0.0
      %5990 = vmatprep.subr.mxu0 0.0
      %5991 = vmatpush2.msra.mxu0 0.0
      %5992 = vmatprep.subr.mxu0 0.0
      %5993 = vmatpush2.msra.mxu0 0.0
      %5994 = vmatprep.subr.mxu0 0.0
      %5995 = vmatpush2.msra.mxu0 0.0
      %5996 = vmatprep.subr.mxu0 0.0
      %5997 = vmatpush2.msra.mxu0 0.0
      %5998 = vmatprep.subr.mxu0 0.0
      %5999 = vmatpush2.msra.mxu0 0.0
      %6000 = vmatprep.subr.mxu0 0.0
      %6001 = vmatpush2.msra.mxu0 0.0
      %6002 = vmatprep.subr.mxu0 0.0
      %6003 = vmatpush2.msra.mxu0 0.0
      %6004 = vmatprep.subr.mxu0 0.0
      %6005 = vmatpush2.msra.mxu0 0.0
      %6006 = vmatprep.subr.mxu0 0.0
      %6007 = vmatpush2.msra.mxu0 0.0
      %6008 = vmatprep.subr.mxu0 0.0
      %6009 = vmatpush2.msra.mxu0 0.0
      %6010 = vmatprep.mubr.f32.mxu0 0.0
      %6011 = vmatmul.mubr.f32.gmra.mxu0 %v4277
      %v6012 = vpop.f32.mrf.mxu0
      %v6013 = vadd.f32 0.0, %v6012
      %v6014 = vpop.f32.mrf.mxu0
      %6015 = vmatprep.mubr.f32.mxu0 0.0
      %6016 = vmatmul.mubr.f32.gmra.mxu0 %v4279
      %v6017 = vpop.f32.mrf.mxu0
      %v6018 = vadd.f32 0.0, %v6017
      %v6019 = vpop.f32.mrf.mxu0
      %6020 = vmatprep.mubr.f32.mxu0 0.0
      %6021 = vmatmul.mubr.f32.gmra.mxu0 %v4281
      %v6022 = vpop.f32.mrf.mxu0
      %v6023 = vadd.f32 0.0, %v6022
      %v6024 = vpop.f32.mrf.mxu0
      %6025 = vmatprep.mubr.f32.mxu0 0.0
      %6026 = vmatmul.mubr.f32.gmra.mxu0 %v4283
      %v6027 = vpop.f32.mrf.mxu0
      %v6028 = vadd.f32 0.0, %v6027
      %v6029 = vpop.f32.mrf.mxu0
      %6030 = vmatprep.mubr.f32.mxu0 0.0
      %6031 = vmatmul.mubr.f32.gmra.mxu0 %v4285
      %v6032 = vpop.f32.mrf.mxu0
      %v6033 = vadd.f32 0.0, %v6032
      %v6034 = vpop.f32.mrf.mxu0
      %6035 = vmatprep.mubr.f32.mxu0 0.0
      %6036 = vmatmul.mubr.f32.gmra.mxu0 %v4287
      %v6037 = vpop.f32.mrf.mxu0
      %v6038 = vadd.f32 0.0, %v6037
      %v6039 = vpop.f32.mrf.mxu0
      %6040 = vmatprep.mubr.f32.mxu0 0.0
      %6041 = vmatmul.mubr.f32.gmra.mxu0 %v4289
      %v6042 = vpop.f32.mrf.mxu0
      %v6043 = vadd.f32 0.0, %v6042
      %v6044 = vpop.f32.mrf.mxu0
      %6045 = vmatprep.mubr.f32.mxu0 0.0
      %6046 = vmatmul.mubr.f32.gmra.mxu0 %v4291
      %v6047 = vpop.f32.mrf.mxu0
      %v6048 = vadd.f32 0.0, %v6047
      %v6049 = vpop.f32.mrf.mxu0
      %6050 = vmatprep.mubr.f32.mxu0 0.0
      %6051 = vmatmul.mubr.f32.gmra.mxu0 %v4293
      %v6052 = vpop.f32.mrf.mxu0
      %v6053 = vadd.f32 0.0, %v6052
      %v6054 = vpop.f32.mrf.mxu0
      %6055 = vmatprep.mubr.f32.mxu0 0.0
      %6056 = vmatmul.mubr.f32.gmra.mxu0 %v4295
      %v6057 = vpop.f32.mrf.mxu0
      %v6058 = vadd.f32 0.0, %v6057
      %v6059 = vpop.f32.mrf.mxu0
      %6060 = vmatprep.mubr.f32.mxu0 0.0
      %6061 = vmatmul.mubr.f32.gmra.mxu0 %v4297
      %v6062 = vpop.f32.mrf.mxu0
      %v6063 = vadd.f32 0.0, %v6062
      %v6064 = vpop.f32.mrf.mxu0
      %6065 = vmatprep.mubr.f32.mxu0 0.0
      %6066 = vmatmul.mubr.f32.gmra.mxu0 %v4299
      %v6067 = vpop.f32.mrf.mxu0
      %v6068 = vadd.f32 0.0, %v6067
      %v6069 = vpop.f32.mrf.mxu0
      %6070 = vmatprep.mubr.f32.mxu0 0.0
      %6071 = vmatmul.mubr.f32.gmra.mxu0 %v4301
      %v6072 = vpop.f32.mrf.mxu0
      %v6073 = vadd.f32 0.0, %v6072
      %v6074 = vpop.f32.mrf.mxu0
      %6075 = vmatprep.mubr.f32.mxu0 0.0
      %6076 = vmatmul.mubr.f32.gmra.mxu0 %v4303
      %v6077 = vpop.f32.mrf.mxu0
      %v6078 = vadd.f32 0.0, %v6077
      %v6079 = vpop.f32.mrf.mxu0
      %6080 = vmatprep.mubr.f32.mxu0 0.0
      %6081 = vmatmul.mubr.f32.gmra.mxu0 %v4305
      %v6082 = vpop.f32.mrf.mxu0
      %v6083 = vadd.f32 0.0, %v6082
      %v6084 = vpop.f32.mrf.mxu0
      %6085 = vmatprep.mubr.f32.mxu0 0.0
      %6086 = vmatmul.mubr.f32.gmra.mxu0 %v4307
      %v6087 = vpop.f32.mrf.mxu0
      %v6088 = vadd.f32 0.0, %v6087
      %v6089 = vpop.f32.mrf.mxu0
      %6090 = vmatprep.mubr.f32.mxu0 0.0
      %6091 = vmatmul.mubr.f32.gmra.mxu0 %v4309
      %v6092 = vpop.f32.mrf.mxu0
      %v6093 = vadd.f32 0.0, %v6092
      %v6094 = vpop.f32.mrf.mxu0
      %6095 = vmatprep.mubr.f32.mxu0 0.0
      %6096 = vmatmul.mubr.f32.gmra.mxu0 %v4311
      %v6097 = vpop.f32.mrf.mxu0
      %v6098 = vadd.f32 0.0, %v6097
      %v6099 = vpop.f32.mrf.mxu0
      %6100 = vmatprep.mubr.f32.mxu0 0.0
      %6101 = vmatmul.mubr.f32.gmra.mxu0 %v4313
      %v6102 = vpop.f32.mrf.mxu0
      %v6103 = vadd.f32 0.0, %v6102
      %v6104 = vpop.f32.mrf.mxu0
      %6105 = vmatprep.mubr.f32.mxu0 0.0
      %6106 = vmatmul.mubr.f32.gmra.mxu0 %v4315
      %v6107 = vpop.f32.mrf.mxu0
      %v6108 = vadd.f32 0.0, %v6107
      %v6109 = vpop.f32.mrf.mxu0
      %6110 = vmatprep.mubr.f32.mxu0 0.0
      %6111 = vmatmul.mubr.f32.gmra.mxu0 %v4317
      %v6112 = vpop.f32.mrf.mxu0
      %v6113 = vadd.f32 0.0, %v6112
      %v6114 = vpop.f32.mrf.mxu0
      %6115 = vmatprep.mubr.f32.mxu0 0.0
      %6116 = vmatmul.mubr.f32.gmra.mxu0 %v4319
      %v6117 = vpop.f32.mrf.mxu0
      %v6118 = vadd.f32 0.0, %v6117
      %v6119 = vpop.f32.mrf.mxu0
      %6120 = vmatprep.mubr.f32.mxu0 0.0
      %6121 = vmatmul.mubr.f32.gmra.mxu0 %v4321
      %v6122 = vpop.f32.mrf.mxu0
      %v6123 = vadd.f32 0.0, %v6122
      %v6124 = vpop.f32.mrf.mxu0
      %6125 = vmatprep.mubr.f32.mxu0 0.0
      %6126 = vmatmul.mubr.f32.gmra.mxu0 %v4323
      %v6127 = vpop.f32.mrf.mxu0
      %v6128 = vadd.f32 0.0, %v6127
      %v6129 = vpop.f32.mrf.mxu0
      %6130 = vmatprep.mubr.f32.mxu0 0.0
      %6131 = vmatmul.mubr.f32.gmra.mxu0 %v4325
      %v6132 = vpop.f32.mrf.mxu0
      %v6133 = vadd.f32 0.0, %v6132
      %v6134 = vpop.f32.mrf.mxu0
      %6135 = vmatprep.mubr.f32.mxu0 0.0
      %6136 = vmatmul.mubr.f32.gmra.mxu0 %v4327
      %v6137 = vpop.f32.mrf.mxu0
      %v6138 = vadd.f32 0.0, %v6137
      %v6139 = vpop.f32.mrf.mxu0
      %6140 = vmatprep.mubr.f32.mxu0 0.0
      %6141 = vmatmul.mubr.f32.gmra.mxu0 %v4329
      %v6142 = vpop.f32.mrf.mxu0
      %v6143 = vadd.f32 0.0, %v6142
      %v6144 = vpop.f32.mrf.mxu0
      %6145 = vmatprep.mubr.f32.mxu0 0.0
      %6146 = vmatmul.mubr.f32.gmra.mxu0 %v4331
      %v6147 = vpop.f32.mrf.mxu0
      %v6148 = vadd.f32 0.0, %v6147
      %v6149 = vpop.f32.mrf.mxu0
      %6150 = vmatprep.mubr.f32.mxu0 0.0
      %6151 = vmatmul.mubr.f32.gmra.mxu0 %v5134
      %v6152 = vpop.f32.mrf.mxu0
      %v6153 = vadd.f32 0.0, %v6152
      %v6154 = vpop.f32.mrf.mxu0
      %6155 = vmatprep.mubr.f32.mxu0 0.0
      %6156 = vmatmul.mubr.f32.gmra.mxu0 %v5136
      %v6157 = vpop.f32.mrf.mxu0
      %v6158 = vadd.f32 0.0, %v6157
      %v6159 = vpop.f32.mrf.mxu0
      %6160 = vmatprep.mubr.f32.mxu0 0.0
      %6161 = vmatmul.mubr.f32.gmra.mxu0 %v5939
      %v6162 = vpop.f32.mrf.mxu0
      %v6163 = vadd.f32 0.0, %v6162
      %v6164 = vpop.f32.mrf.mxu0
      %6165 = vmatprep.mubr.f32.mxu0 0.0
      %6166 = vmatmul.mubr.f32.gmra.mxu0 %v5941
      %v6167 = vpop.f32.mrf.mxu0
      %v6168 = vadd.f32 0.0, %v6167
      %v6169 = vpop.f32.mrf.mxu0
      %6170 = vdwg.mxu0
      %v6171 = vadd.f32 %v5902, %v6013
      %v6172 = vadd.f32 %v5903, %v6018
      %v6173 = vadd.f32 %v5904, %v6023
      %v6174 = vadd.f32 %v5905, %v6028
      %v6175 = vadd.f32 %v5906, %v6033
      %v6176 = vadd.f32 %v5907, %v6038
      %v6177 = vadd.f32 %v5908, %v6043
      %v6178 = vadd.f32 %v5909, %v6048
      %v6179 = vadd.f32 %v5910, %v6053
      %v6180 = vadd.f32 %v5911, %v6058
      %v6181 = vadd.f32 %v5912, %v6063
      %v6182 = vadd.f32 %v5913, %v6068
      %v6183 = vadd.f32 %v5914, %v6073
      %v6184 = vadd.f32 %v5915, %v6078
      %v6185 = vadd.f32 %v5916, %v6083
      %v6186 = vadd.f32 %v5917, %v6088
      %v6187 = vadd.f32 %v5918, %v6093
      %v6188 = vadd.f32 %v5919, %v6098
      %v6189 = vadd.f32 %v5920, %v6103
      %v6190 = vadd.f32 %v5921, %v6108
      %v6191 = vadd.f32 %v5922, %v6113
      %v6192 = vadd.f32 %v5923, %v6118
      %v6193 = vadd.f32 %v5924, %v6123
      %v6194 = vadd.f32 %v5925, %v6128
      %v6195 = vadd.f32 %v5926, %v6133
      %v6196 = vadd.f32 %v5927, %v6138
      %v6197 = vadd.f32 %v5928, %v6143
      %v6198 = vadd.f32 %v5929, %v6148
      %v6199 = vadd.f32 %v5930, %v6153
      %v6200 = vadd.f32 %v5931, %v6158
      %v6201 = vadd.f32 %v5932, %v6163
      %v6202 = vadd.f32 %v5933, %v6168
      %v6204 = vlaneseq
      %v6205 = vshrl.u32 %v6204, 7
      %v6206 = vsub.s32 0, %v6205
      %v6207 = vrot.slane %v503, %v6206
      %v6209 = vadd.f32 %v6171, %v6207
      %v6210 = vadd.f32 %v6172, %v6207
      %v6211 = vadd.f32 %v6173, %v6207
      %v6212 = vadd.f32 %v6174, %v6207
      %v6213 = vadd.f32 %v6175, %v6207
      %v6214 = vadd.f32 %v6176, %v6207
      %v6215 = vadd.f32 %v6177, %v6207
      %v6216 = vadd.f32 %v6178, %v6207
      %v6217 = vadd.f32 %v6179, %v6207
      %v6218 = vadd.f32 %v6180, %v6207
      %v6219 = vadd.f32 %v6181, %v6207
      %v6220 = vadd.f32 %v6182, %v6207
      %v6221 = vadd.f32 %v6183, %v6207
      %v6222 = vadd.f32 %v6184, %v6207
      %v6223 = vadd.f32 %v6185, %v6207
      %v6224 = vadd.f32 %v6186, %v6207
      %v6225 = vadd.f32 %v6187, %v6207
      %v6226 = vadd.f32 %v6188, %v6207
      %v6227 = vadd.f32 %v6189, %v6207
      %v6228 = vadd.f32 %v6190, %v6207
      %v6229 = vadd.f32 %v6191, %v6207
      %v6230 = vadd.f32 %v6192, %v6207
      %v6231 = vadd.f32 %v6193, %v6207
      %v6232 = vadd.f32 %v6194, %v6207
      %v6233 = vadd.f32 %v6195, %v6207
      %v6234 = vadd.f32 %v6196, %v6207
      %v6235 = vadd.f32 %v6197, %v6207
      %v6236 = vadd.f32 %v6198, %v6207
      %v6237 = vadd.f32 %v6199, %v6207
      %v6238 = vadd.f32 %v6200, %v6207
      %v6239 = vadd.f32 %v6201, %v6207
      %v6240 = vadd.f32 %v6202, %v6207
      %v6241 = vadd.f32 %v6209, %v609
      %v6242 = vadd.f32 %v6210, %v611
      %v6243 = vadd.f32 %v6211, %v614
      %v6244 = vadd.f32 %v6212, %v616
      %v6245 = vadd.f32 %v6213, %v619
      %v6246 = vadd.f32 %v6214, %v621
      %v6247 = vadd.f32 %v6215, %v624
      %v6248 = vadd.f32 %v6216, %v626
      %v6249 = vadd.f32 %v6217, %v629
      %v6250 = vadd.f32 %v6218, %v631
      %v6251 = vadd.f32 %v6219, %v634
      %v6252 = vadd.f32 %v6220, %v636
      %v6253 = vadd.f32 %v6221, %v639
      %v6254 = vadd.f32 %v6222, %v641
      %v6255 = vadd.f32 %v6223, %v644
      %v6256 = vadd.f32 %v6224, %v646
      %v6257 = vadd.f32 %v6225, %v649
      %v6258 = vadd.f32 %v6226, %v651
      %v6259 = vadd.f32 %v6227, %v654
      %v6260 = vadd.f32 %v6228, %v656
      %v6261 = vadd.f32 %v6229, %v659
      %v6262 = vadd.f32 %v6230, %v661
      %v6263 = vadd.f32 %v6231, %v664
      %v6264 = vadd.f32 %v6232, %v666
      %v6265 = vadd.f32 %v6233, %v669
      %v6266 = vadd.f32 %v6234, %v671
      %v6267 = vadd.f32 %v6235, %v674
      %v6268 = vadd.f32 %v6236, %v676
      %v6269 = vadd.f32 %v6237, %v679
      %v6270 = vadd.f32 %v6238, %v681
      %v6271 = vadd.f32 %v6239, %v684
      %v6272 = vadd.f32 %v6240, %v686
      %v6273 = vmax.f32 %v6241, 0.0
      %v6274 = vmax.f32 %v6242, 0.0
      %v6275 = vmax.f32 %v6243, 0.0
      %v6276 = vmax.f32 %v6244, 0.0
      %v6277 = vmax.f32 %v6245, 0.0
      %v6278 = vmax.f32 %v6246, 0.0
      %v6279 = vmax.f32 %v6247, 0.0
      %v6280 = vmax.f32 %v6248, 0.0
      %v6281 = vmax.f32 %v6249, 0.0
      %v6282 = vmax.f32 %v6250, 0.0
      %v6283 = vmax.f32 %v6251, 0.0
      %v6284 = vmax.f32 %v6252, 0.0
      %v6285 = vmax.f32 %v6253, 0.0
      %v6286 = vmax.f32 %v6254, 0.0
      %v6287 = vmax.f32 %v6255, 0.0
      %v6288 = vmax.f32 %v6256, 0.0
      %v6289 = vmax.f32 %v6257, 0.0
      %v6290 = vmax.f32 %v6258, 0.0
      %v6291 = vmax.f32 %v6259, 0.0
      %v6292 = vmax.f32 %v6260, 0.0
      %v6293 = vmax.f32 %v6261, 0.0
      %v6294 = vmax.f32 %v6262, 0.0
      %v6295 = vmax.f32 %v6263, 0.0
      %v6296 = vmax.f32 %v6264, 0.0
      %v6297 = vmax.f32 %v6265, 0.0
      %v6298 = vmax.f32 %v6266, 0.0
      %v6299 = vmax.f32 %v6267, 0.0
      %v6300 = vmax.f32 %v6268, 0.0
      %v6301 = vmax.f32 %v6269, 0.0
      %v6302 = vmax.f32 %v6270, 0.0
      %v6303 = vmax.f32 %v6271, 0.0
      %v6304 = vmax.f32 %v6272, 0.0
      %s6305 = scalar_lea.vmem [#allocation2], 24
      %6306 = vst.msk [vmem:[%s6305 + $0x1] sm:$0xff] %vm727, %v6273
      %6307 = vst.msk [vmem:[%s6305 + $0x9] sm:$0xff] %vm727, %v6274
      %6308 = vst.msk [vmem:[%s6305 + $0x19] sm:$0xff] %vm727, %v6275
      %6309 = vst.msk [vmem:[%s6305 + $0x21] sm:$0xff] %vm727, %v6276
      %6310 = vst.msk [vmem:[%s6305 + $0x31] sm:$0xff] %vm727, %v6277
      %6311 = vst.msk [vmem:[%s6305 + $0x39] sm:$0xff] %vm727, %v6278
      %6312 = vst.msk [vmem:[%s6305 + $0x49] sm:$0xff] %vm727, %v6279
      %6313 = vst.msk [vmem:[%s6305 + $0x51] sm:$0xff] %vm727, %v6280
      %6314 = vst.msk [vmem:[%s6305 + $0x61] sm:$0xff] %vm727, %v6281
      %6315 = vst.msk [vmem:[%s6305 + $0x69] sm:$0xff] %vm727, %v6282
      %6316 = vst.msk [vmem:[%s6305 + $0x79] sm:$0xff] %vm727, %v6283
      %6317 = vst.msk [vmem:[%s6305 + $0x81] sm:$0xff] %vm727, %v6284
      %6318 = vst.msk [vmem:[%s6305 + $0x91] sm:$0xff] %vm727, %v6285
      %6319 = vst.msk [vmem:[%s6305 + $0x99] sm:$0xff] %vm727, %v6286
      %6320 = vst.msk [vmem:[%s6305 + $0xa9] sm:$0xff] %vm727, %v6287
      %6321 = vst.msk [vmem:[%s6305 + $0xb1] sm:$0xff] %vm727, %v6288
      %6322 = vst.msk [vmem:[%s6305 + $0xc1] sm:$0xff] %vm727, %v6289
      %6323 = vst.msk [vmem:[%s6305 + $0xc9] sm:$0xff] %vm727, %v6290
      %6324 = vst.msk [vmem:[%s6305 + $0xd9] sm:$0xff] %vm727, %v6291
      %6325 = vst.msk [vmem:[%s6305 + $0xe1] sm:$0xff] %vm727, %v6292
      %6326 = vst.msk [vmem:[%s6305 + $0xf1] sm:$0xff] %vm727, %v6293
      %6327 = vst.msk [vmem:[%s6305 + $0xf9] sm:$0xff] %vm727, %v6294
      %6328 = vst.msk [vmem:[%s6305 + $0x109] sm:$0xff] %vm727, %v6295
      %6329 = vst.msk [vmem:[%s6305 + $0x111] sm:$0xff] %vm727, %v6296
      %6330 = vst.msk [vmem:[%s6305 + $0x121] sm:$0xff] %vm727, %v6297
      %6331 = vst.msk [vmem:[%s6305 + $0x129] sm:$0xff] %vm727, %v6298
      %6332 = vst.msk [vmem:[%s6305 + $0x139] sm:$0xff] %vm727, %v6299
      %6333 = vst.msk [vmem:[%s6305 + $0x141] sm:$0xff] %vm727, %v6300
      %6334 = vst.msk [vmem:[%s6305 + $0x151] sm:$0xff] %vm727, %v6301
      %6335 = vst.msk [vmem:[%s6305 + $0x159] sm:$0xff] %vm727, %v6302
      %6336 = vst.msk [vmem:[%s6305 + $0x169] sm:$0xff] %vm727, %v6303
      %6337 = vst.msk [vmem:[%s6305 + $0x171] sm:$0xff] %vm727, %v6304
      %p6338 = scmp.eq.s32.totalorder %s21, 1
      // Predicated region
      $region45: #{block_series_forward.1} parent=39 // pred_check
        %p6339 = pneg %p6338
      $region46: #{block_series_forward.1} parent=39 // pred_check_branch
        %6341 = sbr.rel (%p6339) target = $region48
      $region47: #{block_series_forward.1} parent=39 // pred_region
        %6342 = vst.msk [vmem:[%s304] sm:$0xff] %vm727, %v6273
        %6343 = vst.msk [vmem:[%s304 + $0x8] sm:$0xff] %vm727, %v6274
        %6344 = vst.msk [vmem:[%s304 + $0x10] sm:$0xff] %vm727, %v6275
        %6345 = vst.msk [vmem:[%s304 + $0x18] sm:$0xff] %vm727, %v6276
        %6346 = vst.msk [vmem:[%s304 + $0x20] sm:$0xff] %vm727, %v6277
        %6347 = vst.msk [vmem:[%s304 + $0x28] sm:$0xff] %vm727, %v6278
        %6348 = vst.msk [vmem:[%s304 + $0x30] sm:$0xff] %vm727, %v6279
        %6349 = vst.msk [vmem:[%s304 + $0x38] sm:$0xff] %vm727, %v6280
        %6350 = vst.msk [vmem:[%s304 + $0x40] sm:$0xff] %vm727, %v6281
        %6351 = vst.msk [vmem:[%s304 + $0x48] sm:$0xff] %vm727, %v6282
        %6352 = vst.msk [vmem:[%s304 + $0x50] sm:$0xff] %vm727, %v6283
        %6353 = vst.msk [vmem:[%s304 + $0x58] sm:$0xff] %vm727, %v6284
        %6354 = vst.msk [vmem:[%s304 + $0x60] sm:$0xff] %vm727, %v6285
        %6355 = vst.msk [vmem:[%s304 + $0x68] sm:$0xff] %vm727, %v6286
        %6356 = vst.msk [vmem:[%s304 + $0x70] sm:$0xff] %vm727, %v6287
        %6357 = vst.msk [vmem:[%s304 + $0x78] sm:$0xff] %vm727, %v6288
        %6358 = vst.msk [vmem:[%s304 + $0x80] sm:$0xff] %vm727, %v6289
        %6359 = vst.msk [vmem:[%s304 + $0x88] sm:$0xff] %vm727, %v6290
        %6360 = vst.msk [vmem:[%s304 + $0x90] sm:$0xff] %vm727, %v6291
        %6361 = vst.msk [vmem:[%s304 + $0x98] sm:$0xff] %vm727, %v6292
        %6362 = vst.msk [vmem:[%s304 + $0xa0] sm:$0xff] %vm727, %v6293
        %6363 = vst.msk [vmem:[%s304 + $0xa8] sm:$0xff] %vm727, %v6294
        %6364 = vst.msk [vmem:[%s304 + $0xb0] sm:$0xff] %vm727, %v6295
        %6365 = vst.msk [vmem:[%s304 + $0xb8] sm:$0xff] %vm727, %v6296
        %6366 = vst.msk [vmem:[%s304 + $0xc0] sm:$0xff] %vm727, %v6297
        %6367 = vst.msk [vmem:[%s304 + $0xc8] sm:$0xff] %vm727, %v6298
        %6368 = vst.msk [vmem:[%s304 + $0xd0] sm:$0xff] %vm727, %v6299
        %6369 = vst.msk [vmem:[%s304 + $0xd8] sm:$0xff] %vm727, %v6300
        %6370 = vst.msk [vmem:[%s304 + $0xe0] sm:$0xff] %vm727, %v6301
        %6371 = vst.msk [vmem:[%s304 + $0xe8] sm:$0xff] %vm727, %v6302
        %6372 = vst.msk [vmem:[%s304 + $0xf0] sm:$0xff] %vm727, %v6303
        %6373 = vst.msk [vmem:[%s304 + $0xf8] sm:$0xff] %vm727, %v6304
      $region48: #{block_series_forward.1} parent=39 // pred_fallthru
        _
      %p6374 = scmp.lt.s32.totalorder %s20, 1
      %s6375 = scalar_select %p6374, %s20, 1
      %s6376 = smul.addr %s6375, 32
      %s6377 = smul.addr %s6376, 8
      %s6378 = scalar_lea.vmem %s5, %s6377
      // Predicated region
      $region49: #{block_series_forward.1} parent=39 // pred_check
        %p6379 = pneg %p176
      $region50: #{block_series_forward.1} parent=39 // pred_check_branch
        %6381 = sbr.rel (%p6379) target = $region52
      $region51: #{block_series_forward.1} parent=39 // pred_region
        _
      $region52: #{block_series_forward.1} parent=39 // pred_fallthru
        _
    $region40: #{block_series_forward.1} parent=5 // pred_fallthru
      _
    %p6382 = scmp.le.s32.totalorder 2, %s11
    // Predicated region
    $region53: #{block_series_forward.1} parent=5 // pred_check
      %p6383 = pneg %p6382
    $region54: #{block_series_forward.1} parent=5 // pred_check_branch
      %6385 = sbr.rel (%p6383) target = $region56
    $region55: #{block_series_forward.1} parent=5 // pred_region
      %s6386 = ssub.s32 %s11, 2
      // Predicated region
      $region57: #{block_series_forward.1} parent=55 // pred_check
        %p6387 = pneg %p182
      $region58: #{block_series_forward.1} parent=55 // pred_check_branch
        %6389 = sbr.rel (%p6387) target = $region60
      $region59: #{block_series_forward.1} parent=55 // pred_region
        %p6390 = scmp.lt.s32.totalorder %s22, 1
        %s6391 = scalar_select %p6390, %s22, 1
        %s6392 = smul.addr %s6391, 32
        %s6393 = smul.addr %s6392, 8
        %s6394 = scalar_lea.vmem %s5, %s6393
      $region60: #{block_series_forward.1} parent=55 // pred_fallthru
        _
    $region56: #{block_series_forward.1} parent=5 // pred_fallthru
      _
  $region6: #{block_series_forward.1} parent=0 // loop_footer
    %s15 = sadd.s32 1, %s11
  $region7: #{block_series_forward.1} parent=0 // loop_footer_branch
    %10 = sbr.rel target = $region3
  $region8: #{block_series_forward.1} parent=0 // loop_exit
    _

</llo_original>
